<compile_context>
chip_gen: v6e
topology: v6e:2x2x1
jax: 0.10.0
libtpu: 0.0.40
codegen_flags: <defaults>
</compile_context>

<pallas_src>
import functools

import numpy as np

import jax
import jax.numpy as jnp
from jax import lax
from jax.experimental import pallas as pl
from jax.experimental.pallas import tpu as pltpu


# ----------------------------------------------------------------------------
# Fused Pallas kernel: encoder + down_conv + reg_encoder + 5 CSAIN resblocks
#                      + ConvTranspose(2,2) + output head
# ----------------------------------------------------------------------------
def _csain_lvl1_kernel(x_ref, reg_ref,
                       wenc1_ref, wenc2_ref, wdown_ref, wreg_ref,
                       wgb_ref, wc_ref, wup_ref, wout1_ref, wout2_ref,
                       disp_ref, e0up_ref, *, range_flow, eps):
    f32 = jnp.float32

    def leaky(v):
        return jnp.where(v > 0, v, 0.2 * v)

    def pad_hw(v):
        # zero halo built in VMEM via concatenation (no HBM-side jnp.pad)
        h, w, c = v.shape
        zc = jnp.zeros((h, 1, c), v.dtype)
        v = jnp.concatenate([zc, v, zc], axis=1)           # (h, w+2, c)
        zr = jnp.zeros((1, w + 2, c), v.dtype)
        return jnp.concatenate([zr, v, zr], axis=0)        # (h+2, w+2, c)

    def im2col(v):
        # (h, w, c) -> (h*w, 9c): 9 shifted static slices, lane-axis concat
        h, wd, c = v.shape
        vp = pad_hw(v)
        cols = [vp[kh:kh + h, kw:kw + wd, :].reshape(h * wd, c)
                for kh in range(3) for kw in range(3)]
        return jnp.concatenate(cols, axis=-1)

    def conv3x3(v, w):
        # one im2col matmul on the MXU (f32 operands kept for numerics)
        h, wd, _ = v.shape
        out = jnp.dot(im2col(v), w, preferred_element_type=f32)
        return out.reshape(h, wd, w.shape[-1])

    def csain(v, gamma, beta):
        # InstanceNorm2d (affine=False, biased var) done in ONE reduction pass
        n = v.shape[0] * v.shape[1]
        s1 = jnp.sum(v, axis=(0, 1), keepdims=True)
        s2 = jnp.sum(v * v, axis=(0, 1), keepdims=True)
        mean = s1 * (1.0 / n)
        var = s2 * (1.0 / n) - mean * mean
        xhat = (v - mean) * lax.rsqrt(var + eps)
        return (1.0 + gamma) * xhat + beta

    def lane_flat(v):
        # (h, w, c) -> (h, w*c) lane-dense store value; per-column slices +
        # lane-axis concat (same op family as the im2col concat).
        h, w, c = v.shape
        return jnp.concatenate([v[:, j, :] for j in range(w)], axis=-1)

    x = x_ref[0].astype(f32)                               # (H, W, 2)
    reg = reg_ref[0].astype(f32)                           # (H/2, W/2, 2)
    H, W = x.shape[0], x.shape[1]
    H1, W1 = reg.shape[0], reg.shape[1]
    C = wenc1_ref.shape[-1]
    n_blocks = wc_ref.shape[0]

    # ---- input_encoder_lvl1: conv(2->C)+leaky, conv(C->C) -------------------
    fea_e0 = leaky(conv3x3(x, wenc1_ref[...]))
    fea_e0 = conv3x3(fea_e0, wenc2_ref[...])               # (H, W, C)

    # ---- down_conv (3x3, stride 2, pad 1): stride-1 conv, then even-col /
    #      even-row select via lane-preserving reshapes + static slices -------
    y_full = conv3x3(fea_e0, wdown_ref[...])               # (H, W, C)
    t = y_full.reshape(H, W1, 2, C)[:, :, 0, :]            # even columns
    e0 = t.reshape(H1, 2, W1, C)[:, 0, :, :]               # even rows -> (H1, W1, C)

    # ---- reg_encoder: conv(2->Creg) + ReLU -----------------------------------
    fea_reg = jnp.maximum(conv3x3(reg, wreg_ref[...]), 0.0)

    # ---- fused gamma/beta generators: 1 im2col + 1 wide matmul (N = 20*C) ----
    # (column groups could be zero-padded to 128/256 multiples for v5e/v6e;
    #  left natural here since C is synthetic and tiny)
    gb = leaky(jnp.dot(im2col(fea_reg), wgb_ref[...],
                       preferred_element_type=f32))        # (H1*W1, 20*C)

    def gb_slice(idx):
        return gb[:, idx * C:(idx + 1) * C].reshape(H1, W1, C)

    # ---- resblock_group_lvl1: 5 x (PreActBlock_CSAIN ; LeakyReLU(0.2)) ------
    for blk in range(n_blocks):
        g1 = gb_slice(4 * blk + 0)
        b1 = gb_slice(4 * blk + 1)
        g2 = gb_slice(4 * blk + 2)
        b2 = gb_slice(4 * blk + 3)
        shortcut = e0
        out = leaky(csain(e0, g1, b1))
        out = conv3x3(out, wc_ref[blk, 0])
        out = leaky(csain(out, g2, b2))
        out = conv3x3(out, wc_ref[blk, 1])
        e0 = leaky(out + shortcut)                         # trailing LeakyReLU

    # ---- up: ConvTranspose2d(k=2, s=2, no bias) = 1 matmul + pixel shuffle ---
    y = jnp.dot(e0.reshape(H1 * W1, C), wup_ref[...],
                preferred_element_type=f32)                # (H1*W1, 4C), k=dh*2+dw
    taps = [y[:, k * C:(k + 1) * C].reshape(H1, W1, C) for k in range(4)]

    def interleave_w(a, b):                                # -> (H1, 2*W1, C)
        s = jnp.concatenate([a[:, :, None, :], b[:, :, None, :]], axis=2)
        return s.reshape(H1, 2 * W1, C)

    r_even = interleave_w(taps[0], taps[1])                # dh = 0 rows
    r_odd = interleave_w(taps[2], taps[3])                 # dh = 1 rows
    e0_up = jnp.concatenate([r_even[:, None], r_odd[:, None]],
                            axis=1).reshape(H, W, C)
    e0up_ref[0] = lane_flat(e0_up).astype(e0up_ref.dtype)  # (H, W*C) lane-dense

    # ---- output_lvl1: conv(2C->C)+leaky, conv(C->ncls)+softsign, *range_flow -
    cat = jnp.concatenate([e0_up, fea_e0], axis=-1)        # (H, W, 2C)
    o = leaky(conv3x3(cat, wout1_ref[...]))
    o = conv3x3(o, wout2_ref[...])
    o = o * pl.reciprocal(1.0 + jnp.abs(o), approx=True)   # softsign on the EUP
    disp_ref[0] = lane_flat(o * range_flow).astype(disp_ref.dtype)


# ----------------------------------------------------------------------------
# Wrapper: weight packing + pallas_call
# ----------------------------------------------------------------------------
def _flat9(w):
    kh, kw, cin, cout = w.shape
    return w.reshape(kh * kw * cin, cout)


def _full_spec(a):
    nd = a.ndim
    return pl.BlockSpec(a.shape, lambda b, _nd=nd: (0,) * _nd)


def _vmem_limit_bytes():
    # generation-aware VMEM cap: ~75% of physical (v7x 64 MiB -> 48 MiB,
    # v5e/v6e 128 MiB -> 96 MiB); conservative fallback if the query fails.
    try:
        cap = int(pltpu.get_tpu_info().vmem_capacity_bytes)
    except Exception:
        cap = 64 * 1024 * 1024
    return max(32 * 1024 * 1024, min(3 * cap // 4, 100 * 1024 * 1024))


def csain_lvl1_pallas(x, reg, params, range_flow):
    """x: (B,H,W,2) lvl1 input, reg: (B,H/2,W/2,2) downsampled reg matrix."""
    B, Hl, Wl, Cin = x.shape
    H1, W1, Cr = reg.shape[1], reg.shape[2], reg.shape[3]
    C = params["enc1"].shape[-1]
    ncls = params["out2"].shape[-1]

    w_enc1 = _flat9(params["enc1"])
    w_enc2 = _flat9(params["enc2"])
    w_down = _flat9(params["down_conv"])
    w_reg = _flat9(params["reg_enc"])
    # all 20 gamma/beta conv weights fused into one (9*Creg, 20*C) matrix;
    # column order per block: [ai1_gamma, ai1_beta, ai2_gamma, ai2_beta]
    w_gb = jnp.concatenate(
        [jnp.concatenate([_flat9(b["ai1_gamma"]), _flat9(b["ai1_beta"]),
                          _flat9(b["ai2_gamma"]), _flat9(b["ai2_beta"])], axis=1)
         for b in params["blocks"]], axis=1)
    w_c = jnp.stack([jnp.stack([_flat9(b["conv1"]), _flat9(b["conv2"])])
                     for b in params["blocks"]])           # (5, 2, 9C, C)
    # up weight (Cin, kh, kw, Cout) -> (C, 4C), column block k = dh*2 + dw
    w_up4 = jnp.transpose(params["up"], (1, 2, 0, 3)).reshape(4, C, C)
    w_up = jnp.concatenate([w_up4[k] for k in range(4)], axis=1)
    w_out1 = _flat9(params["out1"])
    w_out2 = _flat9(params["out2"])

    kern = functools.partial(_csain_lvl1_kernel, range_flow=range_flow, eps=1e-5)

    disp_flat, e0up_flat = pl.pallas_call(
        kern,
        out_shape=(jax.ShapeDtypeStruct((B, Hl, Wl * ncls), x.dtype),
                   jax.ShapeDtypeStruct((B, Hl, Wl * C), x.dtype)),
        grid=(B,),
        in_specs=[
            pl.BlockSpec((1, Hl, Wl, Cin), lambda b: (b, 0, 0, 0)),
            pl.BlockSpec((1, H1, W1, Cr), lambda b: (b, 0, 0, 0)),
            _full_spec(w_enc1), _full_spec(w_enc2), _full_spec(w_down),
            _full_spec(w_reg), _full_spec(w_gb), _full_spec(w_c),
            _full_spec(w_up), _full_spec(w_out1), _full_spec(w_out2),
        ],
        out_specs=(pl.BlockSpec((1, Hl, Wl * ncls), lambda b: (b, 0, 0)),
                   pl.BlockSpec((1, Hl, Wl * C), lambda b: (b, 0, 0))),
        compiler_params=pltpu.CompilerParams(
            dimension_semantics=("parallel",),             # 2 TCs on v7x
            vmem_limit_bytes=_vmem_limit_bytes()),
    )(x, reg, w_enc1, w_enc2, w_down, w_reg, w_gb, w_c, w_up, w_out1, w_out2)

    disp = disp_flat.reshape(B, Hl, Wl, ncls)
    e0_up = e0up_flat.reshape(B, Hl, Wl, C)
    return disp, e0_up


# ----------------------------------------------------------------------------
# JAX glue (pooling / lookup / warping / layout plumbing)
# ----------------------------------------------------------------------------
@functools.lru_cache(maxsize=None)
def _avg_pool_counts(H, W):
    Ho, Wo = (H + 1) // 2, (W + 1) // 2
    cnt = np.zeros((Ho, Wo), np.float32)
    for i in range(Ho):
        for j in range(Wo):
            h0, h1 = max(2 * i - 1, 0), min(2 * i + 2, H)
            w0, w1 = max(2 * j - 1, 0), min(2 * j + 2, W)
            cnt[i, j] = (h1 - h0) * (w1 - w0)
    return cnt


def down_avg(x):
    """AvgPool2d(kernel=3, stride=2, padding=1, count_include_pad=False), NHWC."""
    B, H, W, C = x.shape
    s = lax.reduce_window(x, 0.0, lax.add, (1, 3, 3, 1), (1, 2, 2, 1),
                          ((0, 0), (1, 1), (1, 1), (0, 0)))
    cnt = jnp.asarray(_avg_pool_counts(H, W))[None, :, :, None]
    return s / cnt


def regularization_matrix(seg, reg_code):
    """seg: (B,H,W,1) NHWC -> (B,H,W,2); reproduces the sequential lookup."""
    df = jnp.round(seg[..., 0] * 4.0) * 2.0
    df = jnp.where(df == 0.0, reg_code[0], df)
    df = jnp.where(df == 2.0, reg_code[1], df)
    df = jnp.where(df == 4.0, reg_code[2], df)
    df = jnp.where(df == 6.0, reg_code[3], df)
    df = jnp.where(df == 8.0, reg_code[4], df)
    return jnp.stack([df, df], axis=-1)


def make_identity_grid(H, W):
    """F.affine_grid(identity, (1,1,H,W), align_corners=True), shape (1,H,W,2)."""
    xs = jnp.linspace(-1.0, 1.0, W)
    ys = jnp.linspace(-1.0, 1.0, H)
    gx, gy = jnp.meshgrid(xs, ys)
    return jnp.stack([gx, gy], axis=-1)[None]


def grid_sample_bilinear_border(img, grid):
    """torch.grid_sample(bilinear, padding_mode='border', align_corners=True).
    # TODO(synk): gather-based sampling kept in plain JAX (no clean Pallas gather).
    """
    B, H, W, C = img.shape
    gx, gy = grid[..., 0], grid[..., 1]
    ix = jnp.clip((gx + 1.0) * (W - 1) / 2.0, 0.0, W - 1.0)
    iy = jnp.clip((gy + 1.0) * (H - 1) / 2.0, 0.0, H - 1.0)
    ix0 = jnp.floor(ix)
    iy0 = jnp.floor(iy)
    wx = (ix - ix0)[..., None]
    wy = (iy - iy0)[..., None]
    ix0i = ix0.astype(jnp.int32)
    iy0i = iy0.astype(jnp.int32)
    ix1i = jnp.clip(ix0i + 1, 0, W - 1)
    iy1i = jnp.clip(iy0i + 1, 0, H - 1)
    bidx = jnp.arange(B)[:, None, None]

    def gather(iy_, ix_):
        return img[bidx, iy_, ix_]

    v00 = gather(iy0i, ix0i)
    v01 = gather(iy0i, ix1i)
    v10 = gather(iy1i, ix0i)
    v11 = gather(iy1i, ix1i)
    return (v00 * (1 - wx) * (1 - wy) + v01 * wx * (1 - wy)
            + v10 * (1 - wx) * wy + v11 * wx * wy)


# ----------------------------------------------------------------------------
# Parameters (synthetic, HWIO conv weights)
# ----------------------------------------------------------------------------
def init_params(key, in_channel=2, n_classes=2, sc=4):
    C = sc * 4        # resblock / encoder width
    Creg = sc * 2     # reg-encoder width (CSAIN conv input)

    def conv_w(k, cin, cout, kh=3, kw=3):
        return jax.random.normal(k, (kh, kw, cin, cout), jnp.float32) * 0.1

    keys = iter(jax.random.split(key, 40))
    params = {
        "enc1": conv_w(next(keys), in_channel, C),
        "enc2": conv_w(next(keys), C, C),
        "down_conv": conv_w(next(keys), C, C),
        "reg_enc": conv_w(next(keys), in_channel, Creg),
        "up": jax.random.normal(next(keys), (C, 2, 2, C), jnp.float32) * 0.1,
        "out1": conv_w(next(keys), 2 * C, C),
        "out2": conv_w(next(keys), C, n_classes),
        "blocks": [],
    }
    for _ in range(5):
        params["blocks"].append({
            "ai1_gamma": conv_w(next(keys), Creg, C),
            "ai1_beta": conv_w(next(keys), Creg, C),
            "conv1": conv_w(next(keys), C, C),
            "ai2_gamma": conv_w(next(keys), Creg, C),
            "ai2_beta": conv_w(next(keys), Creg, C),
            "conv2": conv_w(next(keys), C, C),
        })
    return params


# ----------------------------------------------------------------------------
# Forward pass (mirrors CSAIN_disp_lvl1.forward, is_train=True).  Inputs NCHW.
# ----------------------------------------------------------------------------
def csain_disp_lvl1_forward(params, x_nchw, y_nchw, seg_nchw, reg_code,
                            range_flow=0.4):
    to_nhwc = lambda t: jnp.transpose(t, (0, 2, 3, 1))
    to_nchw = lambda t: jnp.transpose(t, (0, 3, 1, 2))
    x = to_nhwc(x_nchw)
    y = to_nhwc(y_nchw)
    seg_Y = to_nhwc(seg_nchw)

    cat_input = jnp.concatenate([x, y], axis=-1)
    cat_input = down_avg(cat_input)
    cat_input_lvl1 = down_avg(cat_input)
    seg_Y_lv2 = down_avg(seg_Y)
    seg_Y_lv1 = down_avg(seg_Y_lv2)
    reg_matrix = regularization_matrix(seg_Y_lv1, reg_code)
    down_y = cat_input_lvl1[..., 1:2]

    # F.interpolate(scale_factor=0.5, mode='nearest')
    reg_ds = reg_matrix[:, ::2, ::2, :]

    # Fused trunk: encoder + down_conv + reg_encoder + 5 resblocks + up + head
    disp, e0_up = csain_lvl1_pallas(cat_input_lvl1, reg_ds, params, range_flow)

    # SpatialTransform_unit: identity grid + flow, bilinear border sampling
    Hg, Wg = disp.shape[1], disp.shape[2]
    grid_1 = make_identity_grid(Hg, Wg)
    sample_grid = grid_1 + disp
    warpped_inputx_lvl1_out = grid_sample_bilinear_border(x, sample_grid)

    return (to_nchw(disp),
            to_nchw(warpped_inputx_lvl1_out),
            to_nchw(down_y),
            to_nchw(disp),
            to_nchw(e0_up),
            to_nchw(reg_matrix))


# ----------------------------------------------------------------------------
if __name__ == "__main__":
    key = jax.random.PRNGKey(0)
    k1, k2, k3, k4 = jax.random.split(key, 4)

    B, H, W = 2, 32, 32          # full-res inputs; lvl1 resolution = (8, 8)
    in_channel, n_classes, start_channel = 2, 2, 4

    x = jax.random.uniform(k1, (B, 1, H, W), jnp.float32)
    y = jax.random.uniform(k2, (B, 1, H, W), jnp.float32)
    seg_levels = jnp.array([0.0, 0.25, 0.5, 0.75, 1.0], jnp.float32)
    seg_Y = seg_levels[jax.random.randint(k3, (B, 1, H, W), 0, 5)]
    reg_code = jnp.array([0.1, 0.3, 0.5, 0.7, 0.9], jnp.float32)

    params = init_params(k4, in_channel=in_channel, n_classes=n_classes,
                         sc=start_channel)

    fwd = jax.jit(functools.partial(csain_disp_lvl1_forward, range_flow=0.4))
    outs = jax.block_until_ready(fwd(params, x, y, seg_Y, reg_code))

    assert outs[0].shape == (B, n_classes, H // 4, W // 4)
    assert outs[1].shape == (B, 1, H // 4, W // 4)
    assert outs[2].shape == (B, 1, H // 4, W // 4)
    assert outs[3].shape == (B, n_classes, H // 4, W // 4)
    assert outs[4].shape == (B, start_channel * 4, H // 4, W // 4)
    assert outs[5].shape == (B, 2, H // 4, W // 4)
    assert all(bool(jnp.all(jnp.isfinite(o))) for o in outs)
    print("KERNEL_OK")
</pallas_src>

<mosaic_0001>
module attributes {stable_mosaic.version = 11 : i64} {
  func.func @_csain_lvl1_kernel(%arg0: i32, %arg1: memref<1x8x8x2xf32, #tpu.memory_space<vmem>>, %arg2: memref<1x4x4x2xf32, #tpu.memory_space<vmem>>, %arg3: memref<18x16xf32, #tpu.memory_space<vmem>>, %arg4: memref<144x16xf32, #tpu.memory_space<vmem>>, %arg5: memref<144x16xf32, #tpu.memory_space<vmem>>, %arg6: memref<18x8xf32, #tpu.memory_space<vmem>>, %arg7: memref<72x320xf32, #tpu.memory_space<vmem>>, %arg8: memref<5x2x144x16xf32, #tpu.memory_space<vmem>>, %arg9: memref<16x64xf32, #tpu.memory_space<vmem>>, %arg10: memref<288x16xf32, #tpu.memory_space<vmem>>, %arg11: memref<144x2xf32, #tpu.memory_space<vmem>>, %arg12: memref<1x8x16xf32, #tpu.memory_space<vmem>>, %arg13: memref<1x8x128xf32, #tpu.memory_space<vmem>>) attributes {dimension_semantics = [#tpu.dimension_semantics<parallel>], iteration_bounds = array<i64: 2>, scalar_prefetch = 0 : i64, scratch_operands = 0 : i64, tpu.core_type = #tpu.core_type<tc>, window_params = [{transform_indices = @transform_0, window_bounds = array<i64: 1, 8, 8, 2>}, {transform_indices = @transform_1, window_bounds = array<i64: 1, 4, 4, 2>}, {pipeline_mode = #tpu.pipeline_mode<synchronous>, transform_indices = @transform_2, window_bounds = array<i64: 18, 16>}, {pipeline_mode = #tpu.pipeline_mode<synchronous>, transform_indices = @transform_3, window_bounds = array<i64: 144, 16>}, {pipeline_mode = #tpu.pipeline_mode<synchronous>, transform_indices = @transform_4, window_bounds = array<i64: 144, 16>}, {pipeline_mode = #tpu.pipeline_mode<synchronous>, transform_indices = @transform_5, window_bounds = array<i64: 18, 8>}, {pipeline_mode = #tpu.pipeline_mode<synchronous>, transform_indices = @transform_6, window_bounds = array<i64: 72, 320>}, {pipeline_mode = #tpu.pipeline_mode<synchronous>, transform_indices = @transform_7, window_bounds = array<i64: 5, 2, 144, 16>}, {pipeline_mode = #tpu.pipeline_mode<synchronous>, transform_indices = @transform_8, window_bounds = array<i64: 16, 64>}, {pipeline_mode = #tpu.pipeline_mode<synchronous>, transform_indices = @transform_9, window_bounds = array<i64: 288, 16>}, {pipeline_mode = #tpu.pipeline_mode<synchronous>, transform_indices = @transform_10, window_bounds = array<i64: 144, 2>}, {transform_indices = @transform_11, window_bounds = array<i64: 1, 8, 16>}, {transform_indices = @transform_12, window_bounds = array<i64: 1, 8, 128>}]} {
    %c0 = arith.constant 0 : index
    %c0_0 = arith.constant 0 : index
    %c0_1 = arith.constant 0 : index
    %c0_2 = arith.constant 0 : index
    %0 = vector.load %arg1[%c0, %c0_0, %c0_1, %c0_2] : memref<1x8x8x2xf32, #tpu.memory_space<vmem>>, vector<1x8x8x2xf32>
    %1 = vector.shape_cast %0 : vector<1x8x8x2xf32> to vector<8x8x2xf32>
    %c0_3 = arith.constant 0 : index
    %c0_4 = arith.constant 0 : index
    %c0_5 = arith.constant 0 : index
    %c0_6 = arith.constant 0 : index
    %2 = vector.load %arg2[%c0_3, %c0_4, %c0_5, %c0_6] : memref<1x4x4x2xf32, #tpu.memory_space<vmem>>, vector<1x4x4x2xf32>
    %3 = vector.shape_cast %2 : vector<1x4x4x2xf32> to vector<4x4x2xf32>
    %c0_7 = arith.constant 0 : index
    %c0_8 = arith.constant 0 : index
    %4 = vector.load %arg3[%c0_7, %c0_8] : memref<18x16xf32, #tpu.memory_space<vmem>>, vector<18x16xf32>
    %cst = arith.constant 0.000000e+00 : f32
    %5 = vector.broadcast %cst : f32 to vector<8x1x2xf32>
    %6 = tpu.concatenate %5, %1, %5 in 1 : vector<8x1x2xf32>, vector<8x8x2xf32>, vector<8x1x2xf32> -> vector<8x10x2xf32>
    %cst_9 = arith.constant 0.000000e+00 : f32
    %7 = vector.broadcast %cst_9 : f32 to vector<1x10x2xf32>
    %8 = tpu.concatenate %7, %6, %7 in 0 : vector<1x10x2xf32>, vector<8x10x2xf32>, vector<1x10x2xf32> -> vector<10x10x2xf32>
    %9 = vector.extract_strided_slice %8 {offsets = [0, 0, 0], sizes = [8, 8, 2], strides = [1, 1, 1]} : vector<10x10x2xf32> to vector<8x8x2xf32>
    %10 = vector.shape_cast %9 : vector<8x8x2xf32> to vector<64x2xf32>
    %11 = vector.extract_strided_slice %8 {offsets = [0, 1, 0], sizes = [8, 8, 2], strides = [1, 1, 1]} : vector<10x10x2xf32> to vector<8x8x2xf32>
    %12 = vector.shape_cast %11 : vector<8x8x2xf32> to vector<64x2xf32>
    %13 = vector.extract_strided_slice %8 {offsets = [0, 2, 0], sizes = [8, 8, 2], strides = [1, 1, 1]} : vector<10x10x2xf32> to vector<8x8x2xf32>
    %14 = vector.shape_cast %13 : vector<8x8x2xf32> to vector<64x2xf32>
    %15 = vector.extract_strided_slice %8 {offsets = [1, 0, 0], sizes = [8, 8, 2], strides = [1, 1, 1]} : vector<10x10x2xf32> to vector<8x8x2xf32>
    %16 = vector.shape_cast %15 : vector<8x8x2xf32> to vector<64x2xf32>
    %17 = vector.extract_strided_slice %8 {offsets = [1, 1, 0], sizes = [8, 8, 2], strides = [1, 1, 1]} : vector<10x10x2xf32> to vector<8x8x2xf32>
    %18 = vector.shape_cast %17 : vector<8x8x2xf32> to vector<64x2xf32>
    %19 = vector.extract_strided_slice %8 {offsets = [1, 2, 0], sizes = [8, 8, 2], strides = [1, 1, 1]} : vector<10x10x2xf32> to vector<8x8x2xf32>
    %20 = vector.shape_cast %19 : vector<8x8x2xf32> to vector<64x2xf32>
    %21 = vector.extract_strided_slice %8 {offsets = [2, 0, 0], sizes = [8, 8, 2], strides = [1, 1, 1]} : vector<10x10x2xf32> to vector<8x8x2xf32>
    %22 = vector.shape_cast %21 : vector<8x8x2xf32> to vector<64x2xf32>
    %23 = vector.extract_strided_slice %8 {offsets = [2, 1, 0], sizes = [8, 8, 2], strides = [1, 1, 1]} : vector<10x10x2xf32> to vector<8x8x2xf32>
    %24 = vector.shape_cast %23 : vector<8x8x2xf32> to vector<64x2xf32>
    %25 = vector.extract_strided_slice %8 {offsets = [2, 2, 0], sizes = [8, 8, 2], strides = [1, 1, 1]} : vector<10x10x2xf32> to vector<8x8x2xf32>
    %26 = vector.shape_cast %25 : vector<8x8x2xf32> to vector<64x2xf32>
    %27 = tpu.concatenate %10, %12, %14, %16, %18, %20, %22, %24, %26 in 1 : vector<64x2xf32>, vector<64x2xf32>, vector<64x2xf32>, vector<64x2xf32>, vector<64x2xf32>, vector<64x2xf32>, vector<64x2xf32>, vector<64x2xf32>, vector<64x2xf32> -> vector<64x18xf32>
    %cst_10 = arith.constant dense<0.000000e+00> : vector<64x16xf32>
    %28 = tpu.matmul %27, %4, %cst_10 {dimension_numbers = #tpu.dot_dimension_numbers<[1], [0], [0], [1], [0, 0, 1, 1], [], []>} : vector<64x18xf32>, vector<18x16xf32>, vector<64x16xf32> -> vector<64x16xf32>
    %29 = vector.shape_cast %28 : vector<64x16xf32> to vector<8x8x16xf32>
    %cst_11 = arith.constant 0.000000e+00 : f32
    %30 = vector.broadcast %cst_11 : f32 to vector<8x8x16xf32>
    %31 = arith.cmpf ogt, %29, %30 : vector<8x8x16xf32>
    %cst_12 = arith.constant 2.000000e-01 : f32
    %32 = vector.broadcast %cst_12 : f32 to vector<8x8x16xf32>
    %33 = arith.mulf %32, %29 : vector<8x8x16xf32>
    %34 = arith.select %31, %29, %33 : vector<8x8x16xi1>, vector<8x8x16xf32>
    %c0_13 = arith.constant 0 : index
    %c0_14 = arith.constant 0 : index
    %35 = vector.load %arg4[%c0_13, %c0_14] : memref<144x16xf32, #tpu.memory_space<vmem>>, vector<144x16xf32>
    %cst_15 = arith.constant 0.000000e+00 : f32
    %36 = vector.broadcast %cst_15 : f32 to vector<8x1x16xf32>
    %37 = tpu.concatenate %36, %34, %36 in 1 : vector<8x1x16xf32>, vector<8x8x16xf32>, vector<8x1x16xf32> -> vector<8x10x16xf32>
    %cst_16 = arith.constant 0.000000e+00 : f32
    %38 = vector.broadcast %cst_16 : f32 to vector<1x10x16xf32>
    %39 = tpu.concatenate %38, %37, %38 in 0 : vector<1x10x16xf32>, vector<8x10x16xf32>, vector<1x10x16xf32> -> vector<10x10x16xf32>
    %40 = vector.extract_strided_slice %39 {offsets = [0, 0, 0], sizes = [8, 8, 16], strides = [1, 1, 1]} : vector<10x10x16xf32> to vector<8x8x16xf32>
    %41 = vector.shape_cast %40 : vector<8x8x16xf32> to vector<64x16xf32>
    %42 = vector.extract_strided_slice %39 {offsets = [0, 1, 0], sizes = [8, 8, 16], strides = [1, 1, 1]} : vector<10x10x16xf32> to vector<8x8x16xf32>
    %43 = vector.shape_cast %42 : vector<8x8x16xf32> to vector<64x16xf32>
    %44 = vector.extract_strided_slice %39 {offsets = [0, 2, 0], sizes = [8, 8, 16], strides = [1, 1, 1]} : vector<10x10x16xf32> to vector<8x8x16xf32>
    %45 = vector.shape_cast %44 : vector<8x8x16xf32> to vector<64x16xf32>
    %46 = vector.extract_strided_slice %39 {offsets = [1, 0, 0], sizes = [8, 8, 16], strides = [1, 1, 1]} : vector<10x10x16xf32> to vector<8x8x16xf32>
    %47 = vector.shape_cast %46 : vector<8x8x16xf32> to vector<64x16xf32>
    %48 = vector.extract_strided_slice %39 {offsets = [1, 1, 0], sizes = [8, 8, 16], strides = [1, 1, 1]} : vector<10x10x16xf32> to vector<8x8x16xf32>
    %49 = vector.shape_cast %48 : vector<8x8x16xf32> to vector<64x16xf32>
    %50 = vector.extract_strided_slice %39 {offsets = [1, 2, 0], sizes = [8, 8, 16], strides = [1, 1, 1]} : vector<10x10x16xf32> to vector<8x8x16xf32>
    %51 = vector.shape_cast %50 : vector<8x8x16xf32> to vector<64x16xf32>
    %52 = vector.extract_strided_slice %39 {offsets = [2, 0, 0], sizes = [8, 8, 16], strides = [1, 1, 1]} : vector<10x10x16xf32> to vector<8x8x16xf32>
    %53 = vector.shape_cast %52 : vector<8x8x16xf32> to vector<64x16xf32>
    %54 = vector.extract_strided_slice %39 {offsets = [2, 1, 0], sizes = [8, 8, 16], strides = [1, 1, 1]} : vector<10x10x16xf32> to vector<8x8x16xf32>
    %55 = vector.shape_cast %54 : vector<8x8x16xf32> to vector<64x16xf32>
    %56 = vector.extract_strided_slice %39 {offsets = [2, 2, 0], sizes = [8, 8, 16], strides = [1, 1, 1]} : vector<10x10x16xf32> to vector<8x8x16xf32>
    %57 = vector.shape_cast %56 : vector<8x8x16xf32> to vector<64x16xf32>
    %58 = tpu.concatenate %41, %43, %45, %47, %49, %51, %53, %55, %57 in 1 : vector<64x16xf32>, vector<64x16xf32>, vector<64x16xf32>, vector<64x16xf32>, vector<64x16xf32>, vector<64x16xf32>, vector<64x16xf32>, vector<64x16xf32>, vector<64x16xf32> -> vector<64x144xf32>
    %cst_17 = arith.constant dense<0.000000e+00> : vector<64x16xf32>
    %59 = tpu.matmul %58, %35, %cst_17 {dimension_numbers = #tpu.dot_dimension_numbers<[1], [0], [0], [1], [0, 0, 1, 1], [], []>} : vector<64x144xf32>, vector<144x16xf32>, vector<64x16xf32> -> vector<64x16xf32>
    %60 = vector.shape_cast %59 : vector<64x16xf32> to vector<8x8x16xf32>
    %c0_18 = arith.constant 0 : index
    %c0_19 = arith.constant 0 : index
    %61 = vector.load %arg5[%c0_18, %c0_19] : memref<144x16xf32, #tpu.memory_space<vmem>>, vector<144x16xf32>
    %cst_20 = arith.constant 0.000000e+00 : f32
    %62 = vector.broadcast %cst_20 : f32 to vector<8x1x16xf32>
    %63 = tpu.concatenate %62, %60, %62 in 1 : vector<8x1x16xf32>, vector<8x8x16xf32>, vector<8x1x16xf32> -> vector<8x10x16xf32>
    %cst_21 = arith.constant 0.000000e+00 : f32
    %64 = vector.broadcast %cst_21 : f32 to vector<1x10x16xf32>
    %65 = tpu.concatenate %64, %63, %64 in 0 : vector<1x10x16xf32>, vector<8x10x16xf32>, vector<1x10x16xf32> -> vector<10x10x16xf32>
    %66 = vector.extract_strided_slice %65 {offsets = [0, 0, 0], sizes = [8, 8, 16], strides = [1, 1, 1]} : vector<10x10x16xf32> to vector<8x8x16xf32>
    %67 = vector.shape_cast %66 : vector<8x8x16xf32> to vector<64x16xf32>
    %68 = vector.extract_strided_slice %65 {offsets = [0, 1, 0], sizes = [8, 8, 16], strides = [1, 1, 1]} : vector<10x10x16xf32> to vector<8x8x16xf32>
    %69 = vector.shape_cast %68 : vector<8x8x16xf32> to vector<64x16xf32>
    %70 = vector.extract_strided_slice %65 {offsets = [0, 2, 0], sizes = [8, 8, 16], strides = [1, 1, 1]} : vector<10x10x16xf32> to vector<8x8x16xf32>
    %71 = vector.shape_cast %70 : vector<8x8x16xf32> to vector<64x16xf32>
    %72 = vector.extract_strided_slice %65 {offsets = [1, 0, 0], sizes = [8, 8, 16], strides = [1, 1, 1]} : vector<10x10x16xf32> to vector<8x8x16xf32>
    %73 = vector.shape_cast %72 : vector<8x8x16xf32> to vector<64x16xf32>
    %74 = vector.extract_strided_slice %65 {offsets = [1, 1, 0], sizes = [8, 8, 16], strides = [1, 1, 1]} : vector<10x10x16xf32> to vector<8x8x16xf32>
    %75 = vector.shape_cast %74 : vector<8x8x16xf32> to vector<64x16xf32>
    %76 = vector.extract_strided_slice %65 {offsets = [1, 2, 0], sizes = [8, 8, 16], strides = [1, 1, 1]} : vector<10x10x16xf32> to vector<8x8x16xf32>
    %77 = vector.shape_cast %76 : vector<8x8x16xf32> to vector<64x16xf32>
    %78 = vector.extract_strided_slice %65 {offsets = [2, 0, 0], sizes = [8, 8, 16], strides = [1, 1, 1]} : vector<10x10x16xf32> to vector<8x8x16xf32>
    %79 = vector.shape_cast %78 : vector<8x8x16xf32> to vector<64x16xf32>
    %80 = vector.extract_strided_slice %65 {offsets = [2, 1, 0], sizes = [8, 8, 16], strides = [1, 1, 1]} : vector<10x10x16xf32> to vector<8x8x16xf32>
    %81 = vector.shape_cast %80 : vector<8x8x16xf32> to vector<64x16xf32>
    %82 = vector.extract_strided_slice %65 {offsets = [2, 2, 0], sizes = [8, 8, 16], strides = [1, 1, 1]} : vector<10x10x16xf32> to vector<8x8x16xf32>
    %83 = vector.shape_cast %82 : vector<8x8x16xf32> to vector<64x16xf32>
    %84 = tpu.concatenate %67, %69, %71, %73, %75, %77, %79, %81, %83 in 1 : vector<64x16xf32>, vector<64x16xf32>, vector<64x16xf32>, vector<64x16xf32>, vector<64x16xf32>, vector<64x16xf32>, vector<64x16xf32>, vector<64x16xf32>, vector<64x16xf32> -> vector<64x144xf32>
    %cst_22 = arith.constant dense<0.000000e+00> : vector<64x16xf32>
    %85 = tpu.matmul %84, %61, %cst_22 {dimension_numbers = #tpu.dot_dimension_numbers<[1], [0], [0], [1], [0, 0, 1, 1], [], []>} : vector<64x144xf32>, vector<144x16xf32>, vector<64x16xf32> -> vector<64x16xf32>
    %86 = vector.shape_cast %85 : vector<64x16xf32> to vector<8x8x16xf32>
    %87 = vector.shape_cast %86 : vector<8x8x16xf32> to vector<8x4x2x16xf32>
    %88 = vector.extract_strided_slice %87 {offsets = [0, 0, 0, 0], sizes = [8, 4, 1, 16], strides = [1, 1, 1, 1]} : vector<8x4x2x16xf32> to vector<8x4x1x16xf32>
    %89 = vector.shape_cast %88 : vector<8x4x1x16xf32> to vector<8x4x16xf32>
    %90 = vector.shape_cast %89 : vector<8x4x16xf32> to vector<4x2x4x16xf32>
    %91 = vector.extract_strided_slice %90 {offsets = [0, 0, 0, 0], sizes = [4, 1, 4, 16], strides = [1, 1, 1, 1]} : vector<4x2x4x16xf32> to vector<4x1x4x16xf32>
    %92 = vector.shape_cast %91 : vector<4x1x4x16xf32> to vector<4x4x16xf32>
    %c0_23 = arith.constant 0 : index
    %c0_24 = arith.constant 0 : index
    %93 = vector.load %arg6[%c0_23, %c0_24] : memref<18x8xf32, #tpu.memory_space<vmem>>, vector<18x8xf32>
    %cst_25 = arith.constant 0.000000e+00 : f32
    %94 = vector.broadcast %cst_25 : f32 to vector<4x1x2xf32>
    %95 = tpu.concatenate %94, %3, %94 in 1 : vector<4x1x2xf32>, vector<4x4x2xf32>, vector<4x1x2xf32> -> vector<4x6x2xf32>
    %cst_26 = arith.constant 0.000000e+00 : f32
    %96 = vector.broadcast %cst_26 : f32 to vector<1x6x2xf32>
    %97 = tpu.concatenate %96, %95, %96 in 0 : vector<1x6x2xf32>, vector<4x6x2xf32>, vector<1x6x2xf32> -> vector<6x6x2xf32>
    %98 = vector.extract_strided_slice %97 {offsets = [0, 0, 0], sizes = [4, 4, 2], strides = [1, 1, 1]} : vector<6x6x2xf32> to vector<4x4x2xf32>
    %99 = vector.shape_cast %98 : vector<4x4x2xf32> to vector<16x2xf32>
    %100 = vector.extract_strided_slice %97 {offsets = [0, 1, 0], sizes = [4, 4, 2], strides = [1, 1, 1]} : vector<6x6x2xf32> to vector<4x4x2xf32>
    %101 = vector.shape_cast %100 : vector<4x4x2xf32> to vector<16x2xf32>
    %102 = vector.extract_strided_slice %97 {offsets = [0, 2, 0], sizes = [4, 4, 2], strides = [1, 1, 1]} : vector<6x6x2xf32> to vector<4x4x2xf32>
    %103 = vector.shape_cast %102 : vector<4x4x2xf32> to vector<16x2xf32>
    %104 = vector.extract_strided_slice %97 {offsets = [1, 0, 0], sizes = [4, 4, 2], strides = [1, 1, 1]} : vector<6x6x2xf32> to vector<4x4x2xf32>
    %105 = vector.shape_cast %104 : vector<4x4x2xf32> to vector<16x2xf32>
    %106 = vector.extract_strided_slice %97 {offsets = [1, 1, 0], sizes = [4, 4, 2], strides = [1, 1, 1]} : vector<6x6x2xf32> to vector<4x4x2xf32>
    %107 = vector.shape_cast %106 : vector<4x4x2xf32> to vector<16x2xf32>
    %108 = vector.extract_strided_slice %97 {offsets = [1, 2, 0], sizes = [4, 4, 2], strides = [1, 1, 1]} : vector<6x6x2xf32> to vector<4x4x2xf32>
    %109 = vector.shape_cast %108 : vector<4x4x2xf32> to vector<16x2xf32>
    %110 = vector.extract_strided_slice %97 {offsets = [2, 0, 0], sizes = [4, 4, 2], strides = [1, 1, 1]} : vector<6x6x2xf32> to vector<4x4x2xf32>
    %111 = vector.shape_cast %110 : vector<4x4x2xf32> to vector<16x2xf32>
    %112 = vector.extract_strided_slice %97 {offsets = [2, 1, 0], sizes = [4, 4, 2], strides = [1, 1, 1]} : vector<6x6x2xf32> to vector<4x4x2xf32>
    %113 = vector.shape_cast %112 : vector<4x4x2xf32> to vector<16x2xf32>
    %114 = vector.extract_strided_slice %97 {offsets = [2, 2, 0], sizes = [4, 4, 2], strides = [1, 1, 1]} : vector<6x6x2xf32> to vector<4x4x2xf32>
    %115 = vector.shape_cast %114 : vector<4x4x2xf32> to vector<16x2xf32>
    %116 = tpu.concatenate %99, %101, %103, %105, %107, %109, %111, %113, %115 in 1 : vector<16x2xf32>, vector<16x2xf32>, vector<16x2xf32>, vector<16x2xf32>, vector<16x2xf32>, vector<16x2xf32>, vector<16x2xf32>, vector<16x2xf32>, vector<16x2xf32> -> vector<16x18xf32>
    %cst_27 = arith.constant dense<0.000000e+00> : vector<16x8xf32>
    %117 = tpu.matmul %116, %93, %cst_27 {dimension_numbers = #tpu.dot_dimension_numbers<[1], [0], [0], [1], [0, 0, 1, 1], [], []>} : vector<16x18xf32>, vector<18x8xf32>, vector<16x8xf32> -> vector<16x8xf32>
    %118 = vector.shape_cast %117 : vector<16x8xf32> to vector<4x4x8xf32>
    %cst_28 = arith.constant 0.000000e+00 : f32
    %119 = vector.broadcast %cst_28 : f32 to vector<4x4x8xf32>
    %120 = arith.maximumf %118, %119 : vector<4x4x8xf32>
    %cst_29 = arith.constant 0.000000e+00 : f32
    %121 = vector.broadcast %cst_29 : f32 to vector<4x1x8xf32>
    %122 = tpu.concatenate %121, %120, %121 in 1 : vector<4x1x8xf32>, vector<4x4x8xf32>, vector<4x1x8xf32> -> vector<4x6x8xf32>
    %cst_30 = arith.constant 0.000000e+00 : f32
    %123 = vector.broadcast %cst_30 : f32 to vector<1x6x8xf32>
    %124 = tpu.concatenate %123, %122, %123 in 0 : vector<1x6x8xf32>, vector<4x6x8xf32>, vector<1x6x8xf32> -> vector<6x6x8xf32>
    %125 = vector.extract_strided_slice %124 {offsets = [0, 0, 0], sizes = [4, 4, 8], strides = [1, 1, 1]} : vector<6x6x8xf32> to vector<4x4x8xf32>
    %126 = vector.shape_cast %125 : vector<4x4x8xf32> to vector<16x8xf32>
    %127 = vector.extract_strided_slice %124 {offsets = [0, 1, 0], sizes = [4, 4, 8], strides = [1, 1, 1]} : vector<6x6x8xf32> to vector<4x4x8xf32>
    %128 = vector.shape_cast %127 : vector<4x4x8xf32> to vector<16x8xf32>
    %129 = vector.extract_strided_slice %124 {offsets = [0, 2, 0], sizes = [4, 4, 8], strides = [1, 1, 1]} : vector<6x6x8xf32> to vector<4x4x8xf32>
    %130 = vector.shape_cast %129 : vector<4x4x8xf32> to vector<16x8xf32>
    %131 = vector.extract_strided_slice %124 {offsets = [1, 0, 0], sizes = [4, 4, 8], strides = [1, 1, 1]} : vector<6x6x8xf32> to vector<4x4x8xf32>
    %132 = vector.shape_cast %131 : vector<4x4x8xf32> to vector<16x8xf32>
    %133 = vector.extract_strided_slice %124 {offsets = [1, 1, 0], sizes = [4, 4, 8], strides = [1, 1, 1]} : vector<6x6x8xf32> to vector<4x4x8xf32>
    %134 = vector.shape_cast %133 : vector<4x4x8xf32> to vector<16x8xf32>
    %135 = vector.extract_strided_slice %124 {offsets = [1, 2, 0], sizes = [4, 4, 8], strides = [1, 1, 1]} : vector<6x6x8xf32> to vector<4x4x8xf32>
    %136 = vector.shape_cast %135 : vector<4x4x8xf32> to vector<16x8xf32>
    %137 = vector.extract_strided_slice %124 {offsets = [2, 0, 0], sizes = [4, 4, 8], strides = [1, 1, 1]} : vector<6x6x8xf32> to vector<4x4x8xf32>
    %138 = vector.shape_cast %137 : vector<4x4x8xf32> to vector<16x8xf32>
    %139 = vector.extract_strided_slice %124 {offsets = [2, 1, 0], sizes = [4, 4, 8], strides = [1, 1, 1]} : vector<6x6x8xf32> to vector<4x4x8xf32>
    %140 = vector.shape_cast %139 : vector<4x4x8xf32> to vector<16x8xf32>
    %141 = vector.extract_strided_slice %124 {offsets = [2, 2, 0], sizes = [4, 4, 8], strides = [1, 1, 1]} : vector<6x6x8xf32> to vector<4x4x8xf32>
    %142 = vector.shape_cast %141 : vector<4x4x8xf32> to vector<16x8xf32>
    %143 = tpu.concatenate %126, %128, %130, %132, %134, %136, %138, %140, %142 in 1 : vector<16x8xf32>, vector<16x8xf32>, vector<16x8xf32>, vector<16x8xf32>, vector<16x8xf32>, vector<16x8xf32>, vector<16x8xf32>, vector<16x8xf32>, vector<16x8xf32> -> vector<16x72xf32>
    %c0_31 = arith.constant 0 : index
    %c0_32 = arith.constant 0 : index
    %144 = vector.load %arg7[%c0_31, %c0_32] : memref<72x320xf32, #tpu.memory_space<vmem>>, vector<72x320xf32>
    %cst_33 = arith.constant dense<0.000000e+00> : vector<16x320xf32>
    %145 = tpu.matmul %143, %144, %cst_33 {dimension_numbers = #tpu.dot_dimension_numbers<[1], [0], [0], [1], [0, 0, 1, 1], [], []>} : vector<16x72xf32>, vector<72x320xf32>, vector<16x320xf32> -> vector<16x320xf32>
    %cst_34 = arith.constant 0.000000e+00 : f32
    %146 = vector.broadcast %cst_34 : f32 to vector<16x320xf32>
    %147 = arith.cmpf ogt, %145, %146 : vector<16x320xf32>
    %cst_35 = arith.constant 2.000000e-01 : f32
    %148 = vector.broadcast %cst_35 : f32 to vector<16x320xf32>
    %149 = arith.mulf %148, %145 : vector<16x320xf32>
    %150 = arith.select %147, %145, %149 : vector<16x320xi1>, vector<16x320xf32>
    %151 = vector.extract_strided_slice %150 {offsets = [0, 0], sizes = [16, 16], strides = [1, 1]} : vector<16x320xf32> to vector<16x16xf32>
    %152 = vector.shape_cast %151 : vector<16x16xf32> to vector<4x4x16xf32>
    %153 = vector.extract_strided_slice %150 {offsets = [0, 16], sizes = [16, 16], strides = [1, 1]} : vector<16x320xf32> to vector<16x16xf32>
    %154 = vector.shape_cast %153 : vector<16x16xf32> to vector<4x4x16xf32>
    %155 = vector.extract_strided_slice %150 {offsets = [0, 32], sizes = [16, 16], strides = [1, 1]} : vector<16x320xf32> to vector<16x16xf32>
    %156 = vector.shape_cast %155 : vector<16x16xf32> to vector<4x4x16xf32>
    %157 = vector.extract_strided_slice %150 {offsets = [0, 48], sizes = [16, 16], strides = [1, 1]} : vector<16x320xf32> to vector<16x16xf32>
    %158 = vector.shape_cast %157 : vector<16x16xf32> to vector<4x4x16xf32>
    %cst_36 = arith.constant dense<0.000000e+00> : vector<16xf32>
    %159 = vector.multi_reduction <add>, %92, %cst_36 [0, 1] : vector<4x4x16xf32> to vector<16xf32>
    %160 = vector.shape_cast %159 : vector<16xf32> to vector<1x1x16xf32>
    %161 = arith.mulf %92, %92 : vector<4x4x16xf32>
    %cst_37 = arith.constant dense<0.000000e+00> : vector<16xf32>
    %162 = vector.multi_reduction <add>, %161, %cst_37 [0, 1] : vector<4x4x16xf32> to vector<16xf32>
    %163 = vector.shape_cast %162 : vector<16xf32> to vector<1x1x16xf32>
    %cst_38 = arith.constant 6.250000e-02 : f32
    %164 = vector.broadcast %cst_38 : f32 to vector<1x1x16xf32>
    %165 = arith.mulf %160, %164 : vector<1x1x16xf32>
    %cst_39 = arith.constant 6.250000e-02 : f32
    %166 = vector.broadcast %cst_39 : f32 to vector<1x1x16xf32>
    %167 = arith.mulf %163, %166 : vector<1x1x16xf32>
    %168 = arith.mulf %165, %165 : vector<1x1x16xf32>
    %169 = arith.subf %167, %168 : vector<1x1x16xf32>
    %170 = vector.broadcast %165 : vector<1x1x16xf32> to vector<4x4x16xf32>
    %171 = arith.subf %92, %170 : vector<4x4x16xf32>
    %cst_40 = arith.constant 9.99999974E-6 : f32
    %172 = vector.broadcast %cst_40 : f32 to vector<1x1x16xf32>
    %173 = arith.addf %169, %172 : vector<1x1x16xf32>
    %174 = math.rsqrt %173 : vector<1x1x16xf32>
    %175 = vector.broadcast %174 : vector<1x1x16xf32> to vector<4x4x16xf32>
    %176 = arith.mulf %171, %175 : vector<4x4x16xf32>
    %cst_41 = arith.constant 1.000000e+00 : f32
    %177 = vector.broadcast %cst_41 : f32 to vector<4x4x16xf32>
    %178 = arith.addf %177, %152 : vector<4x4x16xf32>
    %179 = arith.mulf %178, %176 : vector<4x4x16xf32>
    %180 = arith.addf %179, %154 : vector<4x4x16xf32>
    %cst_42 = arith.constant 0.000000e+00 : f32
    %181 = vector.broadcast %cst_42 : f32 to vector<4x4x16xf32>
    %182 = arith.cmpf ogt, %180, %181 : vector<4x4x16xf32>
    %cst_43 = arith.constant 2.000000e-01 : f32
    %183 = vector.broadcast %cst_43 : f32 to vector<4x4x16xf32>
    %184 = arith.mulf %183, %180 : vector<4x4x16xf32>
    %185 = arith.select %182, %180, %184 : vector<4x4x16xi1>, vector<4x4x16xf32>
    %c0_44 = arith.constant 0 : index
    %c0_45 = arith.constant 0 : index
    %c0_46 = arith.constant 0 : index
    %c0_47 = arith.constant 0 : index
    %186 = vector.load %arg8[%c0_44, %c0_45, %c0_46, %c0_47] : memref<5x2x144x16xf32, #tpu.memory_space<vmem>>, vector<1x1x144x16xf32>
    %187 = vector.shape_cast %186 : vector<1x1x144x16xf32> to vector<144x16xf32>
    %cst_48 = arith.constant 0.000000e+00 : f32
    %188 = vector.broadcast %cst_48 : f32 to vector<4x1x16xf32>
    %189 = tpu.concatenate %188, %185, %188 in 1 : vector<4x1x16xf32>, vector<4x4x16xf32>, vector<4x1x16xf32> -> vector<4x6x16xf32>
    %cst_49 = arith.constant 0.000000e+00 : f32
    %190 = vector.broadcast %cst_49 : f32 to vector<1x6x16xf32>
    %191 = tpu.concatenate %190, %189, %190 in 0 : vector<1x6x16xf32>, vector<4x6x16xf32>, vector<1x6x16xf32> -> vector<6x6x16xf32>
    %192 = vector.extract_strided_slice %191 {offsets = [0, 0, 0], sizes = [4, 4, 16], strides = [1, 1, 1]} : vector<6x6x16xf32> to vector<4x4x16xf32>
    %193 = vector.shape_cast %192 : vector<4x4x16xf32> to vector<16x16xf32>
    %194 = vector.extract_strided_slice %191 {offsets = [0, 1, 0], sizes = [4, 4, 16], strides = [1, 1, 1]} : vector<6x6x16xf32> to vector<4x4x16xf32>
    %195 = vector.shape_cast %194 : vector<4x4x16xf32> to vector<16x16xf32>
    %196 = vector.extract_strided_slice %191 {offsets = [0, 2, 0], sizes = [4, 4, 16], strides = [1, 1, 1]} : vector<6x6x16xf32> to vector<4x4x16xf32>
    %197 = vector.shape_cast %196 : vector<4x4x16xf32> to vector<16x16xf32>
    %198 = vector.extract_strided_slice %191 {offsets = [1, 0, 0], sizes = [4, 4, 16], strides = [1, 1, 1]} : vector<6x6x16xf32> to vector<4x4x16xf32>
    %199 = vector.shape_cast %198 : vector<4x4x16xf32> to vector<16x16xf32>
    %200 = vector.extract_strided_slice %191 {offsets = [1, 1, 0], sizes = [4, 4, 16], strides = [1, 1, 1]} : vector<6x6x16xf32> to vector<4x4x16xf32>
    %201 = vector.shape_cast %200 : vector<4x4x16xf32> to vector<16x16xf32>
    %202 = vector.extract_strided_slice %191 {offsets = [1, 2, 0], sizes = [4, 4, 16], strides = [1, 1, 1]} : vector<6x6x16xf32> to vector<4x4x16xf32>
    %203 = vector.shape_cast %202 : vector<4x4x16xf32> to vector<16x16xf32>
    %204 = vector.extract_strided_slice %191 {offsets = [2, 0, 0], sizes = [4, 4, 16], strides = [1, 1, 1]} : vector<6x6x16xf32> to vector<4x4x16xf32>
    %205 = vector.shape_cast %204 : vector<4x4x16xf32> to vector<16x16xf32>
    %206 = vector.extract_strided_slice %191 {offsets = [2, 1, 0], sizes = [4, 4, 16], strides = [1, 1, 1]} : vector<6x6x16xf32> to vector<4x4x16xf32>
    %207 = vector.shape_cast %206 : vector<4x4x16xf32> to vector<16x16xf32>
    %208 = vector.extract_strided_slice %191 {offsets = [2, 2, 0], sizes = [4, 4, 16], strides = [1, 1, 1]} : vector<6x6x16xf32> to vector<4x4x16xf32>
    %209 = vector.shape_cast %208 : vector<4x4x16xf32> to vector<16x16xf32>
    %210 = tpu.concatenate %193, %195, %197, %199, %201, %203, %205, %207, %209 in 1 : vector<16x16xf32>, vector<16x16xf32>, vector<16x16xf32>, vector<16x16xf32>, vector<16x16xf32>, vector<16x16xf32>, vector<16x16xf32>, vector<16x16xf32>, vector<16x16xf32> -> vector<16x144xf32>
    %cst_50 = arith.constant dense<0.000000e+00> : vector<16x16xf32>
    %211 = tpu.matmul %210, %187, %cst_50 {dimension_numbers = #tpu.dot_dimension_numbers<[1], [0], [0], [1], [0, 0, 1, 1], [], []>} : vector<16x144xf32>, vector<144x16xf32>, vector<16x16xf32> -> vector<16x16xf32>
    %212 = vector.shape_cast %211 : vector<16x16xf32> to vector<4x4x16xf32>
    %cst_51 = arith.constant dense<0.000000e+00> : vector<16xf32>
    %213 = vector.multi_reduction <add>, %212, %cst_51 [0, 1] : vector<4x4x16xf32> to vector<16xf32>
    %214 = vector.shape_cast %213 : vector<16xf32> to vector<1x1x16xf32>
    %215 = arith.mulf %212, %212 : vector<4x4x16xf32>
    %cst_52 = arith.constant dense<0.000000e+00> : vector<16xf32>
    %216 = vector.multi_reduction <add>, %215, %cst_52 [0, 1] : vector<4x4x16xf32> to vector<16xf32>
    %217 = vector.shape_cast %216 : vector<16xf32> to vector<1x1x16xf32>
    %cst_53 = arith.constant 6.250000e-02 : f32
    %218 = vector.broadcast %cst_53 : f32 to vector<1x1x16xf32>
    %219 = arith.mulf %214, %218 : vector<1x1x16xf32>
    %cst_54 = arith.constant 6.250000e-02 : f32
    %220 = vector.broadcast %cst_54 : f32 to vector<1x1x16xf32>
    %221 = arith.mulf %217, %220 : vector<1x1x16xf32>
    %222 = arith.mulf %219, %219 : vector<1x1x16xf32>
    %223 = arith.subf %221, %222 : vector<1x1x16xf32>
    %224 = vector.broadcast %219 : vector<1x1x16xf32> to vector<4x4x16xf32>
    %225 = arith.subf %212, %224 : vector<4x4x16xf32>
    %cst_55 = arith.constant 9.99999974E-6 : f32
    %226 = vector.broadcast %cst_55 : f32 to vector<1x1x16xf32>
    %227 = arith.addf %223, %226 : vector<1x1x16xf32>
    %228 = math.rsqrt %227 : vector<1x1x16xf32>
    %229 = vector.broadcast %228 : vector<1x1x16xf32> to vector<4x4x16xf32>
    %230 = arith.mulf %225, %229 : vector<4x4x16xf32>
    %cst_56 = arith.constant 1.000000e+00 : f32
    %231 = vector.broadcast %cst_56 : f32 to vector<4x4x16xf32>
    %232 = arith.addf %231, %156 : vector<4x4x16xf32>
    %233 = arith.mulf %232, %230 : vector<4x4x16xf32>
    %234 = arith.addf %233, %158 : vector<4x4x16xf32>
    %cst_57 = arith.constant 0.000000e+00 : f32
    %235 = vector.broadcast %cst_57 : f32 to vector<4x4x16xf32>
    %236 = arith.cmpf ogt, %234, %235 : vector<4x4x16xf32>
    %cst_58 = arith.constant 2.000000e-01 : f32
    %237 = vector.broadcast %cst_58 : f32 to vector<4x4x16xf32>
    %238 = arith.mulf %237, %234 : vector<4x4x16xf32>
    %239 = arith.select %236, %234, %238 : vector<4x4x16xi1>, vector<4x4x16xf32>
    %c0_59 = arith.constant 0 : index
    %c1 = arith.constant 1 : index
    %c0_60 = arith.constant 0 : index
    %c0_61 = arith.constant 0 : index
    %240 = vector.load %arg8[%c0_59, %c1, %c0_60, %c0_61] : memref<5x2x144x16xf32, #tpu.memory_space<vmem>>, vector<1x1x144x16xf32>
    %241 = vector.shape_cast %240 : vector<1x1x144x16xf32> to vector<144x16xf32>
    %cst_62 = arith.constant 0.000000e+00 : f32
    %242 = vector.broadcast %cst_62 : f32 to vector<4x1x16xf32>
    %243 = tpu.concatenate %242, %239, %242 in 1 : vector<4x1x16xf32>, vector<4x4x16xf32>, vector<4x1x16xf32> -> vector<4x6x16xf32>
    %cst_63 = arith.constant 0.000000e+00 : f32
    %244 = vector.broadcast %cst_63 : f32 to vector<1x6x16xf32>
    %245 = tpu.concatenate %244, %243, %244 in 0 : vector<1x6x16xf32>, vector<4x6x16xf32>, vector<1x6x16xf32> -> vector<6x6x16xf32>
    %246 = vector.extract_strided_slice %245 {offsets = [0, 0, 0], sizes = [4, 4, 16], strides = [1, 1, 1]} : vector<6x6x16xf32> to vector<4x4x16xf32>
    %247 = vector.shape_cast %246 : vector<4x4x16xf32> to vector<16x16xf32>
    %248 = vector.extract_strided_slice %245 {offsets = [0, 1, 0], sizes = [4, 4, 16], strides = [1, 1, 1]} : vector<6x6x16xf32> to vector<4x4x16xf32>
    %249 = vector.shape_cast %248 : vector<4x4x16xf32> to vector<16x16xf32>
    %250 = vector.extract_strided_slice %245 {offsets = [0, 2, 0], sizes = [4, 4, 16], strides = [1, 1, 1]} : vector<6x6x16xf32> to vector<4x4x16xf32>
    %251 = vector.shape_cast %250 : vector<4x4x16xf32> to vector<16x16xf32>
    %252 = vector.extract_strided_slice %245 {offsets = [1, 0, 0], sizes = [4, 4, 16], strides = [1, 1, 1]} : vector<6x6x16xf32> to vector<4x4x16xf32>
    %253 = vector.shape_cast %252 : vector<4x4x16xf32> to vector<16x16xf32>
    %254 = vector.extract_strided_slice %245 {offsets = [1, 1, 0], sizes = [4, 4, 16], strides = [1, 1, 1]} : vector<6x6x16xf32> to vector<4x4x16xf32>
    %255 = vector.shape_cast %254 : vector<4x4x16xf32> to vector<16x16xf32>
    %256 = vector.extract_strided_slice %245 {offsets = [1, 2, 0], sizes = [4, 4, 16], strides = [1, 1, 1]} : vector<6x6x16xf32> to vector<4x4x16xf32>
    %257 = vector.shape_cast %256 : vector<4x4x16xf32> to vector<16x16xf32>
    %258 = vector.extract_strided_slice %245 {offsets = [2, 0, 0], sizes = [4, 4, 16], strides = [1, 1, 1]} : vector<6x6x16xf32> to vector<4x4x16xf32>
    %259 = vector.shape_cast %258 : vector<4x4x16xf32> to vector<16x16xf32>
    %260 = vector.extract_strided_slice %245 {offsets = [2, 1, 0], sizes = [4, 4, 16], strides = [1, 1, 1]} : vector<6x6x16xf32> to vector<4x4x16xf32>
    %261 = vector.shape_cast %260 : vector<4x4x16xf32> to vector<16x16xf32>
    %262 = vector.extract_strided_slice %245 {offsets = [2, 2, 0], sizes = [4, 4, 16], strides = [1, 1, 1]} : vector<6x6x16xf32> to vector<4x4x16xf32>
    %263 = vector.shape_cast %262 : vector<4x4x16xf32> to vector<16x16xf32>
    %264 = tpu.concatenate %247, %249, %251, %253, %255, %257, %259, %261, %263 in 1 : vector<16x16xf32>, vector<16x16xf32>, vector<16x16xf32>, vector<16x16xf32>, vector<16x16xf32>, vector<16x16xf32>, vector<16x16xf32>, vector<16x16xf32>, vector<16x16xf32> -> vector<16x144xf32>
    %cst_64 = arith.constant dense<0.000000e+00> : vector<16x16xf32>
    %265 = tpu.matmul %264, %241, %cst_64 {dimension_numbers = #tpu.dot_dimension_numbers<[1], [0], [0], [1], [0, 0, 1, 1], [], []>} : vector<16x144xf32>, vector<144x16xf32>, vector<16x16xf32> -> vector<16x16xf32>
    %266 = vector.shape_cast %265 : vector<16x16xf32> to vector<4x4x16xf32>
    %267 = arith.addf %266, %92 : vector<4x4x16xf32>
    %cst_65 = arith.constant 0.000000e+00 : f32
    %268 = vector.broadcast %cst_65 : f32 to vector<4x4x16xf32>
    %269 = arith.cmpf ogt, %267, %268 : vector<4x4x16xf32>
    %cst_66 = arith.constant 2.000000e-01 : f32
    %270 = vector.broadcast %cst_66 : f32 to vector<4x4x16xf32>
    %271 = arith.mulf %270, %267 : vector<4x4x16xf32>
    %272 = arith.select %269, %267, %271 : vector<4x4x16xi1>, vector<4x4x16xf32>
    %273 = vector.extract_strided_slice %150 {offsets = [0, 64], sizes = [16, 16], strides = [1, 1]} : vector<16x320xf32> to vector<16x16xf32>
    %274 = vector.shape_cast %273 : vector<16x16xf32> to vector<4x4x16xf32>
    %275 = vector.extract_strided_slice %150 {offsets = [0, 80], sizes = [16, 16], strides = [1, 1]} : vector<16x320xf32> to vector<16x16xf32>
    %276 = vector.shape_cast %275 : vector<16x16xf32> to vector<4x4x16xf32>
    %277 = vector.extract_strided_slice %150 {offsets = [0, 96], sizes = [16, 16], strides = [1, 1]} : vector<16x320xf32> to vector<16x16xf32>
    %278 = vector.shape_cast %277 : vector<16x16xf32> to vector<4x4x16xf32>
    %279 = vector.extract_strided_slice %150 {offsets = [0, 112], sizes = [16, 16], strides = [1, 1]} : vector<16x320xf32> to vector<16x16xf32>
    %280 = vector.shape_cast %279 : vector<16x16xf32> to vector<4x4x16xf32>
    %cst_67 = arith.constant dense<0.000000e+00> : vector<16xf32>
    %281 = vector.multi_reduction <add>, %272, %cst_67 [0, 1] : vector<4x4x16xf32> to vector<16xf32>
    %282 = vector.shape_cast %281 : vector<16xf32> to vector<1x1x16xf32>
    %283 = arith.mulf %272, %272 : vector<4x4x16xf32>
    %cst_68 = arith.constant dense<0.000000e+00> : vector<16xf32>
    %284 = vector.multi_reduction <add>, %283, %cst_68 [0, 1] : vector<4x4x16xf32> to vector<16xf32>
    %285 = vector.shape_cast %284 : vector<16xf32> to vector<1x1x16xf32>
    %cst_69 = arith.constant 6.250000e-02 : f32
    %286 = vector.broadcast %cst_69 : f32 to vector<1x1x16xf32>
    %287 = arith.mulf %282, %286 : vector<1x1x16xf32>
    %cst_70 = arith.constant 6.250000e-02 : f32
    %288 = vector.broadcast %cst_70 : f32 to vector<1x1x16xf32>
    %289 = arith.mulf %285, %288 : vector<1x1x16xf32>
    %290 = arith.mulf %287, %287 : vector<1x1x16xf32>
    %291 = arith.subf %289, %290 : vector<1x1x16xf32>
    %292 = vector.broadcast %287 : vector<1x1x16xf32> to vector<4x4x16xf32>
    %293 = arith.subf %272, %292 : vector<4x4x16xf32>
    %cst_71 = arith.constant 9.99999974E-6 : f32
    %294 = vector.broadcast %cst_71 : f32 to vector<1x1x16xf32>
    %295 = arith.addf %291, %294 : vector<1x1x16xf32>
    %296 = math.rsqrt %295 : vector<1x1x16xf32>
    %297 = vector.broadcast %296 : vector<1x1x16xf32> to vector<4x4x16xf32>
    %298 = arith.mulf %293, %297 : vector<4x4x16xf32>
    %cst_72 = arith.constant 1.000000e+00 : f32
    %299 = vector.broadcast %cst_72 : f32 to vector<4x4x16xf32>
    %300 = arith.addf %299, %274 : vector<4x4x16xf32>
    %301 = arith.mulf %300, %298 : vector<4x4x16xf32>
    %302 = arith.addf %301, %276 : vector<4x4x16xf32>
    %cst_73 = arith.constant 0.000000e+00 : f32
    %303 = vector.broadcast %cst_73 : f32 to vector<4x4x16xf32>
    %304 = arith.cmpf ogt, %302, %303 : vector<4x4x16xf32>
    %cst_74 = arith.constant 2.000000e-01 : f32
    %305 = vector.broadcast %cst_74 : f32 to vector<4x4x16xf32>
    %306 = arith.mulf %305, %302 : vector<4x4x16xf32>
    %307 = arith.select %304, %302, %306 : vector<4x4x16xi1>, vector<4x4x16xf32>
    %c1_75 = arith.constant 1 : index
    %c0_76 = arith.constant 0 : index
    %c0_77 = arith.constant 0 : index
    %c0_78 = arith.constant 0 : index
    %308 = vector.load %arg8[%c1_75, %c0_76, %c0_77, %c0_78] : memref<5x2x144x16xf32, #tpu.memory_space<vmem>>, vector<1x1x144x16xf32>
    %309 = vector.shape_cast %308 : vector<1x1x144x16xf32> to vector<144x16xf32>
    %cst_79 = arith.constant 0.000000e+00 : f32
    %310 = vector.broadcast %cst_79 : f32 to vector<4x1x16xf32>
    %311 = tpu.concatenate %310, %307, %310 in 1 : vector<4x1x16xf32>, vector<4x4x16xf32>, vector<4x1x16xf32> -> vector<4x6x16xf32>
    %cst_80 = arith.constant 0.000000e+00 : f32
    %312 = vector.broadcast %cst_80 : f32 to vector<1x6x16xf32>
    %313 = tpu.concatenate %312, %311, %312 in 0 : vector<1x6x16xf32>, vector<4x6x16xf32>, vector<1x6x16xf32> -> vector<6x6x16xf32>
    %314 = vector.extract_strided_slice %313 {offsets = [0, 0, 0], sizes = [4, 4, 16], strides = [1, 1, 1]} : vector<6x6x16xf32> to vector<4x4x16xf32>
    %315 = vector.shape_cast %314 : vector<4x4x16xf32> to vector<16x16xf32>
    %316 = vector.extract_strided_slice %313 {offsets = [0, 1, 0], sizes = [4, 4, 16], strides = [1, 1, 1]} : vector<6x6x16xf32> to vector<4x4x16xf32>
    %317 = vector.shape_cast %316 : vector<4x4x16xf32> to vector<16x16xf32>
    %318 = vector.extract_strided_slice %313 {offsets = [0, 2, 0], sizes = [4, 4, 16], strides = [1, 1, 1]} : vector<6x6x16xf32> to vector<4x4x16xf32>
    %319 = vector.shape_cast %318 : vector<4x4x16xf32> to vector<16x16xf32>
    %320 = vector.extract_strided_slice %313 {offsets = [1, 0, 0], sizes = [4, 4, 16], strides = [1, 1, 1]} : vector<6x6x16xf32> to vector<4x4x16xf32>
    %321 = vector.shape_cast %320 : vector<4x4x16xf32> to vector<16x16xf32>
    %322 = vector.extract_strided_slice %313 {offsets = [1, 1, 0], sizes = [4, 4, 16], strides = [1, 1, 1]} : vector<6x6x16xf32> to vector<4x4x16xf32>
    %323 = vector.shape_cast %322 : vector<4x4x16xf32> to vector<16x16xf32>
    %324 = vector.extract_strided_slice %313 {offsets = [1, 2, 0], sizes = [4, 4, 16], strides = [1, 1, 1]} : vector<6x6x16xf32> to vector<4x4x16xf32>
    %325 = vector.shape_cast %324 : vector<4x4x16xf32> to vector<16x16xf32>
    %326 = vector.extract_strided_slice %313 {offsets = [2, 0, 0], sizes = [4, 4, 16], strides = [1, 1, 1]} : vector<6x6x16xf32> to vector<4x4x16xf32>
    %327 = vector.shape_cast %326 : vector<4x4x16xf32> to vector<16x16xf32>
    %328 = vector.extract_strided_slice %313 {offsets = [2, 1, 0], sizes = [4, 4, 16], strides = [1, 1, 1]} : vector<6x6x16xf32> to vector<4x4x16xf32>
    %329 = vector.shape_cast %328 : vector<4x4x16xf32> to vector<16x16xf32>
    %330 = vector.extract_strided_slice %313 {offsets = [2, 2, 0], sizes = [4, 4, 16], strides = [1, 1, 1]} : vector<6x6x16xf32> to vector<4x4x16xf32>
    %331 = vector.shape_cast %330 : vector<4x4x16xf32> to vector<16x16xf32>
    %332 = tpu.concatenate %315, %317, %319, %321, %323, %325, %327, %329, %331 in 1 : vector<16x16xf32>, vector<16x16xf32>, vector<16x16xf32>, vector<16x16xf32>, vector<16x16xf32>, vector<16x16xf32>, vector<16x16xf32>, vector<16x16xf32>, vector<16x16xf32> -> vector<16x144xf32>
    %cst_81 = arith.constant dense<0.000000e+00> : vector<16x16xf32>
    %333 = tpu.matmul %332, %309, %cst_81 {dimension_numbers = #tpu.dot_dimension_numbers<[1], [0], [0], [1], [0, 0, 1, 1], [], []>} : vector<16x144xf32>, vector<144x16xf32>, vector<16x16xf32> -> vector<16x16xf32>
    %334 = vector.shape_cast %333 : vector<16x16xf32> to vector<4x4x16xf32>
    %cst_82 = arith.constant dense<0.000000e+00> : vector<16xf32>
    %335 = vector.multi_reduction <add>, %334, %cst_82 [0, 1] : vector<4x4x16xf32> to vector<16xf32>
    %336 = vector.shape_cast %335 : vector<16xf32> to vector<1x1x16xf32>
    %337 = arith.mulf %334, %334 : vector<4x4x16xf32>
    %cst_83 = arith.constant dense<0.000000e+00> : vector<16xf32>
    %338 = vector.multi_reduction <add>, %337, %cst_83 [0, 1] : vector<4x4x16xf32> to vector<16xf32>
    %339 = vector.shape_cast %338 : vector<16xf32> to vector<1x1x16xf32>
    %cst_84 = arith.constant 6.250000e-02 : f32
    %340 = vector.broadcast %cst_84 : f32 to vector<1x1x16xf32>
    %341 = arith.mulf %336, %340 : vector<1x1x16xf32>
    %cst_85 = arith.constant 6.250000e-02 : f32
    %342 = vector.broadcast %cst_85 : f32 to vector<1x1x16xf32>
    %343 = arith.mulf %339, %342 : vector<1x1x16xf32>
    %344 = arith.mulf %341, %341 : vector<1x1x16xf32>
    %345 = arith.subf %343, %344 : vector<1x1x16xf32>
    %346 = vector.broadcast %341 : vector<1x1x16xf32> to vector<4x4x16xf32>
    %347 = arith.subf %334, %346 : vector<4x4x16xf32>
    %cst_86 = arith.constant 9.99999974E-6 : f32
    %348 = vector.broadcast %cst_86 : f32 to vector<1x1x16xf32>
    %349 = arith.addf %345, %348 : vector<1x1x16xf32>
    %350 = math.rsqrt %349 : vector<1x1x16xf32>
    %351 = vector.broadcast %350 : vector<1x1x16xf32> to vector<4x4x16xf32>
    %352 = arith.mulf %347, %351 : vector<4x4x16xf32>
    %cst_87 = arith.constant 1.000000e+00 : f32
    %353 = vector.broadcast %cst_87 : f32 to vector<4x4x16xf32>
    %354 = arith.addf %353, %278 : vector<4x4x16xf32>
    %355 = arith.mulf %354, %352 : vector<4x4x16xf32>
    %356 = arith.addf %355, %280 : vector<4x4x16xf32>
    %cst_88 = arith.constant 0.000000e+00 : f32
    %357 = vector.broadcast %cst_88 : f32 to vector<4x4x16xf32>
    %358 = arith.cmpf ogt, %356, %357 : vector<4x4x16xf32>
    %cst_89 = arith.constant 2.000000e-01 : f32
    %359 = vector.broadcast %cst_89 : f32 to vector<4x4x16xf32>
    %360 = arith.mulf %359, %356 : vector<4x4x16xf32>
    %361 = arith.select %358, %356, %360 : vector<4x4x16xi1>, vector<4x4x16xf32>
    %c1_90 = arith.constant 1 : index
    %c1_91 = arith.constant 1 : index
    %c0_92 = arith.constant 0 : index
    %c0_93 = arith.constant 0 : index
    %362 = vector.load %arg8[%c1_90, %c1_91, %c0_92, %c0_93] : memref<5x2x144x16xf32, #tpu.memory_space<vmem>>, vector<1x1x144x16xf32>
    %363 = vector.shape_cast %362 : vector<1x1x144x16xf32> to vector<144x16xf32>
    %cst_94 = arith.constant 0.000000e+00 : f32
    %364 = vector.broadcast %cst_94 : f32 to vector<4x1x16xf32>
    %365 = tpu.concatenate %364, %361, %364 in 1 : vector<4x1x16xf32>, vector<4x4x16xf32>, vector<4x1x16xf32> -> vector<4x6x16xf32>
    %cst_95 = arith.constant 0.000000e+00 : f32
    %366 = vector.broadcast %cst_95 : f32 to vector<1x6x16xf32>
    %367 = tpu.concatenate %366, %365, %366 in 0 : vector<1x6x16xf32>, vector<4x6x16xf32>, vector<1x6x16xf32> -> vector<6x6x16xf32>
    %368 = vector.extract_strided_slice %367 {offsets = [0, 0, 0], sizes = [4, 4, 16], strides = [1, 1, 1]} : vector<6x6x16xf32> to vector<4x4x16xf32>
    %369 = vector.shape_cast %368 : vector<4x4x16xf32> to vector<16x16xf32>
    %370 = vector.extract_strided_slice %367 {offsets = [0, 1, 0], sizes = [4, 4, 16], strides = [1, 1, 1]} : vector<6x6x16xf32> to vector<4x4x16xf32>
    %371 = vector.shape_cast %370 : vector<4x4x16xf32> to vector<16x16xf32>
    %372 = vector.extract_strided_slice %367 {offsets = [0, 2, 0], sizes = [4, 4, 16], strides = [1, 1, 1]} : vector<6x6x16xf32> to vector<4x4x16xf32>
    %373 = vector.shape_cast %372 : vector<4x4x16xf32> to vector<16x16xf32>
    %374 = vector.extract_strided_slice %367 {offsets = [1, 0, 0], sizes = [4, 4, 16], strides = [1, 1, 1]} : vector<6x6x16xf32> to vector<4x4x16xf32>
    %375 = vector.shape_cast %374 : vector<4x4x16xf32> to vector<16x16xf32>
    %376 = vector.extract_strided_slice %367 {offsets = [1, 1, 0], sizes = [4, 4, 16], strides = [1, 1, 1]} : vector<6x6x16xf32> to vector<4x4x16xf32>
    %377 = vector.shape_cast %376 : vector<4x4x16xf32> to vector<16x16xf32>
    %378 = vector.extract_strided_slice %367 {offsets = [1, 2, 0], sizes = [4, 4, 16], strides = [1, 1, 1]} : vector<6x6x16xf32> to vector<4x4x16xf32>
    %379 = vector.shape_cast %378 : vector<4x4x16xf32> to vector<16x16xf32>
    %380 = vector.extract_strided_slice %367 {offsets = [2, 0, 0], sizes = [4, 4, 16], strides = [1, 1, 1]} : vector<6x6x16xf32> to vector<4x4x16xf32>
    %381 = vector.shape_cast %380 : vector<4x4x16xf32> to vector<16x16xf32>
    %382 = vector.extract_strided_slice %367 {offsets = [2, 1, 0], sizes = [4, 4, 16], strides = [1, 1, 1]} : vector<6x6x16xf32> to vector<4x4x16xf32>
    %383 = vector.shape_cast %382 : vector<4x4x16xf32> to vector<16x16xf32>
    %384 = vector.extract_strided_slice %367 {offsets = [2, 2, 0], sizes = [4, 4, 16], strides = [1, 1, 1]} : vector<6x6x16xf32> to vector<4x4x16xf32>
    %385 = vector.shape_cast %384 : vector<4x4x16xf32> to vector<16x16xf32>
    %386 = tpu.concatenate %369, %371, %373, %375, %377, %379, %381, %383, %385 in 1 : vector<16x16xf32>, vector<16x16xf32>, vector<16x16xf32>, vector<16x16xf32>, vector<16x16xf32>, vector<16x16xf32>, vector<16x16xf32>, vector<16x16xf32>, vector<16x16xf32> -> vector<16x144xf32>
    %cst_96 = arith.constant dense<0.000000e+00> : vector<16x16xf32>
    %387 = tpu.matmul %386, %363, %cst_96 {dimension_numbers = #tpu.dot_dimension_numbers<[1], [0], [0], [1], [0, 0, 1, 1], [], []>} : vector<16x144xf32>, vector<144x16xf32>, vector<16x16xf32> -> vector<16x16xf32>
    %388 = vector.shape_cast %387 : vector<16x16xf32> to vector<4x4x16xf32>
    %389 = arith.addf %388, %272 : vector<4x4x16xf32>
    %cst_97 = arith.constant 0.000000e+00 : f32
    %390 = vector.broadcast %cst_97 : f32 to vector<4x4x16xf32>
    %391 = arith.cmpf ogt, %389, %390 : vector<4x4x16xf32>
    %cst_98 = arith.constant 2.000000e-01 : f32
    %392 = vector.broadcast %cst_98 : f32 to vector<4x4x16xf32>
    %393 = arith.mulf %392, %389 : vector<4x4x16xf32>
    %394 = arith.select %391, %389, %393 : vector<4x4x16xi1>, vector<4x4x16xf32>
    %395 = vector.extract_strided_slice %150 {offsets = [0, 128], sizes = [16, 16], strides = [1, 1]} : vector<16x320xf32> to vector<16x16xf32>
    %396 = vector.shape_cast %395 : vector<16x16xf32> to vector<4x4x16xf32>
    %397 = vector.extract_strided_slice %150 {offsets = [0, 144], sizes = [16, 16], strides = [1, 1]} : vector<16x320xf32> to vector<16x16xf32>
    %398 = vector.shape_cast %397 : vector<16x16xf32> to vector<4x4x16xf32>
    %399 = vector.extract_strided_slice %150 {offsets = [0, 160], sizes = [16, 16], strides = [1, 1]} : vector<16x320xf32> to vector<16x16xf32>
    %400 = vector.shape_cast %399 : vector<16x16xf32> to vector<4x4x16xf32>
    %401 = vector.extract_strided_slice %150 {offsets = [0, 176], sizes = [16, 16], strides = [1, 1]} : vector<16x320xf32> to vector<16x16xf32>
    %402 = vector.shape_cast %401 : vector<16x16xf32> to vector<4x4x16xf32>
    %cst_99 = arith.constant dense<0.000000e+00> : vector<16xf32>
    %403 = vector.multi_reduction <add>, %394, %cst_99 [0, 1] : vector<4x4x16xf32> to vector<16xf32>
    %404 = vector.shape_cast %403 : vector<16xf32> to vector<1x1x16xf32>
    %405 = arith.mulf %394, %394 : vector<4x4x16xf32>
    %cst_100 = arith.constant dense<0.000000e+00> : vector<16xf32>
    %406 = vector.multi_reduction <add>, %405, %cst_100 [0, 1] : vector<4x4x16xf32> to vector<16xf32>
    %407 = vector.shape_cast %406 : vector<16xf32> to vector<1x1x16xf32>
    %cst_101 = arith.constant 6.250000e-02 : f32
    %408 = vector.broadcast %cst_101 : f32 to vector<1x1x16xf32>
    %409 = arith.mulf %404, %408 : vector<1x1x16xf32>
    %cst_102 = arith.constant 6.250000e-02 : f32
    %410 = vector.broadcast %cst_102 : f32 to vector<1x1x16xf32>
    %411 = arith.mulf %407, %410 : vector<1x1x16xf32>
    %412 = arith.mulf %409, %409 : vector<1x1x16xf32>
    %413 = arith.subf %411, %412 : vector<1x1x16xf32>
    %414 = vector.broadcast %409 : vector<1x1x16xf32> to vector<4x4x16xf32>
    %415 = arith.subf %394, %414 : vector<4x4x16xf32>
    %cst_103 = arith.constant 9.99999974E-6 : f32
    %416 = vector.broadcast %cst_103 : f32 to vector<1x1x16xf32>
    %417 = arith.addf %413, %416 : vector<1x1x16xf32>
    %418 = math.rsqrt %417 : vector<1x1x16xf32>
    %419 = vector.broadcast %418 : vector<1x1x16xf32> to vector<4x4x16xf32>
    %420 = arith.mulf %415, %419 : vector<4x4x16xf32>
    %cst_104 = arith.constant 1.000000e+00 : f32
    %421 = vector.broadcast %cst_104 : f32 to vector<4x4x16xf32>
    %422 = arith.addf %421, %396 : vector<4x4x16xf32>
    %423 = arith.mulf %422, %420 : vector<4x4x16xf32>
    %424 = arith.addf %423, %398 : vector<4x4x16xf32>
    %cst_105 = arith.constant 0.000000e+00 : f32
    %425 = vector.broadcast %cst_105 : f32 to vector<4x4x16xf32>
    %426 = arith.cmpf ogt, %424, %425 : vector<4x4x16xf32>
    %cst_106 = arith.constant 2.000000e-01 : f32
    %427 = vector.broadcast %cst_106 : f32 to vector<4x4x16xf32>
    %428 = arith.mulf %427, %424 : vector<4x4x16xf32>
    %429 = arith.select %426, %424, %428 : vector<4x4x16xi1>, vector<4x4x16xf32>
    %c2 = arith.constant 2 : index
    %c0_107 = arith.constant 0 : index
    %c0_108 = arith.constant 0 : index
    %c0_109 = arith.constant 0 : index
    %430 = vector.load %arg8[%c2, %c0_107, %c0_108, %c0_109] : memref<5x2x144x16xf32, #tpu.memory_space<vmem>>, vector<1x1x144x16xf32>
    %431 = vector.shape_cast %430 : vector<1x1x144x16xf32> to vector<144x16xf32>
    %cst_110 = arith.constant 0.000000e+00 : f32
    %432 = vector.broadcast %cst_110 : f32 to vector<4x1x16xf32>
    %433 = tpu.concatenate %432, %429, %432 in 1 : vector<4x1x16xf32>, vector<4x4x16xf32>, vector<4x1x16xf32> -> vector<4x6x16xf32>
    %cst_111 = arith.constant 0.000000e+00 : f32
    %434 = vector.broadcast %cst_111 : f32 to vector<1x6x16xf32>
    %435 = tpu.concatenate %434, %433, %434 in 0 : vector<1x6x16xf32>, vector<4x6x16xf32>, vector<1x6x16xf32> -> vector<6x6x16xf32>
    %436 = vector.extract_strided_slice %435 {offsets = [0, 0, 0], sizes = [4, 4, 16], strides = [1, 1, 1]} : vector<6x6x16xf32> to vector<4x4x16xf32>
    %437 = vector.shape_cast %436 : vector<4x4x16xf32> to vector<16x16xf32>
    %438 = vector.extract_strided_slice %435 {offsets = [0, 1, 0], sizes = [4, 4, 16], strides = [1, 1, 1]} : vector<6x6x16xf32> to vector<4x4x16xf32>
    %439 = vector.shape_cast %438 : vector<4x4x16xf32> to vector<16x16xf32>
    %440 = vector.extract_strided_slice %435 {offsets = [0, 2, 0], sizes = [4, 4, 16], strides = [1, 1, 1]} : vector<6x6x16xf32> to vector<4x4x16xf32>
    %441 = vector.shape_cast %440 : vector<4x4x16xf32> to vector<16x16xf32>
    %442 = vector.extract_strided_slice %435 {offsets = [1, 0, 0], sizes = [4, 4, 16], strides = [1, 1, 1]} : vector<6x6x16xf32> to vector<4x4x16xf32>
    %443 = vector.shape_cast %442 : vector<4x4x16xf32> to vector<16x16xf32>
    %444 = vector.extract_strided_slice %435 {offsets = [1, 1, 0], sizes = [4, 4, 16], strides = [1, 1, 1]} : vector<6x6x16xf32> to vector<4x4x16xf32>
    %445 = vector.shape_cast %444 : vector<4x4x16xf32> to vector<16x16xf32>
    %446 = vector.extract_strided_slice %435 {offsets = [1, 2, 0], sizes = [4, 4, 16], strides = [1, 1, 1]} : vector<6x6x16xf32> to vector<4x4x16xf32>
    %447 = vector.shape_cast %446 : vector<4x4x16xf32> to vector<16x16xf32>
    %448 = vector.extract_strided_slice %435 {offsets = [2, 0, 0], sizes = [4, 4, 16], strides = [1, 1, 1]} : vector<6x6x16xf32> to vector<4x4x16xf32>
    %449 = vector.shape_cast %448 : vector<4x4x16xf32> to vector<16x16xf32>
    %450 = vector.extract_strided_slice %435 {offsets = [2, 1, 0], sizes = [4, 4, 16], strides = [1, 1, 1]} : vector<6x6x16xf32> to vector<4x4x16xf32>
    %451 = vector.shape_cast %450 : vector<4x4x16xf32> to vector<16x16xf32>
    %452 = vector.extract_strided_slice %435 {offsets = [2, 2, 0], sizes = [4, 4, 16], strides = [1, 1, 1]} : vector<6x6x16xf32> to vector<4x4x16xf32>
    %453 = vector.shape_cast %452 : vector<4x4x16xf32> to vector<16x16xf32>
    %454 = tpu.concatenate %437, %439, %441, %443, %445, %447, %449, %451, %453 in 1 : vector<16x16xf32>, vector<16x16xf32>, vector<16x16xf32>, vector<16x16xf32>, vector<16x16xf32>, vector<16x16xf32>, vector<16x16xf32>, vector<16x16xf32>, vector<16x16xf32> -> vector<16x144xf32>
    %cst_112 = arith.constant dense<0.000000e+00> : vector<16x16xf32>
    %455 = tpu.matmul %454, %431, %cst_112 {dimension_numbers = #tpu.dot_dimension_numbers<[1], [0], [0], [1], [0, 0, 1, 1], [], []>} : vector<16x144xf32>, vector<144x16xf32>, vector<16x16xf32> -> vector<16x16xf32>
    %456 = vector.shape_cast %455 : vector<16x16xf32> to vector<4x4x16xf32>
    %cst_113 = arith.constant dense<0.000000e+00> : vector<16xf32>
    %457 = vector.multi_reduction <add>, %456, %cst_113 [0, 1] : vector<4x4x16xf32> to vector<16xf32>
    %458 = vector.shape_cast %457 : vector<16xf32> to vector<1x1x16xf32>
    %459 = arith.mulf %456, %456 : vector<4x4x16xf32>
    %cst_114 = arith.constant dense<0.000000e+00> : vector<16xf32>
    %460 = vector.multi_reduction <add>, %459, %cst_114 [0, 1] : vector<4x4x16xf32> to vector<16xf32>
    %461 = vector.shape_cast %460 : vector<16xf32> to vector<1x1x16xf32>
    %cst_115 = arith.constant 6.250000e-02 : f32
    %462 = vector.broadcast %cst_115 : f32 to vector<1x1x16xf32>
    %463 = arith.mulf %458, %462 : vector<1x1x16xf32>
    %cst_116 = arith.constant 6.250000e-02 : f32
    %464 = vector.broadcast %cst_116 : f32 to vector<1x1x16xf32>
    %465 = arith.mulf %461, %464 : vector<1x1x16xf32>
    %466 = arith.mulf %463, %463 : vector<1x1x16xf32>
    %467 = arith.subf %465, %466 : vector<1x1x16xf32>
    %468 = vector.broadcast %463 : vector<1x1x16xf32> to vector<4x4x16xf32>
    %469 = arith.subf %456, %468 : vector<4x4x16xf32>
    %cst_117 = arith.constant 9.99999974E-6 : f32
    %470 = vector.broadcast %cst_117 : f32 to vector<1x1x16xf32>
    %471 = arith.addf %467, %470 : vector<1x1x16xf32>
    %472 = math.rsqrt %471 : vector<1x1x16xf32>
    %473 = vector.broadcast %472 : vector<1x1x16xf32> to vector<4x4x16xf32>
    %474 = arith.mulf %469, %473 : vector<4x4x16xf32>
    %cst_118 = arith.constant 1.000000e+00 : f32
    %475 = vector.broadcast %cst_118 : f32 to vector<4x4x16xf32>
    %476 = arith.addf %475, %400 : vector<4x4x16xf32>
    %477 = arith.mulf %476, %474 : vector<4x4x16xf32>
    %478 = arith.addf %477, %402 : vector<4x4x16xf32>
    %cst_119 = arith.constant 0.000000e+00 : f32
    %479 = vector.broadcast %cst_119 : f32 to vector<4x4x16xf32>
    %480 = arith.cmpf ogt, %478, %479 : vector<4x4x16xf32>
    %cst_120 = arith.constant 2.000000e-01 : f32
    %481 = vector.broadcast %cst_120 : f32 to vector<4x4x16xf32>
    %482 = arith.mulf %481, %478 : vector<4x4x16xf32>
    %483 = arith.select %480, %478, %482 : vector<4x4x16xi1>, vector<4x4x16xf32>
    %c2_121 = arith.constant 2 : index
    %c1_122 = arith.constant 1 : index
    %c0_123 = arith.constant 0 : index
    %c0_124 = arith.constant 0 : index
    %484 = vector.load %arg8[%c2_121, %c1_122, %c0_123, %c0_124] : memref<5x2x144x16xf32, #tpu.memory_space<vmem>>, vector<1x1x144x16xf32>
    %485 = vector.shape_cast %484 : vector<1x1x144x16xf32> to vector<144x16xf32>
    %cst_125 = arith.constant 0.000000e+00 : f32
    %486 = vector.broadcast %cst_125 : f32 to vector<4x1x16xf32>
    %487 = tpu.concatenate %486, %483, %486 in 1 : vector<4x1x16xf32>, vector<4x4x16xf32>, vector<4x1x16xf32> -> vector<4x6x16xf32>
    %cst_126 = arith.constant 0.000000e+00 : f32
    %488 = vector.broadcast %cst_126 : f32 to vector<1x6x16xf32>
    %489 = tpu.concatenate %488, %487, %488 in 0 : vector<1x6x16xf32>, vector<4x6x16xf32>, vector<1x6x16xf32> -> vector<6x6x16xf32>
    %490 = vector.extract_strided_slice %489 {offsets = [0, 0, 0], sizes = [4, 4, 16], strides = [1, 1, 1]} : vector<6x6x16xf32> to vector<4x4x16xf32>
    %491 = vector.shape_cast %490 : vector<4x4x16xf32> to vector<16x16xf32>
    %492 = vector.extract_strided_slice %489 {offsets = [0, 1, 0], sizes = [4, 4, 16], strides = [1, 1, 1]} : vector<6x6x16xf32> to vector<4x4x16xf32>
    %493 = vector.shape_cast %492 : vector<4x4x16xf32> to vector<16x16xf32>
    %494 = vector.extract_strided_slice %489 {offsets = [0, 2, 0], sizes = [4, 4, 16], strides = [1, 1, 1]} : vector<6x6x16xf32> to vector<4x4x16xf32>
    %495 = vector.shape_cast %494 : vector<4x4x16xf32> to vector<16x16xf32>
    %496 = vector.extract_strided_slice %489 {offsets = [1, 0, 0], sizes = [4, 4, 16], strides = [1, 1, 1]} : vector<6x6x16xf32> to vector<4x4x16xf32>
    %497 = vector.shape_cast %496 : vector<4x4x16xf32> to vector<16x16xf32>
    %498 = vector.extract_strided_slice %489 {offsets = [1, 1, 0], sizes = [4, 4, 16], strides = [1, 1, 1]} : vector<6x6x16xf32> to vector<4x4x16xf32>
    %499 = vector.shape_cast %498 : vector<4x4x16xf32> to vector<16x16xf32>
    %500 = vector.extract_strided_slice %489 {offsets = [1, 2, 0], sizes = [4, 4, 16], strides = [1, 1, 1]} : vector<6x6x16xf32> to vector<4x4x16xf32>
    %501 = vector.shape_cast %500 : vector<4x4x16xf32> to vector<16x16xf32>
    %502 = vector.extract_strided_slice %489 {offsets = [2, 0, 0], sizes = [4, 4, 16], strides = [1, 1, 1]} : vector<6x6x16xf32> to vector<4x4x16xf32>
    %503 = vector.shape_cast %502 : vector<4x4x16xf32> to vector<16x16xf32>
    %504 = vector.extract_strided_slice %489 {offsets = [2, 1, 0], sizes = [4, 4, 16], strides = [1, 1, 1]} : vector<6x6x16xf32> to vector<4x4x16xf32>
    %505 = vector.shape_cast %504 : vector<4x4x16xf32> to vector<16x16xf32>
    %506 = vector.extract_strided_slice %489 {offsets = [2, 2, 0], sizes = [4, 4, 16], strides = [1, 1, 1]} : vector<6x6x16xf32> to vector<4x4x16xf32>
    %507 = vector.shape_cast %506 : vector<4x4x16xf32> to vector<16x16xf32>
    %508 = tpu.concatenate %491, %493, %495, %497, %499, %501, %503, %505, %507 in 1 : vector<16x16xf32>, vector<16x16xf32>, vector<16x16xf32>, vector<16x16xf32>, vector<16x16xf32>, vector<16x16xf32>, vector<16x16xf32>, vector<16x16xf32>, vector<16x16xf32> -> vector<16x144xf32>
    %cst_127 = arith.constant dense<0.000000e+00> : vector<16x16xf32>
    %509 = tpu.matmul %508, %485, %cst_127 {dimension_numbers = #tpu.dot_dimension_numbers<[1], [0], [0], [1], [0, 0, 1, 1], [], []>} : vector<16x144xf32>, vector<144x16xf32>, vector<16x16xf32> -> vector<16x16xf32>
    %510 = vector.shape_cast %509 : vector<16x16xf32> to vector<4x4x16xf32>
    %511 = arith.addf %510, %394 : vector<4x4x16xf32>
    %cst_128 = arith.constant 0.000000e+00 : f32
    %512 = vector.broadcast %cst_128 : f32 to vector<4x4x16xf32>
    %513 = arith.cmpf ogt, %511, %512 : vector<4x4x16xf32>
    %cst_129 = arith.constant 2.000000e-01 : f32
    %514 = vector.broadcast %cst_129 : f32 to vector<4x4x16xf32>
    %515 = arith.mulf %514, %511 : vector<4x4x16xf32>
    %516 = arith.select %513, %511, %515 : vector<4x4x16xi1>, vector<4x4x16xf32>
    %517 = vector.extract_strided_slice %150 {offsets = [0, 192], sizes = [16, 16], strides = [1, 1]} : vector<16x320xf32> to vector<16x16xf32>
    %518 = vector.shape_cast %517 : vector<16x16xf32> to vector<4x4x16xf32>
    %519 = vector.extract_strided_slice %150 {offsets = [0, 208], sizes = [16, 16], strides = [1, 1]} : vector<16x320xf32> to vector<16x16xf32>
    %520 = vector.shape_cast %519 : vector<16x16xf32> to vector<4x4x16xf32>
    %521 = vector.extract_strided_slice %150 {offsets = [0, 224], sizes = [16, 16], strides = [1, 1]} : vector<16x320xf32> to vector<16x16xf32>
    %522 = vector.shape_cast %521 : vector<16x16xf32> to vector<4x4x16xf32>
    %523 = vector.extract_strided_slice %150 {offsets = [0, 240], sizes = [16, 16], strides = [1, 1]} : vector<16x320xf32> to vector<16x16xf32>
    %524 = vector.shape_cast %523 : vector<16x16xf32> to vector<4x4x16xf32>
    %cst_130 = arith.constant dense<0.000000e+00> : vector<16xf32>
    %525 = vector.multi_reduction <add>, %516, %cst_130 [0, 1] : vector<4x4x16xf32> to vector<16xf32>
    %526 = vector.shape_cast %525 : vector<16xf32> to vector<1x1x16xf32>
    %527 = arith.mulf %516, %516 : vector<4x4x16xf32>
    %cst_131 = arith.constant dense<0.000000e+00> : vector<16xf32>
    %528 = vector.multi_reduction <add>, %527, %cst_131 [0, 1] : vector<4x4x16xf32> to vector<16xf32>
    %529 = vector.shape_cast %528 : vector<16xf32> to vector<1x1x16xf32>
    %cst_132 = arith.constant 6.250000e-02 : f32
    %530 = vector.broadcast %cst_132 : f32 to vector<1x1x16xf32>
    %531 = arith.mulf %526, %530 : vector<1x1x16xf32>
    %cst_133 = arith.constant 6.250000e-02 : f32
    %532 = vector.broadcast %cst_133 : f32 to vector<1x1x16xf32>
    %533 = arith.mulf %529, %532 : vector<1x1x16xf32>
    %534 = arith.mulf %531, %531 : vector<1x1x16xf32>
    %535 = arith.subf %533, %534 : vector<1x1x16xf32>
    %536 = vector.broadcast %531 : vector<1x1x16xf32> to vector<4x4x16xf32>
    %537 = arith.subf %516, %536 : vector<4x4x16xf32>
    %cst_134 = arith.constant 9.99999974E-6 : f32
    %538 = vector.broadcast %cst_134 : f32 to vector<1x1x16xf32>
    %539 = arith.addf %535, %538 : vector<1x1x16xf32>
    %540 = math.rsqrt %539 : vector<1x1x16xf32>
    %541 = vector.broadcast %540 : vector<1x1x16xf32> to vector<4x4x16xf32>
    %542 = arith.mulf %537, %541 : vector<4x4x16xf32>
    %cst_135 = arith.constant 1.000000e+00 : f32
    %543 = vector.broadcast %cst_135 : f32 to vector<4x4x16xf32>
    %544 = arith.addf %543, %518 : vector<4x4x16xf32>
    %545 = arith.mulf %544, %542 : vector<4x4x16xf32>
    %546 = arith.addf %545, %520 : vector<4x4x16xf32>
    %cst_136 = arith.constant 0.000000e+00 : f32
    %547 = vector.broadcast %cst_136 : f32 to vector<4x4x16xf32>
    %548 = arith.cmpf ogt, %546, %547 : vector<4x4x16xf32>
    %cst_137 = arith.constant 2.000000e-01 : f32
    %549 = vector.broadcast %cst_137 : f32 to vector<4x4x16xf32>
    %550 = arith.mulf %549, %546 : vector<4x4x16xf32>
    %551 = arith.select %548, %546, %550 : vector<4x4x16xi1>, vector<4x4x16xf32>
    %c3 = arith.constant 3 : index
    %c0_138 = arith.constant 0 : index
    %c0_139 = arith.constant 0 : index
    %c0_140 = arith.constant 0 : index
    %552 = vector.load %arg8[%c3, %c0_138, %c0_139, %c0_140] : memref<5x2x144x16xf32, #tpu.memory_space<vmem>>, vector<1x1x144x16xf32>
    %553 = vector.shape_cast %552 : vector<1x1x144x16xf32> to vector<144x16xf32>
    %cst_141 = arith.constant 0.000000e+00 : f32
    %554 = vector.broadcast %cst_141 : f32 to vector<4x1x16xf32>
    %555 = tpu.concatenate %554, %551, %554 in 1 : vector<4x1x16xf32>, vector<4x4x16xf32>, vector<4x1x16xf32> -> vector<4x6x16xf32>
    %cst_142 = arith.constant 0.000000e+00 : f32
    %556 = vector.broadcast %cst_142 : f32 to vector<1x6x16xf32>
    %557 = tpu.concatenate %556, %555, %556 in 0 : vector<1x6x16xf32>, vector<4x6x16xf32>, vector<1x6x16xf32> -> vector<6x6x16xf32>
    %558 = vector.extract_strided_slice %557 {offsets = [0, 0, 0], sizes = [4, 4, 16], strides = [1, 1, 1]} : vector<6x6x16xf32> to vector<4x4x16xf32>
    %559 = vector.shape_cast %558 : vector<4x4x16xf32> to vector<16x16xf32>
    %560 = vector.extract_strided_slice %557 {offsets = [0, 1, 0], sizes = [4, 4, 16], strides = [1, 1, 1]} : vector<6x6x16xf32> to vector<4x4x16xf32>
    %561 = vector.shape_cast %560 : vector<4x4x16xf32> to vector<16x16xf32>
    %562 = vector.extract_strided_slice %557 {offsets = [0, 2, 0], sizes = [4, 4, 16], strides = [1, 1, 1]} : vector<6x6x16xf32> to vector<4x4x16xf32>
    %563 = vector.shape_cast %562 : vector<4x4x16xf32> to vector<16x16xf32>
    %564 = vector.extract_strided_slice %557 {offsets = [1, 0, 0], sizes = [4, 4, 16], strides = [1, 1, 1]} : vector<6x6x16xf32> to vector<4x4x16xf32>
    %565 = vector.shape_cast %564 : vector<4x4x16xf32> to vector<16x16xf32>
    %566 = vector.extract_strided_slice %557 {offsets = [1, 1, 0], sizes = [4, 4, 16], strides = [1, 1, 1]} : vector<6x6x16xf32> to vector<4x4x16xf32>
    %567 = vector.shape_cast %566 : vector<4x4x16xf32> to vector<16x16xf32>
    %568 = vector.extract_strided_slice %557 {offsets = [1, 2, 0], sizes = [4, 4, 16], strides = [1, 1, 1]} : vector<6x6x16xf32> to vector<4x4x16xf32>
    %569 = vector.shape_cast %568 : vector<4x4x16xf32> to vector<16x16xf32>
    %570 = vector.extract_strided_slice %557 {offsets = [2, 0, 0], sizes = [4, 4, 16], strides = [1, 1, 1]} : vector<6x6x16xf32> to vector<4x4x16xf32>
    %571 = vector.shape_cast %570 : vector<4x4x16xf32> to vector<16x16xf32>
    %572 = vector.extract_strided_slice %557 {offsets = [2, 1, 0], sizes = [4, 4, 16], strides = [1, 1, 1]} : vector<6x6x16xf32> to vector<4x4x16xf32>
    %573 = vector.shape_cast %572 : vector<4x4x16xf32> to vector<16x16xf32>
    %574 = vector.extract_strided_slice %557 {offsets = [2, 2, 0], sizes = [4, 4, 16], strides = [1, 1, 1]} : vector<6x6x16xf32> to vector<4x4x16xf32>
    %575 = vector.shape_cast %574 : vector<4x4x16xf32> to vector<16x16xf32>
    %576 = tpu.concatenate %559, %561, %563, %565, %567, %569, %571, %573, %575 in 1 : vector<16x16xf32>, vector<16x16xf32>, vector<16x16xf32>, vector<16x16xf32>, vector<16x16xf32>, vector<16x16xf32>, vector<16x16xf32>, vector<16x16xf32>, vector<16x16xf32> -> vector<16x144xf32>
    %cst_143 = arith.constant dense<0.000000e+00> : vector<16x16xf32>
    %577 = tpu.matmul %576, %553, %cst_143 {dimension_numbers = #tpu.dot_dimension_numbers<[1], [0], [0], [1], [0, 0, 1, 1], [], []>} : vector<16x144xf32>, vector<144x16xf32>, vector<16x16xf32> -> vector<16x16xf32>
    %578 = vector.shape_cast %577 : vector<16x16xf32> to vector<4x4x16xf32>
    %cst_144 = arith.constant dense<0.000000e+00> : vector<16xf32>
    %579 = vector.multi_reduction <add>, %578, %cst_144 [0, 1] : vector<4x4x16xf32> to vector<16xf32>
    %580 = vector.shape_cast %579 : vector<16xf32> to vector<1x1x16xf32>
    %581 = arith.mulf %578, %578 : vector<4x4x16xf32>
    %cst_145 = arith.constant dense<0.000000e+00> : vector<16xf32>
    %582 = vector.multi_reduction <add>, %581, %cst_145 [0, 1] : vector<4x4x16xf32> to vector<16xf32>
    %583 = vector.shape_cast %582 : vector<16xf32> to vector<1x1x16xf32>
    %cst_146 = arith.constant 6.250000e-02 : f32
    %584 = vector.broadcast %cst_146 : f32 to vector<1x1x16xf32>
    %585 = arith.mulf %580, %584 : vector<1x1x16xf32>
    %cst_147 = arith.constant 6.250000e-02 : f32
    %586 = vector.broadcast %cst_147 : f32 to vector<1x1x16xf32>
    %587 = arith.mulf %583, %586 : vector<1x1x16xf32>
    %588 = arith.mulf %585, %585 : vector<1x1x16xf32>
    %589 = arith.subf %587, %588 : vector<1x1x16xf32>
    %590 = vector.broadcast %585 : vector<1x1x16xf32> to vector<4x4x16xf32>
    %591 = arith.subf %578, %590 : vector<4x4x16xf32>
    %cst_148 = arith.constant 9.99999974E-6 : f32
    %592 = vector.broadcast %cst_148 : f32 to vector<1x1x16xf32>
    %593 = arith.addf %589, %592 : vector<1x1x16xf32>
    %594 = math.rsqrt %593 : vector<1x1x16xf32>
    %595 = vector.broadcast %594 : vector<1x1x16xf32> to vector<4x4x16xf32>
    %596 = arith.mulf %591, %595 : vector<4x4x16xf32>
    %cst_149 = arith.constant 1.000000e+00 : f32
    %597 = vector.broadcast %cst_149 : f32 to vector<4x4x16xf32>
    %598 = arith.addf %597, %522 : vector<4x4x16xf32>
    %599 = arith.mulf %598, %596 : vector<4x4x16xf32>
    %600 = arith.addf %599, %524 : vector<4x4x16xf32>
    %cst_150 = arith.constant 0.000000e+00 : f32
    %601 = vector.broadcast %cst_150 : f32 to vector<4x4x16xf32>
    %602 = arith.cmpf ogt, %600, %601 : vector<4x4x16xf32>
    %cst_151 = arith.constant 2.000000e-01 : f32
    %603 = vector.broadcast %cst_151 : f32 to vector<4x4x16xf32>
    %604 = arith.mulf %603, %600 : vector<4x4x16xf32>
    %605 = arith.select %602, %600, %604 : vector<4x4x16xi1>, vector<4x4x16xf32>
    %c3_152 = arith.constant 3 : index
    %c1_153 = arith.constant 1 : index
    %c0_154 = arith.constant 0 : index
    %c0_155 = arith.constant 0 : index
    %606 = vector.load %arg8[%c3_152, %c1_153, %c0_154, %c0_155] : memref<5x2x144x16xf32, #tpu.memory_space<vmem>>, vector<1x1x144x16xf32>
    %607 = vector.shape_cast %606 : vector<1x1x144x16xf32> to vector<144x16xf32>
    %cst_156 = arith.constant 0.000000e+00 : f32
    %608 = vector.broadcast %cst_156 : f32 to vector<4x1x16xf32>
    %609 = tpu.concatenate %608, %605, %608 in 1 : vector<4x1x16xf32>, vector<4x4x16xf32>, vector<4x1x16xf32> -> vector<4x6x16xf32>
    %cst_157 = arith.constant 0.000000e+00 : f32
    %610 = vector.broadcast %cst_157 : f32 to vector<1x6x16xf32>
    %611 = tpu.concatenate %610, %609, %610 in 0 : vector<1x6x16xf32>, vector<4x6x16xf32>, vector<1x6x16xf32> -> vector<6x6x16xf32>
    %612 = vector.extract_strided_slice %611 {offsets = [0, 0, 0], sizes = [4, 4, 16], strides = [1, 1, 1]} : vector<6x6x16xf32> to vector<4x4x16xf32>
    %613 = vector.shape_cast %612 : vector<4x4x16xf32> to vector<16x16xf32>
    %614 = vector.extract_strided_slice %611 {offsets = [0, 1, 0], sizes = [4, 4, 16], strides = [1, 1, 1]} : vector<6x6x16xf32> to vector<4x4x16xf32>
    %615 = vector.shape_cast %614 : vector<4x4x16xf32> to vector<16x16xf32>
    %616 = vector.extract_strided_slice %611 {offsets = [0, 2, 0], sizes = [4, 4, 16], strides = [1, 1, 1]} : vector<6x6x16xf32> to vector<4x4x16xf32>
    %617 = vector.shape_cast %616 : vector<4x4x16xf32> to vector<16x16xf32>
    %618 = vector.extract_strided_slice %611 {offsets = [1, 0, 0], sizes = [4, 4, 16], strides = [1, 1, 1]} : vector<6x6x16xf32> to vector<4x4x16xf32>
    %619 = vector.shape_cast %618 : vector<4x4x16xf32> to vector<16x16xf32>
    %620 = vector.extract_strided_slice %611 {offsets = [1, 1, 0], sizes = [4, 4, 16], strides = [1, 1, 1]} : vector<6x6x16xf32> to vector<4x4x16xf32>
    %621 = vector.shape_cast %620 : vector<4x4x16xf32> to vector<16x16xf32>
    %622 = vector.extract_strided_slice %611 {offsets = [1, 2, 0], sizes = [4, 4, 16], strides = [1, 1, 1]} : vector<6x6x16xf32> to vector<4x4x16xf32>
    %623 = vector.shape_cast %622 : vector<4x4x16xf32> to vector<16x16xf32>
    %624 = vector.extract_strided_slice %611 {offsets = [2, 0, 0], sizes = [4, 4, 16], strides = [1, 1, 1]} : vector<6x6x16xf32> to vector<4x4x16xf32>
    %625 = vector.shape_cast %624 : vector<4x4x16xf32> to vector<16x16xf32>
    %626 = vector.extract_strided_slice %611 {offsets = [2, 1, 0], sizes = [4, 4, 16], strides = [1, 1, 1]} : vector<6x6x16xf32> to vector<4x4x16xf32>
    %627 = vector.shape_cast %626 : vector<4x4x16xf32> to vector<16x16xf32>
    %628 = vector.extract_strided_slice %611 {offsets = [2, 2, 0], sizes = [4, 4, 16], strides = [1, 1, 1]} : vector<6x6x16xf32> to vector<4x4x16xf32>
    %629 = vector.shape_cast %628 : vector<4x4x16xf32> to vector<16x16xf32>
    %630 = tpu.concatenate %613, %615, %617, %619, %621, %623, %625, %627, %629 in 1 : vector<16x16xf32>, vector<16x16xf32>, vector<16x16xf32>, vector<16x16xf32>, vector<16x16xf32>, vector<16x16xf32>, vector<16x16xf32>, vector<16x16xf32>, vector<16x16xf32> -> vector<16x144xf32>
    %cst_158 = arith.constant dense<0.000000e+00> : vector<16x16xf32>
    %631 = tpu.matmul %630, %607, %cst_158 {dimension_numbers = #tpu.dot_dimension_numbers<[1], [0], [0], [1], [0, 0, 1, 1], [], []>} : vector<16x144xf32>, vector<144x16xf32>, vector<16x16xf32> -> vector<16x16xf32>
    %632 = vector.shape_cast %631 : vector<16x16xf32> to vector<4x4x16xf32>
    %633 = arith.addf %632, %516 : vector<4x4x16xf32>
    %cst_159 = arith.constant 0.000000e+00 : f32
    %634 = vector.broadcast %cst_159 : f32 to vector<4x4x16xf32>
    %635 = arith.cmpf ogt, %633, %634 : vector<4x4x16xf32>
    %cst_160 = arith.constant 2.000000e-01 : f32
    %636 = vector.broadcast %cst_160 : f32 to vector<4x4x16xf32>
    %637 = arith.mulf %636, %633 : vector<4x4x16xf32>
    %638 = arith.select %635, %633, %637 : vector<4x4x16xi1>, vector<4x4x16xf32>
    %639 = vector.extract_strided_slice %150 {offsets = [0, 256], sizes = [16, 16], strides = [1, 1]} : vector<16x320xf32> to vector<16x16xf32>
    %640 = vector.shape_cast %639 : vector<16x16xf32> to vector<4x4x16xf32>
    %641 = vector.extract_strided_slice %150 {offsets = [0, 272], sizes = [16, 16], strides = [1, 1]} : vector<16x320xf32> to vector<16x16xf32>
    %642 = vector.shape_cast %641 : vector<16x16xf32> to vector<4x4x16xf32>
    %643 = vector.extract_strided_slice %150 {offsets = [0, 288], sizes = [16, 16], strides = [1, 1]} : vector<16x320xf32> to vector<16x16xf32>
    %644 = vector.shape_cast %643 : vector<16x16xf32> to vector<4x4x16xf32>
    %645 = vector.extract_strided_slice %150 {offsets = [0, 304], sizes = [16, 16], strides = [1, 1]} : vector<16x320xf32> to vector<16x16xf32>
    %646 = vector.shape_cast %645 : vector<16x16xf32> to vector<4x4x16xf32>
    %cst_161 = arith.constant dense<0.000000e+00> : vector<16xf32>
    %647 = vector.multi_reduction <add>, %638, %cst_161 [0, 1] : vector<4x4x16xf32> to vector<16xf32>
    %648 = vector.shape_cast %647 : vector<16xf32> to vector<1x1x16xf32>
    %649 = arith.mulf %638, %638 : vector<4x4x16xf32>
    %cst_162 = arith.constant dense<0.000000e+00> : vector<16xf32>
    %650 = vector.multi_reduction <add>, %649, %cst_162 [0, 1] : vector<4x4x16xf32> to vector<16xf32>
    %651 = vector.shape_cast %650 : vector<16xf32> to vector<1x1x16xf32>
    %cst_163 = arith.constant 6.250000e-02 : f32
    %652 = vector.broadcast %cst_163 : f32 to vector<1x1x16xf32>
    %653 = arith.mulf %648, %652 : vector<1x1x16xf32>
    %cst_164 = arith.constant 6.250000e-02 : f32
    %654 = vector.broadcast %cst_164 : f32 to vector<1x1x16xf32>
    %655 = arith.mulf %651, %654 : vector<1x1x16xf32>
    %656 = arith.mulf %653, %653 : vector<1x1x16xf32>
    %657 = arith.subf %655, %656 : vector<1x1x16xf32>
    %658 = vector.broadcast %653 : vector<1x1x16xf32> to vector<4x4x16xf32>
    %659 = arith.subf %638, %658 : vector<4x4x16xf32>
    %cst_165 = arith.constant 9.99999974E-6 : f32
    %660 = vector.broadcast %cst_165 : f32 to vector<1x1x16xf32>
    %661 = arith.addf %657, %660 : vector<1x1x16xf32>
    %662 = math.rsqrt %661 : vector<1x1x16xf32>
    %663 = vector.broadcast %662 : vector<1x1x16xf32> to vector<4x4x16xf32>
    %664 = arith.mulf %659, %663 : vector<4x4x16xf32>
    %cst_166 = arith.constant 1.000000e+00 : f32
    %665 = vector.broadcast %cst_166 : f32 to vector<4x4x16xf32>
    %666 = arith.addf %665, %640 : vector<4x4x16xf32>
    %667 = arith.mulf %666, %664 : vector<4x4x16xf32>
    %668 = arith.addf %667, %642 : vector<4x4x16xf32>
    %cst_167 = arith.constant 0.000000e+00 : f32
    %669 = vector.broadcast %cst_167 : f32 to vector<4x4x16xf32>
    %670 = arith.cmpf ogt, %668, %669 : vector<4x4x16xf32>
    %cst_168 = arith.constant 2.000000e-01 : f32
    %671 = vector.broadcast %cst_168 : f32 to vector<4x4x16xf32>
    %672 = arith.mulf %671, %668 : vector<4x4x16xf32>
    %673 = arith.select %670, %668, %672 : vector<4x4x16xi1>, vector<4x4x16xf32>
    %c4 = arith.constant 4 : index
    %c0_169 = arith.constant 0 : index
    %c0_170 = arith.constant 0 : index
    %c0_171 = arith.constant 0 : index
    %674 = vector.load %arg8[%c4, %c0_169, %c0_170, %c0_171] : memref<5x2x144x16xf32, #tpu.memory_space<vmem>>, vector<1x1x144x16xf32>
    %675 = vector.shape_cast %674 : vector<1x1x144x16xf32> to vector<144x16xf32>
    %cst_172 = arith.constant 0.000000e+00 : f32
    %676 = vector.broadcast %cst_172 : f32 to vector<4x1x16xf32>
    %677 = tpu.concatenate %676, %673, %676 in 1 : vector<4x1x16xf32>, vector<4x4x16xf32>, vector<4x1x16xf32> -> vector<4x6x16xf32>
    %cst_173 = arith.constant 0.000000e+00 : f32
    %678 = vector.broadcast %cst_173 : f32 to vector<1x6x16xf32>
    %679 = tpu.concatenate %678, %677, %678 in 0 : vector<1x6x16xf32>, vector<4x6x16xf32>, vector<1x6x16xf32> -> vector<6x6x16xf32>
    %680 = vector.extract_strided_slice %679 {offsets = [0, 0, 0], sizes = [4, 4, 16], strides = [1, 1, 1]} : vector<6x6x16xf32> to vector<4x4x16xf32>
    %681 = vector.shape_cast %680 : vector<4x4x16xf32> to vector<16x16xf32>
    %682 = vector.extract_strided_slice %679 {offsets = [0, 1, 0], sizes = [4, 4, 16], strides = [1, 1, 1]} : vector<6x6x16xf32> to vector<4x4x16xf32>
    %683 = vector.shape_cast %682 : vector<4x4x16xf32> to vector<16x16xf32>
    %684 = vector.extract_strided_slice %679 {offsets = [0, 2, 0], sizes = [4, 4, 16], strides = [1, 1, 1]} : vector<6x6x16xf32> to vector<4x4x16xf32>
    %685 = vector.shape_cast %684 : vector<4x4x16xf32> to vector<16x16xf32>
    %686 = vector.extract_strided_slice %679 {offsets = [1, 0, 0], sizes = [4, 4, 16], strides = [1, 1, 1]} : vector<6x6x16xf32> to vector<4x4x16xf32>
    %687 = vector.shape_cast %686 : vector<4x4x16xf32> to vector<16x16xf32>
    %688 = vector.extract_strided_slice %679 {offsets = [1, 1, 0], sizes = [4, 4, 16], strides = [1, 1, 1]} : vector<6x6x16xf32> to vector<4x4x16xf32>
    %689 = vector.shape_cast %688 : vector<4x4x16xf32> to vector<16x16xf32>
    %690 = vector.extract_strided_slice %679 {offsets = [1, 2, 0], sizes = [4, 4, 16], strides = [1, 1, 1]} : vector<6x6x16xf32> to vector<4x4x16xf32>
    %691 = vector.shape_cast %690 : vector<4x4x16xf32> to vector<16x16xf32>
    %692 = vector.extract_strided_slice %679 {offsets = [2, 0, 0], sizes = [4, 4, 16], strides = [1, 1, 1]} : vector<6x6x16xf32> to vector<4x4x16xf32>
    %693 = vector.shape_cast %692 : vector<4x4x16xf32> to vector<16x16xf32>
    %694 = vector.extract_strided_slice %679 {offsets = [2, 1, 0], sizes = [4, 4, 16], strides = [1, 1, 1]} : vector<6x6x16xf32> to vector<4x4x16xf32>
    %695 = vector.shape_cast %694 : vector<4x4x16xf32> to vector<16x16xf32>
    %696 = vector.extract_strided_slice %679 {offsets = [2, 2, 0], sizes = [4, 4, 16], strides = [1, 1, 1]} : vector<6x6x16xf32> to vector<4x4x16xf32>
    %697 = vector.shape_cast %696 : vector<4x4x16xf32> to vector<16x16xf32>
    %698 = tpu.concatenate %681, %683, %685, %687, %689, %691, %693, %695, %697 in 1 : vector<16x16xf32>, vector<16x16xf32>, vector<16x16xf32>, vector<16x16xf32>, vector<16x16xf32>, vector<16x16xf32>, vector<16x16xf32>, vector<16x16xf32>, vector<16x16xf32> -> vector<16x144xf32>
    %cst_174 = arith.constant dense<0.000000e+00> : vector<16x16xf32>
    %699 = tpu.matmul %698, %675, %cst_174 {dimension_numbers = #tpu.dot_dimension_numbers<[1], [0], [0], [1], [0, 0, 1, 1], [], []>} : vector<16x144xf32>, vector<144x16xf32>, vector<16x16xf32> -> vector<16x16xf32>
    %700 = vector.shape_cast %699 : vector<16x16xf32> to vector<4x4x16xf32>
    %cst_175 = arith.constant dense<0.000000e+00> : vector<16xf32>
    %701 = vector.multi_reduction <add>, %700, %cst_175 [0, 1] : vector<4x4x16xf32> to vector<16xf32>
    %702 = vector.shape_cast %701 : vector<16xf32> to vector<1x1x16xf32>
    %703 = arith.mulf %700, %700 : vector<4x4x16xf32>
    %cst_176 = arith.constant dense<0.000000e+00> : vector<16xf32>
    %704 = vector.multi_reduction <add>, %703, %cst_176 [0, 1] : vector<4x4x16xf32> to vector<16xf32>
    %705 = vector.shape_cast %704 : vector<16xf32> to vector<1x1x16xf32>
    %cst_177 = arith.constant 6.250000e-02 : f32
    %706 = vector.broadcast %cst_177 : f32 to vector<1x1x16xf32>
    %707 = arith.mulf %702, %706 : vector<1x1x16xf32>
    %cst_178 = arith.constant 6.250000e-02 : f32
    %708 = vector.broadcast %cst_178 : f32 to vector<1x1x16xf32>
    %709 = arith.mulf %705, %708 : vector<1x1x16xf32>
    %710 = arith.mulf %707, %707 : vector<1x1x16xf32>
    %711 = arith.subf %709, %710 : vector<1x1x16xf32>
    %712 = vector.broadcast %707 : vector<1x1x16xf32> to vector<4x4x16xf32>
    %713 = arith.subf %700, %712 : vector<4x4x16xf32>
    %cst_179 = arith.constant 9.99999974E-6 : f32
    %714 = vector.broadcast %cst_179 : f32 to vector<1x1x16xf32>
    %715 = arith.addf %711, %714 : vector<1x1x16xf32>
    %716 = math.rsqrt %715 : vector<1x1x16xf32>
    %717 = vector.broadcast %716 : vector<1x1x16xf32> to vector<4x4x16xf32>
    %718 = arith.mulf %713, %717 : vector<4x4x16xf32>
    %cst_180 = arith.constant 1.000000e+00 : f32
    %719 = vector.broadcast %cst_180 : f32 to vector<4x4x16xf32>
    %720 = arith.addf %719, %644 : vector<4x4x16xf32>
    %721 = arith.mulf %720, %718 : vector<4x4x16xf32>
    %722 = arith.addf %721, %646 : vector<4x4x16xf32>
    %cst_181 = arith.constant 0.000000e+00 : f32
    %723 = vector.broadcast %cst_181 : f32 to vector<4x4x16xf32>
    %724 = arith.cmpf ogt, %722, %723 : vector<4x4x16xf32>
    %cst_182 = arith.constant 2.000000e-01 : f32
    %725 = vector.broadcast %cst_182 : f32 to vector<4x4x16xf32>
    %726 = arith.mulf %725, %722 : vector<4x4x16xf32>
    %727 = arith.select %724, %722, %726 : vector<4x4x16xi1>, vector<4x4x16xf32>
    %c4_183 = arith.constant 4 : index
    %c1_184 = arith.constant 1 : index
    %c0_185 = arith.constant 0 : index
    %c0_186 = arith.constant 0 : index
    %728 = vector.load %arg8[%c4_183, %c1_184, %c0_185, %c0_186] : memref<5x2x144x16xf32, #tpu.memory_space<vmem>>, vector<1x1x144x16xf32>
    %729 = vector.shape_cast %728 : vector<1x1x144x16xf32> to vector<144x16xf32>
    %cst_187 = arith.constant 0.000000e+00 : f32
    %730 = vector.broadcast %cst_187 : f32 to vector<4x1x16xf32>
    %731 = tpu.concatenate %730, %727, %730 in 1 : vector<4x1x16xf32>, vector<4x4x16xf32>, vector<4x1x16xf32> -> vector<4x6x16xf32>
    %cst_188 = arith.constant 0.000000e+00 : f32
    %732 = vector.broadcast %cst_188 : f32 to vector<1x6x16xf32>
    %733 = tpu.concatenate %732, %731, %732 in 0 : vector<1x6x16xf32>, vector<4x6x16xf32>, vector<1x6x16xf32> -> vector<6x6x16xf32>
    %734 = vector.extract_strided_slice %733 {offsets = [0, 0, 0], sizes = [4, 4, 16], strides = [1, 1, 1]} : vector<6x6x16xf32> to vector<4x4x16xf32>
    %735 = vector.shape_cast %734 : vector<4x4x16xf32> to vector<16x16xf32>
    %736 = vector.extract_strided_slice %733 {offsets = [0, 1, 0], sizes = [4, 4, 16], strides = [1, 1, 1]} : vector<6x6x16xf32> to vector<4x4x16xf32>
    %737 = vector.shape_cast %736 : vector<4x4x16xf32> to vector<16x16xf32>
    %738 = vector.extract_strided_slice %733 {offsets = [0, 2, 0], sizes = [4, 4, 16], strides = [1, 1, 1]} : vector<6x6x16xf32> to vector<4x4x16xf32>
    %739 = vector.shape_cast %738 : vector<4x4x16xf32> to vector<16x16xf32>
    %740 = vector.extract_strided_slice %733 {offsets = [1, 0, 0], sizes = [4, 4, 16], strides = [1, 1, 1]} : vector<6x6x16xf32> to vector<4x4x16xf32>
    %741 = vector.shape_cast %740 : vector<4x4x16xf32> to vector<16x16xf32>
    %742 = vector.extract_strided_slice %733 {offsets = [1, 1, 0], sizes = [4, 4, 16], strides = [1, 1, 1]} : vector<6x6x16xf32> to vector<4x4x16xf32>
    %743 = vector.shape_cast %742 : vector<4x4x16xf32> to vector<16x16xf32>
    %744 = vector.extract_strided_slice %733 {offsets = [1, 2, 0], sizes = [4, 4, 16], strides = [1, 1, 1]} : vector<6x6x16xf32> to vector<4x4x16xf32>
    %745 = vector.shape_cast %744 : vector<4x4x16xf32> to vector<16x16xf32>
    %746 = vector.extract_strided_slice %733 {offsets = [2, 0, 0], sizes = [4, 4, 16], strides = [1, 1, 1]} : vector<6x6x16xf32> to vector<4x4x16xf32>
    %747 = vector.shape_cast %746 : vector<4x4x16xf32> to vector<16x16xf32>
    %748 = vector.extract_strided_slice %733 {offsets = [2, 1, 0], sizes = [4, 4, 16], strides = [1, 1, 1]} : vector<6x6x16xf32> to vector<4x4x16xf32>
    %749 = vector.shape_cast %748 : vector<4x4x16xf32> to vector<16x16xf32>
    %750 = vector.extract_strided_slice %733 {offsets = [2, 2, 0], sizes = [4, 4, 16], strides = [1, 1, 1]} : vector<6x6x16xf32> to vector<4x4x16xf32>
    %751 = vector.shape_cast %750 : vector<4x4x16xf32> to vector<16x16xf32>
    %752 = tpu.concatenate %735, %737, %739, %741, %743, %745, %747, %749, %751 in 1 : vector<16x16xf32>, vector<16x16xf32>, vector<16x16xf32>, vector<16x16xf32>, vector<16x16xf32>, vector<16x16xf32>, vector<16x16xf32>, vector<16x16xf32>, vector<16x16xf32> -> vector<16x144xf32>
    %cst_189 = arith.constant dense<0.000000e+00> : vector<16x16xf32>
    %753 = tpu.matmul %752, %729, %cst_189 {dimension_numbers = #tpu.dot_dimension_numbers<[1], [0], [0], [1], [0, 0, 1, 1], [], []>} : vector<16x144xf32>, vector<144x16xf32>, vector<16x16xf32> -> vector<16x16xf32>
    %754 = vector.shape_cast %753 : vector<16x16xf32> to vector<4x4x16xf32>
    %755 = arith.addf %754, %638 : vector<4x4x16xf32>
    %cst_190 = arith.constant 0.000000e+00 : f32
    %756 = vector.broadcast %cst_190 : f32 to vector<4x4x16xf32>
    %757 = arith.cmpf ogt, %755, %756 : vector<4x4x16xf32>
    %cst_191 = arith.constant 2.000000e-01 : f32
    %758 = vector.broadcast %cst_191 : f32 to vector<4x4x16xf32>
    %759 = arith.mulf %758, %755 : vector<4x4x16xf32>
    %760 = arith.select %757, %755, %759 : vector<4x4x16xi1>, vector<4x4x16xf32>
    %761 = vector.shape_cast %760 : vector<4x4x16xf32> to vector<16x16xf32>
    %c0_192 = arith.constant 0 : index
    %c0_193 = arith.constant 0 : index
    %762 = vector.load %arg9[%c0_192, %c0_193] : memref<16x64xf32, #tpu.memory_space<vmem>>, vector<16x64xf32>
    %cst_194 = arith.constant dense<0.000000e+00> : vector<16x64xf32>
    %763 = tpu.matmul %761, %762, %cst_194 {dimension_numbers = #tpu.dot_dimension_numbers<[1], [0], [0], [1], [0, 0, 1, 1], [], []>} : vector<16x16xf32>, vector<16x64xf32>, vector<16x64xf32> -> vector<16x64xf32>
    %764 = vector.extract_strided_slice %763 {offsets = [0, 0], sizes = [16, 16], strides = [1, 1]} : vector<16x64xf32> to vector<16x16xf32>
    %765 = vector.shape_cast %764 : vector<16x16xf32> to vector<4x4x16xf32>
    %766 = vector.extract_strided_slice %763 {offsets = [0, 16], sizes = [16, 16], strides = [1, 1]} : vector<16x64xf32> to vector<16x16xf32>
    %767 = vector.shape_cast %766 : vector<16x16xf32> to vector<4x4x16xf32>
    %768 = vector.extract_strided_slice %763 {offsets = [0, 32], sizes = [16, 16], strides = [1, 1]} : vector<16x64xf32> to vector<16x16xf32>
    %769 = vector.shape_cast %768 : vector<16x16xf32> to vector<4x4x16xf32>
    %770 = vector.extract_strided_slice %763 {offsets = [0, 48], sizes = [16, 16], strides = [1, 1]} : vector<16x64xf32> to vector<16x16xf32>
    %771 = vector.shape_cast %770 : vector<16x16xf32> to vector<4x4x16xf32>
    %772 = vector.shape_cast %765 : vector<4x4x16xf32> to vector<4x4x1x16xf32>
    %773 = vector.shape_cast %767 : vector<4x4x16xf32> to vector<4x4x1x16xf32>
    %774 = tpu.concatenate %772, %773 in 2 : vector<4x4x1x16xf32>, vector<4x4x1x16xf32> -> vector<4x4x2x16xf32>
    %775 = vector.shape_cast %774 : vector<4x4x2x16xf32> to vector<4x8x16xf32>
    %776 = vector.shape_cast %769 : vector<4x4x16xf32> to vector<4x4x1x16xf32>
    %777 = vector.shape_cast %771 : vector<4x4x16xf32> to vector<4x4x1x16xf32>
    %778 = tpu.concatenate %776, %777 in 2 : vector<4x4x1x16xf32>, vector<4x4x1x16xf32> -> vector<4x4x2x16xf32>
    %779 = vector.shape_cast %778 : vector<4x4x2x16xf32> to vector<4x8x16xf32>
    %780 = vector.shape_cast %775 : vector<4x8x16xf32> to vector<4x1x8x16xf32>
    %781 = vector.shape_cast %779 : vector<4x8x16xf32> to vector<4x1x8x16xf32>
    %782 = tpu.concatenate %780, %781 in 1 : vector<4x1x8x16xf32>, vector<4x1x8x16xf32> -> vector<4x2x8x16xf32>
    %783 = vector.shape_cast %782 : vector<4x2x8x16xf32> to vector<8x8x16xf32>
    %784 = vector.extract_strided_slice %783 {offsets = [0, 0, 0], sizes = [8, 1, 16], strides = [1, 1, 1]} : vector<8x8x16xf32> to vector<8x1x16xf32>
    %785 = vector.shape_cast %784 : vector<8x1x16xf32> to vector<8x16xf32>
    %786 = vector.extract_strided_slice %783 {offsets = [0, 1, 0], sizes = [8, 1, 16], strides = [1, 1, 1]} : vector<8x8x16xf32> to vector<8x1x16xf32>
    %787 = vector.shape_cast %786 : vector<8x1x16xf32> to vector<8x16xf32>
    %788 = vector.extract_strided_slice %783 {offsets = [0, 2, 0], sizes = [8, 1, 16], strides = [1, 1, 1]} : vector<8x8x16xf32> to vector<8x1x16xf32>
    %789 = vector.shape_cast %788 : vector<8x1x16xf32> to vector<8x16xf32>
    %790 = vector.extract_strided_slice %783 {offsets = [0, 3, 0], sizes = [8, 1, 16], strides = [1, 1, 1]} : vector<8x8x16xf32> to vector<8x1x16xf32>
    %791 = vector.shape_cast %790 : vector<8x1x16xf32> to vector<8x16xf32>
    %792 = vector.extract_strided_slice %783 {offsets = [0, 4, 0], sizes = [8, 1, 16], strides = [1, 1, 1]} : vector<8x8x16xf32> to vector<8x1x16xf32>
    %793 = vector.shape_cast %792 : vector<8x1x16xf32> to vector<8x16xf32>
    %794 = vector.extract_strided_slice %783 {offsets = [0, 5, 0], sizes = [8, 1, 16], strides = [1, 1, 1]} : vector<8x8x16xf32> to vector<8x1x16xf32>
    %795 = vector.shape_cast %794 : vector<8x1x16xf32> to vector<8x16xf32>
    %796 = vector.extract_strided_slice %783 {offsets = [0, 6, 0], sizes = [8, 1, 16], strides = [1, 1, 1]} : vector<8x8x16xf32> to vector<8x1x16xf32>
    %797 = vector.shape_cast %796 : vector<8x1x16xf32> to vector<8x16xf32>
    %798 = vector.extract_strided_slice %783 {offsets = [0, 7, 0], sizes = [8, 1, 16], strides = [1, 1, 1]} : vector<8x8x16xf32> to vector<8x1x16xf32>
    %799 = vector.shape_cast %798 : vector<8x1x16xf32> to vector<8x16xf32>
    %800 = tpu.concatenate %785, %787, %789, %791, %793, %795, %797, %799 in 1 : vector<8x16xf32>, vector<8x16xf32>, vector<8x16xf32>, vector<8x16xf32>, vector<8x16xf32>, vector<8x16xf32>, vector<8x16xf32>, vector<8x16xf32> -> vector<8x128xf32>
    %c0_195 = arith.constant 0 : index
    %c0_196 = arith.constant 0 : index
    %c0_197 = arith.constant 0 : index
    %801 = vector.load %arg13[%c0_195, %c0_196, %c0_197] : memref<1x8x128xf32, #tpu.memory_space<vmem>>, vector<1x8x128xf32>
    %802 = vector.shape_cast %801 : vector<1x8x128xf32> to vector<8x128xf32>
    %803 = vector.shape_cast %800 : vector<8x128xf32> to vector<1x8x128xf32>
    tpu.vector_store %arg13[%c0_195, %c0_196, %c0_197], %803 {strides = array<i32>} : memref<1x8x128xf32, #tpu.memory_space<vmem>>, vector<1x8x128xf32>,
    %804 = tpu.concatenate %783, %60 in 2 : vector<8x8x16xf32>, vector<8x8x16xf32> -> vector<8x8x32xf32>
    %c0_198 = arith.constant 0 : index
    %c0_199 = arith.constant 0 : index
    %805 = vector.load %arg10[%c0_198, %c0_199] : memref<288x16xf32, #tpu.memory_space<vmem>>, vector<288x16xf32>
    %cst_200 = arith.constant 0.000000e+00 : f32
    %806 = vector.broadcast %cst_200 : f32 to vector<8x1x32xf32>
    %807 = tpu.concatenate %806, %804, %806 in 1 : vector<8x1x32xf32>, vector<8x8x32xf32>, vector<8x1x32xf32> -> vector<8x10x32xf32>
    %cst_201 = arith.constant 0.000000e+00 : f32
    %808 = vector.broadcast %cst_201 : f32 to vector<1x10x32xf32>
    %809 = tpu.concatenate %808, %807, %808 in 0 : vector<1x10x32xf32>, vector<8x10x32xf32>, vector<1x10x32xf32> -> vector<10x10x32xf32>
    %810 = vector.extract_strided_slice %809 {offsets = [0, 0, 0], sizes = [8, 8, 32], strides = [1, 1, 1]} : vector<10x10x32xf32> to vector<8x8x32xf32>
    %811 = vector.shape_cast %810 : vector<8x8x32xf32> to vector<64x32xf32>
    %812 = vector.extract_strided_slice %809 {offsets = [0, 1, 0], sizes = [8, 8, 32], strides = [1, 1, 1]} : vector<10x10x32xf32> to vector<8x8x32xf32>
    %813 = vector.shape_cast %812 : vector<8x8x32xf32> to vector<64x32xf32>
    %814 = vector.extract_strided_slice %809 {offsets = [0, 2, 0], sizes = [8, 8, 32], strides = [1, 1, 1]} : vector<10x10x32xf32> to vector<8x8x32xf32>
    %815 = vector.shape_cast %814 : vector<8x8x32xf32> to vector<64x32xf32>
    %816 = vector.extract_strided_slice %809 {offsets = [1, 0, 0], sizes = [8, 8, 32], strides = [1, 1, 1]} : vector<10x10x32xf32> to vector<8x8x32xf32>
    %817 = vector.shape_cast %816 : vector<8x8x32xf32> to vector<64x32xf32>
    %818 = vector.extract_strided_slice %809 {offsets = [1, 1, 0], sizes = [8, 8, 32], strides = [1, 1, 1]} : vector<10x10x32xf32> to vector<8x8x32xf32>
    %819 = vector.shape_cast %818 : vector<8x8x32xf32> to vector<64x32xf32>
    %820 = vector.extract_strided_slice %809 {offsets = [1, 2, 0], sizes = [8, 8, 32], strides = [1, 1, 1]} : vector<10x10x32xf32> to vector<8x8x32xf32>
    %821 = vector.shape_cast %820 : vector<8x8x32xf32> to vector<64x32xf32>
    %822 = vector.extract_strided_slice %809 {offsets = [2, 0, 0], sizes = [8, 8, 32], strides = [1, 1, 1]} : vector<10x10x32xf32> to vector<8x8x32xf32>
    %823 = vector.shape_cast %822 : vector<8x8x32xf32> to vector<64x32xf32>
    %824 = vector.extract_strided_slice %809 {offsets = [2, 1, 0], sizes = [8, 8, 32], strides = [1, 1, 1]} : vector<10x10x32xf32> to vector<8x8x32xf32>
    %825 = vector.shape_cast %824 : vector<8x8x32xf32> to vector<64x32xf32>
    %826 = vector.extract_strided_slice %809 {offsets = [2, 2, 0], sizes = [8, 8, 32], strides = [1, 1, 1]} : vector<10x10x32xf32> to vector<8x8x32xf32>
    %827 = vector.shape_cast %826 : vector<8x8x32xf32> to vector<64x32xf32>
    %828 = tpu.concatenate %811, %813, %815, %817, %819, %821, %823, %825, %827 in 1 : vector<64x32xf32>, vector<64x32xf32>, vector<64x32xf32>, vector<64x32xf32>, vector<64x32xf32>, vector<64x32xf32>, vector<64x32xf32>, vector<64x32xf32>, vector<64x32xf32> -> vector<64x288xf32>
    %cst_202 = arith.constant dense<0.000000e+00> : vector<64x16xf32>
    %829 = tpu.matmul %828, %805, %cst_202 {dimension_numbers = #tpu.dot_dimension_numbers<[1], [0], [0], [1], [0, 0, 1, 1], [], []>} : vector<64x288xf32>, vector<288x16xf32>, vector<64x16xf32> -> vector<64x16xf32>
    %830 = vector.shape_cast %829 : vector<64x16xf32> to vector<8x8x16xf32>
    %cst_203 = arith.constant 0.000000e+00 : f32
    %831 = vector.broadcast %cst_203 : f32 to vector<8x8x16xf32>
    %832 = arith.cmpf ogt, %830, %831 : vector<8x8x16xf32>
    %cst_204 = arith.constant 2.000000e-01 : f32
    %833 = vector.broadcast %cst_204 : f32 to vector<8x8x16xf32>
    %834 = arith.mulf %833, %830 : vector<8x8x16xf32>
    %835 = arith.select %832, %830, %834 : vector<8x8x16xi1>, vector<8x8x16xf32>
    %c0_205 = arith.constant 0 : index
    %c0_206 = arith.constant 0 : index
    %836 = vector.load %arg11[%c0_205, %c0_206] : memref<144x2xf32, #tpu.memory_space<vmem>>, vector<144x2xf32>
    %cst_207 = arith.constant 0.000000e+00 : f32
    %837 = vector.broadcast %cst_207 : f32 to vector<8x1x16xf32>
    %838 = tpu.concatenate %837, %835, %837 in 1 : vector<8x1x16xf32>, vector<8x8x16xf32>, vector<8x1x16xf32> -> vector<8x10x16xf32>
    %cst_208 = arith.constant 0.000000e+00 : f32
    %839 = vector.broadcast %cst_208 : f32 to vector<1x10x16xf32>
    %840 = tpu.concatenate %839, %838, %839 in 0 : vector<1x10x16xf32>, vector<8x10x16xf32>, vector<1x10x16xf32> -> vector<10x10x16xf32>
    %841 = vector.extract_strided_slice %840 {offsets = [0, 0, 0], sizes = [8, 8, 16], strides = [1, 1, 1]} : vector<10x10x16xf32> to vector<8x8x16xf32>
    %842 = vector.shape_cast %841 : vector<8x8x16xf32> to vector<64x16xf32>
    %843 = vector.extract_strided_slice %840 {offsets = [0, 1, 0], sizes = [8, 8, 16], strides = [1, 1, 1]} : vector<10x10x16xf32> to vector<8x8x16xf32>
    %844 = vector.shape_cast %843 : vector<8x8x16xf32> to vector<64x16xf32>
    %845 = vector.extract_strided_slice %840 {offsets = [0, 2, 0], sizes = [8, 8, 16], strides = [1, 1, 1]} : vector<10x10x16xf32> to vector<8x8x16xf32>
    %846 = vector.shape_cast %845 : vector<8x8x16xf32> to vector<64x16xf32>
    %847 = vector.extract_strided_slice %840 {offsets = [1, 0, 0], sizes = [8, 8, 16], strides = [1, 1, 1]} : vector<10x10x16xf32> to vector<8x8x16xf32>
    %848 = vector.shape_cast %847 : vector<8x8x16xf32> to vector<64x16xf32>
    %849 = vector.extract_strided_slice %840 {offsets = [1, 1, 0], sizes = [8, 8, 16], strides = [1, 1, 1]} : vector<10x10x16xf32> to vector<8x8x16xf32>
    %850 = vector.shape_cast %849 : vector<8x8x16xf32> to vector<64x16xf32>
    %851 = vector.extract_strided_slice %840 {offsets = [1, 2, 0], sizes = [8, 8, 16], strides = [1, 1, 1]} : vector<10x10x16xf32> to vector<8x8x16xf32>
    %852 = vector.shape_cast %851 : vector<8x8x16xf32> to vector<64x16xf32>
    %853 = vector.extract_strided_slice %840 {offsets = [2, 0, 0], sizes = [8, 8, 16], strides = [1, 1, 1]} : vector<10x10x16xf32> to vector<8x8x16xf32>
    %854 = vector.shape_cast %853 : vector<8x8x16xf32> to vector<64x16xf32>
    %855 = vector.extract_strided_slice %840 {offsets = [2, 1, 0], sizes = [8, 8, 16], strides = [1, 1, 1]} : vector<10x10x16xf32> to vector<8x8x16xf32>
    %856 = vector.shape_cast %855 : vector<8x8x16xf32> to vector<64x16xf32>
    %857 = vector.extract_strided_slice %840 {offsets = [2, 2, 0], sizes = [8, 8, 16], strides = [1, 1, 1]} : vector<10x10x16xf32> to vector<8x8x16xf32>
    %858 = vector.shape_cast %857 : vector<8x8x16xf32> to vector<64x16xf32>
    %859 = tpu.concatenate %842, %844, %846, %848, %850, %852, %854, %856, %858 in 1 : vector<64x16xf32>, vector<64x16xf32>, vector<64x16xf32>, vector<64x16xf32>, vector<64x16xf32>, vector<64x16xf32>, vector<64x16xf32>, vector<64x16xf32>, vector<64x16xf32> -> vector<64x144xf32>
    %cst_209 = arith.constant dense<0.000000e+00> : vector<64x2xf32>
    %860 = tpu.matmul %859, %836, %cst_209 {dimension_numbers = #tpu.dot_dimension_numbers<[1], [0], [0], [1], [0, 0, 1, 1], [], []>} : vector<64x144xf32>, vector<144x2xf32>, vector<64x2xf32> -> vector<64x2xf32>
    %861 = vector.shape_cast %860 : vector<64x2xf32> to vector<8x8x2xf32>
    %862 = math.absf %861 : vector<8x8x2xf32>
    %cst_210 = arith.constant 1.000000e+00 : f32
    %863 = vector.broadcast %cst_210 : f32 to vector<8x8x2xf32>
    %864 = arith.addf %863, %862 : vector<8x8x2xf32>
    %865 = tpu.reciprocal %864 {approx = true} : vector<8x8x2xf32> -> vector<8x8x2xf32>
    %866 = arith.mulf %861, %865 : vector<8x8x2xf32>
    %cst_211 = arith.constant 4.000000e-01 : f32
    %867 = vector.broadcast %cst_211 : f32 to vector<8x8x2xf32>
    %868 = arith.mulf %866, %867 : vector<8x8x2xf32>
    %869 = vector.extract_strided_slice %868 {offsets = [0, 0, 0], sizes = [8, 1, 2], strides = [1, 1, 1]} : vector<8x8x2xf32> to vector<8x1x2xf32>
    %870 = vector.shape_cast %869 : vector<8x1x2xf32> to vector<8x2xf32>
    %871 = vector.extract_strided_slice %868 {offsets = [0, 1, 0], sizes = [8, 1, 2], strides = [1, 1, 1]} : vector<8x8x2xf32> to vector<8x1x2xf32>
    %872 = vector.shape_cast %871 : vector<8x1x2xf32> to vector<8x2xf32>
    %873 = vector.extract_strided_slice %868 {offsets = [0, 2, 0], sizes = [8, 1, 2], strides = [1, 1, 1]} : vector<8x8x2xf32> to vector<8x1x2xf32>
    %874 = vector.shape_cast %873 : vector<8x1x2xf32> to vector<8x2xf32>
    %875 = vector.extract_strided_slice %868 {offsets = [0, 3, 0], sizes = [8, 1, 2], strides = [1, 1, 1]} : vector<8x8x2xf32> to vector<8x1x2xf32>
    %876 = vector.shape_cast %875 : vector<8x1x2xf32> to vector<8x2xf32>
    %877 = vector.extract_strided_slice %868 {offsets = [0, 4, 0], sizes = [8, 1, 2], strides = [1, 1, 1]} : vector<8x8x2xf32> to vector<8x1x2xf32>
    %878 = vector.shape_cast %877 : vector<8x1x2xf32> to vector<8x2xf32>
    %879 = vector.extract_strided_slice %868 {offsets = [0, 5, 0], sizes = [8, 1, 2], strides = [1, 1, 1]} : vector<8x8x2xf32> to vector<8x1x2xf32>
    %880 = vector.shape_cast %879 : vector<8x1x2xf32> to vector<8x2xf32>
    %881 = vector.extract_strided_slice %868 {offsets = [0, 6, 0], sizes = [8, 1, 2], strides = [1, 1, 1]} : vector<8x8x2xf32> to vector<8x1x2xf32>
    %882 = vector.shape_cast %881 : vector<8x1x2xf32> to vector<8x2xf32>
    %883 = vector.extract_strided_slice %868 {offsets = [0, 7, 0], sizes = [8, 1, 2], strides = [1, 1, 1]} : vector<8x8x2xf32> to vector<8x1x2xf32>
    %884 = vector.shape_cast %883 : vector<8x1x2xf32> to vector<8x2xf32>
    %885 = tpu.concatenate %870, %872, %874, %876, %878, %880, %882, %884 in 1 : vector<8x2xf32>, vector<8x2xf32>, vector<8x2xf32>, vector<8x2xf32>, vector<8x2xf32>, vector<8x2xf32>, vector<8x2xf32>, vector<8x2xf32> -> vector<8x16xf32>
    %c0_212 = arith.constant 0 : index
    %c0_213 = arith.constant 0 : index
    %c0_214 = arith.constant 0 : index
    %886 = vector.load %arg12[%c0_212, %c0_213, %c0_214] : memref<1x8x16xf32, #tpu.memory_space<vmem>>, vector<1x8x16xf32>
    %887 = vector.shape_cast %886 : vector<1x8x16xf32> to vector<8x16xf32>
    %888 = vector.shape_cast %885 : vector<8x16xf32> to vector<1x8x16xf32>
    tpu.vector_store %arg12[%c0_212, %c0_213, %c0_214], %888 {strides = array<i32>} : memref<1x8x16xf32, #tpu.memory_space<vmem>>, vector<1x8x16xf32>,
    return
  }
  func.func @transform_0(%arg0: i32) -> (i32, i32, i32, i32) {
    %c0_i32 = arith.constant 0 : i32
    %c0_i32_0 = arith.constant 0 : i32
    %c0_i32_1 = arith.constant 0 : i32
    %c0_i32_2 = arith.constant 0 : i32
    return %arg0, %c0_i32, %c0_i32_0, %c0_i32_1 : i32, i32, i32, i32
  }
  func.func @transform_1(%arg0: i32) -> (i32, i32, i32, i32) {
    %c0_i32 = arith.constant 0 : i32
    %c0_i32_0 = arith.constant 0 : i32
    %c0_i32_1 = arith.constant 0 : i32
    %c0_i32_2 = arith.constant 0 : i32
    return %arg0, %c0_i32, %c0_i32_0, %c0_i32_1 : i32, i32, i32, i32
  }
  func.func @transform_2(%arg0: i32) -> (i32, i32) {
    %c0_i32 = arith.constant 0 : i32
    %c0_i32_0 = arith.constant 0 : i32
    %c0_i32_1 = arith.constant 0 : i32
    return %c0_i32, %c0_i32_0 : i32, i32
  }
  func.func @transform_3(%arg0: i32) -> (i32, i32) {
    %c0_i32 = arith.constant 0 : i32
    %c0_i32_0 = arith.constant 0 : i32
    %c0_i32_1 = arith.constant 0 : i32
    return %c0_i32, %c0_i32_0 : i32, i32
  }
  func.func @transform_4(%arg0: i32) -> (i32, i32) {
    %c0_i32 = arith.constant 0 : i32
    %c0_i32_0 = arith.constant 0 : i32
    %c0_i32_1 = arith.constant 0 : i32
    return %c0_i32, %c0_i32_0 : i32, i32
  }
  func.func @transform_5(%arg0: i32) -> (i32, i32) {
    %c0_i32 = arith.constant 0 : i32
    %c0_i32_0 = arith.constant 0 : i32
    %c0_i32_1 = arith.constant 0 : i32
    return %c0_i32, %c0_i32_0 : i32, i32
  }
  func.func @transform_6(%arg0: i32) -> (i32, i32) {
    %c0_i32 = arith.constant 0 : i32
    %c0_i32_0 = arith.constant 0 : i32
    %c0_i32_1 = arith.constant 0 : i32
    return %c0_i32, %c0_i32_0 : i32, i32
  }
  func.func @transform_7(%arg0: i32) -> (i32, i32, i32, i32) {
    %c0_i32 = arith.constant 0 : i32
    %c0_i32_0 = arith.constant 0 : i32
    %c0_i32_1 = arith.constant 0 : i32
    %c0_i32_2 = arith.constant 0 : i32
    %c0_i32_3 = arith.constant 0 : i32
    return %c0_i32, %c0_i32_0, %c0_i32_1, %c0_i32_2 : i32, i32, i32, i32
  }
  func.func @transform_8(%arg0: i32) -> (i32, i32) {
    %c0_i32 = arith.constant 0 : i32
    %c0_i32_0 = arith.constant 0 : i32
    %c0_i32_1 = arith.constant 0 : i32
    return %c0_i32, %c0_i32_0 : i32, i32
  }
  func.func @transform_9(%arg0: i32) -> (i32, i32) {
    %c0_i32 = arith.constant 0 : i32
    %c0_i32_0 = arith.constant 0 : i32
    %c0_i32_1 = arith.constant 0 : i32
    return %c0_i32, %c0_i32_0 : i32, i32
  }
  func.func @transform_10(%arg0: i32) -> (i32, i32) {
    %c0_i32 = arith.constant 0 : i32
    %c0_i32_0 = arith.constant 0 : i32
    %c0_i32_1 = arith.constant 0 : i32
    return %c0_i32, %c0_i32_0 : i32, i32
  }
  func.func @transform_11(%arg0: i32) -> (i32, i32, i32) {
    %c0_i32 = arith.constant 0 : i32
    %c0_i32_0 = arith.constant 0 : i32
    %c0_i32_1 = arith.constant 0 : i32
    return %arg0, %c0_i32, %c0_i32_0 : i32, i32, i32
  }
  func.func @transform_12(%arg0: i32) -> (i32, i32, i32) {
    %c0_i32 = arith.constant 0 : i32
    %c0_i32_0 = arith.constant 0 : i32
    %c0_i32_1 = arith.constant 0 : i32
    return %arg0, %c0_i32, %c0_i32_0 : i32, i32, i32
  }
}

</mosaic_0001>

<llo_original>
// kernel: csain_disp_lvl1_forward.1
$region0: #{csain_disp_lvl1_forward.1}
  #allocation0 [shape = 'u32[]', space=smem, size = 0x4, offset = 0x4, fixed_abs, tag = 'smem constant byte address 0x4 - core index']
  #allocation1 [shape = 'u32[144,128]{1,0:T(1,128)}', space=vmem, size = 0x12000, scoped, tag = 'internal scratch']
  %s0 = inlined_call_operand.vmem [shape: f32[2,8,8,2], index: 0, kind: input, shape index: {}]
  %s1 = inlined_call_operand.vmem [shape: f32[2,4,4,2], index: 1, kind: input, shape index: {}]
  %s2 = inlined_call_operand.vmem [shape: f32[18,16], index: 2, kind: input, shape index: {}]
  %s3 = inlined_call_operand.vmem [shape: f32[144,16], index: 3, kind: input, shape index: {}]
  %s4 = inlined_call_operand.vmem [shape: f32[144,16], index: 4, kind: input, shape index: {}]
  %s5 = inlined_call_operand.vmem [shape: f32[18,8], index: 5, kind: input, shape index: {}]
  %s6 = inlined_call_operand.vmem [shape: f32[72,320], index: 6, kind: input, shape index: {}]
  %s7 = inlined_call_operand.vmem [shape: f32[5,2,144,16], index: 7, kind: input, shape index: {}]
  %s8 = inlined_call_operand.vmem [shape: f32[16,64], index: 8, kind: input, shape index: {}]
  %s9 = inlined_call_operand.vmem [shape: f32[288,16], index: 9, kind: input, shape index: {}]
  %s10 = inlined_call_operand.vmem [shape: f32[144,2], index: 10, kind: input, shape index: {}]
  %s11 = inlined_call_operand.vmem [shape: f32[2,8,16], index: 11, kind: output, shape index: {0}]
  %s12 = inlined_call_operand.vmem [shape: f32[2,8,128], index: 12, kind: output, shape index: {1}]
  %13 = xla_tuple %s11, %s12
  %s14 = sld [smem:[#allocation0]]
  $region85: #{csain_disp_lvl1_forward.1} parent=0
    _
  %s16 = ssub.s32 1, %s14
  %s17 = scalar_select 0, %s16, %s14
  loop: start=0, step=1, limit=4
  $region2: #{csain_disp_lvl1_forward.1} parent=0 // loop_pre_header
    _
  $region3: #{csain_disp_lvl1_forward.1} parent=0 // loop_header
    %s19 = sphi 0, %s23
    %p20 = scmp.ge.s32.totalorder %s19, 4
    %s29 = sphi 0, %s31
    %s32 = sphi 0, %s29
    %s33 = sphi 0, %s32
    %s49 = sphi 0, %s33
    %s55 = sphi 0, %s57
    %s58 = sphi 0, %s55
    %s59 = sphi 0, %s58
    %s75 = sphi 0, %s59
    %s79 = sphi 0, %s79
    %s81 = sphi 0, %s79
    %s82 = sphi 0, %s81
    %s96 = sphi 0, %s82
    %s100 = sphi 0, %s100
    %s102 = sphi 0, %s100
    %s103 = sphi 0, %s102
    %s117 = sphi 0, %s103
    %s121 = sphi 0, %s121
    %s123 = sphi 0, %s121
    %s124 = sphi 0, %s123
    %s138 = sphi 0, %s124
    %s142 = sphi 0, %s142
    %s144 = sphi 0, %s142
    %s145 = sphi 0, %s144
    %s159 = sphi 0, %s145
    %s163 = sphi 0, %s163
    %s165 = sphi 0, %s163
    %s166 = sphi 0, %s165
    %s180 = sphi 0, %s166
    %s184 = sphi 0, %s184
    %s186 = sphi 0, %s184
    %s187 = sphi 0, %s186
    %s201 = sphi 0, %s187
    %s205 = sphi 0, %s205
    %s207 = sphi 0, %s205
    %s208 = sphi 0, %s207
    %s222 = sphi 0, %s208
    %s226 = sphi 0, %s226
    %s228 = sphi 0, %s226
    %s229 = sphi 0, %s228
    %s243 = sphi 0, %s229
    %s247 = sphi 0, %s247
    %s249 = sphi 0, %s247
    %s250 = sphi 0, %s249
    %s264 = sphi 0, %s250
    %s270 = sphi 0, %s272
    %s273 = sphi 0, %s270
    %s274 = sphi 0, %s273
    %s290 = sphi 0, %s274
    %s296 = sphi 0, %s298
    %s299 = sphi 0, %s296
    %s300 = sphi 0, %s299
    %s316 = sphi 0, %s300
  $region4: #{csain_disp_lvl1_forward.1} parent=0 // loop_header_branch
    %22 = sbr.rel (%p20) target = $region8
  $region5: #{csain_disp_lvl1_forward.1} parent=0 // loop_body
    %s24 = ssub.s32 %s19, 1
    %s25 = ssub.s32 %s19, 2
    %s26 = sadd.s32 %s19, 1
    %s27 = ssub.s32 %s19, %s26
    %p28 = scmp.eq.s32.totalorder %s27, 0
    %s30 = sadd.s32 %s29, 1
    %s31 = scalar_select %p28, %s29, %s30
    %p34 = pneg %p28
    %p35 = scmp.eq.s32.totalorder %s19, 1
    %p36 = por %p34, %p35
    %p37 = scmp.ne.s32.totalorder %s29, %s32
    %p38 = scmp.eq.s32.totalorder %s19, 0
    %p39 = por %p37, %p38
    %p40 = scmp.ne.s32.totalorder %s29, %s32
    %p41 = scmp.eq.s32.totalorder %s24, 1
    %p42 = por %p40, %p41
    %p43 = scmp.ne.s32.totalorder %s32, %s33
    %p44 = scmp.eq.s32.totalorder %s24, 0
    %p45 = por %p43, %p44
    %p46 = scmp.ne.s32.totalorder %s32, %s33
    %p47 = scmp.eq.s32.totalorder %s25, 1
    %p48 = por %p46, %p47
    %p50 = scmp.ne.s32.totalorder %s33, %s49
    %p51 = scmp.eq.s32.totalorder %s25, 0
    %p52 = por %p50, %p51
    %s53 = ssub.s32 %s19, %s26
    %p54 = scmp.eq.s32.totalorder %s53, 0
    %s56 = sadd.s32 %s55, 1
    %s57 = scalar_select %p54, %s55, %s56
    %p60 = pneg %p54
    %p61 = scmp.eq.s32.totalorder %s19, 1
    %p62 = por %p60, %p61
    %p63 = scmp.ne.s32.totalorder %s55, %s58
    %p64 = scmp.eq.s32.totalorder %s19, 0
    %p65 = por %p63, %p64
    %p66 = scmp.ne.s32.totalorder %s55, %s58
    %p67 = scmp.eq.s32.totalorder %s24, 1
    %p68 = por %p66, %p67
    %p69 = scmp.ne.s32.totalorder %s58, %s59
    %p70 = scmp.eq.s32.totalorder %s24, 0
    %p71 = por %p69, %p70
    %p72 = scmp.ne.s32.totalorder %s58, %s59
    %p73 = scmp.eq.s32.totalorder %s25, 1
    %p74 = por %p72, %p73
    %p76 = scmp.ne.s32.totalorder %s59, %s75
    %p77 = scmp.eq.s32.totalorder %s25, 0
    %p78 = por %p76, %p77
    %s80 = sadd.s32 %s79, 1
    %p83 = scmp.eq.s32.totalorder %s19, 1
    %p84 = scmp.ne.s32.totalorder %s79, %s81
    %p85 = scmp.eq.s32.totalorder %s19, 0
    %p86 = por %p84, %p85
    %p87 = scmp.ne.s32.totalorder %s79, %s81
    %p88 = scmp.eq.s32.totalorder %s24, 1
    %p89 = por %p87, %p88
    %p90 = scmp.ne.s32.totalorder %s81, %s82
    %p91 = scmp.eq.s32.totalorder %s24, 0
    %p92 = por %p90, %p91
    %p93 = scmp.ne.s32.totalorder %s81, %s82
    %p94 = scmp.eq.s32.totalorder %s25, 1
    %p95 = por %p93, %p94
    %p97 = scmp.ne.s32.totalorder %s82, %s96
    %p98 = scmp.eq.s32.totalorder %s25, 0
    %p99 = por %p97, %p98
    %s101 = sadd.s32 %s100, 1
    %p104 = scmp.eq.s32.totalorder %s19, 1
    %p105 = scmp.ne.s32.totalorder %s100, %s102
    %p106 = scmp.eq.s32.totalorder %s19, 0
    %p107 = por %p105, %p106
    %p108 = scmp.ne.s32.totalorder %s100, %s102
    %p109 = scmp.eq.s32.totalorder %s24, 1
    %p110 = por %p108, %p109
    %p111 = scmp.ne.s32.totalorder %s102, %s103
    %p112 = scmp.eq.s32.totalorder %s24, 0
    %p113 = por %p111, %p112
    %p114 = scmp.ne.s32.totalorder %s102, %s103
    %p115 = scmp.eq.s32.totalorder %s25, 1
    %p116 = por %p114, %p115
    %p118 = scmp.ne.s32.totalorder %s103, %s117
    %p119 = scmp.eq.s32.totalorder %s25, 0
    %p120 = por %p118, %p119
    %s122 = sadd.s32 %s121, 1
    %p125 = scmp.eq.s32.totalorder %s19, 1
    %p126 = scmp.ne.s32.totalorder %s121, %s123
    %p127 = scmp.eq.s32.totalorder %s19, 0
    %p128 = por %p126, %p127
    %p129 = scmp.ne.s32.totalorder %s121, %s123
    %p130 = scmp.eq.s32.totalorder %s24, 1
    %p131 = por %p129, %p130
    %p132 = scmp.ne.s32.totalorder %s123, %s124
    %p133 = scmp.eq.s32.totalorder %s24, 0
    %p134 = por %p132, %p133
    %p135 = scmp.ne.s32.totalorder %s123, %s124
    %p136 = scmp.eq.s32.totalorder %s25, 1
    %p137 = por %p135, %p136
    %p139 = scmp.ne.s32.totalorder %s124, %s138
    %p140 = scmp.eq.s32.totalorder %s25, 0
    %p141 = por %p139, %p140
    %s143 = sadd.s32 %s142, 1
    %p146 = scmp.eq.s32.totalorder %s19, 1
    %p147 = scmp.ne.s32.totalorder %s142, %s144
    %p148 = scmp.eq.s32.totalorder %s19, 0
    %p149 = por %p147, %p148
    %p150 = scmp.ne.s32.totalorder %s142, %s144
    %p151 = scmp.eq.s32.totalorder %s24, 1
    %p152 = por %p150, %p151
    %p153 = scmp.ne.s32.totalorder %s144, %s145
    %p154 = scmp.eq.s32.totalorder %s24, 0
    %p155 = por %p153, %p154
    %p156 = scmp.ne.s32.totalorder %s144, %s145
    %p157 = scmp.eq.s32.totalorder %s25, 1
    %p158 = por %p156, %p157
    %p160 = scmp.ne.s32.totalorder %s145, %s159
    %p161 = scmp.eq.s32.totalorder %s25, 0
    %p162 = por %p160, %p161
    %s164 = sadd.s32 %s163, 1
    %p167 = scmp.eq.s32.totalorder %s19, 1
    %p168 = scmp.ne.s32.totalorder %s163, %s165
    %p169 = scmp.eq.s32.totalorder %s19, 0
    %p170 = por %p168, %p169
    %p171 = scmp.ne.s32.totalorder %s163, %s165
    %p172 = scmp.eq.s32.totalorder %s24, 1
    %p173 = por %p171, %p172
    %p174 = scmp.ne.s32.totalorder %s165, %s166
    %p175 = scmp.eq.s32.totalorder %s24, 0
    %p176 = por %p174, %p175
    %p177 = scmp.ne.s32.totalorder %s165, %s166
    %p178 = scmp.eq.s32.totalorder %s25, 1
    %p179 = por %p177, %p178
    %p181 = scmp.ne.s32.totalorder %s166, %s180
    %p182 = scmp.eq.s32.totalorder %s25, 0
    %p183 = por %p181, %p182
    %s185 = sadd.s32 %s184, 1
    %p188 = scmp.eq.s32.totalorder %s19, 1
    %p189 = scmp.ne.s32.totalorder %s184, %s186
    %p190 = scmp.eq.s32.totalorder %s19, 0
    %p191 = por %p189, %p190
    %p192 = scmp.ne.s32.totalorder %s184, %s186
    %p193 = scmp.eq.s32.totalorder %s24, 1
    %p194 = por %p192, %p193
    %p195 = scmp.ne.s32.totalorder %s186, %s187
    %p196 = scmp.eq.s32.totalorder %s24, 0
    %p197 = por %p195, %p196
    %p198 = scmp.ne.s32.totalorder %s186, %s187
    %p199 = scmp.eq.s32.totalorder %s25, 1
    %p200 = por %p198, %p199
    %p202 = scmp.ne.s32.totalorder %s187, %s201
    %p203 = scmp.eq.s32.totalorder %s25, 0
    %p204 = por %p202, %p203
    %s206 = sadd.s32 %s205, 1
    %p209 = scmp.eq.s32.totalorder %s19, 1
    %p210 = scmp.ne.s32.totalorder %s205, %s207
    %p211 = scmp.eq.s32.totalorder %s19, 0
    %p212 = por %p210, %p211
    %p213 = scmp.ne.s32.totalorder %s205, %s207
    %p214 = scmp.eq.s32.totalorder %s24, 1
    %p215 = por %p213, %p214
    %p216 = scmp.ne.s32.totalorder %s207, %s208
    %p217 = scmp.eq.s32.totalorder %s24, 0
    %p218 = por %p216, %p217
    %p219 = scmp.ne.s32.totalorder %s207, %s208
    %p220 = scmp.eq.s32.totalorder %s25, 1
    %p221 = por %p219, %p220
    %p223 = scmp.ne.s32.totalorder %s208, %s222
    %p224 = scmp.eq.s32.totalorder %s25, 0
    %p225 = por %p223, %p224
    %s227 = sadd.s32 %s226, 1
    %p230 = scmp.eq.s32.totalorder %s19, 1
    %p231 = scmp.ne.s32.totalorder %s226, %s228
    %p232 = scmp.eq.s32.totalorder %s19, 0
    %p233 = por %p231, %p232
    %p234 = scmp.ne.s32.totalorder %s226, %s228
    %p235 = scmp.eq.s32.totalorder %s24, 1
    %p236 = por %p234, %p235
    %p237 = scmp.ne.s32.totalorder %s228, %s229
    %p238 = scmp.eq.s32.totalorder %s24, 0
    %p239 = por %p237, %p238
    %p240 = scmp.ne.s32.totalorder %s228, %s229
    %p241 = scmp.eq.s32.totalorder %s25, 1
    %p242 = por %p240, %p241
    %p244 = scmp.ne.s32.totalorder %s229, %s243
    %p245 = scmp.eq.s32.totalorder %s25, 0
    %p246 = por %p244, %p245
    %s248 = sadd.s32 %s247, 1
    %p251 = scmp.eq.s32.totalorder %s19, 1
    %p252 = scmp.ne.s32.totalorder %s247, %s249
    %p253 = scmp.eq.s32.totalorder %s19, 0
    %p254 = por %p252, %p253
    %p255 = scmp.ne.s32.totalorder %s247, %s249
    %p256 = scmp.eq.s32.totalorder %s24, 1
    %p257 = por %p255, %p256
    %p258 = scmp.ne.s32.totalorder %s249, %s250
    %p259 = scmp.eq.s32.totalorder %s24, 0
    %p260 = por %p258, %p259
    %p261 = scmp.ne.s32.totalorder %s249, %s250
    %p262 = scmp.eq.s32.totalorder %s25, 1
    %p263 = por %p261, %p262
    %p265 = scmp.ne.s32.totalorder %s250, %s264
    %p266 = scmp.eq.s32.totalorder %s25, 0
    %p267 = por %p265, %p266
    %s268 = ssub.s32 %s19, %s26
    %p269 = scmp.eq.s32.totalorder %s268, 0
    %s271 = sadd.s32 %s270, 1
    %s272 = scalar_select %p269, %s270, %s271
    %p275 = pneg %p269
    %p276 = scmp.eq.s32.totalorder %s19, 1
    %p277 = por %p275, %p276
    %p278 = scmp.ne.s32.totalorder %s270, %s273
    %p279 = scmp.eq.s32.totalorder %s19, 0
    %p280 = por %p278, %p279
    %p281 = scmp.ne.s32.totalorder %s270, %s273
    %p282 = scmp.eq.s32.totalorder %s24, 1
    %p283 = por %p281, %p282
    %p284 = scmp.ne.s32.totalorder %s273, %s274
    %p285 = scmp.eq.s32.totalorder %s24, 0
    %p286 = por %p284, %p285
    %p287 = scmp.ne.s32.totalorder %s273, %s274
    %p288 = scmp.eq.s32.totalorder %s25, 1
    %p289 = por %p287, %p288
    %p291 = scmp.ne.s32.totalorder %s274, %s290
    %p292 = scmp.eq.s32.totalorder %s25, 0
    %p293 = por %p291, %p292
    %s294 = ssub.s32 %s19, %s26
    %p295 = scmp.eq.s32.totalorder %s294, 0
    %s297 = sadd.s32 %s296, 1
    %s298 = scalar_select %p295, %s296, %s297
    %p301 = pneg %p295
    %p302 = scmp.eq.s32.totalorder %s19, 1
    %p303 = por %p301, %p302
    %p304 = scmp.ne.s32.totalorder %s296, %s299
    %p305 = scmp.eq.s32.totalorder %s19, 0
    %p306 = por %p304, %p305
    %p307 = scmp.ne.s32.totalorder %s296, %s299
    %p308 = scmp.eq.s32.totalorder %s24, 1
    %p309 = por %p307, %p308
    %p310 = scmp.ne.s32.totalorder %s299, %s300
    %p311 = scmp.eq.s32.totalorder %s24, 0
    %p312 = por %p310, %p311
    %p313 = scmp.ne.s32.totalorder %s299, %s300
    %p314 = scmp.eq.s32.totalorder %s25, 1
    %p315 = por %p313, %p314
    %p317 = scmp.ne.s32.totalorder %s300, %s316
    %p318 = scmp.eq.s32.totalorder %s25, 0
    %p319 = por %p317, %p318
    %p320 = scmp.le.s32.totalorder 1, %s19
    %p321 = scmp.lt.s32.totalorder %s19, 3
    %p322 = pnand %p320, %p321
    %p323 = pneg %p322
    // Predicated region
    $region9: #{csain_disp_lvl1_forward.1} parent=5 // pred_check
      _
    $region10: #{csain_disp_lvl1_forward.1} parent=5 // pred_check_branch
      %325 = sbr.rel (%p322) target = $region12
    $region11: #{csain_disp_lvl1_forward.1} parent=5 // pred_region
      %s326 = ssub.s32 %s19, 1
      // Predicated region
      $region13: #{csain_disp_lvl1_forward.1} parent=11 // pred_check
        %p327 = pneg %p92
      $region14: #{csain_disp_lvl1_forward.1} parent=11 // pred_check_branch
        %329 = sbr.rel (%p327) target = $region16
      $region15: #{csain_disp_lvl1_forward.1} parent=11 // pred_region
        _
      $region16: #{csain_disp_lvl1_forward.1} parent=11 // pred_fallthru
        _
      // Predicated region
      $region17: #{csain_disp_lvl1_forward.1} parent=11 // pred_check
        %p330 = pneg %p113
      $region18: #{csain_disp_lvl1_forward.1} parent=11 // pred_check_branch
        %332 = sbr.rel (%p330) target = $region20
      $region19: #{csain_disp_lvl1_forward.1} parent=11 // pred_region
        _
      $region20: #{csain_disp_lvl1_forward.1} parent=11 // pred_fallthru
        _
      // Predicated region
      $region21: #{csain_disp_lvl1_forward.1} parent=11 // pred_check
        %p333 = pneg %p134
      $region22: #{csain_disp_lvl1_forward.1} parent=11 // pred_check_branch
        %335 = sbr.rel (%p333) target = $region24
      $region23: #{csain_disp_lvl1_forward.1} parent=11 // pred_region
        _
      $region24: #{csain_disp_lvl1_forward.1} parent=11 // pred_fallthru
        _
      // Predicated region
      $region25: #{csain_disp_lvl1_forward.1} parent=11 // pred_check
        %p336 = pneg %p155
      $region26: #{csain_disp_lvl1_forward.1} parent=11 // pred_check_branch
        %338 = sbr.rel (%p336) target = $region28
      $region27: #{csain_disp_lvl1_forward.1} parent=11 // pred_region
        _
      $region28: #{csain_disp_lvl1_forward.1} parent=11 // pred_fallthru
        _
      // Predicated region
      $region29: #{csain_disp_lvl1_forward.1} parent=11 // pred_check
        %p339 = pneg %p176
      $region30: #{csain_disp_lvl1_forward.1} parent=11 // pred_check_branch
        %341 = sbr.rel (%p339) target = $region32
      $region31: #{csain_disp_lvl1_forward.1} parent=11 // pred_region
        _
      $region32: #{csain_disp_lvl1_forward.1} parent=11 // pred_fallthru
        _
      // Predicated region
      $region33: #{csain_disp_lvl1_forward.1} parent=11 // pred_check
        %p342 = pneg %p197
      $region34: #{csain_disp_lvl1_forward.1} parent=11 // pred_check_branch
        %344 = sbr.rel (%p342) target = $region36
      $region35: #{csain_disp_lvl1_forward.1} parent=11 // pred_region
        _
      $region36: #{csain_disp_lvl1_forward.1} parent=11 // pred_fallthru
        _
      // Predicated region
      $region37: #{csain_disp_lvl1_forward.1} parent=11 // pred_check
        %p345 = pneg %p218
      $region38: #{csain_disp_lvl1_forward.1} parent=11 // pred_check_branch
        %347 = sbr.rel (%p345) target = $region40
      $region39: #{csain_disp_lvl1_forward.1} parent=11 // pred_region
        _
      $region40: #{csain_disp_lvl1_forward.1} parent=11 // pred_fallthru
        _
      // Predicated region
      $region41: #{csain_disp_lvl1_forward.1} parent=11 // pred_check
        %p348 = pneg %p239
      $region42: #{csain_disp_lvl1_forward.1} parent=11 // pred_check_branch
        %350 = sbr.rel (%p348) target = $region44
      $region43: #{csain_disp_lvl1_forward.1} parent=11 // pred_region
        _
      $region44: #{csain_disp_lvl1_forward.1} parent=11 // pred_fallthru
        _
      // Predicated region
      $region45: #{csain_disp_lvl1_forward.1} parent=11 // pred_check
        %p351 = pneg %p260
      $region46: #{csain_disp_lvl1_forward.1} parent=11 // pred_check_branch
        %353 = sbr.rel (%p351) target = $region48
      $region47: #{csain_disp_lvl1_forward.1} parent=11 // pred_region
        _
      $region48: #{csain_disp_lvl1_forward.1} parent=11 // pred_fallthru
        _
    $region12: #{csain_disp_lvl1_forward.1} parent=5 // pred_fallthru
      _
    %p354 = scmp.lt.s32.totalorder %s19, 2
    // Predicated region
    $region49: #{csain_disp_lvl1_forward.1} parent=5 // pred_check
      %p355 = pneg %p354
    $region50: #{csain_disp_lvl1_forward.1} parent=5 // pred_check_branch
      %357 = sbr.rel (%p355) target = $region52
    $region51: #{csain_disp_lvl1_forward.1} parent=5 // pred_region
      // Predicated region
      $region53: #{csain_disp_lvl1_forward.1} parent=51 // pred_check
        %p358 = pneg %p39
      $region54: #{csain_disp_lvl1_forward.1} parent=51 // pred_check_branch
        %360 = sbr.rel (%p358) target = $region56
      $region55: #{csain_disp_lvl1_forward.1} parent=51 // pred_region
        %p361 = scmp.lt.s32.totalorder %s19, 1
        %s362 = scalar_select %p361, %s19, 1
        %s363 = smul.addr %s362, 8
        %s364 = smul.addr %s363, 8
        %s365 = scalar_lea.vmem %s0, %s364
      $region56: #{csain_disp_lvl1_forward.1} parent=51 // pred_fallthru
        _
      // Predicated region
      $region57: #{csain_disp_lvl1_forward.1} parent=51 // pred_check
        %p366 = pneg %p65
      $region58: #{csain_disp_lvl1_forward.1} parent=51 // pred_check_branch
        %368 = sbr.rel (%p366) target = $region60
      $region59: #{csain_disp_lvl1_forward.1} parent=51 // pred_region
        %p369 = scmp.lt.s32.totalorder %s19, 1
        %s370 = scalar_select %p369, %s19, 1
        %s371 = smul.addr %s370, 4
        %s372 = smul.addr %s371, 4
        %s373 = scalar_lea.vmem %s1, %s372
      $region60: #{csain_disp_lvl1_forward.1} parent=51 // pred_fallthru
        _
    $region52: #{csain_disp_lvl1_forward.1} parent=5 // pred_fallthru
      _
    %p374 = scmp.le.s32.totalorder 1, %s19
    %p375 = scmp.lt.s32.totalorder %s19, 3
    %p376 = pnand %p374, %p375
    %p377 = pneg %p376
    // Predicated region
    $region61: #{csain_disp_lvl1_forward.1} parent=5 // pred_check
      _
    $region62: #{csain_disp_lvl1_forward.1} parent=5 // pred_check_branch
      %379 = sbr.rel (%p376) target = $region64
    $region63: #{csain_disp_lvl1_forward.1} parent=5 // pred_region
      %s380 = ssub.s32 %s19, 1
      %p381 = scmp.lt.s32.totalorder %s24, 1
      %s382 = scalar_select %p381, %s24, 1
      %s383 = smul.addr %s382, 8
      %s384 = smul.addr %s383, 8
      %s385 = scalar_lea.vmem %s0, %s384
      %p386 = pneg %p45
      %p387 = pneg %p42
      %p388 = scmp.lt.s32.totalorder %s24, 1
      %s389 = scalar_select %p388, %s24, 1
      %s390 = smul.addr %s389, 4
      %s391 = smul.addr %s390, 4
      %s392 = scalar_lea.vmem %s1, %s391
      %p393 = pneg %p71
      %p394 = pneg %p68
      %p395 = pneg %p92
      %p396 = pneg %p89
      %p397 = pneg %p113
      %p398 = pneg %p110
      %p399 = pneg %p134
      %p400 = pneg %p131
      %p401 = pneg %p155
      %p402 = pneg %p152
      %p403 = pneg %p176
      %p404 = pneg %p173
      %p405 = pneg %p197
      %p406 = pneg %p194
      %p407 = pneg %p218
      %p408 = pneg %p215
      %p409 = pneg %p239
      %p410 = pneg %p236
      %p411 = pneg %p260
      %p412 = pneg %p257
      %p413 = pneg %p286
      %p414 = pneg %p283
      %p415 = scmp.lt.s32.totalorder %s24, 1
      %s416 = scalar_select %p415, %s24, 1
      %s417 = smul.addr %s416, 8
      %s418 = scalar_lea.vmem %s11, %s417
      %p419 = pneg %p312
      %p420 = pneg %p309
      %p421 = scmp.lt.s32.totalorder %s24, 1
      %s422 = scalar_select %p421, %s24, 1
      %s423 = smul.addr %s422, 8
      %s424 = scalar_lea.vmem %s12, %s423
      %p425 = scmp.lt.s32.totalorder %s24, 1
      %s426 = scalar_select %p425, %s24, 1
      %s427 = smul.addr %s426, 8
      %s428 = smul.addr %s427, 8
      %s429 = scalar_lea.vmem %s0, %s428
      %p430 = scmp.lt.s32.totalorder %s24, 1
      %s431 = scalar_select %p430, %s24, 1
      %s432 = smul.addr %s431, 4
      %s433 = smul.addr %s432, 4
      %s434 = scalar_lea.vmem %s1, %s433
      %p435 = scmp.lt.s32.totalorder %s24, 1
      %s436 = scalar_select %p435, %s24, 1
      %s437 = smul.addr %s436, 8
      %s438 = scalar_lea.vmem %s11, %s437
      %p439 = scmp.lt.s32.totalorder %s24, 1
      %s440 = scalar_select %p439, %s24, 1
      %s441 = smul.addr %s440, 8
      %s442 = scalar_lea.vmem %s12, %s441
      %v443 = vld [vmem:[%s429] sm:$0xff]
      %v444 = vld [vmem:[%s429 + $0x8] sm:$0xff]
      %v445 = vld [vmem:[%s429 + $0x10] sm:$0xff]
      %v446 = vld [vmem:[%s429 + $0x18] sm:$0xff]
      %v447 = vld [vmem:[%s429 + $0x20] sm:$0xff]
      %v448 = vld [vmem:[%s429 + $0x28] sm:$0xff]
      %v449 = vld [vmem:[%s429 + $0x30] sm:$0xff]
      %v450 = vld [vmem:[%s429 + $0x38] sm:$0xff]
      %v451 = vld [vmem:[%s434] sm:$0xf]
      %v452 = vld [vmem:[%s434 + $0x4] sm:$0xf]
      %v453 = vld [vmem:[%s434 + $0x8] sm:$0xf]
      %v454 = vld [vmem:[%s434 + $0xc] sm:$0xf]
      %v455 = vld [vmem:[%s2] sm:$0xff]
      %v456 = vld [vmem:[%s2 + $0x8] sm:$0xff]
      %v457 = vld [vmem:[%s2 + $0x10] sm:$0x3]
      %v466 = vrot.slane %v443, 7
      %v467 = vrot.slane %v444, 7
      %v468 = vrot.slane %v445, 7
      %v469 = vrot.slane %v446, 7
      %v470 = vrot.slane %v447, 7
      %v471 = vrot.slane %v448, 7
      %v472 = vrot.slane %v449, 7
      %v473 = vrot.slane %v450, 7
      %vm482 = vcmask 1040384
      %v483 = vsel %vm482, 0.0, %v466
      %v484 = vsel %vm482, 0.0, %v467
      %v485 = vsel %vm482, 0.0, %v468
      %v486 = vsel %vm482, 0.0, %v469
      %v487 = vsel %vm482, 0.0, %v470
      %v488 = vsel %vm482, 0.0, %v471
      %v489 = vsel %vm482, 0.0, %v472
      %v490 = vsel %vm482, 0.0, %v473
      %v491 = vsel %vm482, %v466, 0.0
      %v492 = vsel %vm482, %v467, 0.0
      %v493 = vsel %vm482, %v468, 0.0
      %v494 = vsel %vm482, %v469, 0.0
      %v495 = vsel %vm482, %v470, 0.0
      %v496 = vsel %vm482, %v471, 0.0
      %v497 = vsel %vm482, %v472, 0.0
      %v498 = vsel %vm482, %v473, 0.0
      %vm514 = vcmask 1046528
      %v515 = vrot.slane 0.0, 1
      %v516 = vsel %vm514, %v515, %v515
      %v517 = vrot.slane %v483, 1
      %v518 = vrot.slane %v491, 1
      %v519 = vsel %vm514, %v517, %v518
      %v520 = vrot.slane %v484, 1
      %v521 = vrot.slane %v492, 1
      %v522 = vsel %vm514, %v520, %v521
      %v523 = vrot.slane %v485, 1
      %v524 = vrot.slane %v493, 1
      %v525 = vsel %vm514, %v523, %v524
      %v526 = vrot.slane %v486, 1
      %v527 = vrot.slane %v494, 1
      %v528 = vsel %vm514, %v526, %v527
      %v529 = vrot.slane %v487, 1
      %v530 = vrot.slane %v495, 1
      %v531 = vsel %vm514, %v529, %v530
      %v532 = vrot.slane %v488, 1
      %v533 = vrot.slane %v496, 1
      %v534 = vsel %vm514, %v532, %v533
      %v535 = vrot.slane %v489, 1
      %v536 = vrot.slane %v497, 1
      %v537 = vsel %vm514, %v535, %v536
      %vm538 = vcmask 1045504
      %v539 = vrot.slane 0.0, 2
      %v540 = vsel %vm538, %v539, %v539
      %v541 = vrot.slane %v483, 2
      %v542 = vrot.slane %v491, 2
      %v543 = vsel %vm538, %v541, %v542
      %v544 = vrot.slane %v484, 2
      %v545 = vrot.slane %v492, 2
      %v546 = vsel %vm538, %v544, %v545
      %v547 = vrot.slane %v485, 2
      %v548 = vrot.slane %v493, 2
      %v549 = vsel %vm538, %v547, %v548
      %v550 = vrot.slane %v486, 2
      %v551 = vrot.slane %v494, 2
      %v552 = vsel %vm538, %v550, %v551
      %v553 = vrot.slane %v487, 2
      %v554 = vrot.slane %v495, 2
      %v555 = vsel %vm538, %v553, %v554
      %v556 = vrot.slane %v488, 2
      %v557 = vrot.slane %v496, 2
      %v558 = vsel %vm538, %v556, %v557
      %v559 = vrot.slane %v489, 2
      %v560 = vrot.slane %v497, 2
      %v561 = vsel %vm538, %v559, %v560
      %v564 = vrot.slane %v490, 1
      %v565 = vrot.slane %v498, 1
      %v566 = vsel %vm514, %v564, %v565
      %v567 = vrot.slane %v490, 2
      %v568 = vrot.slane %v498, 2
      %v569 = vsel %vm538, %v567, %v568
      %570 = vrot.lane.b32.xlu0 %v516, 2
      %v571 = vpop.permute.xlu0 %570
      %572 = vrot.lane.b32.xlu0 %v519, 2
      %v573 = vpop.permute.xlu0 %572
      %574 = vrot.lane.b32.xlu0 %v522, 2
      %v575 = vpop.permute.xlu0 %574
      %576 = vrot.lane.b32.xlu0 %v525, 2
      %v577 = vpop.permute.xlu0 %576
      %578 = vrot.lane.b32.xlu0 %v528, 2
      %v579 = vpop.permute.xlu0 %578
      %580 = vrot.lane.b32.xlu0 %v531, 2
      %v581 = vpop.permute.xlu0 %580
      %582 = vrot.lane.b32.xlu0 %v534, 2
      %v583 = vpop.permute.xlu0 %582
      %584 = vrot.lane.b32.xlu0 %v537, 2
      %v585 = vpop.permute.xlu0 %584
      %594 = vrot.lane.b32.xlu0 %v540, 4
      %v595 = vpop.permute.xlu0 %594
      %596 = vrot.lane.b32.xlu0 %v543, 4
      %v597 = vpop.permute.xlu0 %596
      %598 = vrot.lane.b32.xlu0 %v546, 4
      %v599 = vpop.permute.xlu0 %598
      %600 = vrot.lane.b32.xlu0 %v549, 4
      %v601 = vpop.permute.xlu0 %600
      %602 = vrot.lane.b32.xlu0 %v552, 4
      %v603 = vpop.permute.xlu0 %602
      %604 = vrot.lane.b32.xlu0 %v555, 4
      %v605 = vpop.permute.xlu0 %604
      %606 = vrot.lane.b32.xlu0 %v558, 4
      %v607 = vpop.permute.xlu0 %606
      %608 = vrot.lane.b32.xlu0 %v561, 4
      %v609 = vpop.permute.xlu0 %608
      %618 = vrot.lane.b32.xlu0 %v483, 6
      %v619 = vpop.permute.xlu0 %618
      %620 = vrot.lane.b32.xlu0 %v484, 6
      %v621 = vpop.permute.xlu0 %620
      %622 = vrot.lane.b32.xlu0 %v485, 6
      %v623 = vpop.permute.xlu0 %622
      %624 = vrot.lane.b32.xlu0 %v486, 6
      %v625 = vpop.permute.xlu0 %624
      %626 = vrot.lane.b32.xlu0 %v487, 6
      %v627 = vpop.permute.xlu0 %626
      %628 = vrot.lane.b32.xlu0 %v488, 6
      %v629 = vpop.permute.xlu0 %628
      %630 = vrot.lane.b32.xlu0 %v489, 6
      %v631 = vpop.permute.xlu0 %630
      %632 = vrot.lane.b32.xlu0 %v490, 6
      %v633 = vpop.permute.xlu0 %632
      %642 = vrot.lane.b32.xlu0 %v519, 8
      %v643 = vpop.permute.xlu0 %642
      %644 = vrot.lane.b32.xlu0 %v522, 8
      %v645 = vpop.permute.xlu0 %644
      %646 = vrot.lane.b32.xlu0 %v525, 8
      %v647 = vpop.permute.xlu0 %646
      %648 = vrot.lane.b32.xlu0 %v528, 8
      %v649 = vpop.permute.xlu0 %648
      %650 = vrot.lane.b32.xlu0 %v531, 8
      %v651 = vpop.permute.xlu0 %650
      %652 = vrot.lane.b32.xlu0 %v534, 8
      %v653 = vpop.permute.xlu0 %652
      %654 = vrot.lane.b32.xlu0 %v537, 8
      %v655 = vpop.permute.xlu0 %654
      %656 = vrot.lane.b32.xlu0 %v566, 8
      %v657 = vpop.permute.xlu0 %656
      %666 = vrot.lane.b32.xlu0 %v543, 10
      %v667 = vpop.permute.xlu0 %666
      %668 = vrot.lane.b32.xlu0 %v546, 10
      %v669 = vpop.permute.xlu0 %668
      %670 = vrot.lane.b32.xlu0 %v549, 10
      %v671 = vpop.permute.xlu0 %670
      %672 = vrot.lane.b32.xlu0 %v552, 10
      %v673 = vpop.permute.xlu0 %672
      %674 = vrot.lane.b32.xlu0 %v555, 10
      %v675 = vpop.permute.xlu0 %674
      %676 = vrot.lane.b32.xlu0 %v558, 10
      %v677 = vpop.permute.xlu0 %676
      %678 = vrot.lane.b32.xlu0 %v561, 10
      %v679 = vpop.permute.xlu0 %678
      %680 = vrot.lane.b32.xlu0 %v569, 10
      %v681 = vpop.permute.xlu0 %680
      %690 = vrot.lane.b32.xlu0 %v484, 12
      %v691 = vpop.permute.xlu0 %690
      %692 = vrot.lane.b32.xlu0 %v485, 12
      %v693 = vpop.permute.xlu0 %692
      %694 = vrot.lane.b32.xlu0 %v486, 12
      %v695 = vpop.permute.xlu0 %694
      %696 = vrot.lane.b32.xlu0 %v487, 12
      %v697 = vpop.permute.xlu0 %696
      %698 = vrot.lane.b32.xlu0 %v488, 12
      %v699 = vpop.permute.xlu0 %698
      %700 = vrot.lane.b32.xlu0 %v489, 12
      %v701 = vpop.permute.xlu0 %700
      %702 = vrot.lane.b32.xlu0 %v490, 12
      %v703 = vpop.permute.xlu0 %702
      %704 = vrot.lane.b32.xlu0 0.0, 12
      %v705 = vpop.permute.xlu0 %704
      %714 = vrot.lane.b32.xlu0 %v522, 14
      %v715 = vpop.permute.xlu0 %714
      %716 = vrot.lane.b32.xlu0 %v525, 14
      %v717 = vpop.permute.xlu0 %716
      %718 = vrot.lane.b32.xlu0 %v528, 14
      %v719 = vpop.permute.xlu0 %718
      %720 = vrot.lane.b32.xlu0 %v531, 14
      %v721 = vpop.permute.xlu0 %720
      %722 = vrot.lane.b32.xlu0 %v534, 14
      %v723 = vpop.permute.xlu0 %722
      %724 = vrot.lane.b32.xlu0 %v537, 14
      %v725 = vpop.permute.xlu0 %724
      %726 = vrot.lane.b32.xlu0 %v566, 14
      %v727 = vpop.permute.xlu0 %726
      %728 = vrot.lane.b32.xlu0 %v516, 14
      %v729 = vpop.permute.xlu0 %728
      %738 = vrot.lane.b32.xlu0 %v546, 16
      %v739 = vpop.permute.xlu0 %738
      %740 = vrot.lane.b32.xlu0 %v549, 16
      %v741 = vpop.permute.xlu0 %740
      %742 = vrot.lane.b32.xlu0 %v552, 16
      %v743 = vpop.permute.xlu0 %742
      %744 = vrot.lane.b32.xlu0 %v555, 16
      %v745 = vpop.permute.xlu0 %744
      %746 = vrot.lane.b32.xlu0 %v558, 16
      %v747 = vpop.permute.xlu0 %746
      %748 = vrot.lane.b32.xlu0 %v561, 16
      %v749 = vpop.permute.xlu0 %748
      %750 = vrot.lane.b32.xlu0 %v569, 16
      %v751 = vpop.permute.xlu0 %750
      %752 = vrot.lane.b32.xlu0 %v540, 16
      %v753 = vpop.permute.xlu0 %752
      %vm762 = vcmask 15360
      %v763 = vsel %vm762, 0.0, %v571
      %v764 = vsel %vm762, %v483, %v573
      %v765 = vsel %vm762, %v484, %v575
      %v766 = vsel %vm762, %v485, %v577
      %v767 = vsel %vm762, %v486, %v579
      %v768 = vsel %vm762, %v487, %v581
      %v769 = vsel %vm762, %v488, %v583
      %v770 = vsel %vm762, %v489, %v585
      %vm771 = vcmask 31744
      %v772 = vsel %vm771, %v763, %v595
      %v773 = vsel %vm771, %v764, %v597
      %v774 = vsel %vm771, %v765, %v599
      %v775 = vsel %vm771, %v766, %v601
      %v776 = vsel %vm771, %v767, %v603
      %v777 = vsel %vm771, %v768, %v605
      %v778 = vsel %vm771, %v769, %v607
      %v779 = vsel %vm771, %v770, %v609
      %vm780 = vcmask 48128
      %v781 = vsel %vm780, %v772, %v619
      %v782 = vsel %vm780, %v773, %v621
      %v783 = vsel %vm780, %v774, %v623
      %v784 = vsel %vm780, %v775, %v625
      %v785 = vsel %vm780, %v776, %v627
      %v786 = vsel %vm780, %v777, %v629
      %v787 = vsel %vm780, %v778, %v631
      %v788 = vsel %vm780, %v779, %v633
      %vm789 = vcmask 64512
      %v790 = vsel %vm789, %v781, %v643
      %v791 = vsel %vm789, %v782, %v645
      %v792 = vsel %vm789, %v783, %v647
      %v793 = vsel %vm789, %v784, %v649
      %v794 = vsel %vm789, %v785, %v651
      %v795 = vsel %vm789, %v786, %v653
      %v796 = vsel %vm789, %v787, %v655
      %v797 = vsel %vm789, %v788, %v657
      %vm798 = vcmask 80896
      %v799 = vsel %vm798, %v790, %v667
      %v800 = vsel %vm798, %v791, %v669
      %v801 = vsel %vm798, %v792, %v671
      %v802 = vsel %vm798, %v793, %v673
      %v803 = vsel %vm798, %v794, %v675
      %v804 = vsel %vm798, %v795, %v677
      %v805 = vsel %vm798, %v796, %v679
      %v806 = vsel %vm798, %v797, %v681
      %vm807 = vcmask 97280
      %v808 = vsel %vm807, %v799, %v691
      %v809 = vsel %vm807, %v800, %v693
      %v810 = vsel %vm807, %v801, %v695
      %v811 = vsel %vm807, %v802, %v697
      %v812 = vsel %vm807, %v803, %v699
      %v813 = vsel %vm807, %v804, %v701
      %v814 = vsel %vm807, %v805, %v703
      %v815 = vsel %vm807, %v806, %v705
      %vm816 = vcmask 113664
      %v817 = vsel %vm816, %v808, %v715
      %v818 = vsel %vm816, %v809, %v717
      %v819 = vsel %vm816, %v810, %v719
      %v820 = vsel %vm816, %v811, %v721
      %v821 = vsel %vm816, %v812, %v723
      %v822 = vsel %vm816, %v813, %v725
      %v823 = vsel %vm816, %v814, %v727
      %v824 = vsel %vm816, %v815, %v729
      %vm825 = vcmask 130048
      %v826 = vsel %vm825, %v817, %v739
      %v827 = vsel %vm825, %v818, %v741
      %v828 = vsel %vm825, %v819, %v743
      %v829 = vsel %vm825, %v820, %v745
      %v830 = vsel %vm825, %v821, %v747
      %v831 = vsel %vm825, %v822, %v749
      %v832 = vsel %vm825, %v823, %v751
      %v833 = vsel %vm825, %v824, %v753
      %vm834 = vcmask 146432
      %v836 = vsel %vm834, %v826, 0
      %v839 = vsel %vm834, %v827, 0
      %v842 = vsel %vm834, %v828, 0
      %v845 = vsel %vm834, %v829, 0
      %v848 = vsel %vm834, %v830, 0
      %v851 = vsel %vm834, %v831, 0
      %v854 = vsel %vm834, %v832, 0
      %v857 = vsel %vm834, %v833, 0
      %vm859 = vcmask 1041408
      %v861 = vsel %vm859, %v457, 0
      %863 = vmatprep.subr.mxu0 0.0
      %864 = vmatpush1.msra.mxu0 0.0
      %865 = vmatprep.subr.mxu0 0.0
      %866 = vmatpush1.msra.mxu0 0.0
      %867 = vmatprep.subr.mxu0 0.0
      %868 = vmatpush1.msra.mxu0 0.0
      %869 = vmatprep.subr.mxu0 0.0
      %870 = vmatpush1.msra.mxu0 0.0
      %871 = vmatprep.subr.mxu0 0.0
      %872 = vmatpush1.msra.mxu0 0.0
      %873 = vmatprep.subr.mxu0 0.0
      %874 = vmatpush1.msra.mxu0 0.0
      %875 = vmatprep.subr.mxu0 0.0
      %876 = vmatpush1.msra.mxu0 0.0
      %877 = vmatprep.subr.mxu0 0.0
      %878 = vmatpush1.msra.mxu0 0.0
      %879 = vmatprep.subr.mxu0 0.0
      %880 = vmatpush1.msra.mxu0 0.0
      %881 = vmatprep.subr.mxu0 0.0
      %882 = vmatpush1.msra.mxu0 0.0
      %883 = vmatprep.subr.mxu0 0.0
      %884 = vmatpush1.msra.mxu0 0.0
      %885 = vmatprep.subr.mxu0 0.0
      %886 = vmatpush1.msra.mxu0 0.0
      %887 = vmatprep.subr.mxu0 0.0
      %888 = vmatpush1.msra.mxu0 0.0
      %889 = vmatprep.subr.mxu0 0.0
      %890 = vmatpush1.msra.mxu0 %v861
      %891 = vmatprep.subr.mxu0 0.0
      %892 = vmatpush1.msra.mxu0 %v456
      %893 = vmatprep.subr.mxu0 0.0
      %894 = vmatpush1.msra.mxu0 %v455
      %895 = vmatprep.subr.mxu0 0.0
      %896 = vmatpush2.msra.mxu0 0.0
      %897 = vmatprep.subr.mxu0 0.0
      %898 = vmatpush2.msra.mxu0 0.0
      %899 = vmatprep.subr.mxu0 0.0
      %900 = vmatpush2.msra.mxu0 0.0
      %901 = vmatprep.subr.mxu0 0.0
      %902 = vmatpush2.msra.mxu0 0.0
      %903 = vmatprep.subr.mxu0 0.0
      %904 = vmatpush2.msra.mxu0 0.0
      %905 = vmatprep.subr.mxu0 0.0
      %906 = vmatpush2.msra.mxu0 0.0
      %907 = vmatprep.subr.mxu0 0.0
      %908 = vmatpush2.msra.mxu0 0.0
      %909 = vmatprep.subr.mxu0 0.0
      %910 = vmatpush2.msra.mxu0 0.0
      %911 = vmatprep.subr.mxu0 0.0
      %912 = vmatpush2.msra.mxu0 0.0
      %913 = vmatprep.subr.mxu0 0.0
      %914 = vmatpush2.msra.mxu0 0.0
      %915 = vmatprep.subr.mxu0 0.0
      %916 = vmatpush2.msra.mxu0 0.0
      %917 = vmatprep.subr.mxu0 0.0
      %918 = vmatpush2.msra.mxu0 0.0
      %919 = vmatprep.subr.mxu0 0.0
      %920 = vmatpush2.msra.mxu0 0.0
      %921 = vmatprep.subr.mxu0 0.0
      %922 = vmatpush2.msra.mxu0 0.0
      %923 = vmatprep.subr.mxu0 0.0
      %924 = vmatpush2.msra.mxu0 0.0
      %925 = vmatprep.subr.mxu0 0.0
      %926 = vmatpush2.msra.mxu0 0.0
      %927 = vmatprep.mubr.f32.mxu0 0.0
      %928 = vmatmul.mubr.f32.gmra.mxu0 %v836
      %v929 = vpop.f32.mrf.mxu0
      %v930 = vadd.f32 0.0, %v929
      %v931 = vpop.f32.mrf.mxu0
      %932 = vmatprep.mubr.f32.mxu0 0.0
      %933 = vmatmul.mubr.f32.gmra.mxu0 %v839
      %v934 = vpop.f32.mrf.mxu0
      %v935 = vadd.f32 0.0, %v934
      %v936 = vpop.f32.mrf.mxu0
      %937 = vmatprep.mubr.f32.mxu0 0.0
      %938 = vmatmul.mubr.f32.gmra.mxu0 %v842
      %v939 = vpop.f32.mrf.mxu0
      %v940 = vadd.f32 0.0, %v939
      %v941 = vpop.f32.mrf.mxu0
      %942 = vmatprep.mubr.f32.mxu0 0.0
      %943 = vmatmul.mubr.f32.gmra.mxu0 %v845
      %v944 = vpop.f32.mrf.mxu0
      %v945 = vadd.f32 0.0, %v944
      %v946 = vpop.f32.mrf.mxu0
      %947 = vmatprep.mubr.f32.mxu0 0.0
      %948 = vmatmul.mubr.f32.gmra.mxu0 %v848
      %v949 = vpop.f32.mrf.mxu0
      %v950 = vadd.f32 0.0, %v949
      %v951 = vpop.f32.mrf.mxu0
      %952 = vmatprep.mubr.f32.mxu0 0.0
      %953 = vmatmul.mubr.f32.gmra.mxu0 %v851
      %v954 = vpop.f32.mrf.mxu0
      %v955 = vadd.f32 0.0, %v954
      %v956 = vpop.f32.mrf.mxu0
      %957 = vmatprep.mubr.f32.mxu0 0.0
      %958 = vmatmul.mubr.f32.gmra.mxu0 %v854
      %v959 = vpop.f32.mrf.mxu0
      %v960 = vadd.f32 0.0, %v959
      %v961 = vpop.f32.mrf.mxu0
      %962 = vmatprep.mubr.f32.mxu0 0.0
      %963 = vmatmul.mubr.f32.gmra.mxu0 %v857
      %v964 = vpop.f32.mrf.mxu0
      %v965 = vadd.f32 0.0, %v964
      %v966 = vpop.f32.mrf.mxu0
      %967 = vdwg.mxu0
      %vm968 = vcmp.gt.f32.partialorder %v930, 0.0
      %vm969 = vcmp.gt.f32.partialorder %v935, 0.0
      %vm970 = vcmp.gt.f32.partialorder %v940, 0.0
      %vm971 = vcmp.gt.f32.partialorder %v945, 0.0
      %vm972 = vcmp.gt.f32.partialorder %v950, 0.0
      %vm973 = vcmp.gt.f32.partialorder %v955, 0.0
      %vm974 = vcmp.gt.f32.partialorder %v960, 0.0
      %vm975 = vcmp.gt.f32.partialorder %v965, 0.0
      %v976 = vmul.f32 %v930, 0.2
      %v977 = vmul.f32 %v935, 0.2
      %v978 = vmul.f32 %v940, 0.2
      %v979 = vmul.f32 %v945, 0.2
      %v980 = vmul.f32 %v950, 0.2
      %v981 = vmul.f32 %v955, 0.2
      %v982 = vmul.f32 %v960, 0.2
      %v983 = vmul.f32 %v965, 0.2
      %v984 = vsel %vm968, %v930, %v976
      %v985 = vsel %vm969, %v935, %v977
      %v986 = vsel %vm970, %v940, %v978
      %v987 = vsel %vm971, %v945, %v979
      %v988 = vsel %vm972, %v950, %v980
      %v989 = vsel %vm973, %v955, %v981
      %v990 = vsel %vm974, %v960, %v982
      %v991 = vsel %vm975, %v965, %v983
      %v992 = vld [vmem:[%s3] sm:$0xff]
      %v993 = vld [vmem:[%s3 + $0x8] sm:$0xff]
      %v994 = vld [vmem:[%s3 + $0x10] sm:$0xff]
      %v995 = vld [vmem:[%s3 + $0x18] sm:$0xff]
      %v996 = vld [vmem:[%s3 + $0x20] sm:$0xff]
      %v997 = vld [vmem:[%s3 + $0x28] sm:$0xff]
      %v998 = vld [vmem:[%s3 + $0x30] sm:$0xff]
      %v999 = vld [vmem:[%s3 + $0x38] sm:$0xff]
      %v1000 = vld [vmem:[%s3 + $0x40] sm:$0xff]
      %v1001 = vld [vmem:[%s3 + $0x48] sm:$0xff]
      %v1002 = vld [vmem:[%s3 + $0x50] sm:$0xff]
      %v1003 = vld [vmem:[%s3 + $0x58] sm:$0xff]
      %v1004 = vld [vmem:[%s3 + $0x60] sm:$0xff]
      %v1005 = vld [vmem:[%s3 + $0x68] sm:$0xff]
      %v1006 = vld [vmem:[%s3 + $0x70] sm:$0xff]
      %v1007 = vld [vmem:[%s3 + $0x78] sm:$0xff]
      %v1008 = vld [vmem:[%s3 + $0x80] sm:$0xff]
      %v1009 = vld [vmem:[%s3 + $0x88] sm:$0xff]
      %v1018 = vrot.slane %v984, 7
      %v1019 = vrot.slane %v985, 7
      %v1020 = vrot.slane %v986, 7
      %v1021 = vrot.slane %v987, 7
      %v1022 = vrot.slane %v988, 7
      %v1023 = vrot.slane %v989, 7
      %v1024 = vrot.slane %v990, 7
      %v1025 = vrot.slane %v991, 7
      %v1034 = vsel %vm482, 0.0, %v1018
      %v1035 = vsel %vm482, 0.0, %v1019
      %v1036 = vsel %vm482, 0.0, %v1020
      %v1037 = vsel %vm482, 0.0, %v1021
      %v1038 = vsel %vm482, 0.0, %v1022
      %v1039 = vsel %vm482, 0.0, %v1023
      %v1040 = vsel %vm482, 0.0, %v1024
      %v1041 = vsel %vm482, 0.0, %v1025
      %v1042 = vsel %vm482, %v1018, 0.0
      %v1043 = vsel %vm482, %v1019, 0.0
      %v1044 = vsel %vm482, %v1020, 0.0
      %v1045 = vsel %vm482, %v1021, 0.0
      %v1046 = vsel %vm482, %v1022, 0.0
      %v1047 = vsel %vm482, %v1023, 0.0
      %v1048 = vsel %vm482, %v1024, 0.0
      %v1049 = vsel %vm482, %v1025, 0.0
      %v1064 = vrot.slane %v1034, 1
      %v1065 = vrot.slane %v1042, 1
      %v1066 = vsel %vm514, %v1064, %v1065
      %v1067 = vrot.slane %v1035, 1
      %v1068 = vrot.slane %v1043, 1
      %v1069 = vsel %vm514, %v1067, %v1068
      %v1070 = vrot.slane %v1036, 1
      %v1071 = vrot.slane %v1044, 1
      %v1072 = vsel %vm514, %v1070, %v1071
      %v1073 = vrot.slane %v1037, 1
      %v1074 = vrot.slane %v1045, 1
      %v1075 = vsel %vm514, %v1073, %v1074
      %v1076 = vrot.slane %v1038, 1
      %v1077 = vrot.slane %v1046, 1
      %v1078 = vsel %vm514, %v1076, %v1077
      %v1079 = vrot.slane %v1039, 1
      %v1080 = vrot.slane %v1047, 1
      %v1081 = vsel %vm514, %v1079, %v1080
      %v1082 = vrot.slane %v1040, 1
      %v1083 = vrot.slane %v1048, 1
      %v1084 = vsel %vm514, %v1082, %v1083
      %v1085 = vrot.slane %v1034, 2
      %v1086 = vrot.slane %v1042, 2
      %v1087 = vsel %vm538, %v1085, %v1086
      %v1088 = vrot.slane %v1035, 2
      %v1089 = vrot.slane %v1043, 2
      %v1090 = vsel %vm538, %v1088, %v1089
      %v1091 = vrot.slane %v1036, 2
      %v1092 = vrot.slane %v1044, 2
      %v1093 = vsel %vm538, %v1091, %v1092
      %v1094 = vrot.slane %v1037, 2
      %v1095 = vrot.slane %v1045, 2
      %v1096 = vsel %vm538, %v1094, %v1095
      %v1097 = vrot.slane %v1038, 2
      %v1098 = vrot.slane %v1046, 2
      %v1099 = vsel %vm538, %v1097, %v1098
      %v1100 = vrot.slane %v1039, 2
      %v1101 = vrot.slane %v1047, 2
      %v1102 = vsel %vm538, %v1100, %v1101
      %v1103 = vrot.slane %v1040, 2
      %v1104 = vrot.slane %v1048, 2
      %v1105 = vsel %vm538, %v1103, %v1104
      %v1108 = vrot.slane %v1041, 1
      %v1109 = vrot.slane %v1049, 1
      %v1110 = vsel %vm514, %v1108, %v1109
      %v1111 = vrot.slane %v1041, 2
      %v1112 = vrot.slane %v1049, 2
      %v1113 = vsel %vm538, %v1111, %v1112
      %1114 = vrot.lane.b32.xlu0 %v516, 16
      %v1115 = vpop.permute.xlu0 %1114
      %1116 = vrot.lane.b32.xlu0 %v1066, 16
      %v1117 = vpop.permute.xlu0 %1116
      %1118 = vrot.lane.b32.xlu0 %v1069, 16
      %v1119 = vpop.permute.xlu0 %1118
      %1120 = vrot.lane.b32.xlu0 %v1072, 16
      %v1121 = vpop.permute.xlu0 %1120
      %1122 = vrot.lane.b32.xlu0 %v1075, 16
      %v1123 = vpop.permute.xlu0 %1122
      %1124 = vrot.lane.b32.xlu0 %v1078, 16
      %v1125 = vpop.permute.xlu0 %1124
      %1126 = vrot.lane.b32.xlu0 %v1081, 16
      %v1127 = vpop.permute.xlu0 %1126
      %1128 = vrot.lane.b32.xlu0 %v1084, 16
      %v1129 = vpop.permute.xlu0 %1128
      %1138 = vrot.lane.b32.xlu0 %v540, 32
      %v1139 = vpop.permute.xlu0 %1138
      %1140 = vrot.lane.b32.xlu0 %v1087, 32
      %v1141 = vpop.permute.xlu0 %1140
      %1142 = vrot.lane.b32.xlu0 %v1090, 32
      %v1143 = vpop.permute.xlu0 %1142
      %1144 = vrot.lane.b32.xlu0 %v1093, 32
      %v1145 = vpop.permute.xlu0 %1144
      %1146 = vrot.lane.b32.xlu0 %v1096, 32
      %v1147 = vpop.permute.xlu0 %1146
      %1148 = vrot.lane.b32.xlu0 %v1099, 32
      %v1149 = vpop.permute.xlu0 %1148
      %1150 = vrot.lane.b32.xlu0 %v1102, 32
      %v1151 = vpop.permute.xlu0 %1150
      %1152 = vrot.lane.b32.xlu0 %v1105, 32
      %v1153 = vpop.permute.xlu0 %1152
      %1162 = vrot.lane.b32.xlu0 %v1034, 48
      %v1163 = vpop.permute.xlu0 %1162
      %1164 = vrot.lane.b32.xlu0 %v1035, 48
      %v1165 = vpop.permute.xlu0 %1164
      %1166 = vrot.lane.b32.xlu0 %v1036, 48
      %v1167 = vpop.permute.xlu0 %1166
      %1168 = vrot.lane.b32.xlu0 %v1037, 48
      %v1169 = vpop.permute.xlu0 %1168
      %1170 = vrot.lane.b32.xlu0 %v1038, 48
      %v1171 = vpop.permute.xlu0 %1170
      %1172 = vrot.lane.b32.xlu0 %v1039, 48
      %v1173 = vpop.permute.xlu0 %1172
      %1174 = vrot.lane.b32.xlu0 %v1040, 48
      %v1175 = vpop.permute.xlu0 %1174
      %1176 = vrot.lane.b32.xlu0 %v1041, 48
      %v1177 = vpop.permute.xlu0 %1176
      %1186 = vrot.lane.b32.xlu0 %v1066, 64
      %v1187 = vpop.permute.xlu0 %1186
      %1188 = vrot.lane.b32.xlu0 %v1069, 64
      %v1189 = vpop.permute.xlu0 %1188
      %1190 = vrot.lane.b32.xlu0 %v1072, 64
      %v1191 = vpop.permute.xlu0 %1190
      %1192 = vrot.lane.b32.xlu0 %v1075, 64
      %v1193 = vpop.permute.xlu0 %1192
      %1194 = vrot.lane.b32.xlu0 %v1078, 64
      %v1195 = vpop.permute.xlu0 %1194
      %1196 = vrot.lane.b32.xlu0 %v1081, 64
      %v1197 = vpop.permute.xlu0 %1196
      %1198 = vrot.lane.b32.xlu0 %v1084, 64
      %v1199 = vpop.permute.xlu0 %1198
      %1200 = vrot.lane.b32.xlu0 %v1110, 64
      %v1201 = vpop.permute.xlu0 %1200
      %1210 = vrot.lane.b32.xlu0 %v1087, 80
      %v1211 = vpop.permute.xlu0 %1210
      %1212 = vrot.lane.b32.xlu0 %v1090, 80
      %v1213 = vpop.permute.xlu0 %1212
      %1214 = vrot.lane.b32.xlu0 %v1093, 80
      %v1215 = vpop.permute.xlu0 %1214
      %1216 = vrot.lane.b32.xlu0 %v1096, 80
      %v1217 = vpop.permute.xlu0 %1216
      %1218 = vrot.lane.b32.xlu0 %v1099, 80
      %v1219 = vpop.permute.xlu0 %1218
      %1220 = vrot.lane.b32.xlu0 %v1102, 80
      %v1221 = vpop.permute.xlu0 %1220
      %1222 = vrot.lane.b32.xlu0 %v1105, 80
      %v1223 = vpop.permute.xlu0 %1222
      %1224 = vrot.lane.b32.xlu0 %v1113, 80
      %v1225 = vpop.permute.xlu0 %1224
      %1234 = vrot.lane.b32.xlu0 %v1035, 96
      %v1235 = vpop.permute.xlu0 %1234
      %1236 = vrot.lane.b32.xlu0 %v1036, 96
      %v1237 = vpop.permute.xlu0 %1236
      %1238 = vrot.lane.b32.xlu0 %v1037, 96
      %v1239 = vpop.permute.xlu0 %1238
      %1240 = vrot.lane.b32.xlu0 %v1038, 96
      %v1241 = vpop.permute.xlu0 %1240
      %1242 = vrot.lane.b32.xlu0 %v1039, 96
      %v1243 = vpop.permute.xlu0 %1242
      %1244 = vrot.lane.b32.xlu0 %v1040, 96
      %v1245 = vpop.permute.xlu0 %1244
      %1246 = vrot.lane.b32.xlu0 %v1041, 96
      %v1247 = vpop.permute.xlu0 %1246
      %1248 = vrot.lane.b32.xlu0 0.0, 96
      %v1249 = vpop.permute.xlu0 %1248
      %1258 = vrot.lane.b32.xlu0 %v1069, 112
      %v1259 = vpop.permute.xlu0 %1258
      %1260 = vrot.lane.b32.xlu0 %v1072, 112
      %v1261 = vpop.permute.xlu0 %1260
      %1262 = vrot.lane.b32.xlu0 %v1075, 112
      %v1263 = vpop.permute.xlu0 %1262
      %1264 = vrot.lane.b32.xlu0 %v1078, 112
      %v1265 = vpop.permute.xlu0 %1264
      %1266 = vrot.lane.b32.xlu0 %v1081, 112
      %v1267 = vpop.permute.xlu0 %1266
      %1268 = vrot.lane.b32.xlu0 %v1084, 112
      %v1269 = vpop.permute.xlu0 %1268
      %1270 = vrot.lane.b32.xlu0 %v1110, 112
      %v1271 = vpop.permute.xlu0 %1270
      %1272 = vrot.lane.b32.xlu0 %v516, 112
      %v1273 = vpop.permute.xlu0 %1272
      %v1282 = vsel %vm825, 0.0, %v1115
      %v1283 = vsel %vm825, %v1034, %v1117
      %v1284 = vsel %vm825, %v1035, %v1119
      %v1285 = vsel %vm825, %v1036, %v1121
      %v1286 = vsel %vm825, %v1037, %v1123
      %v1287 = vsel %vm825, %v1038, %v1125
      %v1288 = vsel %vm825, %v1039, %v1127
      %v1289 = vsel %vm825, %v1040, %v1129
      %vm1290 = vcmask 261120
      %v1291 = vsel %vm1290, %v1282, %v1139
      %v1292 = vsel %vm1290, %v1283, %v1141
      %v1293 = vsel %vm1290, %v1284, %v1143
      %v1294 = vsel %vm1290, %v1285, %v1145
      %v1295 = vsel %vm1290, %v1286, %v1147
      %v1296 = vsel %vm1290, %v1287, %v1149
      %v1297 = vsel %vm1290, %v1288, %v1151
      %v1298 = vsel %vm1290, %v1289, %v1153
      %vm1299 = vcmask 392192
      %v1300 = vsel %vm1299, %v1291, %v1163
      %v1301 = vsel %vm1299, %v1292, %v1165
      %v1302 = vsel %vm1299, %v1293, %v1167
      %v1303 = vsel %vm1299, %v1294, %v1169
      %v1304 = vsel %vm1299, %v1295, %v1171
      %v1305 = vsel %vm1299, %v1296, %v1173
      %v1306 = vsel %vm1299, %v1297, %v1175
      %v1307 = vsel %vm1299, %v1298, %v1177
      %vm1308 = vcmask 523264
      %v1309 = vsel %vm1308, %v1300, %v1187
      %v1310 = vsel %vm1308, %v1301, %v1189
      %v1311 = vsel %vm1308, %v1302, %v1191
      %v1312 = vsel %vm1308, %v1303, %v1193
      %v1313 = vsel %vm1308, %v1304, %v1195
      %v1314 = vsel %vm1308, %v1305, %v1197
      %v1315 = vsel %vm1308, %v1306, %v1199
      %v1316 = vsel %vm1308, %v1307, %v1201
      %vm1317 = vcmask 654336
      %v1318 = vsel %vm1317, %v1309, %v1211
      %v1319 = vsel %vm1317, %v1310, %v1213
      %v1320 = vsel %vm1317, %v1311, %v1215
      %v1321 = vsel %vm1317, %v1312, %v1217
      %v1322 = vsel %vm1317, %v1313, %v1219
      %v1323 = vsel %vm1317, %v1314, %v1221
      %v1324 = vsel %vm1317, %v1315, %v1223
      %v1325 = vsel %vm1317, %v1316, %v1225
      %vm1326 = vcmask 785408
      %v1327 = vsel %vm1326, %v1318, %v1235
      %v1328 = vsel %vm1326, %v1319, %v1237
      %v1329 = vsel %vm1326, %v1320, %v1239
      %v1330 = vsel %vm1326, %v1321, %v1241
      %v1331 = vsel %vm1326, %v1322, %v1243
      %v1332 = vsel %vm1326, %v1323, %v1245
      %v1333 = vsel %vm1326, %v1324, %v1247
      %v1334 = vsel %vm1326, %v1325, %v1249
      %vm1335 = vcmask 916480
      %v1336 = vsel %vm1335, %v1327, %v1259
      %v1337 = vsel %vm1335, %v1328, %v1261
      %v1338 = vsel %vm1335, %v1329, %v1263
      %v1339 = vsel %vm1335, %v1330, %v1265
      %v1340 = vsel %vm1335, %v1331, %v1267
      %v1341 = vsel %vm1335, %v1332, %v1269
      %v1342 = vsel %vm1335, %v1333, %v1271
      %v1343 = vsel %vm1335, %v1334, %v1273
      %v1344 = vsel %vm825, %v1090, 0
      %v1346 = vsel %vm825, %v1093, 0
      %v1348 = vsel %vm825, %v1096, 0
      %v1350 = vsel %vm825, %v1099, 0
      %v1352 = vsel %vm825, %v1102, 0
      %v1354 = vsel %vm825, %v1105, 0
      %v1356 = vsel %vm825, %v1113, 0
      %v1358 = vsel %vm825, %v540, 0
      %1360 = vmatprep.subr.mxu0 0.0
      %1361 = vmatpush1.msra.mxu0 %v1007
      %1362 = vmatprep.subr.mxu0 0.0
      %1363 = vmatpush1.msra.mxu0 %v1006
      %1364 = vmatprep.subr.mxu0 0.0
      %1365 = vmatpush1.msra.mxu0 %v1005
      %1366 = vmatprep.subr.mxu0 0.0
      %1367 = vmatpush1.msra.mxu0 %v1004
      %1368 = vmatprep.subr.mxu0 0.0
      %1369 = vmatpush1.msra.mxu0 %v1003
      %1370 = vmatprep.subr.mxu0 0.0
      %1371 = vmatpush1.msra.mxu0 %v1002
      %1372 = vmatprep.subr.mxu0 0.0
      %1373 = vmatpush1.msra.mxu0 %v1001
      %1374 = vmatprep.subr.mxu0 0.0
      %1375 = vmatpush1.msra.mxu0 %v1000
      %1376 = vmatprep.subr.mxu0 0.0
      %1377 = vmatpush1.msra.mxu0 %v999
      %1378 = vmatprep.subr.mxu0 0.0
      %1379 = vmatpush1.msra.mxu0 %v998
      %1380 = vmatprep.subr.mxu0 0.0
      %1381 = vmatpush1.msra.mxu0 %v997
      %1382 = vmatprep.subr.mxu0 0.0
      %1383 = vmatpush1.msra.mxu0 %v996
      %1384 = vmatprep.subr.mxu0 0.0
      %1385 = vmatpush1.msra.mxu0 %v995
      %1386 = vmatprep.subr.mxu0 0.0
      %1387 = vmatpush1.msra.mxu0 %v994
      %1388 = vmatprep.subr.mxu0 0.0
      %1389 = vmatpush1.msra.mxu0 %v993
      %1390 = vmatprep.subr.mxu0 0.0
      %1391 = vmatpush1.msra.mxu0 %v992
      %1392 = vmatprep.subr.mxu0 0.0
      %1393 = vmatpush2.msra.mxu0 0.0
      %1394 = vmatprep.subr.mxu0 0.0
      %1395 = vmatpush2.msra.mxu0 0.0
      %1396 = vmatprep.subr.mxu0 0.0
      %1397 = vmatpush2.msra.mxu0 0.0
      %1398 = vmatprep.subr.mxu0 0.0
      %1399 = vmatpush2.msra.mxu0 0.0
      %1400 = vmatprep.subr.mxu0 0.0
      %1401 = vmatpush2.msra.mxu0 0.0
      %1402 = vmatprep.subr.mxu0 0.0
      %1403 = vmatpush2.msra.mxu0 0.0
      %1404 = vmatprep.subr.mxu0 0.0
      %1405 = vmatpush2.msra.mxu0 0.0
      %1406 = vmatprep.subr.mxu0 0.0
      %1407 = vmatpush2.msra.mxu0 0.0
      %1408 = vmatprep.subr.mxu0 0.0
      %1409 = vmatpush2.msra.mxu0 0.0
      %1410 = vmatprep.subr.mxu0 0.0
      %1411 = vmatpush2.msra.mxu0 0.0
      %1412 = vmatprep.subr.mxu0 0.0
      %1413 = vmatpush2.msra.mxu0 0.0
      %1414 = vmatprep.subr.mxu0 0.0
      %1415 = vmatpush2.msra.mxu0 0.0
      %1416 = vmatprep.subr.mxu0 0.0
      %1417 = vmatpush2.msra.mxu0 0.0
      %1418 = vmatprep.subr.mxu0 0.0
      %1419 = vmatpush2.msra.mxu0 0.0
      %1420 = vmatprep.subr.mxu0 0.0
      %1421 = vmatpush2.msra.mxu0 %v1009
      %1422 = vmatprep.subr.mxu0 0.0
      %1423 = vmatpush2.msra.mxu0 %v1008
      %1424 = vmatprep.mubr.f32.mxu0 %v1344
      %1425 = vmatmul.mubr.f32.gmra.mxu0 %v1336
      %v1426 = vpop.f32.mrf.mxu0
      %v1427 = vadd.f32 0.0, %v1426
      %v1428 = vpop.f32.mrf.mxu0
      %1429 = vmatprep.mubr.f32.mxu0 %v1346
      %1430 = vmatmul.mubr.f32.gmra.mxu0 %v1337
      %v1431 = vpop.f32.mrf.mxu0
      %v1432 = vadd.f32 0.0, %v1431
      %v1433 = vpop.f32.mrf.mxu0
      %1434 = vmatprep.mubr.f32.mxu0 %v1348
      %1435 = vmatmul.mubr.f32.gmra.mxu0 %v1338
      %v1436 = vpop.f32.mrf.mxu0
      %v1437 = vadd.f32 0.0, %v1436
      %v1438 = vpop.f32.mrf.mxu0
      %1439 = vmatprep.mubr.f32.mxu0 %v1350
      %1440 = vmatmul.mubr.f32.gmra.mxu0 %v1339
      %v1441 = vpop.f32.mrf.mxu0
      %v1442 = vadd.f32 0.0, %v1441
      %v1443 = vpop.f32.mrf.mxu0
      %1444 = vmatprep.mubr.f32.mxu0 %v1352
      %1445 = vmatmul.mubr.f32.gmra.mxu0 %v1340
      %v1446 = vpop.f32.mrf.mxu0
      %v1447 = vadd.f32 0.0, %v1446
      %v1448 = vpop.f32.mrf.mxu0
      %1449 = vmatprep.mubr.f32.mxu0 %v1354
      %1450 = vmatmul.mubr.f32.gmra.mxu0 %v1341
      %v1451 = vpop.f32.mrf.mxu0
      %v1452 = vadd.f32 0.0, %v1451
      %v1453 = vpop.f32.mrf.mxu0
      %1454 = vmatprep.mubr.f32.mxu0 %v1356
      %1455 = vmatmul.mubr.f32.gmra.mxu0 %v1342
      %v1456 = vpop.f32.mrf.mxu0
      %v1457 = vadd.f32 0.0, %v1456
      %v1458 = vpop.f32.mrf.mxu0
      %1459 = vmatprep.mubr.f32.mxu0 %v1358
      %1460 = vmatmul.mubr.f32.gmra.mxu0 %v1343
      %v1461 = vpop.f32.mrf.mxu0
      %v1462 = vadd.f32 0.0, %v1461
      %v1463 = vpop.f32.mrf.mxu0
      %1464 = vdwg.mxu0
      %v1465 = vld [vmem:[%s4] sm:$0xff]
      %v1466 = vld [vmem:[%s4 + $0x8] sm:$0xff]
      %v1467 = vld [vmem:[%s4 + $0x10] sm:$0xff]
      %v1468 = vld [vmem:[%s4 + $0x18] sm:$0xff]
      %v1469 = vld [vmem:[%s4 + $0x20] sm:$0xff]
      %v1470 = vld [vmem:[%s4 + $0x28] sm:$0xff]
      %v1471 = vld [vmem:[%s4 + $0x30] sm:$0xff]
      %v1472 = vld [vmem:[%s4 + $0x38] sm:$0xff]
      %v1473 = vld [vmem:[%s4 + $0x40] sm:$0xff]
      %v1474 = vld [vmem:[%s4 + $0x48] sm:$0xff]
      %v1475 = vld [vmem:[%s4 + $0x50] sm:$0xff]
      %v1476 = vld [vmem:[%s4 + $0x58] sm:$0xff]
      %v1477 = vld [vmem:[%s4 + $0x60] sm:$0xff]
      %v1478 = vld [vmem:[%s4 + $0x68] sm:$0xff]
      %v1479 = vld [vmem:[%s4 + $0x70] sm:$0xff]
      %v1480 = vld [vmem:[%s4 + $0x78] sm:$0xff]
      %v1481 = vld [vmem:[%s4 + $0x80] sm:$0xff]
      %v1482 = vld [vmem:[%s4 + $0x88] sm:$0xff]
      %v1491 = vrot.slane %v1427, 7
      %v1492 = vrot.slane %v1432, 7
      %v1493 = vrot.slane %v1437, 7
      %v1494 = vrot.slane %v1442, 7
      %v1495 = vrot.slane %v1447, 7
      %v1496 = vrot.slane %v1452, 7
      %v1497 = vrot.slane %v1457, 7
      %v1498 = vrot.slane %v1462, 7
      %v1507 = vsel %vm482, 0.0, %v1491
      %v1508 = vsel %vm482, 0.0, %v1492
      %v1509 = vsel %vm482, 0.0, %v1493
      %v1510 = vsel %vm482, 0.0, %v1494
      %v1511 = vsel %vm482, 0.0, %v1495
      %v1512 = vsel %vm482, 0.0, %v1496
      %v1513 = vsel %vm482, 0.0, %v1497
      %v1514 = vsel %vm482, 0.0, %v1498
      %v1515 = vsel %vm482, %v1491, 0.0
      %v1516 = vsel %vm482, %v1492, 0.0
      %v1517 = vsel %vm482, %v1493, 0.0
      %v1518 = vsel %vm482, %v1494, 0.0
      %v1519 = vsel %vm482, %v1495, 0.0
      %v1520 = vsel %vm482, %v1496, 0.0
      %v1521 = vsel %vm482, %v1497, 0.0
      %v1522 = vsel %vm482, %v1498, 0.0
      %v1537 = vrot.slane %v1507, 1
      %v1538 = vrot.slane %v1515, 1
      %v1539 = vsel %vm514, %v1537, %v1538
      %v1540 = vrot.slane %v1508, 1
      %v1541 = vrot.slane %v1516, 1
      %v1542 = vsel %vm514, %v1540, %v1541
      %v1543 = vrot.slane %v1509, 1
      %v1544 = vrot.slane %v1517, 1
      %v1545 = vsel %vm514, %v1543, %v1544
      %v1546 = vrot.slane %v1510, 1
      %v1547 = vrot.slane %v1518, 1
      %v1548 = vsel %vm514, %v1546, %v1547
      %v1549 = vrot.slane %v1511, 1
      %v1550 = vrot.slane %v1519, 1
      %v1551 = vsel %vm514, %v1549, %v1550
      %v1552 = vrot.slane %v1512, 1
      %v1553 = vrot.slane %v1520, 1
      %v1554 = vsel %vm514, %v1552, %v1553
      %v1555 = vrot.slane %v1513, 1
      %v1556 = vrot.slane %v1521, 1
      %v1557 = vsel %vm514, %v1555, %v1556
      %v1558 = vrot.slane %v1507, 2
      %v1559 = vrot.slane %v1515, 2
      %v1560 = vsel %vm538, %v1558, %v1559
      %v1561 = vrot.slane %v1508, 2
      %v1562 = vrot.slane %v1516, 2
      %v1563 = vsel %vm538, %v1561, %v1562
      %v1564 = vrot.slane %v1509, 2
      %v1565 = vrot.slane %v1517, 2
      %v1566 = vsel %vm538, %v1564, %v1565
      %v1567 = vrot.slane %v1510, 2
      %v1568 = vrot.slane %v1518, 2
      %v1569 = vsel %vm538, %v1567, %v1568
      %v1570 = vrot.slane %v1511, 2
      %v1571 = vrot.slane %v1519, 2
      %v1572 = vsel %vm538, %v1570, %v1571
      %v1573 = vrot.slane %v1512, 2
      %v1574 = vrot.slane %v1520, 2
      %v1575 = vsel %vm538, %v1573, %v1574
      %v1576 = vrot.slane %v1513, 2
      %v1577 = vrot.slane %v1521, 2
      %v1578 = vsel %vm538, %v1576, %v1577
      %v1581 = vrot.slane %v1514, 1
      %v1582 = vrot.slane %v1522, 1
      %v1583 = vsel %vm514, %v1581, %v1582
      %v1584 = vrot.slane %v1514, 2
      %v1585 = vrot.slane %v1522, 2
      %v1586 = vsel %vm538, %v1584, %v1585
      %1587 = vrot.lane.b32.xlu0 %v1539, 16
      %v1588 = vpop.permute.xlu0 %1587
      %1589 = vrot.lane.b32.xlu0 %v1542, 16
      %v1590 = vpop.permute.xlu0 %1589
      %1591 = vrot.lane.b32.xlu0 %v1545, 16
      %v1592 = vpop.permute.xlu0 %1591
      %1593 = vrot.lane.b32.xlu0 %v1548, 16
      %v1594 = vpop.permute.xlu0 %1593
      %1595 = vrot.lane.b32.xlu0 %v1551, 16
      %v1596 = vpop.permute.xlu0 %1595
      %1597 = vrot.lane.b32.xlu0 %v1554, 16
      %v1598 = vpop.permute.xlu0 %1597
      %1599 = vrot.lane.b32.xlu0 %v1557, 16
      %v1600 = vpop.permute.xlu0 %1599
      %1608 = vrot.lane.b32.xlu0 %v1560, 32
      %v1609 = vpop.permute.xlu0 %1608
      %1610 = vrot.lane.b32.xlu0 %v1563, 32
      %v1611 = vpop.permute.xlu0 %1610
      %1612 = vrot.lane.b32.xlu0 %v1566, 32
      %v1613 = vpop.permute.xlu0 %1612
      %1614 = vrot.lane.b32.xlu0 %v1569, 32
      %v1615 = vpop.permute.xlu0 %1614
      %1616 = vrot.lane.b32.xlu0 %v1572, 32
      %v1617 = vpop.permute.xlu0 %1616
      %1618 = vrot.lane.b32.xlu0 %v1575, 32
      %v1619 = vpop.permute.xlu0 %1618
      %1620 = vrot.lane.b32.xlu0 %v1578, 32
      %v1621 = vpop.permute.xlu0 %1620
      %1629 = vrot.lane.b32.xlu0 %v1507, 48
      %v1630 = vpop.permute.xlu0 %1629
      %1631 = vrot.lane.b32.xlu0 %v1508, 48
      %v1632 = vpop.permute.xlu0 %1631
      %1633 = vrot.lane.b32.xlu0 %v1509, 48
      %v1634 = vpop.permute.xlu0 %1633
      %1635 = vrot.lane.b32.xlu0 %v1510, 48
      %v1636 = vpop.permute.xlu0 %1635
      %1637 = vrot.lane.b32.xlu0 %v1511, 48
      %v1638 = vpop.permute.xlu0 %1637
      %1639 = vrot.lane.b32.xlu0 %v1512, 48
      %v1640 = vpop.permute.xlu0 %1639
      %1641 = vrot.lane.b32.xlu0 %v1513, 48
      %v1642 = vpop.permute.xlu0 %1641
      %1643 = vrot.lane.b32.xlu0 %v1514, 48
      %v1644 = vpop.permute.xlu0 %1643
      %1653 = vrot.lane.b32.xlu0 %v1539, 64
      %v1654 = vpop.permute.xlu0 %1653
      %1655 = vrot.lane.b32.xlu0 %v1542, 64
      %v1656 = vpop.permute.xlu0 %1655
      %1657 = vrot.lane.b32.xlu0 %v1545, 64
      %v1658 = vpop.permute.xlu0 %1657
      %1659 = vrot.lane.b32.xlu0 %v1548, 64
      %v1660 = vpop.permute.xlu0 %1659
      %1661 = vrot.lane.b32.xlu0 %v1551, 64
      %v1662 = vpop.permute.xlu0 %1661
      %1663 = vrot.lane.b32.xlu0 %v1554, 64
      %v1664 = vpop.permute.xlu0 %1663
      %1665 = vrot.lane.b32.xlu0 %v1557, 64
      %v1666 = vpop.permute.xlu0 %1665
      %1667 = vrot.lane.b32.xlu0 %v1583, 64
      %v1668 = vpop.permute.xlu0 %1667
      %1677 = vrot.lane.b32.xlu0 %v1560, 80
      %v1678 = vpop.permute.xlu0 %1677
      %1679 = vrot.lane.b32.xlu0 %v1563, 80
      %v1680 = vpop.permute.xlu0 %1679
      %1681 = vrot.lane.b32.xlu0 %v1566, 80
      %v1682 = vpop.permute.xlu0 %1681
      %1683 = vrot.lane.b32.xlu0 %v1569, 80
      %v1684 = vpop.permute.xlu0 %1683
      %1685 = vrot.lane.b32.xlu0 %v1572, 80
      %v1686 = vpop.permute.xlu0 %1685
      %1687 = vrot.lane.b32.xlu0 %v1575, 80
      %v1688 = vpop.permute.xlu0 %1687
      %1689 = vrot.lane.b32.xlu0 %v1578, 80
      %v1690 = vpop.permute.xlu0 %1689
      %1691 = vrot.lane.b32.xlu0 %v1586, 80
      %v1692 = vpop.permute.xlu0 %1691
      %1701 = vrot.lane.b32.xlu0 %v1508, 96
      %v1702 = vpop.permute.xlu0 %1701
      %1703 = vrot.lane.b32.xlu0 %v1509, 96
      %v1704 = vpop.permute.xlu0 %1703
      %1705 = vrot.lane.b32.xlu0 %v1510, 96
      %v1706 = vpop.permute.xlu0 %1705
      %1707 = vrot.lane.b32.xlu0 %v1511, 96
      %v1708 = vpop.permute.xlu0 %1707
      %1709 = vrot.lane.b32.xlu0 %v1512, 96
      %v1710 = vpop.permute.xlu0 %1709
      %1711 = vrot.lane.b32.xlu0 %v1513, 96
      %v1712 = vpop.permute.xlu0 %1711
      %1713 = vrot.lane.b32.xlu0 %v1514, 96
      %v1714 = vpop.permute.xlu0 %1713
      %1722 = vrot.lane.b32.xlu0 %v1542, 112
      %v1723 = vpop.permute.xlu0 %1722
      %1724 = vrot.lane.b32.xlu0 %v1545, 112
      %v1725 = vpop.permute.xlu0 %1724
      %1726 = vrot.lane.b32.xlu0 %v1548, 112
      %v1727 = vpop.permute.xlu0 %1726
      %1728 = vrot.lane.b32.xlu0 %v1551, 112
      %v1729 = vpop.permute.xlu0 %1728
      %1730 = vrot.lane.b32.xlu0 %v1554, 112
      %v1731 = vpop.permute.xlu0 %1730
      %1732 = vrot.lane.b32.xlu0 %v1557, 112
      %v1733 = vpop.permute.xlu0 %1732
      %1734 = vrot.lane.b32.xlu0 %v1583, 112
      %v1735 = vpop.permute.xlu0 %1734
      %v1743 = vsel %vm825, %v1507, %v1588
      %v1744 = vsel %vm825, %v1508, %v1590
      %v1745 = vsel %vm825, %v1509, %v1592
      %v1746 = vsel %vm825, %v1510, %v1594
      %v1747 = vsel %vm825, %v1511, %v1596
      %v1748 = vsel %vm825, %v1512, %v1598
      %v1749 = vsel %vm825, %v1513, %v1600
      %v1750 = vsel %vm1290, %v1743, %v1609
      %v1751 = vsel %vm1290, %v1744, %v1611
      %v1752 = vsel %vm1290, %v1745, %v1613
      %v1753 = vsel %vm1290, %v1746, %v1615
      %v1754 = vsel %vm1290, %v1747, %v1617
      %v1755 = vsel %vm1290, %v1748, %v1619
      %v1756 = vsel %vm1290, %v1749, %v1621
      %v1757 = vsel %vm1299, %v1291, %v1630
      %v1758 = vsel %vm1299, %v1750, %v1632
      %v1759 = vsel %vm1299, %v1751, %v1634
      %v1760 = vsel %vm1299, %v1752, %v1636
      %v1761 = vsel %vm1299, %v1753, %v1638
      %v1762 = vsel %vm1299, %v1754, %v1640
      %v1763 = vsel %vm1299, %v1755, %v1642
      %v1764 = vsel %vm1299, %v1756, %v1644
      %v1765 = vsel %vm1308, %v1757, %v1654
      %v1766 = vsel %vm1308, %v1758, %v1656
      %v1767 = vsel %vm1308, %v1759, %v1658
      %v1768 = vsel %vm1308, %v1760, %v1660
      %v1769 = vsel %vm1308, %v1761, %v1662
      %v1770 = vsel %vm1308, %v1762, %v1664
      %v1771 = vsel %vm1308, %v1763, %v1666
      %v1772 = vsel %vm1308, %v1764, %v1668
      %v1773 = vsel %vm1317, %v1765, %v1678
      %v1774 = vsel %vm1317, %v1766, %v1680
      %v1775 = vsel %vm1317, %v1767, %v1682
      %v1776 = vsel %vm1317, %v1768, %v1684
      %v1777 = vsel %vm1317, %v1769, %v1686
      %v1778 = vsel %vm1317, %v1770, %v1688
      %v1779 = vsel %vm1317, %v1771, %v1690
      %v1780 = vsel %vm1317, %v1772, %v1692
      %v1781 = vsel %vm1326, %v1773, %v1702
      %v1782 = vsel %vm1326, %v1774, %v1704
      %v1783 = vsel %vm1326, %v1775, %v1706
      %v1784 = vsel %vm1326, %v1776, %v1708
      %v1785 = vsel %vm1326, %v1777, %v1710
      %v1786 = vsel %vm1326, %v1778, %v1712
      %v1787 = vsel %vm1326, %v1779, %v1714
      %v1788 = vsel %vm1326, %v1780, %v1249
      %v1789 = vsel %vm1335, %v1781, %v1723
      %v1790 = vsel %vm1335, %v1782, %v1725
      %v1791 = vsel %vm1335, %v1783, %v1727
      %v1792 = vsel %vm1335, %v1784, %v1729
      %v1793 = vsel %vm1335, %v1785, %v1731
      %v1794 = vsel %vm1335, %v1786, %v1733
      %v1795 = vsel %vm1335, %v1787, %v1735
      %v1796 = vsel %vm1335, %v1788, %v1273
      %v1797 = vsel %vm825, %v1563, 0
      %v1799 = vsel %vm825, %v1566, 0
      %v1801 = vsel %vm825, %v1569, 0
      %v1803 = vsel %vm825, %v1572, 0
      %v1805 = vsel %vm825, %v1575, 0
      %v1807 = vsel %vm825, %v1578, 0
      %v1809 = vsel %vm825, %v1586, 0
      %1811 = vmatprep.subr.mxu0 0.0
      %1812 = vmatpush1.msra.mxu0 %v1480
      %1813 = vmatprep.subr.mxu0 0.0
      %1814 = vmatpush1.msra.mxu0 %v1479
      %1815 = vmatprep.subr.mxu0 0.0
      %1816 = vmatpush1.msra.mxu0 %v1478
      %1817 = vmatprep.subr.mxu0 0.0
      %1818 = vmatpush1.msra.mxu0 %v1477
      %1819 = vmatprep.subr.mxu0 0.0
      %1820 = vmatpush1.msra.mxu0 %v1476
      %1821 = vmatprep.subr.mxu0 0.0
      %1822 = vmatpush1.msra.mxu0 %v1475
      %1823 = vmatprep.subr.mxu0 0.0
      %1824 = vmatpush1.msra.mxu0 %v1474
      %1825 = vmatprep.subr.mxu0 0.0
      %1826 = vmatpush1.msra.mxu0 %v1473
      %1827 = vmatprep.subr.mxu0 0.0
      %1828 = vmatpush1.msra.mxu0 %v1472
      %1829 = vmatprep.subr.mxu0 0.0
      %1830 = vmatpush1.msra.mxu0 %v1471
      %1831 = vmatprep.subr.mxu0 0.0
      %1832 = vmatpush1.msra.mxu0 %v1470
      %1833 = vmatprep.subr.mxu0 0.0
      %1834 = vmatpush1.msra.mxu0 %v1469
      %1835 = vmatprep.subr.mxu0 0.0
      %1836 = vmatpush1.msra.mxu0 %v1468
      %1837 = vmatprep.subr.mxu0 0.0
      %1838 = vmatpush1.msra.mxu0 %v1467
      %1839 = vmatprep.subr.mxu0 0.0
      %1840 = vmatpush1.msra.mxu0 %v1466
      %1841 = vmatprep.subr.mxu0 0.0
      %1842 = vmatpush1.msra.mxu0 %v1465
      %1843 = vmatprep.subr.mxu0 0.0
      %1844 = vmatpush2.msra.mxu0 0.0
      %1845 = vmatprep.subr.mxu0 0.0
      %1846 = vmatpush2.msra.mxu0 0.0
      %1847 = vmatprep.subr.mxu0 0.0
      %1848 = vmatpush2.msra.mxu0 0.0
      %1849 = vmatprep.subr.mxu0 0.0
      %1850 = vmatpush2.msra.mxu0 0.0
      %1851 = vmatprep.subr.mxu0 0.0
      %1852 = vmatpush2.msra.mxu0 0.0
      %1853 = vmatprep.subr.mxu0 0.0
      %1854 = vmatpush2.msra.mxu0 0.0
      %1855 = vmatprep.subr.mxu0 0.0
      %1856 = vmatpush2.msra.mxu0 0.0
      %1857 = vmatprep.subr.mxu0 0.0
      %1858 = vmatpush2.msra.mxu0 0.0
      %1859 = vmatprep.subr.mxu0 0.0
      %1860 = vmatpush2.msra.mxu0 0.0
      %1861 = vmatprep.subr.mxu0 0.0
      %1862 = vmatpush2.msra.mxu0 0.0
      %1863 = vmatprep.subr.mxu0 0.0
      %1864 = vmatpush2.msra.mxu0 0.0
      %1865 = vmatprep.subr.mxu0 0.0
      %1866 = vmatpush2.msra.mxu0 0.0
      %1867 = vmatprep.subr.mxu0 0.0
      %1868 = vmatpush2.msra.mxu0 0.0
      %1869 = vmatprep.subr.mxu0 0.0
      %1870 = vmatpush2.msra.mxu0 0.0
      %1871 = vmatprep.subr.mxu0 0.0
      %1872 = vmatpush2.msra.mxu0 %v1482
      %1873 = vmatprep.subr.mxu0 0.0
      %1874 = vmatpush2.msra.mxu0 %v1481
      %1875 = vmatprep.mubr.f32.mxu0 %v1797
      %1876 = vmatmul.mubr.f32.gmra.mxu0 %v1789
      %v1877 = vpop.f32.mrf.mxu0
      %v1878 = vadd.f32 0.0, %v1877
      %v1879 = vpop.f32.mrf.mxu0
      %1880 = vmatprep.mubr.f32.mxu0 %v1799
      %1881 = vmatmul.mubr.f32.gmra.mxu0 %v1790
      %v1882 = vpop.f32.mrf.mxu0
      %v1883 = vpop.f32.mrf.mxu0
      %1884 = vmatprep.mubr.f32.mxu0 %v1801
      %1885 = vmatmul.mubr.f32.gmra.mxu0 %v1791
      %v1886 = vpop.f32.mrf.mxu0
      %v1887 = vadd.f32 0.0, %v1886
      %v1888 = vpop.f32.mrf.mxu0
      %1889 = vmatprep.mubr.f32.mxu0 %v1803
      %1890 = vmatmul.mubr.f32.gmra.mxu0 %v1792
      %v1891 = vpop.f32.mrf.mxu0
      %v1892 = vpop.f32.mrf.mxu0
      %1893 = vmatprep.mubr.f32.mxu0 %v1805
      %1894 = vmatmul.mubr.f32.gmra.mxu0 %v1793
      %v1895 = vpop.f32.mrf.mxu0
      %v1896 = vadd.f32 0.0, %v1895
      %v1897 = vpop.f32.mrf.mxu0
      %1898 = vmatprep.mubr.f32.mxu0 %v1807
      %1899 = vmatmul.mubr.f32.gmra.mxu0 %v1794
      %v1900 = vpop.f32.mrf.mxu0
      %v1901 = vpop.f32.mrf.mxu0
      %1902 = vmatprep.mubr.f32.mxu0 %v1809
      %1903 = vmatmul.mubr.f32.gmra.mxu0 %v1795
      %v1904 = vpop.f32.mrf.mxu0
      %v1905 = vadd.f32 0.0, %v1904
      %v1906 = vpop.f32.mrf.mxu0
      %1907 = vmatprep.mubr.f32.mxu0 %v1358
      %1908 = vmatmul.mubr.f32.gmra.mxu0 %v1796
      %v1909 = vpop.f32.mrf.mxu0
      %v1910 = vpop.f32.mrf.mxu0
      %1911 = vdwg.mxu0
      %v1916 = vcombine.high %v1878, %v1878
      %v1918 = vunpack.c.l.s4 1983009808
      %v1919 = vunpack.c.0.s8 %v1918
      %v1920 = vlaneseq
      %v1921 = vshrl.u32 %v1920, 7
      %v1922 = vsub.s32 %v1919, %v1921
      %v1923 = vrot.slane %v1878, %v1922
      %v1925 = vunpack.c.l.s4 1983009808
      %v1926 = vunpack.c.0.s8 %v1925
      %v1927 = vlaneseq
      %v1928 = vshrl.u32 %v1927, 7
      %v1929 = vsub.s32 %v1926, %v1928
      %v1930 = vrot.slane %v1916, %v1929
      %v1931 = vcombine.high %v1923, %v1923
      %v1932 = vcombine.high %v1930, %v1930
      %v1933 = vcombine.high %v1887, %v1887
      %v1935 = vunpack.c.l.s4 1983009808
      %v1936 = vunpack.c.0.s8 %v1935
      %v1937 = vlaneseq
      %v1938 = vshrl.u32 %v1937, 7
      %v1939 = vsub.s32 %v1936, %v1938
      %v1940 = vrot.slane %v1887, %v1939
      %v1942 = vunpack.c.l.s4 1983009808
      %v1943 = vunpack.c.0.s8 %v1942
      %v1944 = vlaneseq
      %v1945 = vshrl.u32 %v1944, 7
      %v1946 = vsub.s32 %v1943, %v1945
      %v1947 = vrot.slane %v1933, %v1946
      %v1948 = vcombine.high %v1940, %v1940
      %v1949 = vcombine.high %v1947, %v1947
      %v1950 = vcombine.high %v1896, %v1896
      %v1952 = vunpack.c.l.s4 1983009808
      %v1953 = vunpack.c.0.s8 %v1952
      %v1954 = vlaneseq
      %v1955 = vshrl.u32 %v1954, 7
      %v1956 = vsub.s32 %v1953, %v1955
      %v1957 = vrot.slane %v1896, %v1956
      %v1959 = vunpack.c.l.s4 1983009808
      %v1960 = vunpack.c.0.s8 %v1959
      %v1961 = vlaneseq
      %v1962 = vshrl.u32 %v1961, 7
      %v1963 = vsub.s32 %v1960, %v1962
      %v1964 = vrot.slane %v1950, %v1963
      %v1965 = vcombine.high %v1957, %v1957
      %v1966 = vcombine.high %v1964, %v1964
      %v1967 = vcombine.high %v1905, %v1905
      %v1969 = vunpack.c.l.s4 1983009808
      %v1970 = vunpack.c.0.s8 %v1969
      %v1971 = vlaneseq
      %v1972 = vshrl.u32 %v1971, 7
      %v1973 = vsub.s32 %v1970, %v1972
      %v1974 = vrot.slane %v1905, %v1973
      %v1976 = vunpack.c.l.s4 1983009808
      %v1977 = vunpack.c.0.s8 %v1976
      %v1978 = vlaneseq
      %v1979 = vshrl.u32 %v1978, 7
      %v1980 = vsub.s32 %v1977, %v1979
      %v1981 = vrot.slane %v1967, %v1980
      %v1982 = vcombine.high %v1974, %v1974
      %v1983 = vcombine.high %v1981, %v1981
      %v2000 = vld [vmem:[%s5] sm:$0xff]
      %v2001 = vld [vmem:[%s5 + $0x8] sm:$0xff]
      %v2002 = vld [vmem:[%s5 + $0x10] sm:$0x3]
      %v2007 = vrot.slane %v451, 7
      %v2008 = vrot.slane %v452, 7
      %v2009 = vrot.slane %v453, 7
      %v2010 = vrot.slane %v454, 7
      %v2015 = vsel %vm482, 0.0, %v2007
      %v2016 = vsel %vm482, 0.0, %v2008
      %v2017 = vsel %vm482, 0.0, %v2009
      %v2018 = vsel %vm482, 0.0, %v2010
      %vm2019 = vcmask 1044480
      %v2020 = vsel %vm2019, %v2015, 0.0
      %v2021 = vsel %vm2019, %v2016, 0.0
      %v2022 = vsel %vm2019, %v2017, 0.0
      %v2023 = vsel %vm2019, %v2018, 0.0
      %v2027 = vcombine.high 0.0, 0.0
      %v2028 = vcombine.high %v2020, %v2020
      %v2029 = vcombine.high %v2021, %v2021
      %v2030 = vcombine.high %v2022, %v2022
      %vm2031 = vcmask 1042432
      %vm2032 = vcmask 1046532
      %vm2033 = vmor %vm2031, %vm2032
      %v2034 = vrot.slane 0.0, 5
      %v2035 = vrot.slane %v2034, 4
      %v2036 = vrot.slane %v2027, 5
      %v2037 = vsel %vm2033, %v2035, %v2036
      %v2038 = vrot.slane %v2020, 5
      %v2039 = vrot.slane %v2038, 4
      %v2040 = vrot.slane %v2028, 5
      %v2041 = vsel %vm2033, %v2039, %v2040
      %v2042 = vrot.slane %v2021, 5
      %v2043 = vrot.slane %v2042, 4
      %v2044 = vrot.slane %v2029, 5
      %v2045 = vsel %vm2033, %v2043, %v2044
      %v2046 = vrot.slane %v2022, 5
      %v2047 = vrot.slane %v2046, 4
      %v2048 = vrot.slane %v2030, 5
      %v2049 = vsel %vm2033, %v2047, %v2048
      %vm2050 = vcmask 1045508
      %vm2051 = vmor %vm859, %vm2050
      %v2052 = vrot.slane 0.0, 6
      %v2053 = vrot.slane %v2052, 4
      %v2054 = vrot.slane %v2027, 6
      %v2055 = vsel %vm2051, %v2053, %v2054
      %v2056 = vrot.slane %v2020, 6
      %v2057 = vrot.slane %v2056, 4
      %v2058 = vrot.slane %v2028, 6
      %v2059 = vsel %vm2051, %v2057, %v2058
      %v2060 = vrot.slane %v2021, 6
      %v2061 = vrot.slane %v2060, 4
      %v2062 = vrot.slane %v2029, 6
      %v2063 = vsel %vm2051, %v2061, %v2062
      %v2064 = vrot.slane %v2022, 6
      %v2065 = vrot.slane %v2064, 4
      %v2066 = vrot.slane %v2030, 6
      %v2067 = vsel %vm2051, %v2065, %v2066
      %v2069 = vcombine.high %v2023, %v2023
      %v2070 = vrot.slane %v2023, 5
      %v2071 = vrot.slane %v2070, 4
      %v2072 = vrot.slane %v2069, 5
      %v2073 = vsel %vm2033, %v2071, %v2072
      %v2074 = vrot.slane %v2023, 6
      %v2075 = vrot.slane %v2074, 4
      %v2076 = vrot.slane %v2069, 6
      %v2077 = vsel %vm2051, %v2075, %v2076
      %v2078 = vcombine.low 0.0, %v2020
      %v2079 = vcombine.low %v2021, %v2022
      %v2082 = vcombine.low %v2037, %v2041
      %v2083 = vcombine.low %v2045, %v2049
      %2084 = vrot.lane.b32.xlu0 %v2082, 2
      %v2085 = vpop.permute.xlu0 %2084
      %2086 = vrot.lane.b32.xlu0 %v2083, 2
      %v2087 = vpop.permute.xlu0 %2086
      %v2090 = vcombine.low %v2055, %v2059
      %v2091 = vcombine.low %v2063, %v2067
      %2092 = vrot.lane.b32.xlu0 %v2090, 4
      %v2093 = vpop.permute.xlu0 %2092
      %2094 = vrot.lane.b32.xlu0 %v2091, 4
      %v2095 = vpop.permute.xlu0 %2094
      %v2098 = vcombine.low %v2020, %v2021
      %v2099 = vcombine.low %v2022, %v2023
      %2100 = vrot.lane.b32.xlu0 %v2098, 6
      %v2101 = vpop.permute.xlu0 %2100
      %2102 = vrot.lane.b32.xlu0 %v2099, 6
      %v2103 = vpop.permute.xlu0 %2102
      %v2106 = vcombine.low %v2041, %v2045
      %v2107 = vcombine.low %v2049, %v2073
      %2108 = vrot.lane.b32.xlu0 %v2106, 8
      %v2109 = vpop.permute.xlu0 %2108
      %2110 = vrot.lane.b32.xlu0 %v2107, 8
      %v2111 = vpop.permute.xlu0 %2110
      %v2114 = vcombine.low %v2059, %v2063
      %v2115 = vcombine.low %v2067, %v2077
      %2116 = vrot.lane.b32.xlu0 %v2114, 10
      %v2117 = vpop.permute.xlu0 %2116
      %2118 = vrot.lane.b32.xlu0 %v2115, 10
      %v2119 = vpop.permute.xlu0 %2118
      %v2122 = vcombine.low %v2023, 0.0
      %2123 = vrot.lane.b32.xlu0 %v2079, 12
      %v2124 = vpop.permute.xlu0 %2123
      %2125 = vrot.lane.b32.xlu0 %v2122, 12
      %v2126 = vpop.permute.xlu0 %2125
      %v2129 = vcombine.low %v2073, %v2037
      %2130 = vrot.lane.b32.xlu0 %v2083, 14
      %v2131 = vpop.permute.xlu0 %2130
      %2132 = vrot.lane.b32.xlu0 %v2129, 14
      %v2133 = vpop.permute.xlu0 %2132
      %v2136 = vcombine.low %v2077, %v2055
      %2137 = vrot.lane.b32.xlu0 %v2091, 16
      %v2138 = vpop.permute.xlu0 %2137
      %2139 = vrot.lane.b32.xlu0 %v2136, 16
      %v2140 = vpop.permute.xlu0 %2139
      %v2143 = vsel %vm762, %v2078, %v2085
      %v2144 = vsel %vm762, %v2079, %v2087
      %v2145 = vsel %vm771, %v2143, %v2093
      %v2146 = vsel %vm771, %v2144, %v2095
      %v2147 = vsel %vm780, %v2145, %v2101
      %v2148 = vsel %vm780, %v2146, %v2103
      %v2149 = vsel %vm789, %v2147, %v2109
      %v2150 = vsel %vm789, %v2148, %v2111
      %v2151 = vsel %vm798, %v2149, %v2117
      %v2152 = vsel %vm798, %v2150, %v2119
      %v2153 = vsel %vm807, %v2151, %v2124
      %v2154 = vsel %vm807, %v2152, %v2126
      %v2155 = vsel %vm816, %v2153, %v2131
      %v2156 = vsel %vm816, %v2154, %v2133
      %v2157 = vsel %vm825, %v2155, %v2138
      %v2158 = vsel %vm825, %v2156, %v2140
      %v2160 = vsel %vm834, %v2157, 0
      %v2163 = vsel %vm834, %v2158, 0
      %v2166 = vsel %vm859, %v2002, 0
      %2168 = vmatprep.subr.mxu0 0.0
      %2169 = vmatpush1.msra.mxu0 0.0
      %2170 = vmatprep.subr.mxu0 0.0
      %2171 = vmatpush1.msra.mxu0 0.0
      %2172 = vmatprep.subr.mxu0 0.0
      %2173 = vmatpush1.msra.mxu0 0.0
      %2174 = vmatprep.subr.mxu0 0.0
      %2175 = vmatpush1.msra.mxu0 0.0
      %2176 = vmatprep.subr.mxu0 0.0
      %2177 = vmatpush1.msra.mxu0 0.0
      %2178 = vmatprep.subr.mxu0 0.0
      %2179 = vmatpush1.msra.mxu0 0.0
      %2180 = vmatprep.subr.mxu0 0.0
      %2181 = vmatpush1.msra.mxu0 0.0
      %2182 = vmatprep.subr.mxu0 0.0
      %2183 = vmatpush1.msra.mxu0 0.0
      %2184 = vmatprep.subr.mxu0 0.0
      %2185 = vmatpush1.msra.mxu0 0.0
      %2186 = vmatprep.subr.mxu0 0.0
      %2187 = vmatpush1.msra.mxu0 0.0
      %2188 = vmatprep.subr.mxu0 0.0
      %2189 = vmatpush1.msra.mxu0 0.0
      %2190 = vmatprep.subr.mxu0 0.0
      %2191 = vmatpush1.msra.mxu0 0.0
      %2192 = vmatprep.subr.mxu0 0.0
      %2193 = vmatpush1.msra.mxu0 0.0
      %2194 = vmatprep.subr.mxu0 0.0
      %2195 = vmatpush1.msra.mxu0 %v2166
      %2196 = vmatprep.subr.mxu0 0.0
      %2197 = vmatpush1.msra.mxu0 %v2001
      %2198 = vmatprep.subr.mxu0 0.0
      %2199 = vmatpush1.msra.mxu0 %v2000
      %2200 = vmatprep.subr.mxu0 0.0
      %2201 = vmatpush2.msra.mxu0 0.0
      %2202 = vmatprep.subr.mxu0 0.0
      %2203 = vmatpush2.msra.mxu0 0.0
      %2204 = vmatprep.subr.mxu0 0.0
      %2205 = vmatpush2.msra.mxu0 0.0
      %2206 = vmatprep.subr.mxu0 0.0
      %2207 = vmatpush2.msra.mxu0 0.0
      %2208 = vmatprep.subr.mxu0 0.0
      %2209 = vmatpush2.msra.mxu0 0.0
      %2210 = vmatprep.subr.mxu0 0.0
      %2211 = vmatpush2.msra.mxu0 0.0
      %2212 = vmatprep.subr.mxu0 0.0
      %2213 = vmatpush2.msra.mxu0 0.0
      %2214 = vmatprep.subr.mxu0 0.0
      %2215 = vmatpush2.msra.mxu0 0.0
      %2216 = vmatprep.subr.mxu0 0.0
      %2217 = vmatpush2.msra.mxu0 0.0
      %2218 = vmatprep.subr.mxu0 0.0
      %2219 = vmatpush2.msra.mxu0 0.0
      %2220 = vmatprep.subr.mxu0 0.0
      %2221 = vmatpush2.msra.mxu0 0.0
      %2222 = vmatprep.subr.mxu0 0.0
      %2223 = vmatpush2.msra.mxu0 0.0
      %2224 = vmatprep.subr.mxu0 0.0
      %2225 = vmatpush2.msra.mxu0 0.0
      %2226 = vmatprep.subr.mxu0 0.0
      %2227 = vmatpush2.msra.mxu0 0.0
      %2228 = vmatprep.subr.mxu0 0.0
      %2229 = vmatpush2.msra.mxu0 0.0
      %2230 = vmatprep.subr.mxu0 0.0
      %2231 = vmatpush2.msra.mxu0 0.0
      %2232 = vmatprep.mubr.f32.mxu0 0.0
      %2233 = vmatmul.mubr.f32.gmra.mxu0 %v2160
      %v2234 = vpop.f32.mrf.mxu0
      %v2235 = vadd.f32 0.0, %v2234
      %v2236 = vpop.f32.mrf.mxu0
      %2237 = vmatprep.mubr.f32.mxu0 0.0
      %2238 = vmatmul.mubr.f32.gmra.mxu0 %v2163
      %v2239 = vpop.f32.mrf.mxu0
      %v2240 = vadd.f32 0.0, %v2239
      %v2241 = vpop.f32.mrf.mxu0
      %2242 = vdwg.mxu0
      %v2245 = vcombine.high %v2235, %v2235
      %v2246 = vcombine.high %v2240, %v2240
      %v2249 = vmax.f32 %v2235, 0.0
      %v2250 = vmax.f32 %v2245, 0.0
      %v2251 = vmax.f32 %v2240, 0.0
      %v2252 = vmax.f32 %v2246, 0.0
      %v2257 = vrot.slane %v2249, 7
      %v2258 = vrot.slane %v2250, 7
      %v2259 = vrot.slane %v2251, 7
      %v2260 = vrot.slane %v2252, 7
      %v2265 = vsel %vm482, 0.0, %v2257
      %v2266 = vsel %vm482, 0.0, %v2258
      %v2267 = vsel %vm482, 0.0, %v2259
      %v2268 = vsel %vm482, 0.0, %v2260
      %v2269 = vsel %vm2019, %v2265, 0.0
      %v2270 = vsel %vm2019, %v2266, 0.0
      %v2271 = vsel %vm2019, %v2267, 0.0
      %v2272 = vsel %vm2019, %v2268, 0.0
      %v2276 = vcombine.high %v2269, %v2269
      %v2277 = vcombine.high %v2270, %v2270
      %v2278 = vcombine.high %v2271, %v2271
      %v2279 = vrot.slane %v2269, 5
      %v2280 = vrot.slane %v2279, 4
      %v2281 = vrot.slane %v2276, 5
      %v2282 = vsel %vm2033, %v2280, %v2281
      %v2283 = vrot.slane %v2270, 5
      %v2284 = vrot.slane %v2283, 4
      %v2285 = vrot.slane %v2277, 5
      %v2286 = vsel %vm2033, %v2284, %v2285
      %v2287 = vrot.slane %v2271, 5
      %v2288 = vrot.slane %v2287, 4
      %v2289 = vrot.slane %v2278, 5
      %v2290 = vsel %vm2033, %v2288, %v2289
      %v2291 = vrot.slane %v2269, 6
      %v2292 = vrot.slane %v2291, 4
      %v2293 = vrot.slane %v2276, 6
      %v2294 = vsel %vm2051, %v2292, %v2293
      %v2295 = vrot.slane %v2270, 6
      %v2296 = vrot.slane %v2295, 4
      %v2297 = vrot.slane %v2277, 6
      %v2298 = vsel %vm2051, %v2296, %v2297
      %v2299 = vrot.slane %v2271, 6
      %v2300 = vrot.slane %v2299, 4
      %v2301 = vrot.slane %v2278, 6
      %v2302 = vsel %vm2051, %v2300, %v2301
      %v2304 = vcombine.high %v2272, %v2272
      %v2305 = vrot.slane %v2272, 5
      %v2306 = vrot.slane %v2305, 4
      %v2307 = vrot.slane %v2304, 5
      %v2308 = vsel %vm2033, %v2306, %v2307
      %v2309 = vrot.slane %v2272, 6
      %v2310 = vrot.slane %v2309, 4
      %v2311 = vrot.slane %v2304, 6
      %v2312 = vsel %vm2051, %v2310, %v2311
      %v2313 = vcombine.low 0.0, %v2269
      %v2314 = vcombine.low %v2270, %v2271
      %v2317 = vcombine.low %v2037, %v2282
      %v2318 = vcombine.low %v2286, %v2290
      %2319 = vrot.lane.b32.xlu0 %v2317, 8
      %v2320 = vpop.permute.xlu0 %2319
      %2321 = vrot.lane.b32.xlu0 %v2318, 8
      %v2322 = vpop.permute.xlu0 %2321
      %v2325 = vcombine.low %v2055, %v2294
      %v2326 = vcombine.low %v2298, %v2302
      %2327 = vrot.lane.b32.xlu0 %v2325, 16
      %v2328 = vpop.permute.xlu0 %2327
      %2329 = vrot.lane.b32.xlu0 %v2326, 16
      %v2330 = vpop.permute.xlu0 %2329
      %v2333 = vcombine.low %v2269, %v2270
      %v2334 = vcombine.low %v2271, %v2272
      %2335 = vrot.lane.b32.xlu0 %v2333, 24
      %v2336 = vpop.permute.xlu0 %2335
      %2337 = vrot.lane.b32.xlu0 %v2334, 24
      %v2338 = vpop.permute.xlu0 %2337
      %v2341 = vcombine.low %v2282, %v2286
      %v2342 = vcombine.low %v2290, %v2308
      %2343 = vrot.lane.b32.xlu0 %v2341, 32
      %v2344 = vpop.permute.xlu0 %2343
      %2345 = vrot.lane.b32.xlu0 %v2342, 32
      %v2346 = vpop.permute.xlu0 %2345
      %v2349 = vcombine.low %v2294, %v2298
      %v2350 = vcombine.low %v2302, %v2312
      %2351 = vrot.lane.b32.xlu0 %v2349, 40
      %v2352 = vpop.permute.xlu0 %2351
      %2353 = vrot.lane.b32.xlu0 %v2350, 40
      %v2354 = vpop.permute.xlu0 %2353
      %v2357 = vcombine.low %v2272, 0.0
      %2358 = vrot.lane.b32.xlu0 %v2314, 48
      %v2359 = vpop.permute.xlu0 %2358
      %2360 = vrot.lane.b32.xlu0 %v2357, 48
      %v2361 = vpop.permute.xlu0 %2360
      %v2364 = vcombine.low %v2308, %v2037
      %2365 = vrot.lane.b32.xlu0 %v2318, 56
      %v2366 = vpop.permute.xlu0 %2365
      %2367 = vrot.lane.b32.xlu0 %v2364, 56
      %v2368 = vpop.permute.xlu0 %2367
      %v2371 = vcombine.low %v2312, %v2055
      %2372 = vrot.lane.b32.xlu0 %v2326, 64
      %v2373 = vpop.permute.xlu0 %2372
      %2374 = vrot.lane.b32.xlu0 %v2371, 64
      %v2375 = vpop.permute.xlu0 %2374
      %v2378 = vsel %vm789, %v2313, %v2320
      %v2379 = vsel %vm789, %v2314, %v2322
      %v2380 = vsel %vm825, %v2378, %v2328
      %v2381 = vsel %vm825, %v2379, %v2330
      %vm2382 = vcmask 195584
      %v2383 = vsel %vm2382, %v2380, %v2336
      %v2384 = vsel %vm2382, %v2381, %v2338
      %v2385 = vsel %vm1290, %v2383, %v2344
      %v2386 = vsel %vm1290, %v2384, %v2346
      %vm2387 = vcmask 326656
      %v2388 = vsel %vm2387, %v2385, %v2352
      %v2389 = vsel %vm2387, %v2386, %v2354
      %v2390 = vsel %vm1299, %v2388, %v2359
      %v2391 = vsel %vm1299, %v2389, %v2361
      %vm2392 = vcmask 457728
      %v2393 = vsel %vm2392, %v2390, %v2366
      %v2394 = vsel %vm2392, %v2391, %v2368
      %v2395 = vsel %vm1308, %v2393, %v2373
      %v2396 = vsel %vm1308, %v2394, %v2375
      %v2397 = vld [vmem:[%s6] sm:$0xff]
      %v2398 = vld [vmem:[%s6 + $0x8] sm:$0xff]
      %v2399 = vld [vmem:[%s6 + $0x10] sm:$0xff]
      %v2400 = vld [vmem:[%s6 + $0x18] sm:$0xff]
      %v2401 = vld [vmem:[%s6 + $0x20] sm:$0xff]
      %v2402 = vld [vmem:[%s6 + $0x28] sm:$0xff]
      %v2403 = vld [vmem:[%s6 + $0x30] sm:$0xff]
      %v2404 = vld [vmem:[%s6 + $0x38] sm:$0xff]
      %v2405 = vld [vmem:[%s6 + $0x40] sm:$0xff]
      %v2406 = vld [vmem:[%s6 + $0x48] sm:$0xff]
      %v2407 = vld [vmem:[%s6 + $0x50] sm:$0xff]
      %v2408 = vld [vmem:[%s6 + $0x58] sm:$0xff]
      %v2409 = vld [vmem:[%s6 + $0x60] sm:$0xff]
      %v2410 = vld [vmem:[%s6 + $0x68] sm:$0xff]
      %v2411 = vld [vmem:[%s6 + $0x70] sm:$0xff]
      %v2412 = vld [vmem:[%s6 + $0x78] sm:$0xff]
      %v2413 = vld [vmem:[%s6 + $0x80] sm:$0xff]
      %v2414 = vld [vmem:[%s6 + $0x88] sm:$0xff]
      %v2415 = vld [vmem:[%s6 + $0x90] sm:$0xff]
      %v2416 = vld [vmem:[%s6 + $0x98] sm:$0xff]
      %v2417 = vld [vmem:[%s6 + $0xa0] sm:$0xff]
      %v2418 = vld [vmem:[%s6 + $0xa8] sm:$0xff]
      %v2419 = vld [vmem:[%s6 + $0xb0] sm:$0xff]
      %v2420 = vld [vmem:[%s6 + $0xb8] sm:$0xff]
      %v2421 = vld [vmem:[%s6 + $0xc0] sm:$0xff]
      %v2422 = vld [vmem:[%s6 + $0xc8] sm:$0xff]
      %v2423 = vld [vmem:[%s6 + $0xd0] sm:$0xff]
      %vm2424 = vcmask 588800
      %v2426 = vsel %vm2424, %v2395, 0
      %v2429 = vsel %vm2424, %v2396, 0
      %2431 = vmatprep.subr.mxu0 0.0
      %2432 = vmatpush1.msra.mxu0 0.0
      %2433 = vmatprep.subr.mxu0 0.0
      %2434 = vmatpush1.msra.mxu0 0.0
      %2435 = vmatprep.subr.mxu0 0.0
      %2436 = vmatpush1.msra.mxu0 0.0
      %2437 = vmatprep.subr.mxu0 0.0
      %2438 = vmatpush1.msra.mxu0 0.0
      %2439 = vmatprep.subr.mxu0 0.0
      %2440 = vmatpush1.msra.mxu0 0.0
      %2441 = vmatprep.subr.mxu0 0.0
      %2442 = vmatpush1.msra.mxu0 0.0
      %2443 = vmatprep.subr.mxu0 0.0
      %2444 = vmatpush1.msra.mxu0 0.0
      %2445 = vmatprep.subr.mxu0 %v2422
      %2446 = vmatpush1.msra.mxu0 %v2421
      %2447 = vmatprep.subr.mxu0 %v2419
      %2448 = vmatpush1.msra.mxu0 %v2418
      %2449 = vmatprep.subr.mxu0 %v2416
      %2450 = vmatpush1.msra.mxu0 %v2415
      %2451 = vmatprep.subr.mxu0 %v2413
      %2452 = vmatpush1.msra.mxu0 %v2412
      %2453 = vmatprep.subr.mxu0 %v2410
      %2454 = vmatpush1.msra.mxu0 %v2409
      %2455 = vmatprep.subr.mxu0 %v2407
      %2456 = vmatpush1.msra.mxu0 %v2406
      %2457 = vmatprep.subr.mxu0 %v2404
      %2458 = vmatpush1.msra.mxu0 %v2403
      %2459 = vmatprep.subr.mxu0 %v2401
      %2460 = vmatpush1.msra.mxu0 %v2400
      %2461 = vmatprep.subr.mxu0 %v2398
      %2462 = vmatpush1.msra.mxu0 %v2397
      %2463 = vmatprep.subr.mxu0 0.0
      %2464 = vmatpush2.msra.mxu0 0.0
      %2465 = vmatprep.subr.mxu0 0.0
      %2466 = vmatpush2.msra.mxu0 0.0
      %2467 = vmatprep.subr.mxu0 0.0
      %2468 = vmatpush2.msra.mxu0 0.0
      %2469 = vmatprep.subr.mxu0 0.0
      %2470 = vmatpush2.msra.mxu0 0.0
      %2471 = vmatprep.subr.mxu0 0.0
      %2472 = vmatpush2.msra.mxu0 0.0
      %2473 = vmatprep.subr.mxu0 0.0
      %2474 = vmatpush2.msra.mxu0 0.0
      %2475 = vmatprep.subr.mxu0 0.0
      %2476 = vmatpush2.msra.mxu0 0.0
      %2477 = vmatprep.subr.mxu0 0.0
      %2478 = vmatpush2.msra.mxu0 0.0
      %2479 = vmatprep.subr.mxu0 0.0
      %2480 = vmatpush2.msra.mxu0 0.0
      %2481 = vmatprep.subr.mxu0 0.0
      %2482 = vmatpush2.msra.mxu0 0.0
      %2483 = vmatprep.subr.mxu0 0.0
      %2484 = vmatpush2.msra.mxu0 0.0
      %2485 = vmatprep.subr.mxu0 0.0
      %2486 = vmatpush2.msra.mxu0 0.0
      %2487 = vmatprep.subr.mxu0 0.0
      %2488 = vmatpush2.msra.mxu0 0.0
      %2489 = vmatprep.subr.mxu0 0.0
      %2490 = vmatpush2.msra.mxu0 0.0
      %2491 = vmatprep.subr.mxu0 0.0
      %2492 = vmatpush2.msra.mxu0 0.0
      %2493 = vmatprep.subr.mxu0 0.0
      %2494 = vmatpush2.msra.mxu0 0.0
      %2495 = vmatprep.mubr.f32.mxu0 0.0
      %2496 = vmatmul.mubr.f32.gmra.mxu0 %v2426
      %v2497 = vpop.f32.mrf.mxu0
      %v2498 = vadd.f32 0.0, %v2497
      %v2499 = vpop.f32.mrf.mxu0
      %v2500 = vadd.f32 0.0, %v2499
      %2501 = vmatprep.mubr.f32.mxu0 0.0
      %2502 = vmatmul.mubr.f32.gmra.mxu0 %v2429
      %v2503 = vpop.f32.mrf.mxu0
      %v2504 = vadd.f32 0.0, %v2503
      %v2505 = vpop.f32.mrf.mxu0
      %v2506 = vadd.f32 0.0, %v2505
      %2507 = vdwg.mxu0
      %2508 = vmatprep.subr.mxu0 0.0
      %2509 = vmatpush1.msra.mxu0 0.0
      %2510 = vmatprep.subr.mxu0 0.0
      %2511 = vmatpush1.msra.mxu0 0.0
      %2512 = vmatprep.subr.mxu0 0.0
      %2513 = vmatpush1.msra.mxu0 0.0
      %2514 = vmatprep.subr.mxu0 0.0
      %2515 = vmatpush1.msra.mxu0 0.0
      %2516 = vmatprep.subr.mxu0 0.0
      %2517 = vmatpush1.msra.mxu0 0.0
      %2518 = vmatprep.subr.mxu0 0.0
      %2519 = vmatpush1.msra.mxu0 0.0
      %2520 = vmatprep.subr.mxu0 0.0
      %2521 = vmatpush1.msra.mxu0 0.0
      %2522 = vmatprep.subr.mxu0 0.0
      %2523 = vmatpush1.msra.mxu0 %v2423
      %2524 = vmatprep.subr.mxu0 0.0
      %2525 = vmatpush1.msra.mxu0 %v2420
      %2526 = vmatprep.subr.mxu0 0.0
      %2527 = vmatpush1.msra.mxu0 %v2417
      %2528 = vmatprep.subr.mxu0 0.0
      %2529 = vmatpush1.msra.mxu0 %v2414
      %2530 = vmatprep.subr.mxu0 0.0
      %2531 = vmatpush1.msra.mxu0 %v2411
      %2532 = vmatprep.subr.mxu0 0.0
      %2533 = vmatpush1.msra.mxu0 %v2408
      %2534 = vmatprep.subr.mxu0 0.0
      %2535 = vmatpush1.msra.mxu0 %v2405
      %2536 = vmatprep.subr.mxu0 0.0
      %2537 = vmatpush1.msra.mxu0 %v2402
      %2538 = vmatprep.subr.mxu0 0.0
      %2539 = vmatpush1.msra.mxu0 %v2399
      %2540 = vmatprep.subr.mxu0 0.0
      %2541 = vmatpush2.msra.mxu0 0.0
      %2542 = vmatprep.subr.mxu0 0.0
      %2543 = vmatpush2.msra.mxu0 0.0
      %2544 = vmatprep.subr.mxu0 0.0
      %2545 = vmatpush2.msra.mxu0 0.0
      %2546 = vmatprep.subr.mxu0 0.0
      %2547 = vmatpush2.msra.mxu0 0.0
      %2548 = vmatprep.subr.mxu0 0.0
      %2549 = vmatpush2.msra.mxu0 0.0
      %2550 = vmatprep.subr.mxu0 0.0
      %2551 = vmatpush2.msra.mxu0 0.0
      %2552 = vmatprep.subr.mxu0 0.0
      %2553 = vmatpush2.msra.mxu0 0.0
      %2554 = vmatprep.subr.mxu0 0.0
      %2555 = vmatpush2.msra.mxu0 0.0
      %2556 = vmatprep.subr.mxu0 0.0
      %2557 = vmatpush2.msra.mxu0 0.0
      %2558 = vmatprep.subr.mxu0 0.0
      %2559 = vmatpush2.msra.mxu0 0.0
      %2560 = vmatprep.subr.mxu0 0.0
      %2561 = vmatpush2.msra.mxu0 0.0
      %2562 = vmatprep.subr.mxu0 0.0
      %2563 = vmatpush2.msra.mxu0 0.0
      %2564 = vmatprep.subr.mxu0 0.0
      %2565 = vmatpush2.msra.mxu0 0.0
      %2566 = vmatprep.subr.mxu0 0.0
      %2567 = vmatpush2.msra.mxu0 0.0
      %2568 = vmatprep.subr.mxu0 0.0
      %2569 = vmatpush2.msra.mxu0 0.0
      %2570 = vmatprep.subr.mxu0 0.0
      %2571 = vmatpush2.msra.mxu0 0.0
      %2572 = vmatprep.mubr.f32.mxu0 0.0
      %2573 = vmatmul.mubr.f32.gmra.mxu0 %v2426
      %v2574 = vpop.f32.mrf.mxu0
      %v2575 = vadd.f32 0.0, %v2574
      %v2576 = vpop.f32.mrf.mxu0
      %2577 = vmatprep.mubr.f32.mxu0 0.0
      %2578 = vmatmul.mubr.f32.gmra.mxu0 %v2429
      %v2579 = vpop.f32.mrf.mxu0
      %v2580 = vadd.f32 0.0, %v2579
      %v2581 = vpop.f32.mrf.mxu0
      %2582 = vdwg.mxu0
      %vm2583 = vcmp.gt.f32.partialorder %v2498, 0.0
      %vm2584 = vcmp.gt.f32.partialorder %v2500, 0.0
      %vm2585 = vcmp.gt.f32.partialorder %v2575, 0.0
      %vm2586 = vcmp.gt.f32.partialorder %v2504, 0.0
      %vm2587 = vcmp.gt.f32.partialorder %v2506, 0.0
      %vm2588 = vcmp.gt.f32.partialorder %v2580, 0.0
      %v2589 = vmul.f32 %v2498, 0.2
      %v2590 = vmul.f32 %v2500, 0.2
      %v2591 = vmul.f32 %v2575, 0.2
      %v2592 = vmul.f32 %v2504, 0.2
      %v2593 = vmul.f32 %v2506, 0.2
      %v2594 = vmul.f32 %v2580, 0.2
      %v2595 = vsel %vm2583, %v2498, %v2589
      %v2596 = vsel %vm2584, %v2500, %v2590
      %v2597 = vsel %vm2585, %v2575, %v2591
      %v2598 = vsel %vm2586, %v2504, %v2592
      %v2599 = vsel %vm2587, %v2506, %v2593
      %v2600 = vsel %vm2588, %v2580, %v2594
      %v2603 = vcombine.high %v2595, %v2595
      %v2604 = vcombine.high %v2598, %v2598
      %v2607 = vlaneseq
      %v2608 = vshrl.u32 %v2607, 7
      %v2609 = vsub.s32 0, %v2608
      %v2610 = vrot.slane %v1923, %v2609
      %v2611 = vlaneseq
      %v2612 = vshrl.u32 %v2611, 7
      %v2613 = vsub.s32 0, %v2612
      %v2614 = vrot.slane %v1931, %v2613
      %v2615 = vlaneseq
      %v2616 = vshrl.u32 %v2615, 7
      %v2617 = vsub.s32 0, %v2616
      %v2618 = vrot.slane %v1930, %v2617
      %v2619 = vlaneseq
      %v2620 = vshrl.u32 %v2619, 7
      %v2621 = vsub.s32 0, %v2620
      %v2622 = vrot.slane %v1932, %v2621
      %v2623 = vlaneseq
      %v2624 = vshrl.u32 %v2623, 7
      %v2625 = vsub.s32 0, %v2624
      %v2626 = vrot.slane %v1940, %v2625
      %v2627 = vlaneseq
      %v2628 = vshrl.u32 %v2627, 7
      %v2629 = vsub.s32 0, %v2628
      %v2630 = vrot.slane %v1948, %v2629
      %v2631 = vlaneseq
      %v2632 = vshrl.u32 %v2631, 7
      %v2633 = vsub.s32 0, %v2632
      %v2634 = vrot.slane %v1947, %v2633
      %v2635 = vlaneseq
      %v2636 = vshrl.u32 %v2635, 7
      %v2637 = vsub.s32 0, %v2636
      %v2638 = vrot.slane %v1949, %v2637
      %v2639 = vlaneseq
      %v2640 = vshrl.u32 %v2639, 7
      %v2641 = vsub.s32 0, %v2640
      %v2642 = vrot.slane %v1957, %v2641
      %v2643 = vlaneseq
      %v2644 = vshrl.u32 %v2643, 7
      %v2645 = vsub.s32 0, %v2644
      %v2646 = vrot.slane %v1965, %v2645
      %v2647 = vlaneseq
      %v2648 = vshrl.u32 %v2647, 7
      %v2649 = vsub.s32 0, %v2648
      %v2650 = vrot.slane %v1964, %v2649
      %v2651 = vlaneseq
      %v2652 = vshrl.u32 %v2651, 7
      %v2653 = vsub.s32 0, %v2652
      %v2654 = vrot.slane %v1966, %v2653
      %v2655 = vlaneseq
      %v2656 = vshrl.u32 %v2655, 7
      %v2657 = vsub.s32 0, %v2656
      %v2658 = vrot.slane %v1974, %v2657
      %v2659 = vlaneseq
      %v2660 = vshrl.u32 %v2659, 7
      %v2661 = vsub.s32 0, %v2660
      %v2662 = vrot.slane %v1982, %v2661
      %v2663 = vlaneseq
      %v2664 = vshrl.u32 %v2663, 7
      %v2665 = vsub.s32 0, %v2664
      %v2666 = vrot.slane %v1981, %v2665
      %v2667 = vlaneseq
      %v2668 = vshrl.u32 %v2667, 7
      %v2669 = vsub.s32 0, %v2668
      %v2670 = vrot.slane %v1983, %v2669
      %vm2671 = vcmask 1041409
      %v2672 = vsel %vm2671, %v2614, %v2610
      %vm2673 = vcmask 1042434
      %v2674 = vsel %vm2673, %v2618, %v2672
      %vm2675 = vcmask 1043459
      %v2676 = vsel %vm2675, %v2622, %v2674
      %v2677 = vsel %vm2671, %v2630, %v2626
      %v2678 = vsel %vm2673, %v2634, %v2677
      %v2679 = vsel %vm2675, %v2638, %v2678
      %v2680 = vsel %vm2671, %v2646, %v2642
      %v2681 = vsel %vm2673, %v2650, %v2680
      %v2682 = vsel %vm2675, %v2654, %v2681
      %v2683 = vsel %vm2671, %v2662, %v2658
      %v2684 = vsel %vm2673, %v2666, %v2683
      %v2685 = vsel %vm2675, %v2670, %v2684
      %vm2690 = vcmask 125952
      %v2691 = vsel %vm2690, %v2676, 0.0
      %v2692 = vsel %vm2690, %v2679, 0.0
      %v2693 = vadd.f32 %v2691, %v2692
      %v2694 = vsel %vm2690, %v2682, 0.0
      %v2695 = vadd.f32 %v2693, %v2694
      %v2696 = vsel %vm2690, %v2685, 0.0
      %v2697 = vadd.f32 %v2695, %v2696
      %v2698 = vrot.slane %v2697, 4
      %v2699 = vadd.f32 %v2697, %v2698
      %v2700 = vrot.slane %v2699, 2
      %v2701 = vadd.f32 %v2699, %v2700
      %v2702 = vrot.slane %v2701, 1
      %v2703 = vadd.f32 %v2701, %v2702
      %v2704 = vmul.f32 %v1923, %v1923
      %v2705 = vmul.f32 %v1931, %v1931
      %v2706 = vmul.f32 %v1930, %v1930
      %v2707 = vmul.f32 %v1932, %v1932
      %v2708 = vmul.f32 %v1940, %v1940
      %v2709 = vmul.f32 %v1948, %v1948
      %v2710 = vmul.f32 %v1947, %v1947
      %v2711 = vmul.f32 %v1949, %v1949
      %v2712 = vmul.f32 %v1957, %v1957
      %v2713 = vmul.f32 %v1965, %v1965
      %v2714 = vmul.f32 %v1964, %v1964
      %v2715 = vmul.f32 %v1966, %v1966
      %v2716 = vmul.f32 %v1974, %v1974
      %v2717 = vmul.f32 %v1982, %v1982
      %v2718 = vmul.f32 %v1981, %v1981
      %v2719 = vmul.f32 %v1983, %v1983
      %v2736 = vlaneseq
      %v2737 = vshrl.u32 %v2736, 7
      %v2738 = vsub.s32 0, %v2737
      %v2739 = vrot.slane %v2704, %v2738
      %v2740 = vlaneseq
      %v2741 = vshrl.u32 %v2740, 7
      %v2742 = vsub.s32 0, %v2741
      %v2743 = vrot.slane %v2705, %v2742
      %v2744 = vlaneseq
      %v2745 = vshrl.u32 %v2744, 7
      %v2746 = vsub.s32 0, %v2745
      %v2747 = vrot.slane %v2706, %v2746
      %v2748 = vlaneseq
      %v2749 = vshrl.u32 %v2748, 7
      %v2750 = vsub.s32 0, %v2749
      %v2751 = vrot.slane %v2707, %v2750
      %v2752 = vlaneseq
      %v2753 = vshrl.u32 %v2752, 7
      %v2754 = vsub.s32 0, %v2753
      %v2755 = vrot.slane %v2708, %v2754
      %v2756 = vlaneseq
      %v2757 = vshrl.u32 %v2756, 7
      %v2758 = vsub.s32 0, %v2757
      %v2759 = vrot.slane %v2709, %v2758
      %v2760 = vlaneseq
      %v2761 = vshrl.u32 %v2760, 7
      %v2762 = vsub.s32 0, %v2761
      %v2763 = vrot.slane %v2710, %v2762
      %v2764 = vlaneseq
      %v2765 = vshrl.u32 %v2764, 7
      %v2766 = vsub.s32 0, %v2765
      %v2767 = vrot.slane %v2711, %v2766
      %v2768 = vlaneseq
      %v2769 = vshrl.u32 %v2768, 7
      %v2770 = vsub.s32 0, %v2769
      %v2771 = vrot.slane %v2712, %v2770
      %v2772 = vlaneseq
      %v2773 = vshrl.u32 %v2772, 7
      %v2774 = vsub.s32 0, %v2773
      %v2775 = vrot.slane %v2713, %v2774
      %v2776 = vlaneseq
      %v2777 = vshrl.u32 %v2776, 7
      %v2778 = vsub.s32 0, %v2777
      %v2779 = vrot.slane %v2714, %v2778
      %v2780 = vlaneseq
      %v2781 = vshrl.u32 %v2780, 7
      %v2782 = vsub.s32 0, %v2781
      %v2783 = vrot.slane %v2715, %v2782
      %v2784 = vlaneseq
      %v2785 = vshrl.u32 %v2784, 7
      %v2786 = vsub.s32 0, %v2785
      %v2787 = vrot.slane %v2716, %v2786
      %v2788 = vlaneseq
      %v2789 = vshrl.u32 %v2788, 7
      %v2790 = vsub.s32 0, %v2789
      %v2791 = vrot.slane %v2717, %v2790
      %v2792 = vlaneseq
      %v2793 = vshrl.u32 %v2792, 7
      %v2794 = vsub.s32 0, %v2793
      %v2795 = vrot.slane %v2718, %v2794
      %v2796 = vlaneseq
      %v2797 = vshrl.u32 %v2796, 7
      %v2798 = vsub.s32 0, %v2797
      %v2799 = vrot.slane %v2719, %v2798
      %v2800 = vsel %vm2671, %v2743, %v2739
      %v2801 = vsel %vm2673, %v2747, %v2800
      %v2802 = vsel %vm2675, %v2751, %v2801
      %v2803 = vsel %vm2671, %v2759, %v2755
      %v2804 = vsel %vm2673, %v2763, %v2803
      %v2805 = vsel %vm2675, %v2767, %v2804
      %v2806 = vsel %vm2671, %v2775, %v2771
      %v2807 = vsel %vm2673, %v2779, %v2806
      %v2808 = vsel %vm2675, %v2783, %v2807
      %v2809 = vsel %vm2671, %v2791, %v2787
      %v2810 = vsel %vm2673, %v2795, %v2809
      %v2811 = vsel %vm2675, %v2799, %v2810
      %v2816 = vsel %vm2690, %v2802, 0.0
      %v2817 = vsel %vm2690, %v2805, 0.0
      %v2818 = vadd.f32 %v2816, %v2817
      %v2819 = vsel %vm2690, %v2808, 0.0
      %v2820 = vadd.f32 %v2818, %v2819
      %v2821 = vsel %vm2690, %v2811, 0.0
      %v2822 = vadd.f32 %v2820, %v2821
      %v2823 = vrot.slane %v2822, 4
      %v2824 = vadd.f32 %v2822, %v2823
      %v2825 = vrot.slane %v2824, 2
      %v2826 = vadd.f32 %v2824, %v2825
      %v2827 = vrot.slane %v2826, 1
      %v2828 = vadd.f32 %v2826, %v2827
      %v2829 = vmul.f32 %v2703, 0.0625
      %v2830 = vmul.f32 %v2828, 0.0625
      %v2831 = vmul.f32 %v2829, %v2829
      %v2832 = vsub.f32 %v2830, %v2831
      %v2833 = vlaneseq
      %v2834 = vshrl.u32 %v2833, 7
      %v2835 = vsub.s32 0, %v2834
      %v2836 = vrot.slane %v2829, %v2835
      %v2839 = vunpack.c.l.s4 1983009808
      %v2840 = vunpack.c.0.s8 %v2839
      %v2841 = vlaneseq
      %v2842 = vshrl.u32 %v2841, 7
      %v2843 = vsub.s32 %v2840, %v2842
      %v2844 = vrot.slane %v2836, %v2843
      %v2845 = vcombine.high %v2844, %v2844
      %v2846 = vrot.slane %v2844, 1
      %v2847 = vrot.slane %v2845, 1
      %v2852 = vsub.f32 %v1923, %v2844
      %v2853 = vsub.f32 %v1931, %v2846
      %v2854 = vsub.f32 %v1930, %v2845
      %v2855 = vsub.f32 %v1932, %v2847
      %v2856 = vsub.f32 %v1940, %v2844
      %v2857 = vsub.f32 %v1948, %v2846
      %v2858 = vsub.f32 %v1947, %v2845
      %v2859 = vsub.f32 %v1949, %v2847
      %v2860 = vsub.f32 %v1957, %v2844
      %v2861 = vsub.f32 %v1965, %v2846
      %v2862 = vsub.f32 %v1964, %v2845
      %v2863 = vsub.f32 %v1966, %v2847
      %v2864 = vsub.f32 %v1974, %v2844
      %v2865 = vsub.f32 %v1982, %v2846
      %v2866 = vsub.f32 %v1981, %v2845
      %v2867 = vsub.f32 %v1983, %v2847
      %v2868 = vadd.f32 %v2832, 1e-05
      %v2869 = vrsqrt.pop %v2868
      %v2870 = vlaneseq
      %v2871 = vshrl.u32 %v2870, 7
      %v2872 = vsub.s32 0, %v2871
      %v2873 = vrot.slane %v2869, %v2872
      %v2876 = vunpack.c.l.s4 1983009808
      %v2877 = vunpack.c.0.s8 %v2876
      %v2878 = vlaneseq
      %v2879 = vshrl.u32 %v2878, 7
      %v2880 = vsub.s32 %v2877, %v2879
      %v2881 = vrot.slane %v2873, %v2880
      %v2882 = vcombine.high %v2881, %v2881
      %v2883 = vrot.slane %v2881, 1
      %v2884 = vrot.slane %v2882, 1
      %v2889 = vmul.f32 %v2852, %v2881
      %v2890 = vmul.f32 %v2853, %v2883
      %v2891 = vmul.f32 %v2854, %v2882
      %v2892 = vmul.f32 %v2855, %v2884
      %v2893 = vmul.f32 %v2856, %v2881
      %v2894 = vmul.f32 %v2857, %v2883
      %v2895 = vmul.f32 %v2858, %v2882
      %v2896 = vmul.f32 %v2859, %v2884
      %v2897 = vmul.f32 %v2860, %v2881
      %v2898 = vmul.f32 %v2861, %v2883
      %v2899 = vmul.f32 %v2862, %v2882
      %v2900 = vmul.f32 %v2863, %v2884
      %v2901 = vmul.f32 %v2864, %v2881
      %v2902 = vmul.f32 %v2865, %v2883
      %v2903 = vmul.f32 %v2866, %v2882
      %v2904 = vmul.f32 %v2867, %v2884
      %v2905 = vadd.f32 %v2595, 1.0
      %v2906 = vadd.f32 %v2603, 1.0
      %v2907 = vadd.f32 %v2598, 1.0
      %v2908 = vadd.f32 %v2604, 1.0
      %v2926 = vunpack.c.l.s4 572653568
      %v2927 = vunpack.c.0.s8 %v2926
      %v2928 = vlaneseq
      %v2929 = vshrl.u32 %v2928, 7
      %v2930 = vsub.s32 %v2927, %v2929
      %v2931 = vrot.slane %v2889, %v2930
      %v2933 = vunpack.c.l.s4 572653568
      %v2934 = vunpack.c.0.s8 %v2933
      %v2935 = vlaneseq
      %v2936 = vshrl.u32 %v2935, 7
      %v2937 = vsub.s32 %v2934, %v2936
      %v2938 = vrot.slane %v2890, %v2937
      %v2940 = vunpack.c.l.s4 572653568
      %v2941 = vunpack.c.0.s8 %v2940
      %v2942 = vlaneseq
      %v2943 = vshrl.u32 %v2942, 7
      %v2944 = vsub.s32 %v2941, %v2943
      %v2945 = vrot.slane %v2891, %v2944
      %v2947 = vunpack.c.l.s4 572653568
      %v2948 = vunpack.c.0.s8 %v2947
      %v2949 = vlaneseq
      %v2950 = vshrl.u32 %v2949, 7
      %v2951 = vsub.s32 %v2948, %v2950
      %v2952 = vrot.slane %v2892, %v2951
      %v2954 = vunpack.c.l.s4 572653568
      %v2955 = vunpack.c.0.s8 %v2954
      %v2956 = vlaneseq
      %v2957 = vshrl.u32 %v2956, 7
      %v2958 = vsub.s32 %v2955, %v2957
      %v2959 = vrot.slane %v2893, %v2958
      %v2961 = vunpack.c.l.s4 572653568
      %v2962 = vunpack.c.0.s8 %v2961
      %v2963 = vlaneseq
      %v2964 = vshrl.u32 %v2963, 7
      %v2965 = vsub.s32 %v2962, %v2964
      %v2966 = vrot.slane %v2894, %v2965
      %v2968 = vunpack.c.l.s4 572653568
      %v2969 = vunpack.c.0.s8 %v2968
      %v2970 = vlaneseq
      %v2971 = vshrl.u32 %v2970, 7
      %v2972 = vsub.s32 %v2969, %v2971
      %v2973 = vrot.slane %v2895, %v2972
      %v2975 = vunpack.c.l.s4 572653568
      %v2976 = vunpack.c.0.s8 %v2975
      %v2977 = vlaneseq
      %v2978 = vshrl.u32 %v2977, 7
      %v2979 = vsub.s32 %v2976, %v2978
      %v2980 = vrot.slane %v2896, %v2979
      %v2982 = vunpack.c.l.s4 572653568
      %v2983 = vunpack.c.0.s8 %v2982
      %v2984 = vlaneseq
      %v2985 = vshrl.u32 %v2984, 7
      %v2986 = vsub.s32 %v2983, %v2985
      %v2987 = vrot.slane %v2897, %v2986
      %v2989 = vunpack.c.l.s4 572653568
      %v2990 = vunpack.c.0.s8 %v2989
      %v2991 = vlaneseq
      %v2992 = vshrl.u32 %v2991, 7
      %v2993 = vsub.s32 %v2990, %v2992
      %v2994 = vrot.slane %v2898, %v2993
      %v2996 = vunpack.c.l.s4 572653568
      %v2997 = vunpack.c.0.s8 %v2996
      %v2998 = vlaneseq
      %v2999 = vshrl.u32 %v2998, 7
      %v3000 = vsub.s32 %v2997, %v2999
      %v3001 = vrot.slane %v2899, %v3000
      %v3003 = vunpack.c.l.s4 572653568
      %v3004 = vunpack.c.0.s8 %v3003
      %v3005 = vlaneseq
      %v3006 = vshrl.u32 %v3005, 7
      %v3007 = vsub.s32 %v3004, %v3006
      %v3008 = vrot.slane %v2900, %v3007
      %v3010 = vunpack.c.l.s4 572653568
      %v3011 = vunpack.c.0.s8 %v3010
      %v3012 = vlaneseq
      %v3013 = vshrl.u32 %v3012, 7
      %v3014 = vsub.s32 %v3011, %v3013
      %v3015 = vrot.slane %v2901, %v3014
      %v3017 = vunpack.c.l.s4 572653568
      %v3018 = vunpack.c.0.s8 %v3017
      %v3019 = vlaneseq
      %v3020 = vshrl.u32 %v3019, 7
      %v3021 = vsub.s32 %v3018, %v3020
      %v3022 = vrot.slane %v2902, %v3021
      %v3024 = vunpack.c.l.s4 572653568
      %v3025 = vunpack.c.0.s8 %v3024
      %v3026 = vlaneseq
      %v3027 = vshrl.u32 %v3026, 7
      %v3028 = vsub.s32 %v3025, %v3027
      %v3029 = vrot.slane %v2903, %v3028
      %v3031 = vunpack.c.l.s4 572653568
      %v3032 = vunpack.c.0.s8 %v3031
      %v3033 = vlaneseq
      %v3034 = vshrl.u32 %v3033, 7
      %v3035 = vsub.s32 %v3032, %v3034
      %v3036 = vrot.slane %v2904, %v3035
      %vm3037 = vcmask 1044484
      %v3038 = vsel %vm2671, %v2938, %v2931
      %vm3039 = vcmask 1045509
      %v3040 = vsel %vm3039, %v2938, %v3038
      %v3041 = vsel %vm2673, %v2945, %v3040
      %vm3042 = vcmask 1046534
      %v3043 = vsel %vm3042, %v2945, %v3041
      %v3044 = vsel %vm2675, %v2952, %v3043
      %vm3045 = vcmask 1047559
      %v3046 = vsel %vm3045, %v2952, %v3044
      %v3047 = vsel %vm2671, %v2966, %v2959
      %v3048 = vsel %vm3039, %v2966, %v3047
      %v3049 = vsel %vm2673, %v2973, %v3048
      %v3050 = vsel %vm3042, %v2973, %v3049
      %v3051 = vsel %vm2675, %v2980, %v3050
      %v3052 = vsel %vm3045, %v2980, %v3051
      %v3053 = vsel %vm2671, %v2994, %v2987
      %v3054 = vsel %vm3039, %v2994, %v3053
      %v3055 = vsel %vm2673, %v3001, %v3054
      %v3056 = vsel %vm3042, %v3001, %v3055
      %v3057 = vsel %vm2675, %v3008, %v3056
      %v3058 = vsel %vm3045, %v3008, %v3057
      %v3059 = vsel %vm2671, %v3022, %v3015
      %v3060 = vsel %vm3039, %v3022, %v3059
      %v3061 = vsel %vm2673, %v3029, %v3060
      %v3062 = vsel %vm3042, %v3029, %v3061
      %v3063 = vsel %vm2675, %v3036, %v3062
      %v3064 = vsel %vm3045, %v3036, %v3063
      %v3069 = vmul.f32 %v2905, %v3046
      %v3070 = vmul.f32 %v2906, %v3052
      %v3071 = vmul.f32 %v2907, %v3058
      %v3072 = vmul.f32 %v2908, %v3064
      %3073 = vrot.lane.b32.xlu0 %v2595, 112
      %v3074 = vpop.permute.xlu0 %3073
      %3075 = vrot.lane.b32.xlu0 %v2603, 112
      %v3076 = vpop.permute.xlu0 %3075
      %3077 = vrot.lane.b32.xlu0 %v2598, 112
      %v3078 = vpop.permute.xlu0 %3077
      %3079 = vrot.lane.b32.xlu0 %v2604, 112
      %v3080 = vpop.permute.xlu0 %3079
      %v3085 = vadd.f32 %v3069, %v3074
      %v3086 = vadd.f32 %v3070, %v3076
      %v3087 = vadd.f32 %v3071, %v3078
      %v3088 = vadd.f32 %v3072, %v3080
      %vm3089 = vcmp.gt.f32.partialorder %v3085, 0.0
      %vm3090 = vcmp.gt.f32.partialorder %v3086, 0.0
      %vm3091 = vcmp.gt.f32.partialorder %v3087, 0.0
      %vm3092 = vcmp.gt.f32.partialorder %v3088, 0.0
      %v3093 = vmul.f32 %v3085, 0.2
      %v3094 = vmul.f32 %v3086, 0.2
      %v3095 = vmul.f32 %v3087, 0.2
      %v3096 = vmul.f32 %v3088, 0.2
      %v3097 = vsel %vm3089, %v3085, %v3093
      %v3098 = vsel %vm3090, %v3086, %v3094
      %v3099 = vsel %vm3091, %v3087, %v3095
      %v3100 = vsel %vm3092, %v3088, %v3096
      %v3101 = vld [vmem:[%s7] sm:$0xff]
      %v3102 = vld [vmem:[%s7 + $0x8] sm:$0xff]
      %v3103 = vld [vmem:[%s7 + $0x10] sm:$0xff]
      %v3104 = vld [vmem:[%s7 + $0x18] sm:$0xff]
      %v3105 = vld [vmem:[%s7 + $0x20] sm:$0xff]
      %v3106 = vld [vmem:[%s7 + $0x28] sm:$0xff]
      %v3107 = vld [vmem:[%s7 + $0x30] sm:$0xff]
      %v3108 = vld [vmem:[%s7 + $0x38] sm:$0xff]
      %v3109 = vld [vmem:[%s7 + $0x40] sm:$0xff]
      %v3110 = vld [vmem:[%s7 + $0x48] sm:$0xff]
      %v3111 = vld [vmem:[%s7 + $0x50] sm:$0xff]
      %v3112 = vld [vmem:[%s7 + $0x58] sm:$0xff]
      %v3113 = vld [vmem:[%s7 + $0x60] sm:$0xff]
      %v3114 = vld [vmem:[%s7 + $0x68] sm:$0xff]
      %v3115 = vld [vmem:[%s7 + $0x70] sm:$0xff]
      %v3116 = vld [vmem:[%s7 + $0x78] sm:$0xff]
      %v3117 = vld [vmem:[%s7 + $0x80] sm:$0xff]
      %v3118 = vld [vmem:[%s7 + $0x88] sm:$0xff]
      %v3123 = vrot.slane %v3097, 7
      %v3124 = vrot.slane %v3098, 7
      %v3125 = vrot.slane %v3099, 7
      %v3126 = vrot.slane %v3100, 7
      %v3131 = vsel %vm482, 0.0, %v3123
      %v3132 = vsel %vm482, 0.0, %v3124
      %v3133 = vsel %vm482, 0.0, %v3125
      %v3134 = vsel %vm482, 0.0, %v3126
      %v3135 = vsel %vm2019, %v3131, 0.0
      %v3136 = vsel %vm2019, %v3132, 0.0
      %v3137 = vsel %vm2019, %v3133, 0.0
      %v3138 = vsel %vm2019, %v3134, 0.0
      %v3142 = vcombine.high %v3135, %v3135
      %v3143 = vcombine.high %v3136, %v3136
      %v3144 = vcombine.high %v3137, %v3137
      %v3145 = vrot.slane %v3135, 5
      %v3146 = vrot.slane %v3145, 4
      %v3147 = vrot.slane %v3142, 5
      %v3148 = vsel %vm2033, %v3146, %v3147
      %v3149 = vrot.slane %v3136, 5
      %v3150 = vrot.slane %v3149, 4
      %v3151 = vrot.slane %v3143, 5
      %v3152 = vsel %vm2033, %v3150, %v3151
      %v3153 = vrot.slane %v3137, 5
      %v3154 = vrot.slane %v3153, 4
      %v3155 = vrot.slane %v3144, 5
      %v3156 = vsel %vm2033, %v3154, %v3155
      %v3157 = vrot.slane %v3135, 6
      %v3158 = vrot.slane %v3157, 4
      %v3159 = vrot.slane %v3142, 6
      %v3160 = vsel %vm2051, %v3158, %v3159
      %v3161 = vrot.slane %v3136, 6
      %v3162 = vrot.slane %v3161, 4
      %v3163 = vrot.slane %v3143, 6
      %v3164 = vsel %vm2051, %v3162, %v3163
      %v3165 = vrot.slane %v3137, 6
      %v3166 = vrot.slane %v3165, 4
      %v3167 = vrot.slane %v3144, 6
      %v3168 = vsel %vm2051, %v3166, %v3167
      %v3170 = vcombine.high %v3138, %v3138
      %v3171 = vrot.slane %v3138, 5
      %v3172 = vrot.slane %v3171, 4
      %v3173 = vrot.slane %v3170, 5
      %v3174 = vsel %vm2033, %v3172, %v3173
      %v3175 = vrot.slane %v3138, 6
      %v3176 = vrot.slane %v3175, 4
      %v3177 = vrot.slane %v3170, 6
      %v3178 = vsel %vm2051, %v3176, %v3177
      %v3179 = vcombine.low 0.0, %v3135
      %v3180 = vcombine.low %v3136, %v3137
      %v3183 = vcombine.low %v2037, %v3148
      %v3184 = vcombine.low %v3152, %v3156
      %3185 = vrot.lane.b32.xlu0 %v3183, 16
      %v3186 = vpop.permute.xlu0 %3185
      %3187 = vrot.lane.b32.xlu0 %v3184, 16
      %v3188 = vpop.permute.xlu0 %3187
      %v3191 = vcombine.low %v2055, %v3160
      %v3192 = vcombine.low %v3164, %v3168
      %3193 = vrot.lane.b32.xlu0 %v3191, 32
      %v3194 = vpop.permute.xlu0 %3193
      %3195 = vrot.lane.b32.xlu0 %v3192, 32
      %v3196 = vpop.permute.xlu0 %3195
      %v3199 = vcombine.low %v3135, %v3136
      %v3200 = vcombine.low %v3137, %v3138
      %3201 = vrot.lane.b32.xlu0 %v3199, 48
      %v3202 = vpop.permute.xlu0 %3201
      %3203 = vrot.lane.b32.xlu0 %v3200, 48
      %v3204 = vpop.permute.xlu0 %3203
      %v3207 = vcombine.low %v3148, %v3152
      %v3208 = vcombine.low %v3156, %v3174
      %3209 = vrot.lane.b32.xlu0 %v3207, 64
      %v3210 = vpop.permute.xlu0 %3209
      %3211 = vrot.lane.b32.xlu0 %v3208, 64
      %v3212 = vpop.permute.xlu0 %3211
      %v3215 = vcombine.low %v3160, %v3164
      %v3216 = vcombine.low %v3168, %v3178
      %3217 = vrot.lane.b32.xlu0 %v3215, 80
      %v3218 = vpop.permute.xlu0 %3217
      %3219 = vrot.lane.b32.xlu0 %v3216, 80
      %v3220 = vpop.permute.xlu0 %3219
      %v3223 = vcombine.low %v3138, 0.0
      %3224 = vrot.lane.b32.xlu0 %v3180, 96
      %v3225 = vpop.permute.xlu0 %3224
      %3226 = vrot.lane.b32.xlu0 %v3223, 96
      %v3227 = vpop.permute.xlu0 %3226
      %v3230 = vcombine.low %v3174, %v2037
      %3231 = vrot.lane.b32.xlu0 %v3184, 112
      %v3232 = vpop.permute.xlu0 %3231
      %3233 = vrot.lane.b32.xlu0 %v3230, 112
      %v3234 = vpop.permute.xlu0 %3233
      %v3237 = vcombine.low %v3178, %v2055
      %v3238 = vsel %vm825, %v3179, %v3186
      %v3239 = vsel %vm825, %v3180, %v3188
      %v3240 = vsel %vm1290, %v3238, %v3194
      %v3241 = vsel %vm1290, %v3239, %v3196
      %v3242 = vsel %vm1299, %v3240, %v3202
      %v3243 = vsel %vm1299, %v3241, %v3204
      %v3244 = vsel %vm1308, %v3242, %v3210
      %v3245 = vsel %vm1308, %v3243, %v3212
      %v3246 = vsel %vm1317, %v3244, %v3218
      %v3247 = vsel %vm1317, %v3245, %v3220
      %v3248 = vsel %vm1326, %v3246, %v3225
      %v3249 = vsel %vm1326, %v3247, %v3227
      %v3250 = vsel %vm1335, %v3248, %v3232
      %v3251 = vsel %vm1335, %v3249, %v3234
      %v3252 = vsel %vm825, %v3192, 0
      %v3254 = vsel %vm825, %v3237, 0
      %3256 = vmatprep.subr.mxu0 0.0
      %3257 = vmatpush1.msra.mxu0 %v3116
      %3258 = vmatprep.subr.mxu0 0.0
      %3259 = vmatpush1.msra.mxu0 %v3115
      %3260 = vmatprep.subr.mxu0 0.0
      %3261 = vmatpush1.msra.mxu0 %v3114
      %3262 = vmatprep.subr.mxu0 0.0
      %3263 = vmatpush1.msra.mxu0 %v3113
      %3264 = vmatprep.subr.mxu0 0.0
      %3265 = vmatpush1.msra.mxu0 %v3112
      %3266 = vmatprep.subr.mxu0 0.0
      %3267 = vmatpush1.msra.mxu0 %v3111
      %3268 = vmatprep.subr.mxu0 0.0
      %3269 = vmatpush1.msra.mxu0 %v3110
      %3270 = vmatprep.subr.mxu0 0.0
      %3271 = vmatpush1.msra.mxu0 %v3109
      %3272 = vmatprep.subr.mxu0 0.0
      %3273 = vmatpush1.msra.mxu0 %v3108
      %3274 = vmatprep.subr.mxu0 0.0
      %3275 = vmatpush1.msra.mxu0 %v3107
      %3276 = vmatprep.subr.mxu0 0.0
      %3277 = vmatpush1.msra.mxu0 %v3106
      %3278 = vmatprep.subr.mxu0 0.0
      %3279 = vmatpush1.msra.mxu0 %v3105
      %3280 = vmatprep.subr.mxu0 0.0
      %3281 = vmatpush1.msra.mxu0 %v3104
      %3282 = vmatprep.subr.mxu0 0.0
      %3283 = vmatpush1.msra.mxu0 %v3103
      %3284 = vmatprep.subr.mxu0 0.0
      %3285 = vmatpush1.msra.mxu0 %v3102
      %3286 = vmatprep.subr.mxu0 0.0
      %3287 = vmatpush1.msra.mxu0 %v3101
      %3288 = vmatprep.subr.mxu0 0.0
      %3289 = vmatpush2.msra.mxu0 0.0
      %3290 = vmatprep.subr.mxu0 0.0
      %3291 = vmatpush2.msra.mxu0 0.0
      %3292 = vmatprep.subr.mxu0 0.0
      %3293 = vmatpush2.msra.mxu0 0.0
      %3294 = vmatprep.subr.mxu0 0.0
      %3295 = vmatpush2.msra.mxu0 0.0
      %3296 = vmatprep.subr.mxu0 0.0
      %3297 = vmatpush2.msra.mxu0 0.0
      %3298 = vmatprep.subr.mxu0 0.0
      %3299 = vmatpush2.msra.mxu0 0.0
      %3300 = vmatprep.subr.mxu0 0.0
      %3301 = vmatpush2.msra.mxu0 0.0
      %3302 = vmatprep.subr.mxu0 0.0
      %3303 = vmatpush2.msra.mxu0 0.0
      %3304 = vmatprep.subr.mxu0 0.0
      %3305 = vmatpush2.msra.mxu0 0.0
      %3306 = vmatprep.subr.mxu0 0.0
      %3307 = vmatpush2.msra.mxu0 0.0
      %3308 = vmatprep.subr.mxu0 0.0
      %3309 = vmatpush2.msra.mxu0 0.0
      %3310 = vmatprep.subr.mxu0 0.0
      %3311 = vmatpush2.msra.mxu0 0.0
      %3312 = vmatprep.subr.mxu0 0.0
      %3313 = vmatpush2.msra.mxu0 0.0
      %3314 = vmatprep.subr.mxu0 0.0
      %3315 = vmatpush2.msra.mxu0 0.0
      %3316 = vmatprep.subr.mxu0 0.0
      %3317 = vmatpush2.msra.mxu0 %v3118
      %3318 = vmatprep.subr.mxu0 0.0
      %3319 = vmatpush2.msra.mxu0 %v3117
      %3320 = vmatprep.mubr.f32.mxu0 %v3252
      %3321 = vmatmul.mubr.f32.gmra.mxu0 %v3250
      %v3322 = vpop.f32.mrf.mxu0
      %v3323 = vadd.f32 0.0, %v3322
      %v3324 = vpop.f32.mrf.mxu0
      %3325 = vmatprep.mubr.f32.mxu0 %v3254
      %3326 = vmatmul.mubr.f32.gmra.mxu0 %v3251
      %v3327 = vpop.f32.mrf.mxu0
      %v3328 = vadd.f32 0.0, %v3327
      %v3329 = vpop.f32.mrf.mxu0
      %3330 = vdwg.mxu0
      %v3333 = vcombine.high %v3323, %v3323
      %v3334 = vcombine.high %v3328, %v3328
      %v3337 = vsel %vm2690, %v3323, 0.0
      %v3338 = vsel %vm2690, %v3333, 0.0
      %v3339 = vadd.f32 %v3337, %v3338
      %v3340 = vsel %vm2690, %v3328, 0.0
      %v3341 = vadd.f32 %v3339, %v3340
      %v3342 = vsel %vm2690, %v3334, 0.0
      %v3343 = vadd.f32 %v3341, %v3342
      %v3344 = vrot.slane %v3343, 4
      %v3345 = vadd.f32 %v3343, %v3344
      %v3346 = vrot.slane %v3345, 2
      %v3347 = vadd.f32 %v3345, %v3346
      %v3348 = vrot.slane %v3347, 1
      %v3349 = vadd.f32 %v3347, %v3348
      %v3350 = vmul.f32 %v3323, %v3323
      %v3351 = vmul.f32 %v3333, %v3333
      %v3352 = vmul.f32 %v3328, %v3328
      %v3353 = vmul.f32 %v3334, %v3334
      %v3354 = vsel %vm2690, %v3350, 0.0
      %v3355 = vsel %vm2690, %v3351, 0.0
      %v3356 = vadd.f32 %v3354, %v3355
      %v3357 = vsel %vm2690, %v3352, 0.0
      %v3358 = vadd.f32 %v3356, %v3357
      %v3359 = vsel %vm2690, %v3353, 0.0
      %v3360 = vadd.f32 %v3358, %v3359
      %v3361 = vrot.slane %v3360, 4
      %v3362 = vadd.f32 %v3360, %v3361
      %v3363 = vrot.slane %v3362, 2
      %v3364 = vadd.f32 %v3362, %v3363
      %v3365 = vrot.slane %v3364, 1
      %v3366 = vadd.f32 %v3364, %v3365
      %v3367 = vmul.f32 %v3349, 0.0625
      %v3368 = vmul.f32 %v3366, 0.0625
      %v3369 = vmul.f32 %v3367, %v3367
      %v3370 = vsub.f32 %v3368, %v3369
      %v3371 = vsub.f32 %v3323, %v3367
      %v3372 = vsub.f32 %v3333, %v3367
      %v3373 = vsub.f32 %v3328, %v3367
      %v3374 = vsub.f32 %v3334, %v3367
      %v3375 = vadd.f32 %v3370, 1e-05
      %v3376 = vrsqrt.pop %v3375
      %v3377 = vmul.f32 %v3371, %v3376
      %v3378 = vmul.f32 %v3372, %v3376
      %v3379 = vmul.f32 %v3373, %v3376
      %v3380 = vmul.f32 %v3374, %v3376
      %3385 = vrot.lane.b32.xlu0 %v3377, 32
      %v3386 = vpop.permute.xlu0 %3385
      %3387 = vrot.lane.b32.xlu0 %v3378, 32
      %v3388 = vpop.permute.xlu0 %3387
      %3389 = vrot.lane.b32.xlu0 %v3379, 32
      %v3390 = vpop.permute.xlu0 %3389
      %3391 = vrot.lane.b32.xlu0 %v3380, 32
      %v3392 = vpop.permute.xlu0 %3391
      %v3397 = vmul.f32 %v2905, %v3386
      %v3398 = vmul.f32 %v2906, %v3388
      %v3399 = vmul.f32 %v2907, %v3390
      %v3400 = vmul.f32 %v2908, %v3392
      %v3401 = vadd.f32 %v3397, %v3074
      %v3402 = vadd.f32 %v3398, %v3076
      %v3403 = vadd.f32 %v3399, %v3078
      %v3404 = vadd.f32 %v3400, %v3080
      %vm3405 = vcmp.gt.f32.partialorder %v3401, 0.0
      %vm3406 = vcmp.gt.f32.partialorder %v3402, 0.0
      %vm3407 = vcmp.gt.f32.partialorder %v3403, 0.0
      %vm3408 = vcmp.gt.f32.partialorder %v3404, 0.0
      %v3409 = vmul.f32 %v3401, 0.2
      %v3410 = vmul.f32 %v3402, 0.2
      %v3411 = vmul.f32 %v3403, 0.2
      %v3412 = vmul.f32 %v3404, 0.2
      %v3413 = vsel %vm3405, %v3401, %v3409
      %v3414 = vsel %vm3406, %v3402, %v3410
      %v3415 = vsel %vm3407, %v3403, %v3411
      %v3416 = vsel %vm3408, %v3404, %v3412
      %s3417 = scalar_lea.vmem %s7, 144
      %v3418 = vld [vmem:[%s3417] sm:$0xff]
      %v3419 = vld [vmem:[%s3417 + $0x8] sm:$0xff]
      %v3420 = vld [vmem:[%s3417 + $0x10] sm:$0xff]
      %v3421 = vld [vmem:[%s3417 + $0x18] sm:$0xff]
      %v3422 = vld [vmem:[%s3417 + $0x20] sm:$0xff]
      %v3423 = vld [vmem:[%s3417 + $0x28] sm:$0xff]
      %v3424 = vld [vmem:[%s3417 + $0x30] sm:$0xff]
      %v3425 = vld [vmem:[%s3417 + $0x38] sm:$0xff]
      %v3426 = vld [vmem:[%s3417 + $0x40] sm:$0xff]
      %v3427 = vld [vmem:[%s3417 + $0x48] sm:$0xff]
      %v3428 = vld [vmem:[%s3417 + $0x50] sm:$0xff]
      %v3429 = vld [vmem:[%s3417 + $0x58] sm:$0xff]
      %v3430 = vld [vmem:[%s3417 + $0x60] sm:$0xff]
      %v3431 = vld [vmem:[%s3417 + $0x68] sm:$0xff]
      %v3432 = vld [vmem:[%s3417 + $0x70] sm:$0xff]
      %v3433 = vld [vmem:[%s3417 + $0x78] sm:$0xff]
      %v3434 = vld [vmem:[%s3417 + $0x80] sm:$0xff]
      %v3435 = vld [vmem:[%s3417 + $0x88] sm:$0xff]
      %v3440 = vrot.slane %v3413, 7
      %v3441 = vrot.slane %v3414, 7
      %v3442 = vrot.slane %v3415, 7
      %v3443 = vrot.slane %v3416, 7
      %3444 = vrot.lane.b32.xlu0 %v3440, 96
      %v3445 = vpop.permute.xlu0 %3444
      %3446 = vrot.lane.b32.xlu0 %v3441, 96
      %v3447 = vpop.permute.xlu0 %3446
      %3448 = vrot.lane.b32.xlu0 %v3442, 96
      %v3449 = vpop.permute.xlu0 %3448
      %3450 = vrot.lane.b32.xlu0 %v3443, 96
      %v3451 = vpop.permute.xlu0 %3450
      %v3456 = vsel %vm482, 0.0, %v3445
      %v3457 = vsel %vm482, 0.0, %v3447
      %v3458 = vsel %vm482, 0.0, %v3449
      %v3459 = vsel %vm482, 0.0, %v3451
      %v3460 = vsel %vm2019, %v3456, 0.0
      %v3461 = vsel %vm2019, %v3457, 0.0
      %v3462 = vsel %vm2019, %v3458, 0.0
      %v3463 = vsel %vm2019, %v3459, 0.0
      %v3467 = vcombine.high %v3460, %v3460
      %v3468 = vcombine.high %v3461, %v3461
      %v3469 = vcombine.high %v3462, %v3462
      %v3470 = vrot.slane %v3460, 5
      %v3471 = vrot.slane %v3470, 4
      %v3472 = vrot.slane %v3467, 5
      %v3473 = vsel %vm2033, %v3471, %v3472
      %v3474 = vrot.slane %v3461, 5
      %v3475 = vrot.slane %v3474, 4
      %v3476 = vrot.slane %v3468, 5
      %v3477 = vsel %vm2033, %v3475, %v3476
      %v3478 = vrot.slane %v3462, 5
      %v3479 = vrot.slane %v3478, 4
      %v3480 = vrot.slane %v3469, 5
      %v3481 = vsel %vm2033, %v3479, %v3480
      %v3482 = vrot.slane %v3460, 6
      %v3483 = vrot.slane %v3482, 4
      %v3484 = vrot.slane %v3467, 6
      %v3485 = vsel %vm2051, %v3483, %v3484
      %v3486 = vrot.slane %v3461, 6
      %v3487 = vrot.slane %v3486, 4
      %v3488 = vrot.slane %v3468, 6
      %v3489 = vsel %vm2051, %v3487, %v3488
      %v3490 = vrot.slane %v3462, 6
      %v3491 = vrot.slane %v3490, 4
      %v3492 = vrot.slane %v3469, 6
      %v3493 = vsel %vm2051, %v3491, %v3492
      %v3495 = vcombine.high %v3463, %v3463
      %v3496 = vrot.slane %v3463, 5
      %v3497 = vrot.slane %v3496, 4
      %v3498 = vrot.slane %v3495, 5
      %v3499 = vsel %vm2033, %v3497, %v3498
      %v3500 = vrot.slane %v3463, 6
      %v3501 = vrot.slane %v3500, 4
      %v3502 = vrot.slane %v3495, 6
      %v3503 = vsel %vm2051, %v3501, %v3502
      %v3504 = vcombine.low 0.0, %v3460
      %v3505 = vcombine.low %v3461, %v3462
      %v3508 = vcombine.low %v2037, %v3473
      %v3509 = vcombine.low %v3477, %v3481
      %3510 = vrot.lane.b32.xlu0 %v3508, 16
      %v3511 = vpop.permute.xlu0 %3510
      %3512 = vrot.lane.b32.xlu0 %v3509, 16
      %v3513 = vpop.permute.xlu0 %3512
      %v3516 = vcombine.low %v2055, %v3485
      %v3517 = vcombine.low %v3489, %v3493
      %3518 = vrot.lane.b32.xlu0 %v3516, 32
      %v3519 = vpop.permute.xlu0 %3518
      %3520 = vrot.lane.b32.xlu0 %v3517, 32
      %v3521 = vpop.permute.xlu0 %3520
      %v3524 = vcombine.low %v3460, %v3461
      %v3525 = vcombine.low %v3462, %v3463
      %3526 = vrot.lane.b32.xlu0 %v3524, 48
      %v3527 = vpop.permute.xlu0 %3526
      %3528 = vrot.lane.b32.xlu0 %v3525, 48
      %v3529 = vpop.permute.xlu0 %3528
      %v3532 = vcombine.low %v3473, %v3477
      %v3533 = vcombine.low %v3481, %v3499
      %3534 = vrot.lane.b32.xlu0 %v3532, 64
      %v3535 = vpop.permute.xlu0 %3534
      %3536 = vrot.lane.b32.xlu0 %v3533, 64
      %v3537 = vpop.permute.xlu0 %3536
      %v3540 = vcombine.low %v3485, %v3489
      %v3541 = vcombine.low %v3493, %v3503
      %3542 = vrot.lane.b32.xlu0 %v3540, 80
      %v3543 = vpop.permute.xlu0 %3542
      %3544 = vrot.lane.b32.xlu0 %v3541, 80
      %v3545 = vpop.permute.xlu0 %3544
      %v3548 = vcombine.low %v3463, 0.0
      %3549 = vrot.lane.b32.xlu0 %v3505, 96
      %v3550 = vpop.permute.xlu0 %3549
      %3551 = vrot.lane.b32.xlu0 %v3548, 96
      %v3552 = vpop.permute.xlu0 %3551
      %v3555 = vcombine.low %v3499, %v2037
      %3556 = vrot.lane.b32.xlu0 %v3509, 112
      %v3557 = vpop.permute.xlu0 %3556
      %3558 = vrot.lane.b32.xlu0 %v3555, 112
      %v3559 = vpop.permute.xlu0 %3558
      %v3562 = vcombine.low %v3503, %v2055
      %v3563 = vsel %vm825, %v3504, %v3511
      %v3564 = vsel %vm825, %v3505, %v3513
      %v3565 = vsel %vm1290, %v3563, %v3519
      %v3566 = vsel %vm1290, %v3564, %v3521
      %v3567 = vsel %vm1299, %v3565, %v3527
      %v3568 = vsel %vm1299, %v3566, %v3529
      %v3569 = vsel %vm1308, %v3567, %v3535
      %v3570 = vsel %vm1308, %v3568, %v3537
      %v3571 = vsel %vm1317, %v3569, %v3543
      %v3572 = vsel %vm1317, %v3570, %v3545
      %v3573 = vsel %vm1326, %v3571, %v3550
      %v3574 = vsel %vm1326, %v3572, %v3552
      %v3575 = vsel %vm1335, %v3573, %v3557
      %v3576 = vsel %vm1335, %v3574, %v3559
      %v3577 = vsel %vm825, %v3517, 0
      %v3579 = vsel %vm825, %v3562, 0
      %3581 = vmatprep.subr.mxu0 0.0
      %3582 = vmatpush1.msra.mxu0 %v3433
      %3583 = vmatprep.subr.mxu0 0.0
      %3584 = vmatpush1.msra.mxu0 %v3432
      %3585 = vmatprep.subr.mxu0 0.0
      %3586 = vmatpush1.msra.mxu0 %v3431
      %3587 = vmatprep.subr.mxu0 0.0
      %3588 = vmatpush1.msra.mxu0 %v3430
      %3589 = vmatprep.subr.mxu0 0.0
      %3590 = vmatpush1.msra.mxu0 %v3429
      %3591 = vmatprep.subr.mxu0 0.0
      %3592 = vmatpush1.msra.mxu0 %v3428
      %3593 = vmatprep.subr.mxu0 0.0
      %3594 = vmatpush1.msra.mxu0 %v3427
      %3595 = vmatprep.subr.mxu0 0.0
      %3596 = vmatpush1.msra.mxu0 %v3426
      %3597 = vmatprep.subr.mxu0 0.0
      %3598 = vmatpush1.msra.mxu0 %v3425
      %3599 = vmatprep.subr.mxu0 0.0
      %3600 = vmatpush1.msra.mxu0 %v3424
      %3601 = vmatprep.subr.mxu0 0.0
      %3602 = vmatpush1.msra.mxu0 %v3423
      %3603 = vmatprep.subr.mxu0 0.0
      %3604 = vmatpush1.msra.mxu0 %v3422
      %3605 = vmatprep.subr.mxu0 0.0
      %3606 = vmatpush1.msra.mxu0 %v3421
      %3607 = vmatprep.subr.mxu0 0.0
      %3608 = vmatpush1.msra.mxu0 %v3420
      %3609 = vmatprep.subr.mxu0 0.0
      %3610 = vmatpush1.msra.mxu0 %v3419
      %3611 = vmatprep.subr.mxu0 0.0
      %3612 = vmatpush1.msra.mxu0 %v3418
      %3613 = vmatprep.subr.mxu0 0.0
      %3614 = vmatpush2.msra.mxu0 0.0
      %3615 = vmatprep.subr.mxu0 0.0
      %3616 = vmatpush2.msra.mxu0 0.0
      %3617 = vmatprep.subr.mxu0 0.0
      %3618 = vmatpush2.msra.mxu0 0.0
      %3619 = vmatprep.subr.mxu0 0.0
      %3620 = vmatpush2.msra.mxu0 0.0
      %3621 = vmatprep.subr.mxu0 0.0
      %3622 = vmatpush2.msra.mxu0 0.0
      %3623 = vmatprep.subr.mxu0 0.0
      %3624 = vmatpush2.msra.mxu0 0.0
      %3625 = vmatprep.subr.mxu0 0.0
      %3626 = vmatpush2.msra.mxu0 0.0
      %3627 = vmatprep.subr.mxu0 0.0
      %3628 = vmatpush2.msra.mxu0 0.0
      %3629 = vmatprep.subr.mxu0 0.0
      %3630 = vmatpush2.msra.mxu0 0.0
      %3631 = vmatprep.subr.mxu0 0.0
      %3632 = vmatpush2.msra.mxu0 0.0
      %3633 = vmatprep.subr.mxu0 0.0
      %3634 = vmatpush2.msra.mxu0 0.0
      %3635 = vmatprep.subr.mxu0 0.0
      %3636 = vmatpush2.msra.mxu0 0.0
      %3637 = vmatprep.subr.mxu0 0.0
      %3638 = vmatpush2.msra.mxu0 0.0
      %3639 = vmatprep.subr.mxu0 0.0
      %3640 = vmatpush2.msra.mxu0 0.0
      %3641 = vmatprep.subr.mxu0 0.0
      %3642 = vmatpush2.msra.mxu0 %v3435
      %3643 = vmatprep.subr.mxu0 0.0
      %3644 = vmatpush2.msra.mxu0 %v3434
      %3645 = vmatprep.mubr.f32.mxu0 %v3577
      %3646 = vmatmul.mubr.f32.gmra.mxu0 %v3575
      %v3647 = vpop.f32.mrf.mxu0
      %v3648 = vadd.f32 0.0, %v3647
      %v3649 = vpop.f32.mrf.mxu0
      %3650 = vmatprep.mubr.f32.mxu0 %v3579
      %3651 = vmatmul.mubr.f32.gmra.mxu0 %v3576
      %v3652 = vpop.f32.mrf.mxu0
      %v3653 = vadd.f32 0.0, %v3652
      %v3654 = vpop.f32.mrf.mxu0
      %3655 = vdwg.mxu0
      %v3658 = vcombine.high %v3648, %v3648
      %v3659 = vcombine.high %v3653, %v3653
      %v3663 = vunpack.c.l.s4 572653568
      %v3664 = vunpack.c.0.s8 %v3663
      %v3665 = vlaneseq
      %v3666 = vshrl.u32 %v3665, 7
      %v3667 = vsub.s32 %v3664, %v3666
      %v3668 = vrot.slane %v1923, %v3667
      %v3670 = vunpack.c.l.s4 572653568
      %v3671 = vunpack.c.0.s8 %v3670
      %v3672 = vlaneseq
      %v3673 = vshrl.u32 %v3672, 7
      %v3674 = vsub.s32 %v3671, %v3673
      %v3675 = vrot.slane %v1931, %v3674
      %v3677 = vunpack.c.l.s4 572653568
      %v3678 = vunpack.c.0.s8 %v3677
      %v3679 = vlaneseq
      %v3680 = vshrl.u32 %v3679, 7
      %v3681 = vsub.s32 %v3678, %v3680
      %v3682 = vrot.slane %v1930, %v3681
      %v3684 = vunpack.c.l.s4 572653568
      %v3685 = vunpack.c.0.s8 %v3684
      %v3686 = vlaneseq
      %v3687 = vshrl.u32 %v3686, 7
      %v3688 = vsub.s32 %v3685, %v3687
      %v3689 = vrot.slane %v1932, %v3688
      %v3691 = vunpack.c.l.s4 572653568
      %v3692 = vunpack.c.0.s8 %v3691
      %v3693 = vlaneseq
      %v3694 = vshrl.u32 %v3693, 7
      %v3695 = vsub.s32 %v3692, %v3694
      %v3696 = vrot.slane %v1940, %v3695
      %v3698 = vunpack.c.l.s4 572653568
      %v3699 = vunpack.c.0.s8 %v3698
      %v3700 = vlaneseq
      %v3701 = vshrl.u32 %v3700, 7
      %v3702 = vsub.s32 %v3699, %v3701
      %v3703 = vrot.slane %v1948, %v3702
      %v3705 = vunpack.c.l.s4 572653568
      %v3706 = vunpack.c.0.s8 %v3705
      %v3707 = vlaneseq
      %v3708 = vshrl.u32 %v3707, 7
      %v3709 = vsub.s32 %v3706, %v3708
      %v3710 = vrot.slane %v1947, %v3709
      %v3712 = vunpack.c.l.s4 572653568
      %v3713 = vunpack.c.0.s8 %v3712
      %v3714 = vlaneseq
      %v3715 = vshrl.u32 %v3714, 7
      %v3716 = vsub.s32 %v3713, %v3715
      %v3717 = vrot.slane %v1949, %v3716
      %v3719 = vunpack.c.l.s4 572653568
      %v3720 = vunpack.c.0.s8 %v3719
      %v3721 = vlaneseq
      %v3722 = vshrl.u32 %v3721, 7
      %v3723 = vsub.s32 %v3720, %v3722
      %v3724 = vrot.slane %v1957, %v3723
      %v3726 = vunpack.c.l.s4 572653568
      %v3727 = vunpack.c.0.s8 %v3726
      %v3728 = vlaneseq
      %v3729 = vshrl.u32 %v3728, 7
      %v3730 = vsub.s32 %v3727, %v3729
      %v3731 = vrot.slane %v1965, %v3730
      %v3733 = vunpack.c.l.s4 572653568
      %v3734 = vunpack.c.0.s8 %v3733
      %v3735 = vlaneseq
      %v3736 = vshrl.u32 %v3735, 7
      %v3737 = vsub.s32 %v3734, %v3736
      %v3738 = vrot.slane %v1964, %v3737
      %v3740 = vunpack.c.l.s4 572653568
      %v3741 = vunpack.c.0.s8 %v3740
      %v3742 = vlaneseq
      %v3743 = vshrl.u32 %v3742, 7
      %v3744 = vsub.s32 %v3741, %v3743
      %v3745 = vrot.slane %v1966, %v3744
      %v3747 = vunpack.c.l.s4 572653568
      %v3748 = vunpack.c.0.s8 %v3747
      %v3749 = vlaneseq
      %v3750 = vshrl.u32 %v3749, 7
      %v3751 = vsub.s32 %v3748, %v3750
      %v3752 = vrot.slane %v1974, %v3751
      %v3754 = vunpack.c.l.s4 572653568
      %v3755 = vunpack.c.0.s8 %v3754
      %v3756 = vlaneseq
      %v3757 = vshrl.u32 %v3756, 7
      %v3758 = vsub.s32 %v3755, %v3757
      %v3759 = vrot.slane %v1982, %v3758
      %v3761 = vunpack.c.l.s4 572653568
      %v3762 = vunpack.c.0.s8 %v3761
      %v3763 = vlaneseq
      %v3764 = vshrl.u32 %v3763, 7
      %v3765 = vsub.s32 %v3762, %v3764
      %v3766 = vrot.slane %v1981, %v3765
      %v3768 = vunpack.c.l.s4 572653568
      %v3769 = vunpack.c.0.s8 %v3768
      %v3770 = vlaneseq
      %v3771 = vshrl.u32 %v3770, 7
      %v3772 = vsub.s32 %v3769, %v3771
      %v3773 = vrot.slane %v1983, %v3772
      %v3774 = vsel %vm2671, %v3675, %v3668
      %v3775 = vsel %vm3039, %v3675, %v3774
      %v3776 = vsel %vm2673, %v3682, %v3775
      %v3777 = vsel %vm3042, %v3682, %v3776
      %v3778 = vsel %vm2675, %v3689, %v3777
      %v3779 = vsel %vm3045, %v3689, %v3778
      %v3780 = vsel %vm2671, %v3703, %v3696
      %v3781 = vsel %vm3039, %v3703, %v3780
      %v3782 = vsel %vm2673, %v3710, %v3781
      %v3783 = vsel %vm3042, %v3710, %v3782
      %v3784 = vsel %vm2675, %v3717, %v3783
      %v3785 = vsel %vm3045, %v3717, %v3784
      %v3786 = vsel %vm2671, %v3731, %v3724
      %v3787 = vsel %vm3039, %v3731, %v3786
      %v3788 = vsel %vm2673, %v3738, %v3787
      %v3789 = vsel %vm3042, %v3738, %v3788
      %v3790 = vsel %vm2675, %v3745, %v3789
      %v3791 = vsel %vm3045, %v3745, %v3790
      %v3792 = vsel %vm2671, %v3759, %v3752
      %v3793 = vsel %vm3039, %v3759, %v3792
      %v3794 = vsel %vm2673, %v3766, %v3793
      %v3795 = vsel %vm3042, %v3766, %v3794
      %v3796 = vsel %vm2675, %v3773, %v3795
      %v3797 = vsel %vm3045, %v3773, %v3796
      %v3802 = vadd.f32 %v3648, %v3779
      %v3803 = vadd.f32 %v3658, %v3785
      %v3804 = vadd.f32 %v3653, %v3791
      %v3805 = vadd.f32 %v3659, %v3797
      %vm3806 = vcmp.gt.f32.partialorder %v3802, 0.0
      %vm3807 = vcmp.gt.f32.partialorder %v3803, 0.0
      %vm3808 = vcmp.gt.f32.partialorder %v3804, 0.0
      %vm3809 = vcmp.gt.f32.partialorder %v3805, 0.0
      %v3810 = vmul.f32 %v3802, 0.2
      %v3811 = vmul.f32 %v3803, 0.2
      %v3812 = vmul.f32 %v3804, 0.2
      %v3813 = vmul.f32 %v3805, 0.2
      %v3814 = vsel %vm3806, %v3802, %v3810
      %v3815 = vsel %vm3807, %v3803, %v3811
      %v3816 = vsel %vm3808, %v3804, %v3812
      %v3817 = vsel %vm3809, %v3805, %v3813
      %v3818 = vsel %vm2690, %v3814, 0.0
      %v3819 = vsel %vm2690, %v3815, 0.0
      %v3820 = vadd.f32 %v3818, %v3819
      %v3821 = vsel %vm2690, %v3816, 0.0
      %v3822 = vadd.f32 %v3820, %v3821
      %v3823 = vsel %vm2690, %v3817, 0.0
      %v3824 = vadd.f32 %v3822, %v3823
      %v3825 = vrot.slane %v3824, 4
      %v3826 = vadd.f32 %v3824, %v3825
      %v3827 = vrot.slane %v3826, 2
      %v3828 = vadd.f32 %v3826, %v3827
      %v3829 = vrot.slane %v3828, 1
      %v3830 = vadd.f32 %v3828, %v3829
      %v3831 = vmul.f32 %v3814, %v3814
      %v3832 = vmul.f32 %v3815, %v3815
      %v3833 = vmul.f32 %v3816, %v3816
      %v3834 = vmul.f32 %v3817, %v3817
      %v3835 = vsel %vm2690, %v3831, 0.0
      %v3836 = vsel %vm2690, %v3832, 0.0
      %v3837 = vadd.f32 %v3835, %v3836
      %v3838 = vsel %vm2690, %v3833, 0.0
      %v3839 = vadd.f32 %v3837, %v3838
      %v3840 = vsel %vm2690, %v3834, 0.0
      %v3841 = vadd.f32 %v3839, %v3840
      %v3842 = vrot.slane %v3841, 4
      %v3843 = vadd.f32 %v3841, %v3842
      %v3844 = vrot.slane %v3843, 2
      %v3845 = vadd.f32 %v3843, %v3844
      %v3846 = vrot.slane %v3845, 1
      %v3847 = vadd.f32 %v3845, %v3846
      %v3848 = vmul.f32 %v3830, 0.0625
      %v3849 = vmul.f32 %v3847, 0.0625
      %v3850 = vmul.f32 %v3848, %v3848
      %v3851 = vsub.f32 %v3849, %v3850
      %v3852 = vsub.f32 %v3814, %v3848
      %v3853 = vsub.f32 %v3815, %v3848
      %v3854 = vsub.f32 %v3816, %v3848
      %v3855 = vsub.f32 %v3817, %v3848
      %v3856 = vadd.f32 %v3851, 1e-05
      %v3857 = vrsqrt.pop %v3856
      %v3858 = vmul.f32 %v3852, %v3857
      %v3859 = vmul.f32 %v3853, %v3857
      %v3860 = vmul.f32 %v3854, %v3857
      %v3861 = vmul.f32 %v3855, %v3857
      %3866 = vrot.lane.b32.xlu0 %v3858, 64
      %v3867 = vpop.permute.xlu0 %3866
      %3868 = vrot.lane.b32.xlu0 %v3859, 64
      %v3869 = vpop.permute.xlu0 %3868
      %3870 = vrot.lane.b32.xlu0 %v3860, 64
      %v3871 = vpop.permute.xlu0 %3870
      %3872 = vrot.lane.b32.xlu0 %v3861, 64
      %v3873 = vpop.permute.xlu0 %3872
      %v3878 = vmul.f32 %v2905, %v3867
      %v3879 = vmul.f32 %v2906, %v3869
      %v3880 = vmul.f32 %v2907, %v3871
      %v3881 = vmul.f32 %v2908, %v3873
      %v3882 = vadd.f32 %v3878, %v3074
      %v3883 = vadd.f32 %v3879, %v3076
      %v3884 = vadd.f32 %v3880, %v3078
      %v3885 = vadd.f32 %v3881, %v3080
      %vm3886 = vcmp.gt.f32.partialorder %v3882, 0.0
      %vm3887 = vcmp.gt.f32.partialorder %v3883, 0.0
      %vm3888 = vcmp.gt.f32.partialorder %v3884, 0.0
      %vm3889 = vcmp.gt.f32.partialorder %v3885, 0.0
      %v3890 = vmul.f32 %v3882, 0.2
      %v3891 = vmul.f32 %v3883, 0.2
      %v3892 = vmul.f32 %v3884, 0.2
      %v3893 = vmul.f32 %v3885, 0.2
      %v3894 = vsel %vm3886, %v3882, %v3890
      %v3895 = vsel %vm3887, %v3883, %v3891
      %v3896 = vsel %vm3888, %v3884, %v3892
      %v3897 = vsel %vm3889, %v3885, %v3893
      %s3898 = scalar_lea.vmem %s7, 288
      %v3899 = vld [vmem:[%s3898] sm:$0xff]
      %v3900 = vld [vmem:[%s3898 + $0x8] sm:$0xff]
      %v3901 = vld [vmem:[%s3898 + $0x10] sm:$0xff]
      %v3902 = vld [vmem:[%s3898 + $0x18] sm:$0xff]
      %v3903 = vld [vmem:[%s3898 + $0x20] sm:$0xff]
      %v3904 = vld [vmem:[%s3898 + $0x28] sm:$0xff]
      %v3905 = vld [vmem:[%s3898 + $0x30] sm:$0xff]
      %v3906 = vld [vmem:[%s3898 + $0x38] sm:$0xff]
      %v3907 = vld [vmem:[%s3898 + $0x40] sm:$0xff]
      %v3908 = vld [vmem:[%s3898 + $0x48] sm:$0xff]
      %v3909 = vld [vmem:[%s3898 + $0x50] sm:$0xff]
      %v3910 = vld [vmem:[%s3898 + $0x58] sm:$0xff]
      %v3911 = vld [vmem:[%s3898 + $0x60] sm:$0xff]
      %v3912 = vld [vmem:[%s3898 + $0x68] sm:$0xff]
      %v3913 = vld [vmem:[%s3898 + $0x70] sm:$0xff]
      %v3914 = vld [vmem:[%s3898 + $0x78] sm:$0xff]
      %v3915 = vld [vmem:[%s3898 + $0x80] sm:$0xff]
      %v3916 = vld [vmem:[%s3898 + $0x88] sm:$0xff]
      %v3921 = vrot.slane %v3894, 7
      %v3922 = vrot.slane %v3895, 7
      %v3923 = vrot.slane %v3896, 7
      %v3924 = vrot.slane %v3897, 7
      %3925 = vrot.lane.b32.xlu0 %v3921, 64
      %v3926 = vpop.permute.xlu0 %3925
      %3927 = vrot.lane.b32.xlu0 %v3922, 64
      %v3928 = vpop.permute.xlu0 %3927
      %3929 = vrot.lane.b32.xlu0 %v3923, 64
      %v3930 = vpop.permute.xlu0 %3929
      %3931 = vrot.lane.b32.xlu0 %v3924, 64
      %v3932 = vpop.permute.xlu0 %3931
      %v3937 = vsel %vm482, 0.0, %v3926
      %v3938 = vsel %vm482, 0.0, %v3928
      %v3939 = vsel %vm482, 0.0, %v3930
      %v3940 = vsel %vm482, 0.0, %v3932
      %v3941 = vsel %vm2019, %v3937, 0.0
      %v3942 = vsel %vm2019, %v3938, 0.0
      %v3943 = vsel %vm2019, %v3939, 0.0
      %v3944 = vsel %vm2019, %v3940, 0.0
      %v3948 = vcombine.high %v3941, %v3941
      %v3949 = vcombine.high %v3942, %v3942
      %v3950 = vcombine.high %v3943, %v3943
      %v3951 = vrot.slane %v3941, 5
      %v3952 = vrot.slane %v3951, 4
      %v3953 = vrot.slane %v3948, 5
      %v3954 = vsel %vm2033, %v3952, %v3953
      %v3955 = vrot.slane %v3942, 5
      %v3956 = vrot.slane %v3955, 4
      %v3957 = vrot.slane %v3949, 5
      %v3958 = vsel %vm2033, %v3956, %v3957
      %v3959 = vrot.slane %v3943, 5
      %v3960 = vrot.slane %v3959, 4
      %v3961 = vrot.slane %v3950, 5
      %v3962 = vsel %vm2033, %v3960, %v3961
      %v3963 = vrot.slane %v3941, 6
      %v3964 = vrot.slane %v3963, 4
      %v3965 = vrot.slane %v3948, 6
      %v3966 = vsel %vm2051, %v3964, %v3965
      %v3967 = vrot.slane %v3942, 6
      %v3968 = vrot.slane %v3967, 4
      %v3969 = vrot.slane %v3949, 6
      %v3970 = vsel %vm2051, %v3968, %v3969
      %v3971 = vrot.slane %v3943, 6
      %v3972 = vrot.slane %v3971, 4
      %v3973 = vrot.slane %v3950, 6
      %v3974 = vsel %vm2051, %v3972, %v3973
      %v3976 = vcombine.high %v3944, %v3944
      %v3977 = vrot.slane %v3944, 5
      %v3978 = vrot.slane %v3977, 4
      %v3979 = vrot.slane %v3976, 5
      %v3980 = vsel %vm2033, %v3978, %v3979
      %v3981 = vrot.slane %v3944, 6
      %v3982 = vrot.slane %v3981, 4
      %v3983 = vrot.slane %v3976, 6
      %v3984 = vsel %vm2051, %v3982, %v3983
      %v3985 = vcombine.low 0.0, %v3941
      %v3986 = vcombine.low %v3942, %v3943
      %v3989 = vcombine.low %v2037, %v3954
      %v3990 = vcombine.low %v3958, %v3962
      %3991 = vrot.lane.b32.xlu0 %v3989, 16
      %v3992 = vpop.permute.xlu0 %3991
      %3993 = vrot.lane.b32.xlu0 %v3990, 16
      %v3994 = vpop.permute.xlu0 %3993
      %v3997 = vcombine.low %v2055, %v3966
      %v3998 = vcombine.low %v3970, %v3974
      %3999 = vrot.lane.b32.xlu0 %v3997, 32
      %v4000 = vpop.permute.xlu0 %3999
      %4001 = vrot.lane.b32.xlu0 %v3998, 32
      %v4002 = vpop.permute.xlu0 %4001
      %v4005 = vcombine.low %v3941, %v3942
      %v4006 = vcombine.low %v3943, %v3944
      %4007 = vrot.lane.b32.xlu0 %v4005, 48
      %v4008 = vpop.permute.xlu0 %4007
      %4009 = vrot.lane.b32.xlu0 %v4006, 48
      %v4010 = vpop.permute.xlu0 %4009
      %v4013 = vcombine.low %v3954, %v3958
      %v4014 = vcombine.low %v3962, %v3980
      %4015 = vrot.lane.b32.xlu0 %v4013, 64
      %v4016 = vpop.permute.xlu0 %4015
      %4017 = vrot.lane.b32.xlu0 %v4014, 64
      %v4018 = vpop.permute.xlu0 %4017
      %v4021 = vcombine.low %v3966, %v3970
      %v4022 = vcombine.low %v3974, %v3984
      %4023 = vrot.lane.b32.xlu0 %v4021, 80
      %v4024 = vpop.permute.xlu0 %4023
      %4025 = vrot.lane.b32.xlu0 %v4022, 80
      %v4026 = vpop.permute.xlu0 %4025
      %v4029 = vcombine.low %v3944, 0.0
      %4030 = vrot.lane.b32.xlu0 %v3986, 96
      %v4031 = vpop.permute.xlu0 %4030
      %4032 = vrot.lane.b32.xlu0 %v4029, 96
      %v4033 = vpop.permute.xlu0 %4032
      %v4036 = vcombine.low %v3980, %v2037
      %4037 = vrot.lane.b32.xlu0 %v3990, 112
      %v4038 = vpop.permute.xlu0 %4037
      %4039 = vrot.lane.b32.xlu0 %v4036, 112
      %v4040 = vpop.permute.xlu0 %4039
      %v4043 = vcombine.low %v3984, %v2055
      %v4044 = vsel %vm825, %v3985, %v3992
      %v4045 = vsel %vm825, %v3986, %v3994
      %v4046 = vsel %vm1290, %v4044, %v4000
      %v4047 = vsel %vm1290, %v4045, %v4002
      %v4048 = vsel %vm1299, %v4046, %v4008
      %v4049 = vsel %vm1299, %v4047, %v4010
      %v4050 = vsel %vm1308, %v4048, %v4016
      %v4051 = vsel %vm1308, %v4049, %v4018
      %v4052 = vsel %vm1317, %v4050, %v4024
      %v4053 = vsel %vm1317, %v4051, %v4026
      %v4054 = vsel %vm1326, %v4052, %v4031
      %v4055 = vsel %vm1326, %v4053, %v4033
      %v4056 = vsel %vm1335, %v4054, %v4038
      %v4057 = vsel %vm1335, %v4055, %v4040
      %v4058 = vsel %vm825, %v3998, 0
      %v4060 = vsel %vm825, %v4043, 0
      %4062 = vmatprep.subr.mxu0 0.0
      %4063 = vmatpush1.msra.mxu0 %v3914
      %4064 = vmatprep.subr.mxu0 0.0
      %4065 = vmatpush1.msra.mxu0 %v3913
      %4066 = vmatprep.subr.mxu0 0.0
      %4067 = vmatpush1.msra.mxu0 %v3912
      %4068 = vmatprep.subr.mxu0 0.0
      %4069 = vmatpush1.msra.mxu0 %v3911
      %4070 = vmatprep.subr.mxu0 0.0
      %4071 = vmatpush1.msra.mxu0 %v3910
      %4072 = vmatprep.subr.mxu0 0.0
      %4073 = vmatpush1.msra.mxu0 %v3909
      %4074 = vmatprep.subr.mxu0 0.0
      %4075 = vmatpush1.msra.mxu0 %v3908
      %4076 = vmatprep.subr.mxu0 0.0
      %4077 = vmatpush1.msra.mxu0 %v3907
      %4078 = vmatprep.subr.mxu0 0.0
      %4079 = vmatpush1.msra.mxu0 %v3906
      %4080 = vmatprep.subr.mxu0 0.0
      %4081 = vmatpush1.msra.mxu0 %v3905
      %4082 = vmatprep.subr.mxu0 0.0
      %4083 = vmatpush1.msra.mxu0 %v3904
      %4084 = vmatprep.subr.mxu0 0.0
      %4085 = vmatpush1.msra.mxu0 %v3903
      %4086 = vmatprep.subr.mxu0 0.0
      %4087 = vmatpush1.msra.mxu0 %v3902
      %4088 = vmatprep.subr.mxu0 0.0
      %4089 = vmatpush1.msra.mxu0 %v3901
      %4090 = vmatprep.subr.mxu0 0.0
      %4091 = vmatpush1.msra.mxu0 %v3900
      %4092 = vmatprep.subr.mxu0 0.0
      %4093 = vmatpush1.msra.mxu0 %v3899
      %4094 = vmatprep.subr.mxu0 0.0
      %4095 = vmatpush2.msra.mxu0 0.0
      %4096 = vmatprep.subr.mxu0 0.0
      %4097 = vmatpush2.msra.mxu0 0.0
      %4098 = vmatprep.subr.mxu0 0.0
      %4099 = vmatpush2.msra.mxu0 0.0
      %4100 = vmatprep.subr.mxu0 0.0
      %4101 = vmatpush2.msra.mxu0 0.0
      %4102 = vmatprep.subr.mxu0 0.0
      %4103 = vmatpush2.msra.mxu0 0.0
      %4104 = vmatprep.subr.mxu0 0.0
      %4105 = vmatpush2.msra.mxu0 0.0
      %4106 = vmatprep.subr.mxu0 0.0
      %4107 = vmatpush2.msra.mxu0 0.0
      %4108 = vmatprep.subr.mxu0 0.0
      %4109 = vmatpush2.msra.mxu0 0.0
      %4110 = vmatprep.subr.mxu0 0.0
      %4111 = vmatpush2.msra.mxu0 0.0
      %4112 = vmatprep.subr.mxu0 0.0
      %4113 = vmatpush2.msra.mxu0 0.0
      %4114 = vmatprep.subr.mxu0 0.0
      %4115 = vmatpush2.msra.mxu0 0.0
      %4116 = vmatprep.subr.mxu0 0.0
      %4117 = vmatpush2.msra.mxu0 0.0
      %4118 = vmatprep.subr.mxu0 0.0
      %4119 = vmatpush2.msra.mxu0 0.0
      %4120 = vmatprep.subr.mxu0 0.0
      %4121 = vmatpush2.msra.mxu0 0.0
      %4122 = vmatprep.subr.mxu0 0.0
      %4123 = vmatpush2.msra.mxu0 %v3916
      %4124 = vmatprep.subr.mxu0 0.0
      %4125 = vmatpush2.msra.mxu0 %v3915
      %4126 = vmatprep.mubr.f32.mxu0 %v4058
      %4127 = vmatmul.mubr.f32.gmra.mxu0 %v4056
      %v4128 = vpop.f32.mrf.mxu0
      %v4129 = vadd.f32 0.0, %v4128
      %v4130 = vpop.f32.mrf.mxu0
      %4131 = vmatprep.mubr.f32.mxu0 %v4060
      %4132 = vmatmul.mubr.f32.gmra.mxu0 %v4057
      %v4133 = vpop.f32.mrf.mxu0
      %v4134 = vadd.f32 0.0, %v4133
      %v4135 = vpop.f32.mrf.mxu0
      %4136 = vdwg.mxu0
      %v4139 = vcombine.high %v4129, %v4129
      %v4140 = vcombine.high %v4134, %v4134
      %v4143 = vsel %vm2690, %v4129, 0.0
      %v4144 = vsel %vm2690, %v4139, 0.0
      %v4145 = vadd.f32 %v4143, %v4144
      %v4146 = vsel %vm2690, %v4134, 0.0
      %v4147 = vadd.f32 %v4145, %v4146
      %v4148 = vsel %vm2690, %v4140, 0.0
      %v4149 = vadd.f32 %v4147, %v4148
      %v4150 = vrot.slane %v4149, 4
      %v4151 = vadd.f32 %v4149, %v4150
      %v4152 = vrot.slane %v4151, 2
      %v4153 = vadd.f32 %v4151, %v4152
      %v4154 = vrot.slane %v4153, 1
      %v4155 = vadd.f32 %v4153, %v4154
      %v4156 = vmul.f32 %v4129, %v4129
      %v4157 = vmul.f32 %v4139, %v4139
      %v4158 = vmul.f32 %v4134, %v4134
      %v4159 = vmul.f32 %v4140, %v4140
      %v4160 = vsel %vm2690, %v4156, 0.0
      %v4161 = vsel %vm2690, %v4157, 0.0
      %v4162 = vadd.f32 %v4160, %v4161
      %v4163 = vsel %vm2690, %v4158, 0.0
      %v4164 = vadd.f32 %v4162, %v4163
      %v4165 = vsel %vm2690, %v4159, 0.0
      %v4166 = vadd.f32 %v4164, %v4165
      %v4167 = vrot.slane %v4166, 4
      %v4168 = vadd.f32 %v4166, %v4167
      %v4169 = vrot.slane %v4168, 2
      %v4170 = vadd.f32 %v4168, %v4169
      %v4171 = vrot.slane %v4170, 1
      %v4172 = vadd.f32 %v4170, %v4171
      %v4173 = vmul.f32 %v4155, 0.0625
      %v4174 = vmul.f32 %v4172, 0.0625
      %v4175 = vmul.f32 %v4173, %v4173
      %v4176 = vsub.f32 %v4174, %v4175
      %v4177 = vsub.f32 %v4129, %v4173
      %v4178 = vsub.f32 %v4139, %v4173
      %v4179 = vsub.f32 %v4134, %v4173
      %v4180 = vsub.f32 %v4140, %v4173
      %v4181 = vadd.f32 %v4176, 1e-05
      %v4182 = vrsqrt.pop %v4181
      %v4183 = vmul.f32 %v4177, %v4182
      %v4184 = vmul.f32 %v4178, %v4182
      %v4185 = vmul.f32 %v4179, %v4182
      %v4186 = vmul.f32 %v4180, %v4182
      %4191 = vrot.lane.b32.xlu0 %v4183, 96
      %v4192 = vpop.permute.xlu0 %4191
      %4193 = vrot.lane.b32.xlu0 %v4184, 96
      %v4194 = vpop.permute.xlu0 %4193
      %4195 = vrot.lane.b32.xlu0 %v4185, 96
      %v4196 = vpop.permute.xlu0 %4195
      %4197 = vrot.lane.b32.xlu0 %v4186, 96
      %v4198 = vpop.permute.xlu0 %4197
      %v4203 = vmul.f32 %v2905, %v4192
      %v4204 = vmul.f32 %v2906, %v4194
      %v4205 = vmul.f32 %v2907, %v4196
      %v4206 = vmul.f32 %v2908, %v4198
      %v4207 = vadd.f32 %v4203, %v3074
      %v4208 = vadd.f32 %v4204, %v3076
      %v4209 = vadd.f32 %v4205, %v3078
      %v4210 = vadd.f32 %v4206, %v3080
      %vm4211 = vcmp.gt.f32.partialorder %v4207, 0.0
      %vm4212 = vcmp.gt.f32.partialorder %v4208, 0.0
      %vm4213 = vcmp.gt.f32.partialorder %v4209, 0.0
      %vm4214 = vcmp.gt.f32.partialorder %v4210, 0.0
      %v4215 = vmul.f32 %v4207, 0.2
      %v4216 = vmul.f32 %v4208, 0.2
      %v4217 = vmul.f32 %v4209, 0.2
      %v4218 = vmul.f32 %v4210, 0.2
      %v4219 = vsel %vm4211, %v4207, %v4215
      %v4220 = vsel %vm4212, %v4208, %v4216
      %v4221 = vsel %vm4213, %v4209, %v4217
      %v4222 = vsel %vm4214, %v4210, %v4218
      %s4223 = scalar_lea.vmem %s7, 432
      %v4224 = vld [vmem:[%s4223] sm:$0xff]
      %v4225 = vld [vmem:[%s4223 + $0x8] sm:$0xff]
      %v4226 = vld [vmem:[%s4223 + $0x10] sm:$0xff]
      %v4227 = vld [vmem:[%s4223 + $0x18] sm:$0xff]
      %v4228 = vld [vmem:[%s4223 + $0x20] sm:$0xff]
      %v4229 = vld [vmem:[%s4223 + $0x28] sm:$0xff]
      %v4230 = vld [vmem:[%s4223 + $0x30] sm:$0xff]
      %v4231 = vld [vmem:[%s4223 + $0x38] sm:$0xff]
      %v4232 = vld [vmem:[%s4223 + $0x40] sm:$0xff]
      %v4233 = vld [vmem:[%s4223 + $0x48] sm:$0xff]
      %v4234 = vld [vmem:[%s4223 + $0x50] sm:$0xff]
      %v4235 = vld [vmem:[%s4223 + $0x58] sm:$0xff]
      %v4236 = vld [vmem:[%s4223 + $0x60] sm:$0xff]
      %v4237 = vld [vmem:[%s4223 + $0x68] sm:$0xff]
      %v4238 = vld [vmem:[%s4223 + $0x70] sm:$0xff]
      %v4239 = vld [vmem:[%s4223 + $0x78] sm:$0xff]
      %v4240 = vld [vmem:[%s4223 + $0x80] sm:$0xff]
      %v4241 = vld [vmem:[%s4223 + $0x88] sm:$0xff]
      %v4246 = vrot.slane %v4219, 7
      %v4247 = vrot.slane %v4220, 7
      %v4248 = vrot.slane %v4221, 7
      %v4249 = vrot.slane %v4222, 7
      %4250 = vrot.lane.b32.xlu0 %v4246, 32
      %v4251 = vpop.permute.xlu0 %4250
      %4252 = vrot.lane.b32.xlu0 %v4247, 32
      %v4253 = vpop.permute.xlu0 %4252
      %4254 = vrot.lane.b32.xlu0 %v4248, 32
      %v4255 = vpop.permute.xlu0 %4254
      %4256 = vrot.lane.b32.xlu0 %v4249, 32
      %v4257 = vpop.permute.xlu0 %4256
      %v4262 = vsel %vm482, 0.0, %v4251
      %v4263 = vsel %vm482, 0.0, %v4253
      %v4264 = vsel %vm482, 0.0, %v4255
      %v4265 = vsel %vm482, 0.0, %v4257
      %v4266 = vsel %vm2019, %v4262, 0.0
      %v4267 = vsel %vm2019, %v4263, 0.0
      %v4268 = vsel %vm2019, %v4264, 0.0
      %v4269 = vsel %vm2019, %v4265, 0.0
      %v4273 = vcombine.high %v4266, %v4266
      %v4274 = vcombine.high %v4267, %v4267
      %v4275 = vcombine.high %v4268, %v4268
      %v4276 = vrot.slane %v4266, 5
      %v4277 = vrot.slane %v4276, 4
      %v4278 = vrot.slane %v4273, 5
      %v4279 = vsel %vm2033, %v4277, %v4278
      %v4280 = vrot.slane %v4267, 5
      %v4281 = vrot.slane %v4280, 4
      %v4282 = vrot.slane %v4274, 5
      %v4283 = vsel %vm2033, %v4281, %v4282
      %v4284 = vrot.slane %v4268, 5
      %v4285 = vrot.slane %v4284, 4
      %v4286 = vrot.slane %v4275, 5
      %v4287 = vsel %vm2033, %v4285, %v4286
      %v4288 = vrot.slane %v4266, 6
      %v4289 = vrot.slane %v4288, 4
      %v4290 = vrot.slane %v4273, 6
      %v4291 = vsel %vm2051, %v4289, %v4290
      %v4292 = vrot.slane %v4267, 6
      %v4293 = vrot.slane %v4292, 4
      %v4294 = vrot.slane %v4274, 6
      %v4295 = vsel %vm2051, %v4293, %v4294
      %v4296 = vrot.slane %v4268, 6
      %v4297 = vrot.slane %v4296, 4
      %v4298 = vrot.slane %v4275, 6
      %v4299 = vsel %vm2051, %v4297, %v4298
      %v4301 = vcombine.high %v4269, %v4269
      %v4302 = vrot.slane %v4269, 5
      %v4303 = vrot.slane %v4302, 4
      %v4304 = vrot.slane %v4301, 5
      %v4305 = vsel %vm2033, %v4303, %v4304
      %v4306 = vrot.slane %v4269, 6
      %v4307 = vrot.slane %v4306, 4
      %v4308 = vrot.slane %v4301, 6
      %v4309 = vsel %vm2051, %v4307, %v4308
      %v4310 = vcombine.low 0.0, %v4266
      %v4311 = vcombine.low %v4267, %v4268
      %v4314 = vcombine.low %v2037, %v4279
      %v4315 = vcombine.low %v4283, %v4287
      %4316 = vrot.lane.b32.xlu0 %v4314, 16
      %v4317 = vpop.permute.xlu0 %4316
      %4318 = vrot.lane.b32.xlu0 %v4315, 16
      %v4319 = vpop.permute.xlu0 %4318
      %v4322 = vcombine.low %v2055, %v4291
      %v4323 = vcombine.low %v4295, %v4299
      %4324 = vrot.lane.b32.xlu0 %v4322, 32
      %v4325 = vpop.permute.xlu0 %4324
      %4326 = vrot.lane.b32.xlu0 %v4323, 32
      %v4327 = vpop.permute.xlu0 %4326
      %v4330 = vcombine.low %v4266, %v4267
      %v4331 = vcombine.low %v4268, %v4269
      %4332 = vrot.lane.b32.xlu0 %v4330, 48
      %v4333 = vpop.permute.xlu0 %4332
      %4334 = vrot.lane.b32.xlu0 %v4331, 48
      %v4335 = vpop.permute.xlu0 %4334
      %v4338 = vcombine.low %v4279, %v4283
      %v4339 = vcombine.low %v4287, %v4305
      %4340 = vrot.lane.b32.xlu0 %v4338, 64
      %v4341 = vpop.permute.xlu0 %4340
      %4342 = vrot.lane.b32.xlu0 %v4339, 64
      %v4343 = vpop.permute.xlu0 %4342
      %v4346 = vcombine.low %v4291, %v4295
      %v4347 = vcombine.low %v4299, %v4309
      %4348 = vrot.lane.b32.xlu0 %v4346, 80
      %v4349 = vpop.permute.xlu0 %4348
      %4350 = vrot.lane.b32.xlu0 %v4347, 80
      %v4351 = vpop.permute.xlu0 %4350
      %v4354 = vcombine.low %v4269, 0.0
      %4355 = vrot.lane.b32.xlu0 %v4311, 96
      %v4356 = vpop.permute.xlu0 %4355
      %4357 = vrot.lane.b32.xlu0 %v4354, 96
      %v4358 = vpop.permute.xlu0 %4357
      %v4361 = vcombine.low %v4305, %v2037
      %4362 = vrot.lane.b32.xlu0 %v4315, 112
      %v4363 = vpop.permute.xlu0 %4362
      %4364 = vrot.lane.b32.xlu0 %v4361, 112
      %v4365 = vpop.permute.xlu0 %4364
      %v4368 = vcombine.low %v4309, %v2055
      %v4369 = vsel %vm825, %v4310, %v4317
      %v4370 = vsel %vm825, %v4311, %v4319
      %v4371 = vsel %vm1290, %v4369, %v4325
      %v4372 = vsel %vm1290, %v4370, %v4327
      %v4373 = vsel %vm1299, %v4371, %v4333
      %v4374 = vsel %vm1299, %v4372, %v4335
      %v4375 = vsel %vm1308, %v4373, %v4341
      %v4376 = vsel %vm1308, %v4374, %v4343
      %v4377 = vsel %vm1317, %v4375, %v4349
      %v4378 = vsel %vm1317, %v4376, %v4351
      %v4379 = vsel %vm1326, %v4377, %v4356
      %v4380 = vsel %vm1326, %v4378, %v4358
      %v4381 = vsel %vm1335, %v4379, %v4363
      %v4382 = vsel %vm1335, %v4380, %v4365
      %v4383 = vsel %vm825, %v4323, 0
      %v4385 = vsel %vm825, %v4368, 0
      %4387 = vmatprep.subr.mxu0 0.0
      %4388 = vmatpush1.msra.mxu0 %v4239
      %4389 = vmatprep.subr.mxu0 0.0
      %4390 = vmatpush1.msra.mxu0 %v4238
      %4391 = vmatprep.subr.mxu0 0.0
      %4392 = vmatpush1.msra.mxu0 %v4237
      %4393 = vmatprep.subr.mxu0 0.0
      %4394 = vmatpush1.msra.mxu0 %v4236
      %4395 = vmatprep.subr.mxu0 0.0
      %4396 = vmatpush1.msra.mxu0 %v4235
      %4397 = vmatprep.subr.mxu0 0.0
      %4398 = vmatpush1.msra.mxu0 %v4234
      %4399 = vmatprep.subr.mxu0 0.0
      %4400 = vmatpush1.msra.mxu0 %v4233
      %4401 = vmatprep.subr.mxu0 0.0
      %4402 = vmatpush1.msra.mxu0 %v4232
      %4403 = vmatprep.subr.mxu0 0.0
      %4404 = vmatpush1.msra.mxu0 %v4231
      %4405 = vmatprep.subr.mxu0 0.0
      %4406 = vmatpush1.msra.mxu0 %v4230
      %4407 = vmatprep.subr.mxu0 0.0
      %4408 = vmatpush1.msra.mxu0 %v4229
      %4409 = vmatprep.subr.mxu0 0.0
      %4410 = vmatpush1.msra.mxu0 %v4228
      %4411 = vmatprep.subr.mxu0 0.0
      %4412 = vmatpush1.msra.mxu0 %v4227
      %4413 = vmatprep.subr.mxu0 0.0
      %4414 = vmatpush1.msra.mxu0 %v4226
      %4415 = vmatprep.subr.mxu0 0.0
      %4416 = vmatpush1.msra.mxu0 %v4225
      %4417 = vmatprep.subr.mxu0 0.0
      %4418 = vmatpush1.msra.mxu0 %v4224
      %4419 = vmatprep.subr.mxu0 0.0
      %4420 = vmatpush2.msra.mxu0 0.0
      %4421 = vmatprep.subr.mxu0 0.0
      %4422 = vmatpush2.msra.mxu0 0.0
      %4423 = vmatprep.subr.mxu0 0.0
      %4424 = vmatpush2.msra.mxu0 0.0
      %4425 = vmatprep.subr.mxu0 0.0
      %4426 = vmatpush2.msra.mxu0 0.0
      %4427 = vmatprep.subr.mxu0 0.0
      %4428 = vmatpush2.msra.mxu0 0.0
      %4429 = vmatprep.subr.mxu0 0.0
      %4430 = vmatpush2.msra.mxu0 0.0
      %4431 = vmatprep.subr.mxu0 0.0
      %4432 = vmatpush2.msra.mxu0 0.0
      %4433 = vmatprep.subr.mxu0 0.0
      %4434 = vmatpush2.msra.mxu0 0.0
      %4435 = vmatprep.subr.mxu0 0.0
      %4436 = vmatpush2.msra.mxu0 0.0
      %4437 = vmatprep.subr.mxu0 0.0
      %4438 = vmatpush2.msra.mxu0 0.0
      %4439 = vmatprep.subr.mxu0 0.0
      %4440 = vmatpush2.msra.mxu0 0.0
      %4441 = vmatprep.subr.mxu0 0.0
      %4442 = vmatpush2.msra.mxu0 0.0
      %4443 = vmatprep.subr.mxu0 0.0
      %4444 = vmatpush2.msra.mxu0 0.0
      %4445 = vmatprep.subr.mxu0 0.0
      %4446 = vmatpush2.msra.mxu0 0.0
      %4447 = vmatprep.subr.mxu0 0.0
      %4448 = vmatpush2.msra.mxu0 %v4241
      %4449 = vmatprep.subr.mxu0 0.0
      %4450 = vmatpush2.msra.mxu0 %v4240
      %4451 = vmatprep.mubr.f32.mxu0 %v4383
      %4452 = vmatmul.mubr.f32.gmra.mxu0 %v4381
      %v4453 = vpop.f32.mrf.mxu0
      %v4454 = vadd.f32 0.0, %v4453
      %v4455 = vpop.f32.mrf.mxu0
      %4456 = vmatprep.mubr.f32.mxu0 %v4385
      %4457 = vmatmul.mubr.f32.gmra.mxu0 %v4382
      %v4458 = vpop.f32.mrf.mxu0
      %v4459 = vadd.f32 0.0, %v4458
      %v4460 = vpop.f32.mrf.mxu0
      %4461 = vdwg.mxu0
      %v4464 = vcombine.high %v4454, %v4454
      %v4465 = vcombine.high %v4459, %v4459
      %v4468 = vadd.f32 %v4454, %v3814
      %v4469 = vadd.f32 %v4464, %v3815
      %v4470 = vadd.f32 %v4459, %v3816
      %v4471 = vadd.f32 %v4465, %v3817
      %vm4472 = vcmp.gt.f32.partialorder %v4468, 0.0
      %vm4473 = vcmp.gt.f32.partialorder %v4469, 0.0
      %vm4474 = vcmp.gt.f32.partialorder %v4470, 0.0
      %vm4475 = vcmp.gt.f32.partialorder %v4471, 0.0
      %v4476 = vmul.f32 %v4468, 0.2
      %v4477 = vmul.f32 %v4469, 0.2
      %v4478 = vmul.f32 %v4470, 0.2
      %v4479 = vmul.f32 %v4471, 0.2
      %v4480 = vsel %vm4472, %v4468, %v4476
      %v4481 = vsel %vm4473, %v4469, %v4477
      %v4482 = vsel %vm4474, %v4470, %v4478
      %v4483 = vsel %vm4475, %v4471, %v4479
      %v4486 = vcombine.high %v2596, %v2596
      %v4487 = vcombine.high %v2599, %v2599
      %v4490 = vsel %vm2690, %v4480, 0.0
      %v4491 = vsel %vm2690, %v4481, 0.0
      %v4492 = vadd.f32 %v4490, %v4491
      %v4493 = vsel %vm2690, %v4482, 0.0
      %v4494 = vadd.f32 %v4492, %v4493
      %v4495 = vsel %vm2690, %v4483, 0.0
      %v4496 = vadd.f32 %v4494, %v4495
      %v4497 = vrot.slane %v4496, 4
      %v4498 = vadd.f32 %v4496, %v4497
      %v4499 = vrot.slane %v4498, 2
      %v4500 = vadd.f32 %v4498, %v4499
      %v4501 = vrot.slane %v4500, 1
      %v4502 = vadd.f32 %v4500, %v4501
      %v4503 = vmul.f32 %v4480, %v4480
      %v4504 = vmul.f32 %v4481, %v4481
      %v4505 = vmul.f32 %v4482, %v4482
      %v4506 = vmul.f32 %v4483, %v4483
      %v4507 = vsel %vm2690, %v4503, 0.0
      %v4508 = vsel %vm2690, %v4504, 0.0
      %v4509 = vadd.f32 %v4507, %v4508
      %v4510 = vsel %vm2690, %v4505, 0.0
      %v4511 = vadd.f32 %v4509, %v4510
      %v4512 = vsel %vm2690, %v4506, 0.0
      %v4513 = vadd.f32 %v4511, %v4512
      %v4514 = vrot.slane %v4513, 4
      %v4515 = vadd.f32 %v4513, %v4514
      %v4516 = vrot.slane %v4515, 2
      %v4517 = vadd.f32 %v4515, %v4516
      %v4518 = vrot.slane %v4517, 1
      %v4519 = vadd.f32 %v4517, %v4518
      %v4520 = vmul.f32 %v4502, 0.0625
      %v4521 = vmul.f32 %v4519, 0.0625
      %v4522 = vmul.f32 %v4520, %v4520
      %v4523 = vsub.f32 %v4521, %v4522
      %v4524 = vsub.f32 %v4480, %v4520
      %v4525 = vsub.f32 %v4481, %v4520
      %v4526 = vsub.f32 %v4482, %v4520
      %v4527 = vsub.f32 %v4483, %v4520
      %v4528 = vadd.f32 %v4523, 1e-05
      %v4529 = vrsqrt.pop %v4528
      %v4530 = vmul.f32 %v4524, %v4529
      %v4531 = vmul.f32 %v4525, %v4529
      %v4532 = vmul.f32 %v4526, %v4529
      %v4533 = vmul.f32 %v4527, %v4529
      %v4534 = vadd.f32 %v2596, 1.0
      %v4535 = vadd.f32 %v4486, 1.0
      %v4536 = vadd.f32 %v2599, 1.0
      %v4537 = vadd.f32 %v4487, 1.0
      %v4538 = vmul.f32 %v4534, %v4530
      %v4539 = vmul.f32 %v4535, %v4531
      %v4540 = vmul.f32 %v4536, %v4532
      %v4541 = vmul.f32 %v4537, %v4533
      %4542 = vrot.lane.b32.xlu0 %v2596, 112
      %v4543 = vpop.permute.xlu0 %4542
      %4544 = vrot.lane.b32.xlu0 %v4486, 112
      %v4545 = vpop.permute.xlu0 %4544
      %4546 = vrot.lane.b32.xlu0 %v2599, 112
      %v4547 = vpop.permute.xlu0 %4546
      %4548 = vrot.lane.b32.xlu0 %v4487, 112
      %v4549 = vpop.permute.xlu0 %4548
      %v4554 = vadd.f32 %v4538, %v4543
      %v4555 = vadd.f32 %v4539, %v4545
      %v4556 = vadd.f32 %v4540, %v4547
      %v4557 = vadd.f32 %v4541, %v4549
      %vm4558 = vcmp.gt.f32.partialorder %v4554, 0.0
      %vm4559 = vcmp.gt.f32.partialorder %v4555, 0.0
      %vm4560 = vcmp.gt.f32.partialorder %v4556, 0.0
      %vm4561 = vcmp.gt.f32.partialorder %v4557, 0.0
      %v4562 = vmul.f32 %v4554, 0.2
      %v4563 = vmul.f32 %v4555, 0.2
      %v4564 = vmul.f32 %v4556, 0.2
      %v4565 = vmul.f32 %v4557, 0.2
      %v4566 = vsel %vm4558, %v4554, %v4562
      %v4567 = vsel %vm4559, %v4555, %v4563
      %v4568 = vsel %vm4560, %v4556, %v4564
      %v4569 = vsel %vm4561, %v4557, %v4565
      %s4570 = scalar_lea.vmem %s7, 576
      %v4571 = vld [vmem:[%s4570] sm:$0xff]
      %v4572 = vld [vmem:[%s4570 + $0x8] sm:$0xff]
      %v4573 = vld [vmem:[%s4570 + $0x10] sm:$0xff]
      %v4574 = vld [vmem:[%s4570 + $0x18] sm:$0xff]
      %v4575 = vld [vmem:[%s4570 + $0x20] sm:$0xff]
      %v4576 = vld [vmem:[%s4570 + $0x28] sm:$0xff]
      %v4577 = vld [vmem:[%s4570 + $0x30] sm:$0xff]
      %v4578 = vld [vmem:[%s4570 + $0x38] sm:$0xff]
      %v4579 = vld [vmem:[%s4570 + $0x40] sm:$0xff]
      %v4580 = vld [vmem:[%s4570 + $0x48] sm:$0xff]
      %v4581 = vld [vmem:[%s4570 + $0x50] sm:$0xff]
      %v4582 = vld [vmem:[%s4570 + $0x58] sm:$0xff]
      %v4583 = vld [vmem:[%s4570 + $0x60] sm:$0xff]
      %v4584 = vld [vmem:[%s4570 + $0x68] sm:$0xff]
      %v4585 = vld [vmem:[%s4570 + $0x70] sm:$0xff]
      %v4586 = vld [vmem:[%s4570 + $0x78] sm:$0xff]
      %v4587 = vld [vmem:[%s4570 + $0x80] sm:$0xff]
      %v4588 = vld [vmem:[%s4570 + $0x88] sm:$0xff]
      %v4593 = vrot.slane %v4566, 7
      %v4594 = vrot.slane %v4567, 7
      %v4595 = vrot.slane %v4568, 7
      %v4596 = vrot.slane %v4569, 7
      %v4601 = vsel %vm482, 0.0, %v4593
      %v4602 = vsel %vm482, 0.0, %v4594
      %v4603 = vsel %vm482, 0.0, %v4595
      %v4604 = vsel %vm482, 0.0, %v4596
      %v4605 = vsel %vm2019, %v4601, 0.0
      %v4606 = vsel %vm2019, %v4602, 0.0
      %v4607 = vsel %vm2019, %v4603, 0.0
      %v4608 = vsel %vm2019, %v4604, 0.0
      %v4612 = vcombine.high %v4605, %v4605
      %v4613 = vcombine.high %v4606, %v4606
      %v4614 = vcombine.high %v4607, %v4607
      %v4615 = vrot.slane %v4605, 5
      %v4616 = vrot.slane %v4615, 4
      %v4617 = vrot.slane %v4612, 5
      %v4618 = vsel %vm2033, %v4616, %v4617
      %v4619 = vrot.slane %v4606, 5
      %v4620 = vrot.slane %v4619, 4
      %v4621 = vrot.slane %v4613, 5
      %v4622 = vsel %vm2033, %v4620, %v4621
      %v4623 = vrot.slane %v4607, 5
      %v4624 = vrot.slane %v4623, 4
      %v4625 = vrot.slane %v4614, 5
      %v4626 = vsel %vm2033, %v4624, %v4625
      %v4627 = vrot.slane %v4605, 6
      %v4628 = vrot.slane %v4627, 4
      %v4629 = vrot.slane %v4612, 6
      %v4630 = vsel %vm2051, %v4628, %v4629
      %v4631 = vrot.slane %v4606, 6
      %v4632 = vrot.slane %v4631, 4
      %v4633 = vrot.slane %v4613, 6
      %v4634 = vsel %vm2051, %v4632, %v4633
      %v4635 = vrot.slane %v4607, 6
      %v4636 = vrot.slane %v4635, 4
      %v4637 = vrot.slane %v4614, 6
      %v4638 = vsel %vm2051, %v4636, %v4637
      %v4640 = vcombine.high %v4608, %v4608
      %v4641 = vrot.slane %v4608, 5
      %v4642 = vrot.slane %v4641, 4
      %v4643 = vrot.slane %v4640, 5
      %v4644 = vsel %vm2033, %v4642, %v4643
      %v4645 = vrot.slane %v4608, 6
      %v4646 = vrot.slane %v4645, 4
      %v4647 = vrot.slane %v4640, 6
      %v4648 = vsel %vm2051, %v4646, %v4647
      %v4649 = vcombine.low 0.0, %v4605
      %v4650 = vcombine.low %v4606, %v4607
      %v4653 = vcombine.low %v2037, %v4618
      %v4654 = vcombine.low %v4622, %v4626
      %4655 = vrot.lane.b32.xlu0 %v4653, 16
      %v4656 = vpop.permute.xlu0 %4655
      %4657 = vrot.lane.b32.xlu0 %v4654, 16
      %v4658 = vpop.permute.xlu0 %4657
      %v4661 = vcombine.low %v2055, %v4630
      %v4662 = vcombine.low %v4634, %v4638
      %4663 = vrot.lane.b32.xlu0 %v4661, 32
      %v4664 = vpop.permute.xlu0 %4663
      %4665 = vrot.lane.b32.xlu0 %v4662, 32
      %v4666 = vpop.permute.xlu0 %4665
      %v4669 = vcombine.low %v4605, %v4606
      %v4670 = vcombine.low %v4607, %v4608
      %4671 = vrot.lane.b32.xlu0 %v4669, 48
      %v4672 = vpop.permute.xlu0 %4671
      %4673 = vrot.lane.b32.xlu0 %v4670, 48
      %v4674 = vpop.permute.xlu0 %4673
      %v4677 = vcombine.low %v4618, %v4622
      %v4678 = vcombine.low %v4626, %v4644
      %4679 = vrot.lane.b32.xlu0 %v4677, 64
      %v4680 = vpop.permute.xlu0 %4679
      %4681 = vrot.lane.b32.xlu0 %v4678, 64
      %v4682 = vpop.permute.xlu0 %4681
      %v4685 = vcombine.low %v4630, %v4634
      %v4686 = vcombine.low %v4638, %v4648
      %4687 = vrot.lane.b32.xlu0 %v4685, 80
      %v4688 = vpop.permute.xlu0 %4687
      %4689 = vrot.lane.b32.xlu0 %v4686, 80
      %v4690 = vpop.permute.xlu0 %4689
      %v4693 = vcombine.low %v4608, 0.0
      %4694 = vrot.lane.b32.xlu0 %v4650, 96
      %v4695 = vpop.permute.xlu0 %4694
      %4696 = vrot.lane.b32.xlu0 %v4693, 96
      %v4697 = vpop.permute.xlu0 %4696
      %v4700 = vcombine.low %v4644, %v2037
      %4701 = vrot.lane.b32.xlu0 %v4654, 112
      %v4702 = vpop.permute.xlu0 %4701
      %4703 = vrot.lane.b32.xlu0 %v4700, 112
      %v4704 = vpop.permute.xlu0 %4703
      %v4707 = vcombine.low %v4648, %v2055
      %v4708 = vsel %vm825, %v4649, %v4656
      %v4709 = vsel %vm825, %v4650, %v4658
      %v4710 = vsel %vm1290, %v4708, %v4664
      %v4711 = vsel %vm1290, %v4709, %v4666
      %v4712 = vsel %vm1299, %v4710, %v4672
      %v4713 = vsel %vm1299, %v4711, %v4674
      %v4714 = vsel %vm1308, %v4712, %v4680
      %v4715 = vsel %vm1308, %v4713, %v4682
      %v4716 = vsel %vm1317, %v4714, %v4688
      %v4717 = vsel %vm1317, %v4715, %v4690
      %v4718 = vsel %vm1326, %v4716, %v4695
      %v4719 = vsel %vm1326, %v4717, %v4697
      %v4720 = vsel %vm1335, %v4718, %v4702
      %v4721 = vsel %vm1335, %v4719, %v4704
      %v4722 = vsel %vm825, %v4662, 0
      %v4724 = vsel %vm825, %v4707, 0
      %4726 = vmatprep.subr.mxu0 0.0
      %4727 = vmatpush1.msra.mxu0 %v4586
      %4728 = vmatprep.subr.mxu0 0.0
      %4729 = vmatpush1.msra.mxu0 %v4585
      %4730 = vmatprep.subr.mxu0 0.0
      %4731 = vmatpush1.msra.mxu0 %v4584
      %4732 = vmatprep.subr.mxu0 0.0
      %4733 = vmatpush1.msra.mxu0 %v4583
      %4734 = vmatprep.subr.mxu0 0.0
      %4735 = vmatpush1.msra.mxu0 %v4582
      %4736 = vmatprep.subr.mxu0 0.0
      %4737 = vmatpush1.msra.mxu0 %v4581
      %4738 = vmatprep.subr.mxu0 0.0
      %4739 = vmatpush1.msra.mxu0 %v4580
      %4740 = vmatprep.subr.mxu0 0.0
      %4741 = vmatpush1.msra.mxu0 %v4579
      %4742 = vmatprep.subr.mxu0 0.0
      %4743 = vmatpush1.msra.mxu0 %v4578
      %4744 = vmatprep.subr.mxu0 0.0
      %4745 = vmatpush1.msra.mxu0 %v4577
      %4746 = vmatprep.subr.mxu0 0.0
      %4747 = vmatpush1.msra.mxu0 %v4576
      %4748 = vmatprep.subr.mxu0 0.0
      %4749 = vmatpush1.msra.mxu0 %v4575
      %4750 = vmatprep.subr.mxu0 0.0
      %4751 = vmatpush1.msra.mxu0 %v4574
      %4752 = vmatprep.subr.mxu0 0.0
      %4753 = vmatpush1.msra.mxu0 %v4573
      %4754 = vmatprep.subr.mxu0 0.0
      %4755 = vmatpush1.msra.mxu0 %v4572
      %4756 = vmatprep.subr.mxu0 0.0
      %4757 = vmatpush1.msra.mxu0 %v4571
      %4758 = vmatprep.subr.mxu0 0.0
      %4759 = vmatpush2.msra.mxu0 0.0
      %4760 = vmatprep.subr.mxu0 0.0
      %4761 = vmatpush2.msra.mxu0 0.0
      %4762 = vmatprep.subr.mxu0 0.0
      %4763 = vmatpush2.msra.mxu0 0.0
      %4764 = vmatprep.subr.mxu0 0.0
      %4765 = vmatpush2.msra.mxu0 0.0
      %4766 = vmatprep.subr.mxu0 0.0
      %4767 = vmatpush2.msra.mxu0 0.0
      %4768 = vmatprep.subr.mxu0 0.0
      %4769 = vmatpush2.msra.mxu0 0.0
      %4770 = vmatprep.subr.mxu0 0.0
      %4771 = vmatpush2.msra.mxu0 0.0
      %4772 = vmatprep.subr.mxu0 0.0
      %4773 = vmatpush2.msra.mxu0 0.0
      %4774 = vmatprep.subr.mxu0 0.0
      %4775 = vmatpush2.msra.mxu0 0.0
      %4776 = vmatprep.subr.mxu0 0.0
      %4777 = vmatpush2.msra.mxu0 0.0
      %4778 = vmatprep.subr.mxu0 0.0
      %4779 = vmatpush2.msra.mxu0 0.0
      %4780 = vmatprep.subr.mxu0 0.0
      %4781 = vmatpush2.msra.mxu0 0.0
      %4782 = vmatprep.subr.mxu0 0.0
      %4783 = vmatpush2.msra.mxu0 0.0
      %4784 = vmatprep.subr.mxu0 0.0
      %4785 = vmatpush2.msra.mxu0 0.0
      %4786 = vmatprep.subr.mxu0 0.0
      %4787 = vmatpush2.msra.mxu0 %v4588
      %4788 = vmatprep.subr.mxu0 0.0
      %4789 = vmatpush2.msra.mxu0 %v4587
      %4790 = vmatprep.mubr.f32.mxu0 %v4722
      %4791 = vmatmul.mubr.f32.gmra.mxu0 %v4720
      %v4792 = vpop.f32.mrf.mxu0
      %v4793 = vadd.f32 0.0, %v4792
      %v4794 = vpop.f32.mrf.mxu0
      %4795 = vmatprep.mubr.f32.mxu0 %v4724
      %4796 = vmatmul.mubr.f32.gmra.mxu0 %v4721
      %v4797 = vpop.f32.mrf.mxu0
      %v4798 = vadd.f32 0.0, %v4797
      %v4799 = vpop.f32.mrf.mxu0
      %4800 = vdwg.mxu0
      %v4803 = vcombine.high %v4793, %v4793
      %v4804 = vcombine.high %v4798, %v4798
      %v4807 = vsel %vm2690, %v4793, 0.0
      %v4808 = vsel %vm2690, %v4803, 0.0
      %v4809 = vadd.f32 %v4807, %v4808
      %v4810 = vsel %vm2690, %v4798, 0.0
      %v4811 = vadd.f32 %v4809, %v4810
      %v4812 = vsel %vm2690, %v4804, 0.0
      %v4813 = vadd.f32 %v4811, %v4812
      %v4814 = vrot.slane %v4813, 4
      %v4815 = vadd.f32 %v4813, %v4814
      %v4816 = vrot.slane %v4815, 2
      %v4817 = vadd.f32 %v4815, %v4816
      %v4818 = vrot.slane %v4817, 1
      %v4819 = vadd.f32 %v4817, %v4818
      %v4820 = vmul.f32 %v4793, %v4793
      %v4821 = vmul.f32 %v4803, %v4803
      %v4822 = vmul.f32 %v4798, %v4798
      %v4823 = vmul.f32 %v4804, %v4804
      %v4824 = vsel %vm2690, %v4820, 0.0
      %v4825 = vsel %vm2690, %v4821, 0.0
      %v4826 = vadd.f32 %v4824, %v4825
      %v4827 = vsel %vm2690, %v4822, 0.0
      %v4828 = vadd.f32 %v4826, %v4827
      %v4829 = vsel %vm2690, %v4823, 0.0
      %v4830 = vadd.f32 %v4828, %v4829
      %v4831 = vrot.slane %v4830, 4
      %v4832 = vadd.f32 %v4830, %v4831
      %v4833 = vrot.slane %v4832, 2
      %v4834 = vadd.f32 %v4832, %v4833
      %v4835 = vrot.slane %v4834, 1
      %v4836 = vadd.f32 %v4834, %v4835
      %v4837 = vmul.f32 %v4819, 0.0625
      %v4838 = vmul.f32 %v4836, 0.0625
      %v4839 = vmul.f32 %v4837, %v4837
      %v4840 = vsub.f32 %v4838, %v4839
      %v4841 = vsub.f32 %v4793, %v4837
      %v4842 = vsub.f32 %v4803, %v4837
      %v4843 = vsub.f32 %v4798, %v4837
      %v4844 = vsub.f32 %v4804, %v4837
      %v4845 = vadd.f32 %v4840, 1e-05
      %v4846 = vrsqrt.pop %v4845
      %v4847 = vmul.f32 %v4841, %v4846
      %v4848 = vmul.f32 %v4842, %v4846
      %v4849 = vmul.f32 %v4843, %v4846
      %v4850 = vmul.f32 %v4844, %v4846
      %4855 = vrot.lane.b32.xlu0 %v4847, 32
      %v4856 = vpop.permute.xlu0 %4855
      %4857 = vrot.lane.b32.xlu0 %v4848, 32
      %v4858 = vpop.permute.xlu0 %4857
      %4859 = vrot.lane.b32.xlu0 %v4849, 32
      %v4860 = vpop.permute.xlu0 %4859
      %4861 = vrot.lane.b32.xlu0 %v4850, 32
      %v4862 = vpop.permute.xlu0 %4861
      %v4867 = vmul.f32 %v4534, %v4856
      %v4868 = vmul.f32 %v4535, %v4858
      %v4869 = vmul.f32 %v4536, %v4860
      %v4870 = vmul.f32 %v4537, %v4862
      %v4871 = vadd.f32 %v4867, %v4543
      %v4872 = vadd.f32 %v4868, %v4545
      %v4873 = vadd.f32 %v4869, %v4547
      %v4874 = vadd.f32 %v4870, %v4549
      %vm4875 = vcmp.gt.f32.partialorder %v4871, 0.0
      %vm4876 = vcmp.gt.f32.partialorder %v4872, 0.0
      %vm4877 = vcmp.gt.f32.partialorder %v4873, 0.0
      %vm4878 = vcmp.gt.f32.partialorder %v4874, 0.0
      %v4879 = vmul.f32 %v4871, 0.2
      %v4880 = vmul.f32 %v4872, 0.2
      %v4881 = vmul.f32 %v4873, 0.2
      %v4882 = vmul.f32 %v4874, 0.2
      %v4883 = vsel %vm4875, %v4871, %v4879
      %v4884 = vsel %vm4876, %v4872, %v4880
      %v4885 = vsel %vm4877, %v4873, %v4881
      %v4886 = vsel %vm4878, %v4874, %v4882
      %s4887 = scalar_lea.vmem %s7, 720
      %v4888 = vld [vmem:[%s4887] sm:$0xff]
      %v4889 = vld [vmem:[%s4887 + $0x8] sm:$0xff]
      %v4890 = vld [vmem:[%s4887 + $0x10] sm:$0xff]
      %v4891 = vld [vmem:[%s4887 + $0x18] sm:$0xff]
      %v4892 = vld [vmem:[%s4887 + $0x20] sm:$0xff]
      %v4893 = vld [vmem:[%s4887 + $0x28] sm:$0xff]
      %v4894 = vld [vmem:[%s4887 + $0x30] sm:$0xff]
      %v4895 = vld [vmem:[%s4887 + $0x38] sm:$0xff]
      %v4896 = vld [vmem:[%s4887 + $0x40] sm:$0xff]
      %v4897 = vld [vmem:[%s4887 + $0x48] sm:$0xff]
      %v4898 = vld [vmem:[%s4887 + $0x50] sm:$0xff]
      %v4899 = vld [vmem:[%s4887 + $0x58] sm:$0xff]
      %v4900 = vld [vmem:[%s4887 + $0x60] sm:$0xff]
      %v4901 = vld [vmem:[%s4887 + $0x68] sm:$0xff]
      %v4902 = vld [vmem:[%s4887 + $0x70] sm:$0xff]
      %v4903 = vld [vmem:[%s4887 + $0x78] sm:$0xff]
      %v4904 = vld [vmem:[%s4887 + $0x80] sm:$0xff]
      %v4905 = vld [vmem:[%s4887 + $0x88] sm:$0xff]
      %v4910 = vrot.slane %v4883, 7
      %v4911 = vrot.slane %v4884, 7
      %v4912 = vrot.slane %v4885, 7
      %v4913 = vrot.slane %v4886, 7
      %4914 = vrot.lane.b32.xlu0 %v4910, 96
      %v4915 = vpop.permute.xlu0 %4914
      %4916 = vrot.lane.b32.xlu0 %v4911, 96
      %v4917 = vpop.permute.xlu0 %4916
      %4918 = vrot.lane.b32.xlu0 %v4912, 96
      %v4919 = vpop.permute.xlu0 %4918
      %4920 = vrot.lane.b32.xlu0 %v4913, 96
      %v4921 = vpop.permute.xlu0 %4920
      %v4926 = vsel %vm482, 0.0, %v4915
      %v4927 = vsel %vm482, 0.0, %v4917
      %v4928 = vsel %vm482, 0.0, %v4919
      %v4929 = vsel %vm482, 0.0, %v4921
      %v4930 = vsel %vm2019, %v4926, 0.0
      %v4931 = vsel %vm2019, %v4927, 0.0
      %v4932 = vsel %vm2019, %v4928, 0.0
      %v4933 = vsel %vm2019, %v4929, 0.0
      %v4937 = vcombine.high %v4930, %v4930
      %v4938 = vcombine.high %v4931, %v4931
      %v4939 = vcombine.high %v4932, %v4932
      %v4940 = vrot.slane %v4930, 5
      %v4941 = vrot.slane %v4940, 4
      %v4942 = vrot.slane %v4937, 5
      %v4943 = vsel %vm2033, %v4941, %v4942
      %v4944 = vrot.slane %v4931, 5
      %v4945 = vrot.slane %v4944, 4
      %v4946 = vrot.slane %v4938, 5
      %v4947 = vsel %vm2033, %v4945, %v4946
      %v4948 = vrot.slane %v4932, 5
      %v4949 = vrot.slane %v4948, 4
      %v4950 = vrot.slane %v4939, 5
      %v4951 = vsel %vm2033, %v4949, %v4950
      %v4952 = vrot.slane %v4930, 6
      %v4953 = vrot.slane %v4952, 4
      %v4954 = vrot.slane %v4937, 6
      %v4955 = vsel %vm2051, %v4953, %v4954
      %v4956 = vrot.slane %v4931, 6
      %v4957 = vrot.slane %v4956, 4
      %v4958 = vrot.slane %v4938, 6
      %v4959 = vsel %vm2051, %v4957, %v4958
      %v4960 = vrot.slane %v4932, 6
      %v4961 = vrot.slane %v4960, 4
      %v4962 = vrot.slane %v4939, 6
      %v4963 = vsel %vm2051, %v4961, %v4962
      %v4965 = vcombine.high %v4933, %v4933
      %v4966 = vrot.slane %v4933, 5
      %v4967 = vrot.slane %v4966, 4
      %v4968 = vrot.slane %v4965, 5
      %v4969 = vsel %vm2033, %v4967, %v4968
      %v4970 = vrot.slane %v4933, 6
      %v4971 = vrot.slane %v4970, 4
      %v4972 = vrot.slane %v4965, 6
      %v4973 = vsel %vm2051, %v4971, %v4972
      %v4974 = vcombine.low 0.0, %v4930
      %v4975 = vcombine.low %v4931, %v4932
      %v4978 = vcombine.low %v2037, %v4943
      %v4979 = vcombine.low %v4947, %v4951
      %4980 = vrot.lane.b32.xlu0 %v4978, 16
      %v4981 = vpop.permute.xlu0 %4980
      %4982 = vrot.lane.b32.xlu0 %v4979, 16
      %v4983 = vpop.permute.xlu0 %4982
      %v4986 = vcombine.low %v2055, %v4955
      %v4987 = vcombine.low %v4959, %v4963
      %4988 = vrot.lane.b32.xlu0 %v4986, 32
      %v4989 = vpop.permute.xlu0 %4988
      %4990 = vrot.lane.b32.xlu0 %v4987, 32
      %v4991 = vpop.permute.xlu0 %4990
      %v4994 = vcombine.low %v4930, %v4931
      %v4995 = vcombine.low %v4932, %v4933
      %4996 = vrot.lane.b32.xlu0 %v4994, 48
      %v4997 = vpop.permute.xlu0 %4996
      %4998 = vrot.lane.b32.xlu0 %v4995, 48
      %v4999 = vpop.permute.xlu0 %4998
      %v5002 = vcombine.low %v4943, %v4947
      %v5003 = vcombine.low %v4951, %v4969
      %5004 = vrot.lane.b32.xlu0 %v5002, 64
      %v5005 = vpop.permute.xlu0 %5004
      %5006 = vrot.lane.b32.xlu0 %v5003, 64
      %v5007 = vpop.permute.xlu0 %5006
      %v5010 = vcombine.low %v4955, %v4959
      %v5011 = vcombine.low %v4963, %v4973
      %5012 = vrot.lane.b32.xlu0 %v5010, 80
      %v5013 = vpop.permute.xlu0 %5012
      %5014 = vrot.lane.b32.xlu0 %v5011, 80
      %v5015 = vpop.permute.xlu0 %5014
      %v5018 = vcombine.low %v4933, 0.0
      %5019 = vrot.lane.b32.xlu0 %v4975, 96
      %v5020 = vpop.permute.xlu0 %5019
      %5021 = vrot.lane.b32.xlu0 %v5018, 96
      %v5022 = vpop.permute.xlu0 %5021
      %v5025 = vcombine.low %v4969, %v2037
      %5026 = vrot.lane.b32.xlu0 %v4979, 112
      %v5027 = vpop.permute.xlu0 %5026
      %5028 = vrot.lane.b32.xlu0 %v5025, 112
      %v5029 = vpop.permute.xlu0 %5028
      %v5032 = vcombine.low %v4973, %v2055
      %v5033 = vsel %vm825, %v4974, %v4981
      %v5034 = vsel %vm825, %v4975, %v4983
      %v5035 = vsel %vm1290, %v5033, %v4989
      %v5036 = vsel %vm1290, %v5034, %v4991
      %v5037 = vsel %vm1299, %v5035, %v4997
      %v5038 = vsel %vm1299, %v5036, %v4999
      %v5039 = vsel %vm1308, %v5037, %v5005
      %v5040 = vsel %vm1308, %v5038, %v5007
      %v5041 = vsel %vm1317, %v5039, %v5013
      %v5042 = vsel %vm1317, %v5040, %v5015
      %v5043 = vsel %vm1326, %v5041, %v5020
      %v5044 = vsel %vm1326, %v5042, %v5022
      %v5045 = vsel %vm1335, %v5043, %v5027
      %v5046 = vsel %vm1335, %v5044, %v5029
      %v5047 = vsel %vm825, %v4987, 0
      %v5049 = vsel %vm825, %v5032, 0
      %5051 = vmatprep.subr.mxu0 0.0
      %5052 = vmatpush1.msra.mxu0 %v4903
      %5053 = vmatprep.subr.mxu0 0.0
      %5054 = vmatpush1.msra.mxu0 %v4902
      %5055 = vmatprep.subr.mxu0 0.0
      %5056 = vmatpush1.msra.mxu0 %v4901
      %5057 = vmatprep.subr.mxu0 0.0
      %5058 = vmatpush1.msra.mxu0 %v4900
      %5059 = vmatprep.subr.mxu0 0.0
      %5060 = vmatpush1.msra.mxu0 %v4899
      %5061 = vmatprep.subr.mxu0 0.0
      %5062 = vmatpush1.msra.mxu0 %v4898
      %5063 = vmatprep.subr.mxu0 0.0
      %5064 = vmatpush1.msra.mxu0 %v4897
      %5065 = vmatprep.subr.mxu0 0.0
      %5066 = vmatpush1.msra.mxu0 %v4896
      %5067 = vmatprep.subr.mxu0 0.0
      %5068 = vmatpush1.msra.mxu0 %v4895
      %5069 = vmatprep.subr.mxu0 0.0
      %5070 = vmatpush1.msra.mxu0 %v4894
      %5071 = vmatprep.subr.mxu0 0.0
      %5072 = vmatpush1.msra.mxu0 %v4893
      %5073 = vmatprep.subr.mxu0 0.0
      %5074 = vmatpush1.msra.mxu0 %v4892
      %5075 = vmatprep.subr.mxu0 0.0
      %5076 = vmatpush1.msra.mxu0 %v4891
      %5077 = vmatprep.subr.mxu0 0.0
      %5078 = vmatpush1.msra.mxu0 %v4890
      %5079 = vmatprep.subr.mxu0 0.0
      %5080 = vmatpush1.msra.mxu0 %v4889
      %5081 = vmatprep.subr.mxu0 0.0
      %5082 = vmatpush1.msra.mxu0 %v4888
      %5083 = vmatprep.subr.mxu0 0.0
      %5084 = vmatpush2.msra.mxu0 0.0
      %5085 = vmatprep.subr.mxu0 0.0
      %5086 = vmatpush2.msra.mxu0 0.0
      %5087 = vmatprep.subr.mxu0 0.0
      %5088 = vmatpush2.msra.mxu0 0.0
      %5089 = vmatprep.subr.mxu0 0.0
      %5090 = vmatpush2.msra.mxu0 0.0
      %5091 = vmatprep.subr.mxu0 0.0
      %5092 = vmatpush2.msra.mxu0 0.0
      %5093 = vmatprep.subr.mxu0 0.0
      %5094 = vmatpush2.msra.mxu0 0.0
      %5095 = vmatprep.subr.mxu0 0.0
      %5096 = vmatpush2.msra.mxu0 0.0
      %5097 = vmatprep.subr.mxu0 0.0
      %5098 = vmatpush2.msra.mxu0 0.0
      %5099 = vmatprep.subr.mxu0 0.0
      %5100 = vmatpush2.msra.mxu0 0.0
      %5101 = vmatprep.subr.mxu0 0.0
      %5102 = vmatpush2.msra.mxu0 0.0
      %5103 = vmatprep.subr.mxu0 0.0
      %5104 = vmatpush2.msra.mxu0 0.0
      %5105 = vmatprep.subr.mxu0 0.0
      %5106 = vmatpush2.msra.mxu0 0.0
      %5107 = vmatprep.subr.mxu0 0.0
      %5108 = vmatpush2.msra.mxu0 0.0
      %5109 = vmatprep.subr.mxu0 0.0
      %5110 = vmatpush2.msra.mxu0 0.0
      %5111 = vmatprep.subr.mxu0 0.0
      %5112 = vmatpush2.msra.mxu0 %v4905
      %5113 = vmatprep.subr.mxu0 0.0
      %5114 = vmatpush2.msra.mxu0 %v4904
      %5115 = vmatprep.mubr.f32.mxu0 %v5047
      %5116 = vmatmul.mubr.f32.gmra.mxu0 %v5045
      %v5117 = vpop.f32.mrf.mxu0
      %v5118 = vadd.f32 0.0, %v5117
      %v5119 = vpop.f32.mrf.mxu0
      %5120 = vmatprep.mubr.f32.mxu0 %v5049
      %5121 = vmatmul.mubr.f32.gmra.mxu0 %v5046
      %v5122 = vpop.f32.mrf.mxu0
      %v5123 = vadd.f32 0.0, %v5122
      %v5124 = vpop.f32.mrf.mxu0
      %5125 = vdwg.mxu0
      %v5128 = vcombine.high %v5118, %v5118
      %v5129 = vcombine.high %v5123, %v5123
      %v5132 = vadd.f32 %v5118, %v4480
      %v5133 = vadd.f32 %v5128, %v4481
      %v5134 = vadd.f32 %v5123, %v4482
      %v5135 = vadd.f32 %v5129, %v4483
      %vm5136 = vcmp.gt.f32.partialorder %v5132, 0.0
      %vm5137 = vcmp.gt.f32.partialorder %v5133, 0.0
      %vm5138 = vcmp.gt.f32.partialorder %v5134, 0.0
      %vm5139 = vcmp.gt.f32.partialorder %v5135, 0.0
      %v5140 = vmul.f32 %v5132, 0.2
      %v5141 = vmul.f32 %v5133, 0.2
      %v5142 = vmul.f32 %v5134, 0.2
      %v5143 = vmul.f32 %v5135, 0.2
      %v5144 = vsel %vm5136, %v5132, %v5140
      %v5145 = vsel %vm5137, %v5133, %v5141
      %v5146 = vsel %vm5138, %v5134, %v5142
      %v5147 = vsel %vm5139, %v5135, %v5143
      %v5148 = vsel %vm2690, %v5144, 0.0
      %v5149 = vsel %vm2690, %v5145, 0.0
      %v5150 = vadd.f32 %v5148, %v5149
      %v5151 = vsel %vm2690, %v5146, 0.0
      %v5152 = vadd.f32 %v5150, %v5151
      %v5153 = vsel %vm2690, %v5147, 0.0
      %v5154 = vadd.f32 %v5152, %v5153
      %v5155 = vrot.slane %v5154, 4
      %v5156 = vadd.f32 %v5154, %v5155
      %v5157 = vrot.slane %v5156, 2
      %v5158 = vadd.f32 %v5156, %v5157
      %v5159 = vrot.slane %v5158, 1
      %v5160 = vadd.f32 %v5158, %v5159
      %v5161 = vmul.f32 %v5144, %v5144
      %v5162 = vmul.f32 %v5145, %v5145
      %v5163 = vmul.f32 %v5146, %v5146
      %v5164 = vmul.f32 %v5147, %v5147
      %v5165 = vsel %vm2690, %v5161, 0.0
      %v5166 = vsel %vm2690, %v5162, 0.0
      %v5167 = vadd.f32 %v5165, %v5166
      %v5168 = vsel %vm2690, %v5163, 0.0
      %v5169 = vadd.f32 %v5167, %v5168
      %v5170 = vsel %vm2690, %v5164, 0.0
      %v5171 = vadd.f32 %v5169, %v5170
      %v5172 = vrot.slane %v5171, 4
      %v5173 = vadd.f32 %v5171, %v5172
      %v5174 = vrot.slane %v5173, 2
      %v5175 = vadd.f32 %v5173, %v5174
      %v5176 = vrot.slane %v5175, 1
      %v5177 = vadd.f32 %v5175, %v5176
      %v5178 = vmul.f32 %v5160, 0.0625
      %v5179 = vmul.f32 %v5177, 0.0625
      %v5180 = vmul.f32 %v5178, %v5178
      %v5181 = vsub.f32 %v5179, %v5180
      %v5182 = vsub.f32 %v5144, %v5178
      %v5183 = vsub.f32 %v5145, %v5178
      %v5184 = vsub.f32 %v5146, %v5178
      %v5185 = vsub.f32 %v5147, %v5178
      %v5186 = vadd.f32 %v5181, 1e-05
      %v5187 = vrsqrt.pop %v5186
      %v5188 = vmul.f32 %v5182, %v5187
      %v5189 = vmul.f32 %v5183, %v5187
      %v5190 = vmul.f32 %v5184, %v5187
      %v5191 = vmul.f32 %v5185, %v5187
      %5196 = vrot.lane.b32.xlu0 %v5188, 64
      %v5197 = vpop.permute.xlu0 %5196
      %5198 = vrot.lane.b32.xlu0 %v5189, 64
      %v5199 = vpop.permute.xlu0 %5198
      %5200 = vrot.lane.b32.xlu0 %v5190, 64
      %v5201 = vpop.permute.xlu0 %5200
      %5202 = vrot.lane.b32.xlu0 %v5191, 64
      %v5203 = vpop.permute.xlu0 %5202
      %v5208 = vmul.f32 %v4534, %v5197
      %v5209 = vmul.f32 %v4535, %v5199
      %v5210 = vmul.f32 %v4536, %v5201
      %v5211 = vmul.f32 %v4537, %v5203
      %v5212 = vadd.f32 %v5208, %v4543
      %v5213 = vadd.f32 %v5209, %v4545
      %v5214 = vadd.f32 %v5210, %v4547
      %v5215 = vadd.f32 %v5211, %v4549
      %vm5216 = vcmp.gt.f32.partialorder %v5212, 0.0
      %vm5217 = vcmp.gt.f32.partialorder %v5213, 0.0
      %vm5218 = vcmp.gt.f32.partialorder %v5214, 0.0
      %vm5219 = vcmp.gt.f32.partialorder %v5215, 0.0
      %v5220 = vmul.f32 %v5212, 0.2
      %v5221 = vmul.f32 %v5213, 0.2
      %v5222 = vmul.f32 %v5214, 0.2
      %v5223 = vmul.f32 %v5215, 0.2
      %v5224 = vsel %vm5216, %v5212, %v5220
      %v5225 = vsel %vm5217, %v5213, %v5221
      %v5226 = vsel %vm5218, %v5214, %v5222
      %v5227 = vsel %vm5219, %v5215, %v5223
      %s5228 = scalar_lea.vmem %s7, 864
      %v5229 = vld [vmem:[%s5228] sm:$0xff]
      %v5230 = vld [vmem:[%s5228 + $0x8] sm:$0xff]
      %v5231 = vld [vmem:[%s5228 + $0x10] sm:$0xff]
      %v5232 = vld [vmem:[%s5228 + $0x18] sm:$0xff]
      %v5233 = vld [vmem:[%s5228 + $0x20] sm:$0xff]
      %v5234 = vld [vmem:[%s5228 + $0x28] sm:$0xff]
      %v5235 = vld [vmem:[%s5228 + $0x30] sm:$0xff]
      %v5236 = vld [vmem:[%s5228 + $0x38] sm:$0xff]
      %v5237 = vld [vmem:[%s5228 + $0x40] sm:$0xff]
      %v5238 = vld [vmem:[%s5228 + $0x48] sm:$0xff]
      %v5239 = vld [vmem:[%s5228 + $0x50] sm:$0xff]
      %v5240 = vld [vmem:[%s5228 + $0x58] sm:$0xff]
      %v5241 = vld [vmem:[%s5228 + $0x60] sm:$0xff]
      %v5242 = vld [vmem:[%s5228 + $0x68] sm:$0xff]
      %v5243 = vld [vmem:[%s5228 + $0x70] sm:$0xff]
      %v5244 = vld [vmem:[%s5228 + $0x78] sm:$0xff]
      %v5245 = vld [vmem:[%s5228 + $0x80] sm:$0xff]
      %v5246 = vld [vmem:[%s5228 + $0x88] sm:$0xff]
      %v5251 = vrot.slane %v5224, 7
      %v5252 = vrot.slane %v5225, 7
      %v5253 = vrot.slane %v5226, 7
      %v5254 = vrot.slane %v5227, 7
      %5255 = vrot.lane.b32.xlu0 %v5251, 64
      %v5256 = vpop.permute.xlu0 %5255
      %5257 = vrot.lane.b32.xlu0 %v5252, 64
      %v5258 = vpop.permute.xlu0 %5257
      %5259 = vrot.lane.b32.xlu0 %v5253, 64
      %v5260 = vpop.permute.xlu0 %5259
      %5261 = vrot.lane.b32.xlu0 %v5254, 64
      %v5262 = vpop.permute.xlu0 %5261
      %v5267 = vsel %vm482, 0.0, %v5256
      %v5268 = vsel %vm482, 0.0, %v5258
      %v5269 = vsel %vm482, 0.0, %v5260
      %v5270 = vsel %vm482, 0.0, %v5262
      %v5271 = vsel %vm2019, %v5267, 0.0
      %v5272 = vsel %vm2019, %v5268, 0.0
      %v5273 = vsel %vm2019, %v5269, 0.0
      %v5274 = vsel %vm2019, %v5270, 0.0
      %v5278 = vcombine.high %v5271, %v5271
      %v5279 = vcombine.high %v5272, %v5272
      %v5280 = vcombine.high %v5273, %v5273
      %v5281 = vrot.slane %v5271, 5
      %v5282 = vrot.slane %v5281, 4
      %v5283 = vrot.slane %v5278, 5
      %v5284 = vsel %vm2033, %v5282, %v5283
      %v5285 = vrot.slane %v5272, 5
      %v5286 = vrot.slane %v5285, 4
      %v5287 = vrot.slane %v5279, 5
      %v5288 = vsel %vm2033, %v5286, %v5287
      %v5289 = vrot.slane %v5273, 5
      %v5290 = vrot.slane %v5289, 4
      %v5291 = vrot.slane %v5280, 5
      %v5292 = vsel %vm2033, %v5290, %v5291
      %v5293 = vrot.slane %v5271, 6
      %v5294 = vrot.slane %v5293, 4
      %v5295 = vrot.slane %v5278, 6
      %v5296 = vsel %vm2051, %v5294, %v5295
      %v5297 = vrot.slane %v5272, 6
      %v5298 = vrot.slane %v5297, 4
      %v5299 = vrot.slane %v5279, 6
      %v5300 = vsel %vm2051, %v5298, %v5299
      %v5301 = vrot.slane %v5273, 6
      %v5302 = vrot.slane %v5301, 4
      %v5303 = vrot.slane %v5280, 6
      %v5304 = vsel %vm2051, %v5302, %v5303
      %v5306 = vcombine.high %v5274, %v5274
      %v5307 = vrot.slane %v5274, 5
      %v5308 = vrot.slane %v5307, 4
      %v5309 = vrot.slane %v5306, 5
      %v5310 = vsel %vm2033, %v5308, %v5309
      %v5311 = vrot.slane %v5274, 6
      %v5312 = vrot.slane %v5311, 4
      %v5313 = vrot.slane %v5306, 6
      %v5314 = vsel %vm2051, %v5312, %v5313
      %v5315 = vcombine.low 0.0, %v5271
      %v5316 = vcombine.low %v5272, %v5273
      %v5319 = vcombine.low %v2037, %v5284
      %v5320 = vcombine.low %v5288, %v5292
      %5321 = vrot.lane.b32.xlu0 %v5319, 16
      %v5322 = vpop.permute.xlu0 %5321
      %5323 = vrot.lane.b32.xlu0 %v5320, 16
      %v5324 = vpop.permute.xlu0 %5323
      %v5327 = vcombine.low %v2055, %v5296
      %v5328 = vcombine.low %v5300, %v5304
      %5329 = vrot.lane.b32.xlu0 %v5327, 32
      %v5330 = vpop.permute.xlu0 %5329
      %5331 = vrot.lane.b32.xlu0 %v5328, 32
      %v5332 = vpop.permute.xlu0 %5331
      %v5335 = vcombine.low %v5271, %v5272
      %v5336 = vcombine.low %v5273, %v5274
      %5337 = vrot.lane.b32.xlu0 %v5335, 48
      %v5338 = vpop.permute.xlu0 %5337
      %5339 = vrot.lane.b32.xlu0 %v5336, 48
      %v5340 = vpop.permute.xlu0 %5339
      %v5343 = vcombine.low %v5284, %v5288
      %v5344 = vcombine.low %v5292, %v5310
      %5345 = vrot.lane.b32.xlu0 %v5343, 64
      %v5346 = vpop.permute.xlu0 %5345
      %5347 = vrot.lane.b32.xlu0 %v5344, 64
      %v5348 = vpop.permute.xlu0 %5347
      %v5351 = vcombine.low %v5296, %v5300
      %v5352 = vcombine.low %v5304, %v5314
      %5353 = vrot.lane.b32.xlu0 %v5351, 80
      %v5354 = vpop.permute.xlu0 %5353
      %5355 = vrot.lane.b32.xlu0 %v5352, 80
      %v5356 = vpop.permute.xlu0 %5355
      %v5359 = vcombine.low %v5274, 0.0
      %5360 = vrot.lane.b32.xlu0 %v5316, 96
      %v5361 = vpop.permute.xlu0 %5360
      %5362 = vrot.lane.b32.xlu0 %v5359, 96
      %v5363 = vpop.permute.xlu0 %5362
      %v5366 = vcombine.low %v5310, %v2037
      %5367 = vrot.lane.b32.xlu0 %v5320, 112
      %v5368 = vpop.permute.xlu0 %5367
      %5369 = vrot.lane.b32.xlu0 %v5366, 112
      %v5370 = vpop.permute.xlu0 %5369
      %v5373 = vcombine.low %v5314, %v2055
      %v5374 = vsel %vm825, %v5315, %v5322
      %v5375 = vsel %vm825, %v5316, %v5324
      %v5376 = vsel %vm1290, %v5374, %v5330
      %v5377 = vsel %vm1290, %v5375, %v5332
      %v5378 = vsel %vm1299, %v5376, %v5338
      %v5379 = vsel %vm1299, %v5377, %v5340
      %v5380 = vsel %vm1308, %v5378, %v5346
      %v5381 = vsel %vm1308, %v5379, %v5348
      %v5382 = vsel %vm1317, %v5380, %v5354
      %v5383 = vsel %vm1317, %v5381, %v5356
      %v5384 = vsel %vm1326, %v5382, %v5361
      %v5385 = vsel %vm1326, %v5383, %v5363
      %v5386 = vsel %vm1335, %v5384, %v5368
      %v5387 = vsel %vm1335, %v5385, %v5370
      %v5388 = vsel %vm825, %v5328, 0
      %v5390 = vsel %vm825, %v5373, 0
      %5392 = vmatprep.subr.mxu0 0.0
      %5393 = vmatpush1.msra.mxu0 %v5244
      %5394 = vmatprep.subr.mxu0 0.0
      %5395 = vmatpush1.msra.mxu0 %v5243
      %5396 = vmatprep.subr.mxu0 0.0
      %5397 = vmatpush1.msra.mxu0 %v5242
      %5398 = vmatprep.subr.mxu0 0.0
      %5399 = vmatpush1.msra.mxu0 %v5241
      %5400 = vmatprep.subr.mxu0 0.0
      %5401 = vmatpush1.msra.mxu0 %v5240
      %5402 = vmatprep.subr.mxu0 0.0
      %5403 = vmatpush1.msra.mxu0 %v5239
      %5404 = vmatprep.subr.mxu0 0.0
      %5405 = vmatpush1.msra.mxu0 %v5238
      %5406 = vmatprep.subr.mxu0 0.0
      %5407 = vmatpush1.msra.mxu0 %v5237
      %5408 = vmatprep.subr.mxu0 0.0
      %5409 = vmatpush1.msra.mxu0 %v5236
      %5410 = vmatprep.subr.mxu0 0.0
      %5411 = vmatpush1.msra.mxu0 %v5235
      %5412 = vmatprep.subr.mxu0 0.0
      %5413 = vmatpush1.msra.mxu0 %v5234
      %5414 = vmatprep.subr.mxu0 0.0
      %5415 = vmatpush1.msra.mxu0 %v5233
      %5416 = vmatprep.subr.mxu0 0.0
      %5417 = vmatpush1.msra.mxu0 %v5232
      %5418 = vmatprep.subr.mxu0 0.0
      %5419 = vmatpush1.msra.mxu0 %v5231
      %5420 = vmatprep.subr.mxu0 0.0
      %5421 = vmatpush1.msra.mxu0 %v5230
      %5422 = vmatprep.subr.mxu0 0.0
      %5423 = vmatpush1.msra.mxu0 %v5229
      %5424 = vmatprep.subr.mxu0 0.0
      %5425 = vmatpush2.msra.mxu0 0.0
      %5426 = vmatprep.subr.mxu0 0.0
      %5427 = vmatpush2.msra.mxu0 0.0
      %5428 = vmatprep.subr.mxu0 0.0
      %5429 = vmatpush2.msra.mxu0 0.0
      %5430 = vmatprep.subr.mxu0 0.0
      %5431 = vmatpush2.msra.mxu0 0.0
      %5432 = vmatprep.subr.mxu0 0.0
      %5433 = vmatpush2.msra.mxu0 0.0
      %5434 = vmatprep.subr.mxu0 0.0
      %5435 = vmatpush2.msra.mxu0 0.0
      %5436 = vmatprep.subr.mxu0 0.0
      %5437 = vmatpush2.msra.mxu0 0.0
      %5438 = vmatprep.subr.mxu0 0.0
      %5439 = vmatpush2.msra.mxu0 0.0
      %5440 = vmatprep.subr.mxu0 0.0
      %5441 = vmatpush2.msra.mxu0 0.0
      %5442 = vmatprep.subr.mxu0 0.0
      %5443 = vmatpush2.msra.mxu0 0.0
      %5444 = vmatprep.subr.mxu0 0.0
      %5445 = vmatpush2.msra.mxu0 0.0
      %5446 = vmatprep.subr.mxu0 0.0
      %5447 = vmatpush2.msra.mxu0 0.0
      %5448 = vmatprep.subr.mxu0 0.0
      %5449 = vmatpush2.msra.mxu0 0.0
      %5450 = vmatprep.subr.mxu0 0.0
      %5451 = vmatpush2.msra.mxu0 0.0
      %5452 = vmatprep.subr.mxu0 0.0
      %5453 = vmatpush2.msra.mxu0 %v5246
      %5454 = vmatprep.subr.mxu0 0.0
      %5455 = vmatpush2.msra.mxu0 %v5245
      %5456 = vmatprep.mubr.f32.mxu0 %v5388
      %5457 = vmatmul.mubr.f32.gmra.mxu0 %v5386
      %v5458 = vpop.f32.mrf.mxu0
      %v5459 = vadd.f32 0.0, %v5458
      %v5460 = vpop.f32.mrf.mxu0
      %5461 = vmatprep.mubr.f32.mxu0 %v5390
      %5462 = vmatmul.mubr.f32.gmra.mxu0 %v5387
      %v5463 = vpop.f32.mrf.mxu0
      %v5464 = vadd.f32 0.0, %v5463
      %v5465 = vpop.f32.mrf.mxu0
      %5466 = vdwg.mxu0
      %v5469 = vcombine.high %v5459, %v5459
      %v5470 = vcombine.high %v5464, %v5464
      %v5473 = vsel %vm2690, %v5459, 0.0
      %v5474 = vsel %vm2690, %v5469, 0.0
      %v5475 = vadd.f32 %v5473, %v5474
      %v5476 = vsel %vm2690, %v5464, 0.0
      %v5477 = vadd.f32 %v5475, %v5476
      %v5478 = vsel %vm2690, %v5470, 0.0
      %v5479 = vadd.f32 %v5477, %v5478
      %v5480 = vrot.slane %v5479, 4
      %v5481 = vadd.f32 %v5479, %v5480
      %v5482 = vrot.slane %v5481, 2
      %v5483 = vadd.f32 %v5481, %v5482
      %v5484 = vrot.slane %v5483, 1
      %v5485 = vadd.f32 %v5483, %v5484
      %v5486 = vmul.f32 %v5459, %v5459
      %v5487 = vmul.f32 %v5469, %v5469
      %v5488 = vmul.f32 %v5464, %v5464
      %v5489 = vmul.f32 %v5470, %v5470
      %v5490 = vsel %vm2690, %v5486, 0.0
      %v5491 = vsel %vm2690, %v5487, 0.0
      %v5492 = vadd.f32 %v5490, %v5491
      %v5493 = vsel %vm2690, %v5488, 0.0
      %v5494 = vadd.f32 %v5492, %v5493
      %v5495 = vsel %vm2690, %v5489, 0.0
      %v5496 = vadd.f32 %v5494, %v5495
      %v5497 = vrot.slane %v5496, 4
      %v5498 = vadd.f32 %v5496, %v5497
      %v5499 = vrot.slane %v5498, 2
      %v5500 = vadd.f32 %v5498, %v5499
      %v5501 = vrot.slane %v5500, 1
      %v5502 = vadd.f32 %v5500, %v5501
      %v5503 = vmul.f32 %v5485, 0.0625
      %v5504 = vmul.f32 %v5502, 0.0625
      %v5505 = vmul.f32 %v5503, %v5503
      %v5506 = vsub.f32 %v5504, %v5505
      %v5507 = vsub.f32 %v5459, %v5503
      %v5508 = vsub.f32 %v5469, %v5503
      %v5509 = vsub.f32 %v5464, %v5503
      %v5510 = vsub.f32 %v5470, %v5503
      %v5511 = vadd.f32 %v5506, 1e-05
      %v5512 = vrsqrt.pop %v5511
      %v5513 = vmul.f32 %v5507, %v5512
      %v5514 = vmul.f32 %v5508, %v5512
      %v5515 = vmul.f32 %v5509, %v5512
      %v5516 = vmul.f32 %v5510, %v5512
      %5521 = vrot.lane.b32.xlu0 %v5513, 96
      %v5522 = vpop.permute.xlu0 %5521
      %5523 = vrot.lane.b32.xlu0 %v5514, 96
      %v5524 = vpop.permute.xlu0 %5523
      %5525 = vrot.lane.b32.xlu0 %v5515, 96
      %v5526 = vpop.permute.xlu0 %5525
      %5527 = vrot.lane.b32.xlu0 %v5516, 96
      %v5528 = vpop.permute.xlu0 %5527
      %v5533 = vmul.f32 %v4534, %v5522
      %v5534 = vmul.f32 %v4535, %v5524
      %v5535 = vmul.f32 %v4536, %v5526
      %v5536 = vmul.f32 %v4537, %v5528
      %v5537 = vadd.f32 %v5533, %v4543
      %v5538 = vadd.f32 %v5534, %v4545
      %v5539 = vadd.f32 %v5535, %v4547
      %v5540 = vadd.f32 %v5536, %v4549
      %vm5541 = vcmp.gt.f32.partialorder %v5537, 0.0
      %vm5542 = vcmp.gt.f32.partialorder %v5538, 0.0
      %vm5543 = vcmp.gt.f32.partialorder %v5539, 0.0
      %vm5544 = vcmp.gt.f32.partialorder %v5540, 0.0
      %v5545 = vmul.f32 %v5537, 0.2
      %v5546 = vmul.f32 %v5538, 0.2
      %v5547 = vmul.f32 %v5539, 0.2
      %v5548 = vmul.f32 %v5540, 0.2
      %v5549 = vsel %vm5541, %v5537, %v5545
      %v5550 = vsel %vm5542, %v5538, %v5546
      %v5551 = vsel %vm5543, %v5539, %v5547
      %v5552 = vsel %vm5544, %v5540, %v5548
      %s5553 = scalar_lea.vmem %s7, 1008
      %v5554 = vld [vmem:[%s5553] sm:$0xff]
      %v5555 = vld [vmem:[%s5553 + $0x8] sm:$0xff]
      %v5556 = vld [vmem:[%s5553 + $0x10] sm:$0xff]
      %v5557 = vld [vmem:[%s5553 + $0x18] sm:$0xff]
      %v5558 = vld [vmem:[%s5553 + $0x20] sm:$0xff]
      %v5559 = vld [vmem:[%s5553 + $0x28] sm:$0xff]
      %v5560 = vld [vmem:[%s5553 + $0x30] sm:$0xff]
      %v5561 = vld [vmem:[%s5553 + $0x38] sm:$0xff]
      %v5562 = vld [vmem:[%s5553 + $0x40] sm:$0xff]
      %v5563 = vld [vmem:[%s5553 + $0x48] sm:$0xff]
      %v5564 = vld [vmem:[%s5553 + $0x50] sm:$0xff]
      %v5565 = vld [vmem:[%s5553 + $0x58] sm:$0xff]
      %v5566 = vld [vmem:[%s5553 + $0x60] sm:$0xff]
      %v5567 = vld [vmem:[%s5553 + $0x68] sm:$0xff]
      %v5568 = vld [vmem:[%s5553 + $0x70] sm:$0xff]
      %v5569 = vld [vmem:[%s5553 + $0x78] sm:$0xff]
      %v5570 = vld [vmem:[%s5553 + $0x80] sm:$0xff]
      %v5571 = vld [vmem:[%s5553 + $0x88] sm:$0xff]
      %v5576 = vrot.slane %v5549, 7
      %v5577 = vrot.slane %v5550, 7
      %v5578 = vrot.slane %v5551, 7
      %v5579 = vrot.slane %v5552, 7
      %5580 = vrot.lane.b32.xlu0 %v5576, 32
      %v5581 = vpop.permute.xlu0 %5580
      %5582 = vrot.lane.b32.xlu0 %v5577, 32
      %v5583 = vpop.permute.xlu0 %5582
      %5584 = vrot.lane.b32.xlu0 %v5578, 32
      %v5585 = vpop.permute.xlu0 %5584
      %5586 = vrot.lane.b32.xlu0 %v5579, 32
      %v5587 = vpop.permute.xlu0 %5586
      %v5592 = vsel %vm482, 0.0, %v5581
      %v5593 = vsel %vm482, 0.0, %v5583
      %v5594 = vsel %vm482, 0.0, %v5585
      %v5595 = vsel %vm482, 0.0, %v5587
      %v5596 = vsel %vm2019, %v5592, 0.0
      %v5597 = vsel %vm2019, %v5593, 0.0
      %v5598 = vsel %vm2019, %v5594, 0.0
      %v5599 = vsel %vm2019, %v5595, 0.0
      %v5603 = vcombine.high %v5596, %v5596
      %v5604 = vcombine.high %v5597, %v5597
      %v5605 = vcombine.high %v5598, %v5598
      %v5606 = vrot.slane %v5596, 5
      %v5607 = vrot.slane %v5606, 4
      %v5608 = vrot.slane %v5603, 5
      %v5609 = vsel %vm2033, %v5607, %v5608
      %v5610 = vrot.slane %v5597, 5
      %v5611 = vrot.slane %v5610, 4
      %v5612 = vrot.slane %v5604, 5
      %v5613 = vsel %vm2033, %v5611, %v5612
      %v5614 = vrot.slane %v5598, 5
      %v5615 = vrot.slane %v5614, 4
      %v5616 = vrot.slane %v5605, 5
      %v5617 = vsel %vm2033, %v5615, %v5616
      %v5618 = vrot.slane %v5596, 6
      %v5619 = vrot.slane %v5618, 4
      %v5620 = vrot.slane %v5603, 6
      %v5621 = vsel %vm2051, %v5619, %v5620
      %v5622 = vrot.slane %v5597, 6
      %v5623 = vrot.slane %v5622, 4
      %v5624 = vrot.slane %v5604, 6
      %v5625 = vsel %vm2051, %v5623, %v5624
      %v5626 = vrot.slane %v5598, 6
      %v5627 = vrot.slane %v5626, 4
      %v5628 = vrot.slane %v5605, 6
      %v5629 = vsel %vm2051, %v5627, %v5628
      %v5631 = vcombine.high %v5599, %v5599
      %v5632 = vrot.slane %v5599, 5
      %v5633 = vrot.slane %v5632, 4
      %v5634 = vrot.slane %v5631, 5
      %v5635 = vsel %vm2033, %v5633, %v5634
      %v5636 = vrot.slane %v5599, 6
      %v5637 = vrot.slane %v5636, 4
      %v5638 = vrot.slane %v5631, 6
      %v5639 = vsel %vm2051, %v5637, %v5638
      %v5640 = vcombine.low 0.0, %v5596
      %v5641 = vcombine.low %v5597, %v5598
      %v5644 = vcombine.low %v2037, %v5609
      %v5645 = vcombine.low %v5613, %v5617
      %5646 = vrot.lane.b32.xlu0 %v5644, 16
      %v5647 = vpop.permute.xlu0 %5646
      %5648 = vrot.lane.b32.xlu0 %v5645, 16
      %v5649 = vpop.permute.xlu0 %5648
      %v5652 = vcombine.low %v2055, %v5621
      %v5653 = vcombine.low %v5625, %v5629
      %5654 = vrot.lane.b32.xlu0 %v5652, 32
      %v5655 = vpop.permute.xlu0 %5654
      %5656 = vrot.lane.b32.xlu0 %v5653, 32
      %v5657 = vpop.permute.xlu0 %5656
      %v5660 = vcombine.low %v5596, %v5597
      %v5661 = vcombine.low %v5598, %v5599
      %5662 = vrot.lane.b32.xlu0 %v5660, 48
      %v5663 = vpop.permute.xlu0 %5662
      %5664 = vrot.lane.b32.xlu0 %v5661, 48
      %v5665 = vpop.permute.xlu0 %5664
      %v5668 = vcombine.low %v5609, %v5613
      %v5669 = vcombine.low %v5617, %v5635
      %5670 = vrot.lane.b32.xlu0 %v5668, 64
      %v5671 = vpop.permute.xlu0 %5670
      %5672 = vrot.lane.b32.xlu0 %v5669, 64
      %v5673 = vpop.permute.xlu0 %5672
      %v5676 = vcombine.low %v5621, %v5625
      %v5677 = vcombine.low %v5629, %v5639
      %5678 = vrot.lane.b32.xlu0 %v5676, 80
      %v5679 = vpop.permute.xlu0 %5678
      %5680 = vrot.lane.b32.xlu0 %v5677, 80
      %v5681 = vpop.permute.xlu0 %5680
      %v5684 = vcombine.low %v5599, 0.0
      %5685 = vrot.lane.b32.xlu0 %v5641, 96
      %v5686 = vpop.permute.xlu0 %5685
      %5687 = vrot.lane.b32.xlu0 %v5684, 96
      %v5688 = vpop.permute.xlu0 %5687
      %v5691 = vcombine.low %v5635, %v2037
      %5692 = vrot.lane.b32.xlu0 %v5645, 112
      %v5693 = vpop.permute.xlu0 %5692
      %5694 = vrot.lane.b32.xlu0 %v5691, 112
      %v5695 = vpop.permute.xlu0 %5694
      %v5698 = vcombine.low %v5639, %v2055
      %v5699 = vsel %vm825, %v5640, %v5647
      %v5700 = vsel %vm825, %v5641, %v5649
      %v5701 = vsel %vm1290, %v5699, %v5655
      %v5702 = vsel %vm1290, %v5700, %v5657
      %v5703 = vsel %vm1299, %v5701, %v5663
      %v5704 = vsel %vm1299, %v5702, %v5665
      %v5705 = vsel %vm1308, %v5703, %v5671
      %v5706 = vsel %vm1308, %v5704, %v5673
      %v5707 = vsel %vm1317, %v5705, %v5679
      %v5708 = vsel %vm1317, %v5706, %v5681
      %v5709 = vsel %vm1326, %v5707, %v5686
      %v5710 = vsel %vm1326, %v5708, %v5688
      %v5711 = vsel %vm1335, %v5709, %v5693
      %v5712 = vsel %vm1335, %v5710, %v5695
      %v5713 = vsel %vm825, %v5653, 0
      %v5715 = vsel %vm825, %v5698, 0
      %5717 = vmatprep.subr.mxu0 0.0
      %5718 = vmatpush1.msra.mxu0 %v5569
      %5719 = vmatprep.subr.mxu0 0.0
      %5720 = vmatpush1.msra.mxu0 %v5568
      %5721 = vmatprep.subr.mxu0 0.0
      %5722 = vmatpush1.msra.mxu0 %v5567
      %5723 = vmatprep.subr.mxu0 0.0
      %5724 = vmatpush1.msra.mxu0 %v5566
      %5725 = vmatprep.subr.mxu0 0.0
      %5726 = vmatpush1.msra.mxu0 %v5565
      %5727 = vmatprep.subr.mxu0 0.0
      %5728 = vmatpush1.msra.mxu0 %v5564
      %5729 = vmatprep.subr.mxu0 0.0
      %5730 = vmatpush1.msra.mxu0 %v5563
      %5731 = vmatprep.subr.mxu0 0.0
      %5732 = vmatpush1.msra.mxu0 %v5562
      %5733 = vmatprep.subr.mxu0 0.0
      %5734 = vmatpush1.msra.mxu0 %v5561
      %5735 = vmatprep.subr.mxu0 0.0
      %5736 = vmatpush1.msra.mxu0 %v5560
      %5737 = vmatprep.subr.mxu0 0.0
      %5738 = vmatpush1.msra.mxu0 %v5559
      %5739 = vmatprep.subr.mxu0 0.0
      %5740 = vmatpush1.msra.mxu0 %v5558
      %5741 = vmatprep.subr.mxu0 0.0
      %5742 = vmatpush1.msra.mxu0 %v5557
      %5743 = vmatprep.subr.mxu0 0.0
      %5744 = vmatpush1.msra.mxu0 %v5556
      %5745 = vmatprep.subr.mxu0 0.0
      %5746 = vmatpush1.msra.mxu0 %v5555
      %5747 = vmatprep.subr.mxu0 0.0
      %5748 = vmatpush1.msra.mxu0 %v5554
      %5749 = vmatprep.subr.mxu0 0.0
      %5750 = vmatpush2.msra.mxu0 0.0
      %5751 = vmatprep.subr.mxu0 0.0
      %5752 = vmatpush2.msra.mxu0 0.0
      %5753 = vmatprep.subr.mxu0 0.0
      %5754 = vmatpush2.msra.mxu0 0.0
      %5755 = vmatprep.subr.mxu0 0.0
      %5756 = vmatpush2.msra.mxu0 0.0
      %5757 = vmatprep.subr.mxu0 0.0
      %5758 = vmatpush2.msra.mxu0 0.0
      %5759 = vmatprep.subr.mxu0 0.0
      %5760 = vmatpush2.msra.mxu0 0.0
      %5761 = vmatprep.subr.mxu0 0.0
      %5762 = vmatpush2.msra.mxu0 0.0
      %5763 = vmatprep.subr.mxu0 0.0
      %5764 = vmatpush2.msra.mxu0 0.0
      %5765 = vmatprep.subr.mxu0 0.0
      %5766 = vmatpush2.msra.mxu0 0.0
      %5767 = vmatprep.subr.mxu0 0.0
      %5768 = vmatpush2.msra.mxu0 0.0
      %5769 = vmatprep.subr.mxu0 0.0
      %5770 = vmatpush2.msra.mxu0 0.0
      %5771 = vmatprep.subr.mxu0 0.0
      %5772 = vmatpush2.msra.mxu0 0.0
      %5773 = vmatprep.subr.mxu0 0.0
      %5774 = vmatpush2.msra.mxu0 0.0
      %5775 = vmatprep.subr.mxu0 0.0
      %5776 = vmatpush2.msra.mxu0 0.0
      %5777 = vmatprep.subr.mxu0 0.0
      %5778 = vmatpush2.msra.mxu0 %v5571
      %5779 = vmatprep.subr.mxu0 0.0
      %5780 = vmatpush2.msra.mxu0 %v5570
      %5781 = vmatprep.mubr.f32.mxu0 %v5713
      %5782 = vmatmul.mubr.f32.gmra.mxu0 %v5711
      %v5783 = vpop.f32.mrf.mxu0
      %v5784 = vadd.f32 0.0, %v5783
      %v5785 = vpop.f32.mrf.mxu0
      %5786 = vmatprep.mubr.f32.mxu0 %v5715
      %5787 = vmatmul.mubr.f32.gmra.mxu0 %v5712
      %v5788 = vpop.f32.mrf.mxu0
      %v5789 = vadd.f32 0.0, %v5788
      %v5790 = vpop.f32.mrf.mxu0
      %5791 = vdwg.mxu0
      %v5794 = vcombine.high %v5784, %v5784
      %v5795 = vcombine.high %v5789, %v5789
      %v5798 = vadd.f32 %v5784, %v5144
      %v5799 = vadd.f32 %v5794, %v5145
      %v5800 = vadd.f32 %v5789, %v5146
      %v5801 = vadd.f32 %v5795, %v5147
      %vm5802 = vcmp.gt.f32.partialorder %v5798, 0.0
      %vm5803 = vcmp.gt.f32.partialorder %v5799, 0.0
      %vm5804 = vcmp.gt.f32.partialorder %v5800, 0.0
      %vm5805 = vcmp.gt.f32.partialorder %v5801, 0.0
      %v5806 = vmul.f32 %v5798, 0.2
      %v5807 = vmul.f32 %v5799, 0.2
      %v5808 = vmul.f32 %v5800, 0.2
      %v5809 = vmul.f32 %v5801, 0.2
      %v5810 = vsel %vm5802, %v5798, %v5806
      %v5811 = vsel %vm5803, %v5799, %v5807
      %v5812 = vsel %vm5804, %v5800, %v5808
      %v5813 = vsel %vm5805, %v5801, %v5809
      %v5816 = vcombine.high %v2597, %v2597
      %v5817 = vcombine.high %v2600, %v2600
      %v5820 = vsel %vm2690, %v5810, 0.0
      %v5821 = vsel %vm2690, %v5811, 0.0
      %v5822 = vadd.f32 %v5820, %v5821
      %v5823 = vsel %vm2690, %v5812, 0.0
      %v5824 = vadd.f32 %v5822, %v5823
      %v5825 = vsel %vm2690, %v5813, 0.0
      %v5826 = vadd.f32 %v5824, %v5825
      %v5827 = vrot.slane %v5826, 4
      %v5828 = vadd.f32 %v5826, %v5827
      %v5829 = vrot.slane %v5828, 2
      %v5830 = vadd.f32 %v5828, %v5829
      %v5831 = vrot.slane %v5830, 1
      %v5832 = vadd.f32 %v5830, %v5831
      %v5833 = vmul.f32 %v5810, %v5810
      %v5834 = vmul.f32 %v5811, %v5811
      %v5835 = vmul.f32 %v5812, %v5812
      %v5836 = vmul.f32 %v5813, %v5813
      %v5837 = vsel %vm2690, %v5833, 0.0
      %v5838 = vsel %vm2690, %v5834, 0.0
      %v5839 = vadd.f32 %v5837, %v5838
      %v5840 = vsel %vm2690, %v5835, 0.0
      %v5841 = vadd.f32 %v5839, %v5840
      %v5842 = vsel %vm2690, %v5836, 0.0
      %v5843 = vadd.f32 %v5841, %v5842
      %v5844 = vrot.slane %v5843, 4
      %v5845 = vadd.f32 %v5843, %v5844
      %v5846 = vrot.slane %v5845, 2
      %v5847 = vadd.f32 %v5845, %v5846
      %v5848 = vrot.slane %v5847, 1
      %v5849 = vadd.f32 %v5847, %v5848
      %v5850 = vmul.f32 %v5832, 0.0625
      %v5851 = vmul.f32 %v5849, 0.0625
      %v5852 = vmul.f32 %v5850, %v5850
      %v5853 = vsub.f32 %v5851, %v5852
      %v5854 = vsub.f32 %v5810, %v5850
      %v5855 = vsub.f32 %v5811, %v5850
      %v5856 = vsub.f32 %v5812, %v5850
      %v5857 = vsub.f32 %v5813, %v5850
      %v5858 = vadd.f32 %v5853, 1e-05
      %v5859 = vrsqrt.pop %v5858
      %v5860 = vmul.f32 %v5854, %v5859
      %v5861 = vmul.f32 %v5855, %v5859
      %v5862 = vmul.f32 %v5856, %v5859
      %v5863 = vmul.f32 %v5857, %v5859
      %v5864 = vadd.f32 %v2597, 1.0
      %v5865 = vadd.f32 %v5816, 1.0
      %v5866 = vadd.f32 %v2600, 1.0
      %v5867 = vadd.f32 %v5817, 1.0
      %v5868 = vmul.f32 %v5864, %v5860
      %v5869 = vmul.f32 %v5865, %v5861
      %v5870 = vmul.f32 %v5866, %v5862
      %v5871 = vmul.f32 %v5867, %v5863
      %5872 = vrot.lane.b32.xlu0 %v2597, 112
      %v5873 = vpop.permute.xlu0 %5872
      %5874 = vrot.lane.b32.xlu0 %v5816, 112
      %v5875 = vpop.permute.xlu0 %5874
      %5876 = vrot.lane.b32.xlu0 %v2600, 112
      %v5877 = vpop.permute.xlu0 %5876
      %5878 = vrot.lane.b32.xlu0 %v5817, 112
      %v5879 = vpop.permute.xlu0 %5878
      %v5884 = vadd.f32 %v5868, %v5873
      %v5885 = vadd.f32 %v5869, %v5875
      %v5886 = vadd.f32 %v5870, %v5877
      %v5887 = vadd.f32 %v5871, %v5879
      %vm5888 = vcmp.gt.f32.partialorder %v5884, 0.0
      %vm5889 = vcmp.gt.f32.partialorder %v5885, 0.0
      %vm5890 = vcmp.gt.f32.partialorder %v5886, 0.0
      %vm5891 = vcmp.gt.f32.partialorder %v5887, 0.0
      %v5892 = vmul.f32 %v5884, 0.2
      %v5893 = vmul.f32 %v5885, 0.2
      %v5894 = vmul.f32 %v5886, 0.2
      %v5895 = vmul.f32 %v5887, 0.2
      %v5896 = vsel %vm5888, %v5884, %v5892
      %v5897 = vsel %vm5889, %v5885, %v5893
      %v5898 = vsel %vm5890, %v5886, %v5894
      %v5899 = vsel %vm5891, %v5887, %v5895
      %s5900 = scalar_lea.vmem %s7, 1152
      %v5901 = vld [vmem:[%s5900] sm:$0xff]
      %v5902 = vld [vmem:[%s5900 + $0x8] sm:$0xff]
      %v5903 = vld [vmem:[%s5900 + $0x10] sm:$0xff]
      %v5904 = vld [vmem:[%s5900 + $0x18] sm:$0xff]
      %v5905 = vld [vmem:[%s5900 + $0x20] sm:$0xff]
      %v5906 = vld [vmem:[%s5900 + $0x28] sm:$0xff]
      %v5907 = vld [vmem:[%s5900 + $0x30] sm:$0xff]
      %v5908 = vld [vmem:[%s5900 + $0x38] sm:$0xff]
      %v5909 = vld [vmem:[%s5900 + $0x40] sm:$0xff]
      %v5910 = vld [vmem:[%s5900 + $0x48] sm:$0xff]
      %v5911 = vld [vmem:[%s5900 + $0x50] sm:$0xff]
      %v5912 = vld [vmem:[%s5900 + $0x58] sm:$0xff]
      %v5913 = vld [vmem:[%s5900 + $0x60] sm:$0xff]
      %v5914 = vld [vmem:[%s5900 + $0x68] sm:$0xff]
      %v5915 = vld [vmem:[%s5900 + $0x70] sm:$0xff]
      %v5916 = vld [vmem:[%s5900 + $0x78] sm:$0xff]
      %v5917 = vld [vmem:[%s5900 + $0x80] sm:$0xff]
      %v5918 = vld [vmem:[%s5900 + $0x88] sm:$0xff]
      %v5923 = vrot.slane %v5896, 7
      %v5924 = vrot.slane %v5897, 7
      %v5925 = vrot.slane %v5898, 7
      %v5926 = vrot.slane %v5899, 7
      %v5931 = vsel %vm482, 0.0, %v5923
      %v5932 = vsel %vm482, 0.0, %v5924
      %v5933 = vsel %vm482, 0.0, %v5925
      %v5934 = vsel %vm482, 0.0, %v5926
      %v5935 = vsel %vm2019, %v5931, 0.0
      %v5936 = vsel %vm2019, %v5932, 0.0
      %v5937 = vsel %vm2019, %v5933, 0.0
      %v5938 = vsel %vm2019, %v5934, 0.0
      %v5942 = vcombine.high %v5935, %v5935
      %v5943 = vcombine.high %v5936, %v5936
      %v5944 = vcombine.high %v5937, %v5937
      %v5945 = vrot.slane %v5935, 5
      %v5946 = vrot.slane %v5945, 4
      %v5947 = vrot.slane %v5942, 5
      %v5948 = vsel %vm2033, %v5946, %v5947
      %v5949 = vrot.slane %v5936, 5
      %v5950 = vrot.slane %v5949, 4
      %v5951 = vrot.slane %v5943, 5
      %v5952 = vsel %vm2033, %v5950, %v5951
      %v5953 = vrot.slane %v5937, 5
      %v5954 = vrot.slane %v5953, 4
      %v5955 = vrot.slane %v5944, 5
      %v5956 = vsel %vm2033, %v5954, %v5955
      %v5957 = vrot.slane %v5935, 6
      %v5958 = vrot.slane %v5957, 4
      %v5959 = vrot.slane %v5942, 6
      %v5960 = vsel %vm2051, %v5958, %v5959
      %v5961 = vrot.slane %v5936, 6
      %v5962 = vrot.slane %v5961, 4
      %v5963 = vrot.slane %v5943, 6
      %v5964 = vsel %vm2051, %v5962, %v5963
      %v5965 = vrot.slane %v5937, 6
      %v5966 = vrot.slane %v5965, 4
      %v5967 = vrot.slane %v5944, 6
      %v5968 = vsel %vm2051, %v5966, %v5967
      %v5970 = vcombine.high %v5938, %v5938
      %v5971 = vrot.slane %v5938, 5
      %v5972 = vrot.slane %v5971, 4
      %v5973 = vrot.slane %v5970, 5
      %v5974 = vsel %vm2033, %v5972, %v5973
      %v5975 = vrot.slane %v5938, 6
      %v5976 = vrot.slane %v5975, 4
      %v5977 = vrot.slane %v5970, 6
      %v5978 = vsel %vm2051, %v5976, %v5977
      %v5979 = vcombine.low 0.0, %v5935
      %v5980 = vcombine.low %v5936, %v5937
      %v5983 = vcombine.low %v2037, %v5948
      %v5984 = vcombine.low %v5952, %v5956
      %5985 = vrot.lane.b32.xlu0 %v5983, 16
      %v5986 = vpop.permute.xlu0 %5985
      %5987 = vrot.lane.b32.xlu0 %v5984, 16
      %v5988 = vpop.permute.xlu0 %5987
      %v5991 = vcombine.low %v2055, %v5960
      %v5992 = vcombine.low %v5964, %v5968
      %5993 = vrot.lane.b32.xlu0 %v5991, 32
      %v5994 = vpop.permute.xlu0 %5993
      %5995 = vrot.lane.b32.xlu0 %v5992, 32
      %v5996 = vpop.permute.xlu0 %5995
      %v5999 = vcombine.low %v5935, %v5936
      %v6000 = vcombine.low %v5937, %v5938
      %6001 = vrot.lane.b32.xlu0 %v5999, 48
      %v6002 = vpop.permute.xlu0 %6001
      %6003 = vrot.lane.b32.xlu0 %v6000, 48
      %v6004 = vpop.permute.xlu0 %6003
      %v6007 = vcombine.low %v5948, %v5952
      %v6008 = vcombine.low %v5956, %v5974
      %6009 = vrot.lane.b32.xlu0 %v6007, 64
      %v6010 = vpop.permute.xlu0 %6009
      %6011 = vrot.lane.b32.xlu0 %v6008, 64
      %v6012 = vpop.permute.xlu0 %6011
      %v6015 = vcombine.low %v5960, %v5964
      %v6016 = vcombine.low %v5968, %v5978
      %6017 = vrot.lane.b32.xlu0 %v6015, 80
      %v6018 = vpop.permute.xlu0 %6017
      %6019 = vrot.lane.b32.xlu0 %v6016, 80
      %v6020 = vpop.permute.xlu0 %6019
      %v6023 = vcombine.low %v5938, 0.0
      %6024 = vrot.lane.b32.xlu0 %v5980, 96
      %v6025 = vpop.permute.xlu0 %6024
      %6026 = vrot.lane.b32.xlu0 %v6023, 96
      %v6027 = vpop.permute.xlu0 %6026
      %v6030 = vcombine.low %v5974, %v2037
      %6031 = vrot.lane.b32.xlu0 %v5984, 112
      %v6032 = vpop.permute.xlu0 %6031
      %6033 = vrot.lane.b32.xlu0 %v6030, 112
      %v6034 = vpop.permute.xlu0 %6033
      %v6037 = vcombine.low %v5978, %v2055
      %v6038 = vsel %vm825, %v5979, %v5986
      %v6039 = vsel %vm825, %v5980, %v5988
      %v6040 = vsel %vm1290, %v6038, %v5994
      %v6041 = vsel %vm1290, %v6039, %v5996
      %v6042 = vsel %vm1299, %v6040, %v6002
      %v6043 = vsel %vm1299, %v6041, %v6004
      %v6044 = vsel %vm1308, %v6042, %v6010
      %v6045 = vsel %vm1308, %v6043, %v6012
      %v6046 = vsel %vm1317, %v6044, %v6018
      %v6047 = vsel %vm1317, %v6045, %v6020
      %v6048 = vsel %vm1326, %v6046, %v6025
      %v6049 = vsel %vm1326, %v6047, %v6027
      %v6050 = vsel %vm1335, %v6048, %v6032
      %v6051 = vsel %vm1335, %v6049, %v6034
      %v6052 = vsel %vm825, %v5992, 0
      %v6054 = vsel %vm825, %v6037, 0
      %6056 = vmatprep.subr.mxu0 0.0
      %6057 = vmatpush1.msra.mxu0 %v5916
      %6058 = vmatprep.subr.mxu0 0.0
      %6059 = vmatpush1.msra.mxu0 %v5915
      %6060 = vmatprep.subr.mxu0 0.0
      %6061 = vmatpush1.msra.mxu0 %v5914
      %6062 = vmatprep.subr.mxu0 0.0
      %6063 = vmatpush1.msra.mxu0 %v5913
      %6064 = vmatprep.subr.mxu0 0.0
      %6065 = vmatpush1.msra.mxu0 %v5912
      %6066 = vmatprep.subr.mxu0 0.0
      %6067 = vmatpush1.msra.mxu0 %v5911
      %6068 = vmatprep.subr.mxu0 0.0
      %6069 = vmatpush1.msra.mxu0 %v5910
      %6070 = vmatprep.subr.mxu0 0.0
      %6071 = vmatpush1.msra.mxu0 %v5909
      %6072 = vmatprep.subr.mxu0 0.0
      %6073 = vmatpush1.msra.mxu0 %v5908
      %6074 = vmatprep.subr.mxu0 0.0
      %6075 = vmatpush1.msra.mxu0 %v5907
      %6076 = vmatprep.subr.mxu0 0.0
      %6077 = vmatpush1.msra.mxu0 %v5906
      %6078 = vmatprep.subr.mxu0 0.0
      %6079 = vmatpush1.msra.mxu0 %v5905
      %6080 = vmatprep.subr.mxu0 0.0
      %6081 = vmatpush1.msra.mxu0 %v5904
      %6082 = vmatprep.subr.mxu0 0.0
      %6083 = vmatpush1.msra.mxu0 %v5903
      %6084 = vmatprep.subr.mxu0 0.0
      %6085 = vmatpush1.msra.mxu0 %v5902
      %6086 = vmatprep.subr.mxu0 0.0
      %6087 = vmatpush1.msra.mxu0 %v5901
      %6088 = vmatprep.subr.mxu0 0.0
      %6089 = vmatpush2.msra.mxu0 0.0
      %6090 = vmatprep.subr.mxu0 0.0
      %6091 = vmatpush2.msra.mxu0 0.0
      %6092 = vmatprep.subr.mxu0 0.0
      %6093 = vmatpush2.msra.mxu0 0.0
      %6094 = vmatprep.subr.mxu0 0.0
      %6095 = vmatpush2.msra.mxu0 0.0
      %6096 = vmatprep.subr.mxu0 0.0
      %6097 = vmatpush2.msra.mxu0 0.0
      %6098 = vmatprep.subr.mxu0 0.0
      %6099 = vmatpush2.msra.mxu0 0.0
      %6100 = vmatprep.subr.mxu0 0.0
      %6101 = vmatpush2.msra.mxu0 0.0
      %6102 = vmatprep.subr.mxu0 0.0
      %6103 = vmatpush2.msra.mxu0 0.0
      %6104 = vmatprep.subr.mxu0 0.0
      %6105 = vmatpush2.msra.mxu0 0.0
      %6106 = vmatprep.subr.mxu0 0.0
      %6107 = vmatpush2.msra.mxu0 0.0
      %6108 = vmatprep.subr.mxu0 0.0
      %6109 = vmatpush2.msra.mxu0 0.0
      %6110 = vmatprep.subr.mxu0 0.0
      %6111 = vmatpush2.msra.mxu0 0.0
      %6112 = vmatprep.subr.mxu0 0.0
      %6113 = vmatpush2.msra.mxu0 0.0
      %6114 = vmatprep.subr.mxu0 0.0
      %6115 = vmatpush2.msra.mxu0 0.0
      %6116 = vmatprep.subr.mxu0 0.0
      %6117 = vmatpush2.msra.mxu0 %v5918
      %6118 = vmatprep.subr.mxu0 0.0
      %6119 = vmatpush2.msra.mxu0 %v5917
      %6120 = vmatprep.mubr.f32.mxu0 %v6052
      %6121 = vmatmul.mubr.f32.gmra.mxu0 %v6050
      %v6122 = vpop.f32.mrf.mxu0
      %v6123 = vadd.f32 0.0, %v6122
      %v6124 = vpop.f32.mrf.mxu0
      %6125 = vmatprep.mubr.f32.mxu0 %v6054
      %6126 = vmatmul.mubr.f32.gmra.mxu0 %v6051
      %v6127 = vpop.f32.mrf.mxu0
      %v6128 = vadd.f32 0.0, %v6127
      %v6129 = vpop.f32.mrf.mxu0
      %6130 = vdwg.mxu0
      %v6133 = vcombine.high %v6123, %v6123
      %v6134 = vcombine.high %v6128, %v6128
      %v6137 = vsel %vm2690, %v6123, 0.0
      %v6138 = vsel %vm2690, %v6133, 0.0
      %v6139 = vadd.f32 %v6137, %v6138
      %v6140 = vsel %vm2690, %v6128, 0.0
      %v6141 = vadd.f32 %v6139, %v6140
      %v6142 = vsel %vm2690, %v6134, 0.0
      %v6143 = vadd.f32 %v6141, %v6142
      %v6144 = vrot.slane %v6143, 4
      %v6145 = vadd.f32 %v6143, %v6144
      %v6146 = vrot.slane %v6145, 2
      %v6147 = vadd.f32 %v6145, %v6146
      %v6148 = vrot.slane %v6147, 1
      %v6149 = vadd.f32 %v6147, %v6148
      %v6150 = vmul.f32 %v6123, %v6123
      %v6151 = vmul.f32 %v6133, %v6133
      %v6152 = vmul.f32 %v6128, %v6128
      %v6153 = vmul.f32 %v6134, %v6134
      %v6154 = vsel %vm2690, %v6150, 0.0
      %v6155 = vsel %vm2690, %v6151, 0.0
      %v6156 = vadd.f32 %v6154, %v6155
      %v6157 = vsel %vm2690, %v6152, 0.0
      %v6158 = vadd.f32 %v6156, %v6157
      %v6159 = vsel %vm2690, %v6153, 0.0
      %v6160 = vadd.f32 %v6158, %v6159
      %v6161 = vrot.slane %v6160, 4
      %v6162 = vadd.f32 %v6160, %v6161
      %v6163 = vrot.slane %v6162, 2
      %v6164 = vadd.f32 %v6162, %v6163
      %v6165 = vrot.slane %v6164, 1
      %v6166 = vadd.f32 %v6164, %v6165
      %v6167 = vmul.f32 %v6149, 0.0625
      %v6168 = vmul.f32 %v6166, 0.0625
      %v6169 = vmul.f32 %v6167, %v6167
      %v6170 = vsub.f32 %v6168, %v6169
      %v6171 = vsub.f32 %v6123, %v6167
      %v6172 = vsub.f32 %v6133, %v6167
      %v6173 = vsub.f32 %v6128, %v6167
      %v6174 = vsub.f32 %v6134, %v6167
      %v6175 = vadd.f32 %v6170, 1e-05
      %v6176 = vrsqrt.pop %v6175
      %v6177 = vmul.f32 %v6171, %v6176
      %v6178 = vmul.f32 %v6172, %v6176
      %v6179 = vmul.f32 %v6173, %v6176
      %v6180 = vmul.f32 %v6174, %v6176
      %6185 = vrot.lane.b32.xlu0 %v6177, 32
      %v6186 = vpop.permute.xlu0 %6185
      %6187 = vrot.lane.b32.xlu0 %v6178, 32
      %v6188 = vpop.permute.xlu0 %6187
      %6189 = vrot.lane.b32.xlu0 %v6179, 32
      %v6190 = vpop.permute.xlu0 %6189
      %6191 = vrot.lane.b32.xlu0 %v6180, 32
      %v6192 = vpop.permute.xlu0 %6191
      %v6197 = vmul.f32 %v5864, %v6186
      %v6198 = vmul.f32 %v5865, %v6188
      %v6199 = vmul.f32 %v5866, %v6190
      %v6200 = vmul.f32 %v5867, %v6192
      %v6201 = vadd.f32 %v6197, %v5873
      %v6202 = vadd.f32 %v6198, %v5875
      %v6203 = vadd.f32 %v6199, %v5877
      %v6204 = vadd.f32 %v6200, %v5879
      %vm6205 = vcmp.gt.f32.partialorder %v6201, 0.0
      %vm6206 = vcmp.gt.f32.partialorder %v6202, 0.0
      %vm6207 = vcmp.gt.f32.partialorder %v6203, 0.0
      %vm6208 = vcmp.gt.f32.partialorder %v6204, 0.0
      %v6209 = vmul.f32 %v6201, 0.2
      %v6210 = vmul.f32 %v6202, 0.2
      %v6211 = vmul.f32 %v6203, 0.2
      %v6212 = vmul.f32 %v6204, 0.2
      %v6213 = vsel %vm6205, %v6201, %v6209
      %v6214 = vsel %vm6206, %v6202, %v6210
      %v6215 = vsel %vm6207, %v6203, %v6211
      %v6216 = vsel %vm6208, %v6204, %v6212
      %s6217 = scalar_lea.vmem %s7, 1296
      %v6218 = vld [vmem:[%s6217] sm:$0xff]
      %v6219 = vld [vmem:[%s6217 + $0x8] sm:$0xff]
      %v6220 = vld [vmem:[%s6217 + $0x10] sm:$0xff]
      %v6221 = vld [vmem:[%s6217 + $0x18] sm:$0xff]
      %v6222 = vld [vmem:[%s6217 + $0x20] sm:$0xff]
      %v6223 = vld [vmem:[%s6217 + $0x28] sm:$0xff]
      %v6224 = vld [vmem:[%s6217 + $0x30] sm:$0xff]
      %v6225 = vld [vmem:[%s6217 + $0x38] sm:$0xff]
      %v6226 = vld [vmem:[%s6217 + $0x40] sm:$0xff]
      %v6227 = vld [vmem:[%s6217 + $0x48] sm:$0xff]
      %v6228 = vld [vmem:[%s6217 + $0x50] sm:$0xff]
      %v6229 = vld [vmem:[%s6217 + $0x58] sm:$0xff]
      %v6230 = vld [vmem:[%s6217 + $0x60] sm:$0xff]
      %v6231 = vld [vmem:[%s6217 + $0x68] sm:$0xff]
      %v6232 = vld [vmem:[%s6217 + $0x70] sm:$0xff]
      %v6233 = vld [vmem:[%s6217 + $0x78] sm:$0xff]
      %v6234 = vld [vmem:[%s6217 + $0x80] sm:$0xff]
      %v6235 = vld [vmem:[%s6217 + $0x88] sm:$0xff]
      %v6240 = vrot.slane %v6213, 7
      %v6241 = vrot.slane %v6214, 7
      %v6242 = vrot.slane %v6215, 7
      %v6243 = vrot.slane %v6216, 7
      %6244 = vrot.lane.b32.xlu0 %v6240, 96
      %v6245 = vpop.permute.xlu0 %6244
      %6246 = vrot.lane.b32.xlu0 %v6241, 96
      %v6247 = vpop.permute.xlu0 %6246
      %6248 = vrot.lane.b32.xlu0 %v6242, 96
      %v6249 = vpop.permute.xlu0 %6248
      %6250 = vrot.lane.b32.xlu0 %v6243, 96
      %v6251 = vpop.permute.xlu0 %6250
      %v6256 = vsel %vm482, 0.0, %v6245
      %v6257 = vsel %vm482, 0.0, %v6247
      %v6258 = vsel %vm482, 0.0, %v6249
      %v6259 = vsel %vm482, 0.0, %v6251
      %v6260 = vsel %vm2019, %v6256, 0.0
      %v6261 = vsel %vm2019, %v6257, 0.0
      %v6262 = vsel %vm2019, %v6258, 0.0
      %v6263 = vsel %vm2019, %v6259, 0.0
      %v6267 = vcombine.high %v6260, %v6260
      %v6268 = vcombine.high %v6261, %v6261
      %v6269 = vcombine.high %v6262, %v6262
      %v6270 = vrot.slane %v6260, 5
      %v6271 = vrot.slane %v6270, 4
      %v6272 = vrot.slane %v6267, 5
      %v6273 = vsel %vm2033, %v6271, %v6272
      %v6274 = vrot.slane %v6261, 5
      %v6275 = vrot.slane %v6274, 4
      %v6276 = vrot.slane %v6268, 5
      %v6277 = vsel %vm2033, %v6275, %v6276
      %v6278 = vrot.slane %v6262, 5
      %v6279 = vrot.slane %v6278, 4
      %v6280 = vrot.slane %v6269, 5
      %v6281 = vsel %vm2033, %v6279, %v6280
      %v6282 = vrot.slane %v6260, 6
      %v6283 = vrot.slane %v6282, 4
      %v6284 = vrot.slane %v6267, 6
      %v6285 = vsel %vm2051, %v6283, %v6284
      %v6286 = vrot.slane %v6261, 6
      %v6287 = vrot.slane %v6286, 4
      %v6288 = vrot.slane %v6268, 6
      %v6289 = vsel %vm2051, %v6287, %v6288
      %v6290 = vrot.slane %v6262, 6
      %v6291 = vrot.slane %v6290, 4
      %v6292 = vrot.slane %v6269, 6
      %v6293 = vsel %vm2051, %v6291, %v6292
      %v6295 = vcombine.high %v6263, %v6263
      %v6296 = vrot.slane %v6263, 5
      %v6297 = vrot.slane %v6296, 4
      %v6298 = vrot.slane %v6295, 5
      %v6299 = vsel %vm2033, %v6297, %v6298
      %v6300 = vrot.slane %v6263, 6
      %v6301 = vrot.slane %v6300, 4
      %v6302 = vrot.slane %v6295, 6
      %v6303 = vsel %vm2051, %v6301, %v6302
      %v6304 = vcombine.low 0.0, %v6260
      %v6305 = vcombine.low %v6261, %v6262
      %v6308 = vcombine.low %v2037, %v6273
      %v6309 = vcombine.low %v6277, %v6281
      %6310 = vrot.lane.b32.xlu0 %v6308, 16
      %v6311 = vpop.permute.xlu0 %6310
      %6312 = vrot.lane.b32.xlu0 %v6309, 16
      %v6313 = vpop.permute.xlu0 %6312
      %v6316 = vcombine.low %v2055, %v6285
      %v6317 = vcombine.low %v6289, %v6293
      %6318 = vrot.lane.b32.xlu0 %v6316, 32
      %v6319 = vpop.permute.xlu0 %6318
      %6320 = vrot.lane.b32.xlu0 %v6317, 32
      %v6321 = vpop.permute.xlu0 %6320
      %v6324 = vcombine.low %v6260, %v6261
      %v6325 = vcombine.low %v6262, %v6263
      %6326 = vrot.lane.b32.xlu0 %v6324, 48
      %v6327 = vpop.permute.xlu0 %6326
      %6328 = vrot.lane.b32.xlu0 %v6325, 48
      %v6329 = vpop.permute.xlu0 %6328
      %v6332 = vcombine.low %v6273, %v6277
      %v6333 = vcombine.low %v6281, %v6299
      %6334 = vrot.lane.b32.xlu0 %v6332, 64
      %v6335 = vpop.permute.xlu0 %6334
      %6336 = vrot.lane.b32.xlu0 %v6333, 64
      %v6337 = vpop.permute.xlu0 %6336
      %v6340 = vcombine.low %v6285, %v6289
      %v6341 = vcombine.low %v6293, %v6303
      %6342 = vrot.lane.b32.xlu0 %v6340, 80
      %v6343 = vpop.permute.xlu0 %6342
      %6344 = vrot.lane.b32.xlu0 %v6341, 80
      %v6345 = vpop.permute.xlu0 %6344
      %v6348 = vcombine.low %v6263, 0.0
      %6349 = vrot.lane.b32.xlu0 %v6305, 96
      %v6350 = vpop.permute.xlu0 %6349
      %6351 = vrot.lane.b32.xlu0 %v6348, 96
      %v6352 = vpop.permute.xlu0 %6351
      %v6355 = vcombine.low %v6299, %v2037
      %6356 = vrot.lane.b32.xlu0 %v6309, 112
      %v6357 = vpop.permute.xlu0 %6356
      %6358 = vrot.lane.b32.xlu0 %v6355, 112
      %v6359 = vpop.permute.xlu0 %6358
      %v6362 = vcombine.low %v6303, %v2055
      %v6363 = vsel %vm825, %v6304, %v6311
      %v6364 = vsel %vm825, %v6305, %v6313
      %v6365 = vsel %vm1290, %v6363, %v6319
      %v6366 = vsel %vm1290, %v6364, %v6321
      %v6367 = vsel %vm1299, %v6365, %v6327
      %v6368 = vsel %vm1299, %v6366, %v6329
      %v6369 = vsel %vm1308, %v6367, %v6335
      %v6370 = vsel %vm1308, %v6368, %v6337
      %v6371 = vsel %vm1317, %v6369, %v6343
      %v6372 = vsel %vm1317, %v6370, %v6345
      %v6373 = vsel %vm1326, %v6371, %v6350
      %v6374 = vsel %vm1326, %v6372, %v6352
      %v6375 = vsel %vm1335, %v6373, %v6357
      %v6376 = vsel %vm1335, %v6374, %v6359
      %v6377 = vsel %vm825, %v6317, 0
      %v6379 = vsel %vm825, %v6362, 0
      %6381 = vmatprep.subr.mxu0 0.0
      %6382 = vmatpush1.msra.mxu0 %v6233
      %6383 = vmatprep.subr.mxu0 0.0
      %6384 = vmatpush1.msra.mxu0 %v6232
      %6385 = vmatprep.subr.mxu0 0.0
      %6386 = vmatpush1.msra.mxu0 %v6231
      %6387 = vmatprep.subr.mxu0 0.0
      %6388 = vmatpush1.msra.mxu0 %v6230
      %6389 = vmatprep.subr.mxu0 0.0
      %6390 = vmatpush1.msra.mxu0 %v6229
      %6391 = vmatprep.subr.mxu0 0.0
      %6392 = vmatpush1.msra.mxu0 %v6228
      %6393 = vmatprep.subr.mxu0 0.0
      %6394 = vmatpush1.msra.mxu0 %v6227
      %6395 = vmatprep.subr.mxu0 0.0
      %6396 = vmatpush1.msra.mxu0 %v6226
      %6397 = vmatprep.subr.mxu0 0.0
      %6398 = vmatpush1.msra.mxu0 %v6225
      %6399 = vmatprep.subr.mxu0 0.0
      %6400 = vmatpush1.msra.mxu0 %v6224
      %6401 = vmatprep.subr.mxu0 0.0
      %6402 = vmatpush1.msra.mxu0 %v6223
      %6403 = vmatprep.subr.mxu0 0.0
      %6404 = vmatpush1.msra.mxu0 %v6222
      %6405 = vmatprep.subr.mxu0 0.0
      %6406 = vmatpush1.msra.mxu0 %v6221
      %6407 = vmatprep.subr.mxu0 0.0
      %6408 = vmatpush1.msra.mxu0 %v6220
      %6409 = vmatprep.subr.mxu0 0.0
      %6410 = vmatpush1.msra.mxu0 %v6219
      %6411 = vmatprep.subr.mxu0 0.0
      %6412 = vmatpush1.msra.mxu0 %v6218
      %6413 = vmatprep.subr.mxu0 0.0
      %6414 = vmatpush2.msra.mxu0 0.0
      %6415 = vmatprep.subr.mxu0 0.0
      %6416 = vmatpush2.msra.mxu0 0.0
      %6417 = vmatprep.subr.mxu0 0.0
      %6418 = vmatpush2.msra.mxu0 0.0
      %6419 = vmatprep.subr.mxu0 0.0
      %6420 = vmatpush2.msra.mxu0 0.0
      %6421 = vmatprep.subr.mxu0 0.0
      %6422 = vmatpush2.msra.mxu0 0.0
      %6423 = vmatprep.subr.mxu0 0.0
      %6424 = vmatpush2.msra.mxu0 0.0
      %6425 = vmatprep.subr.mxu0 0.0
      %6426 = vmatpush2.msra.mxu0 0.0
      %6427 = vmatprep.subr.mxu0 0.0
      %6428 = vmatpush2.msra.mxu0 0.0
      %6429 = vmatprep.subr.mxu0 0.0
      %6430 = vmatpush2.msra.mxu0 0.0
      %6431 = vmatprep.subr.mxu0 0.0
      %6432 = vmatpush2.msra.mxu0 0.0
      %6433 = vmatprep.subr.mxu0 0.0
      %6434 = vmatpush2.msra.mxu0 0.0
      %6435 = vmatprep.subr.mxu0 0.0
      %6436 = vmatpush2.msra.mxu0 0.0
      %6437 = vmatprep.subr.mxu0 0.0
      %6438 = vmatpush2.msra.mxu0 0.0
      %6439 = vmatprep.subr.mxu0 0.0
      %6440 = vmatpush2.msra.mxu0 0.0
      %6441 = vmatprep.subr.mxu0 0.0
      %6442 = vmatpush2.msra.mxu0 %v6235
      %6443 = vmatprep.subr.mxu0 0.0
      %6444 = vmatpush2.msra.mxu0 %v6234
      %6445 = vmatprep.mubr.f32.mxu0 %v6377
      %6446 = vmatmul.mubr.f32.gmra.mxu0 %v6375
      %v6447 = vpop.f32.mrf.mxu0
      %v6448 = vadd.f32 0.0, %v6447
      %v6449 = vpop.f32.mrf.mxu0
      %6450 = vmatprep.mubr.f32.mxu0 %v6379
      %6451 = vmatmul.mubr.f32.gmra.mxu0 %v6376
      %v6452 = vpop.f32.mrf.mxu0
      %v6453 = vadd.f32 0.0, %v6452
      %v6454 = vpop.f32.mrf.mxu0
      %6455 = vdwg.mxu0
      %v6458 = vcombine.high %v6448, %v6448
      %v6459 = vcombine.high %v6453, %v6453
      %v6462 = vadd.f32 %v6448, %v5810
      %v6463 = vadd.f32 %v6458, %v5811
      %v6464 = vadd.f32 %v6453, %v5812
      %v6465 = vadd.f32 %v6459, %v5813
      %vm6466 = vcmp.gt.f32.partialorder %v6462, 0.0
      %vm6467 = vcmp.gt.f32.partialorder %v6463, 0.0
      %vm6468 = vcmp.gt.f32.partialorder %v6464, 0.0
      %vm6469 = vcmp.gt.f32.partialorder %v6465, 0.0
      %v6470 = vmul.f32 %v6462, 0.2
      %v6471 = vmul.f32 %v6463, 0.2
      %v6472 = vmul.f32 %v6464, 0.2
      %v6473 = vmul.f32 %v6465, 0.2
      %v6474 = vsel %vm6466, %v6462, %v6470
      %v6475 = vsel %vm6467, %v6463, %v6471
      %v6476 = vsel %vm6468, %v6464, %v6472
      %v6477 = vsel %vm6469, %v6465, %v6473
      %v6478 = vld [vmem:[%s8] sm:$0xff]
      %v6479 = vld [vmem:[%s8 + $0x8] sm:$0xff]
      %v6484 = vcombine.low %v6474, %v6475
      %v6485 = vcombine.low %v6476, %v6477
      %v6486 = vsel %vm825, %v6484, 0
      %v6488 = vsel %vm825, %v6485, 0
      %6490 = vmatprep.subr.mxu0 0.0
      %6491 = vmatpush1.msra.mxu0 0.0
      %6492 = vmatprep.subr.mxu0 0.0
      %6493 = vmatpush1.msra.mxu0 0.0
      %6494 = vmatprep.subr.mxu0 0.0
      %6495 = vmatpush1.msra.mxu0 0.0
      %6496 = vmatprep.subr.mxu0 0.0
      %6497 = vmatpush1.msra.mxu0 0.0
      %6498 = vmatprep.subr.mxu0 0.0
      %6499 = vmatpush1.msra.mxu0 0.0
      %6500 = vmatprep.subr.mxu0 0.0
      %6501 = vmatpush1.msra.mxu0 0.0
      %6502 = vmatprep.subr.mxu0 0.0
      %6503 = vmatpush1.msra.mxu0 0.0
      %6504 = vmatprep.subr.mxu0 0.0
      %6505 = vmatpush1.msra.mxu0 0.0
      %6506 = vmatprep.subr.mxu0 0.0
      %6507 = vmatpush1.msra.mxu0 0.0
      %6508 = vmatprep.subr.mxu0 0.0
      %6509 = vmatpush1.msra.mxu0 0.0
      %6510 = vmatprep.subr.mxu0 0.0
      %6511 = vmatpush1.msra.mxu0 0.0
      %6512 = vmatprep.subr.mxu0 0.0
      %6513 = vmatpush1.msra.mxu0 0.0
      %6514 = vmatprep.subr.mxu0 0.0
      %6515 = vmatpush1.msra.mxu0 0.0
      %6516 = vmatprep.subr.mxu0 0.0
      %6517 = vmatpush1.msra.mxu0 0.0
      %6518 = vmatprep.subr.mxu0 0.0
      %6519 = vmatpush1.msra.mxu0 %v6479
      %6520 = vmatprep.subr.mxu0 0.0
      %6521 = vmatpush1.msra.mxu0 %v6478
      %6522 = vmatprep.subr.mxu0 0.0
      %6523 = vmatpush2.msra.mxu0 0.0
      %6524 = vmatprep.subr.mxu0 0.0
      %6525 = vmatpush2.msra.mxu0 0.0
      %6526 = vmatprep.subr.mxu0 0.0
      %6527 = vmatpush2.msra.mxu0 0.0
      %6528 = vmatprep.subr.mxu0 0.0
      %6529 = vmatpush2.msra.mxu0 0.0
      %6530 = vmatprep.subr.mxu0 0.0
      %6531 = vmatpush2.msra.mxu0 0.0
      %6532 = vmatprep.subr.mxu0 0.0
      %6533 = vmatpush2.msra.mxu0 0.0
      %6534 = vmatprep.subr.mxu0 0.0
      %6535 = vmatpush2.msra.mxu0 0.0
      %6536 = vmatprep.subr.mxu0 0.0
      %6537 = vmatpush2.msra.mxu0 0.0
      %6538 = vmatprep.subr.mxu0 0.0
      %6539 = vmatpush2.msra.mxu0 0.0
      %6540 = vmatprep.subr.mxu0 0.0
      %6541 = vmatpush2.msra.mxu0 0.0
      %6542 = vmatprep.subr.mxu0 0.0
      %6543 = vmatpush2.msra.mxu0 0.0
      %6544 = vmatprep.subr.mxu0 0.0
      %6545 = vmatpush2.msra.mxu0 0.0
      %6546 = vmatprep.subr.mxu0 0.0
      %6547 = vmatpush2.msra.mxu0 0.0
      %6548 = vmatprep.subr.mxu0 0.0
      %6549 = vmatpush2.msra.mxu0 0.0
      %6550 = vmatprep.subr.mxu0 0.0
      %6551 = vmatpush2.msra.mxu0 0.0
      %6552 = vmatprep.subr.mxu0 0.0
      %6553 = vmatpush2.msra.mxu0 0.0
      %6554 = vmatprep.mubr.f32.mxu0 0.0
      %6555 = vmatmul.mubr.f32.gmra.mxu0 %v6486
      %v6556 = vpop.f32.mrf.mxu0
      %v6557 = vadd.f32 0.0, %v6556
      %v6558 = vpop.f32.mrf.mxu0
      %6559 = vmatprep.mubr.f32.mxu0 0.0
      %6560 = vmatmul.mubr.f32.gmra.mxu0 %v6488
      %v6561 = vpop.f32.mrf.mxu0
      %v6562 = vadd.f32 0.0, %v6561
      %v6563 = vpop.f32.mrf.mxu0
      %6564 = vdwg.mxu0
      %v6567 = vcombine.high %v6557, %v6557
      %v6569 = vunpack.c.l.s4 1966171168
      %v6570 = vunpack.c.0.s8 %v6569
      %v6571 = vlaneseq
      %v6572 = vshrl.u32 %v6571, 7
      %v6573 = vsub.s32 %v6570, %v6572
      %v6574 = vrot.slane %v6557, %v6573
      %v6576 = vunpack.c.l.s4 1966171168
      %v6577 = vunpack.c.0.s8 %v6576
      %v6578 = vlaneseq
      %v6579 = vshrl.u32 %v6578, 7
      %v6580 = vsub.s32 %v6577, %v6579
      %v6581 = vrot.slane %v6567, %v6580
      %v6582 = vcombine.high %v6574, %v6574
      %v6583 = vcombine.high %v6581, %v6581
      %v6585 = vunpack.c.l.s4 1966171168
      %v6586 = vunpack.c.0.s8 %v6585
      %v6587 = vlaneseq
      %v6588 = vshrl.u32 %v6587, 7
      %v6589 = vsub.s32 %v6586, %v6588
      %v6590 = vrot.slane %v6574, %v6589
      %v6592 = vunpack.c.l.s4 1966171168
      %v6593 = vunpack.c.0.s8 %v6592
      %v6594 = vlaneseq
      %v6595 = vshrl.u32 %v6594, 7
      %v6596 = vsub.s32 %v6593, %v6595
      %v6597 = vrot.slane %v6581, %v6596
      %v6599 = vunpack.c.l.s4 1966171168
      %v6600 = vunpack.c.0.s8 %v6599
      %v6601 = vlaneseq
      %v6602 = vshrl.u32 %v6601, 7
      %v6603 = vsub.s32 %v6600, %v6602
      %v6604 = vrot.slane %v6582, %v6603
      %v6606 = vunpack.c.l.s4 1966171168
      %v6607 = vunpack.c.0.s8 %v6606
      %v6608 = vlaneseq
      %v6609 = vshrl.u32 %v6608, 7
      %v6610 = vsub.s32 %v6607, %v6609
      %v6611 = vrot.slane %v6583, %v6610
      %v6612 = vcombine.high %v6590, %v6590
      %v6613 = vcombine.high %v6597, %v6597
      %v6614 = vcombine.high %v6604, %v6604
      %v6615 = vcombine.high %v6611, %v6611
      %v6616 = vcombine.high %v6562, %v6562
      %v6618 = vunpack.c.l.s4 1966171168
      %v6619 = vunpack.c.0.s8 %v6618
      %v6620 = vlaneseq
      %v6621 = vshrl.u32 %v6620, 7
      %v6622 = vsub.s32 %v6619, %v6621
      %v6623 = vrot.slane %v6562, %v6622
      %v6625 = vunpack.c.l.s4 1966171168
      %v6626 = vunpack.c.0.s8 %v6625
      %v6627 = vlaneseq
      %v6628 = vshrl.u32 %v6627, 7
      %v6629 = vsub.s32 %v6626, %v6628
      %v6630 = vrot.slane %v6616, %v6629
      %v6631 = vcombine.high %v6623, %v6623
      %v6632 = vcombine.high %v6630, %v6630
      %v6634 = vunpack.c.l.s4 1966171168
      %v6635 = vunpack.c.0.s8 %v6634
      %v6636 = vlaneseq
      %v6637 = vshrl.u32 %v6636, 7
      %v6638 = vsub.s32 %v6635, %v6637
      %v6639 = vrot.slane %v6623, %v6638
      %v6641 = vunpack.c.l.s4 1966171168
      %v6642 = vunpack.c.0.s8 %v6641
      %v6643 = vlaneseq
      %v6644 = vshrl.u32 %v6643, 7
      %v6645 = vsub.s32 %v6642, %v6644
      %v6646 = vrot.slane %v6630, %v6645
      %v6648 = vunpack.c.l.s4 1966171168
      %v6649 = vunpack.c.0.s8 %v6648
      %v6650 = vlaneseq
      %v6651 = vshrl.u32 %v6650, 7
      %v6652 = vsub.s32 %v6649, %v6651
      %v6653 = vrot.slane %v6631, %v6652
      %v6655 = vunpack.c.l.s4 1966171168
      %v6656 = vunpack.c.0.s8 %v6655
      %v6657 = vlaneseq
      %v6658 = vshrl.u32 %v6657, 7
      %v6659 = vsub.s32 %v6656, %v6658
      %v6660 = vrot.slane %v6632, %v6659
      %v6661 = vcombine.high %v6639, %v6639
      %v6662 = vcombine.high %v6646, %v6646
      %v6663 = vcombine.high %v6653, %v6653
      %v6664 = vcombine.high %v6660, %v6660
      %v6681 = vlaneseq
      %v6682 = vshrl.u32 %v6681, 7
      %v6683 = vsub.s32 0, %v6682
      %v6684 = vrot.slane %v6590, %v6683
      %v6685 = vlaneseq
      %v6686 = vshrl.u32 %v6685, 7
      %v6687 = vsub.s32 0, %v6686
      %v6688 = vrot.slane %v6604, %v6687
      %v6689 = vlaneseq
      %v6690 = vshrl.u32 %v6689, 7
      %v6691 = vsub.s32 0, %v6690
      %v6692 = vrot.slane %v6612, %v6691
      %v6693 = vlaneseq
      %v6694 = vshrl.u32 %v6693, 7
      %v6695 = vsub.s32 0, %v6694
      %v6696 = vrot.slane %v6614, %v6695
      %v6697 = vlaneseq
      %v6698 = vshrl.u32 %v6697, 7
      %v6699 = vsub.s32 0, %v6698
      %v6700 = vrot.slane %v6597, %v6699
      %v6701 = vlaneseq
      %v6702 = vshrl.u32 %v6701, 7
      %v6703 = vsub.s32 0, %v6702
      %v6704 = vrot.slane %v6611, %v6703
      %v6705 = vlaneseq
      %v6706 = vshrl.u32 %v6705, 7
      %v6707 = vsub.s32 0, %v6706
      %v6708 = vrot.slane %v6613, %v6707
      %v6709 = vlaneseq
      %v6710 = vshrl.u32 %v6709, 7
      %v6711 = vsub.s32 0, %v6710
      %v6712 = vrot.slane %v6615, %v6711
      %v6713 = vlaneseq
      %v6714 = vshrl.u32 %v6713, 7
      %v6715 = vsub.s32 0, %v6714
      %v6716 = vrot.slane %v6639, %v6715
      %v6717 = vlaneseq
      %v6718 = vshrl.u32 %v6717, 7
      %v6719 = vsub.s32 0, %v6718
      %v6720 = vrot.slane %v6653, %v6719
      %v6721 = vlaneseq
      %v6722 = vshrl.u32 %v6721, 7
      %v6723 = vsub.s32 0, %v6722
      %v6724 = vrot.slane %v6661, %v6723
      %v6725 = vlaneseq
      %v6726 = vshrl.u32 %v6725, 7
      %v6727 = vsub.s32 0, %v6726
      %v6728 = vrot.slane %v6663, %v6727
      %v6729 = vlaneseq
      %v6730 = vshrl.u32 %v6729, 7
      %v6731 = vsub.s32 0, %v6730
      %v6732 = vrot.slane %v6646, %v6731
      %v6733 = vlaneseq
      %v6734 = vshrl.u32 %v6733, 7
      %v6735 = vsub.s32 0, %v6734
      %v6736 = vrot.slane %v6660, %v6735
      %v6737 = vlaneseq
      %v6738 = vshrl.u32 %v6737, 7
      %v6739 = vsub.s32 0, %v6738
      %v6740 = vrot.slane %v6662, %v6739
      %v6741 = vlaneseq
      %v6742 = vshrl.u32 %v6741, 7
      %v6743 = vsub.s32 0, %v6742
      %v6744 = vrot.slane %v6664, %v6743
      %6745 = vrot.lane.b32.xlu0 %v6684, 112
      %v6746 = vpop.permute.xlu0 %6745
      %6747 = vrot.lane.b32.xlu0 %v6688, 112
      %v6748 = vpop.permute.xlu0 %6747
      %6749 = vrot.lane.b32.xlu0 %v6692, 112
      %v6750 = vpop.permute.xlu0 %6749
      %6751 = vrot.lane.b32.xlu0 %v6696, 112
      %v6752 = vpop.permute.xlu0 %6751
      %6753 = vrot.lane.b32.xlu0 %v6700, 112
      %v6754 = vpop.permute.xlu0 %6753
      %6755 = vrot.lane.b32.xlu0 %v6704, 112
      %v6756 = vpop.permute.xlu0 %6755
      %6757 = vrot.lane.b32.xlu0 %v6708, 112
      %v6758 = vpop.permute.xlu0 %6757
      %6759 = vrot.lane.b32.xlu0 %v6712, 112
      %v6760 = vpop.permute.xlu0 %6759
      %6761 = vrot.lane.b32.xlu0 %v6716, 112
      %v6762 = vpop.permute.xlu0 %6761
      %6763 = vrot.lane.b32.xlu0 %v6720, 112
      %v6764 = vpop.permute.xlu0 %6763
      %6765 = vrot.lane.b32.xlu0 %v6724, 112
      %v6766 = vpop.permute.xlu0 %6765
      %6767 = vrot.lane.b32.xlu0 %v6728, 112
      %v6768 = vpop.permute.xlu0 %6767
      %6769 = vrot.lane.b32.xlu0 %v6732, 112
      %v6770 = vpop.permute.xlu0 %6769
      %6771 = vrot.lane.b32.xlu0 %v6736, 112
      %v6772 = vpop.permute.xlu0 %6771
      %6773 = vrot.lane.b32.xlu0 %v6740, 112
      %v6774 = vpop.permute.xlu0 %6773
      %6775 = vrot.lane.b32.xlu0 %v6744, 112
      %v6776 = vpop.permute.xlu0 %6775
      %v6793 = vsel %vm482, %v6590, %v6746
      %v6794 = vsel %vm482, %v6604, %v6748
      %v6795 = vsel %vm482, %v6612, %v6750
      %v6796 = vsel %vm482, %v6614, %v6752
      %v6797 = vsel %vm482, %v6597, %v6754
      %v6798 = vsel %vm482, %v6611, %v6756
      %v6799 = vsel %vm482, %v6613, %v6758
      %v6800 = vsel %vm482, %v6615, %v6760
      %v6801 = vsel %vm482, %v6639, %v6762
      %v6802 = vsel %vm482, %v6653, %v6764
      %v6803 = vsel %vm482, %v6661, %v6766
      %v6804 = vsel %vm482, %v6663, %v6768
      %v6805 = vsel %vm482, %v6646, %v6770
      %v6806 = vsel %vm482, %v6660, %v6772
      %v6807 = vsel %vm482, %v6662, %v6774
      %v6808 = vsel %vm482, %v6664, %v6776
      %6825 = vrot.lane.b32.xlu0 %v6793, 96
      %v6826 = vpop.permute.xlu0 %6825
      %6827 = vrot.lane.b32.xlu0 %v6794, 96
      %v6828 = vpop.permute.xlu0 %6827
      %6829 = vrot.lane.b32.xlu0 %v6795, 96
      %v6830 = vpop.permute.xlu0 %6829
      %6831 = vrot.lane.b32.xlu0 %v6796, 96
      %v6832 = vpop.permute.xlu0 %6831
      %6833 = vrot.lane.b32.xlu0 %v6797, 96
      %v6834 = vpop.permute.xlu0 %6833
      %6835 = vrot.lane.b32.xlu0 %v6798, 96
      %v6836 = vpop.permute.xlu0 %6835
      %6837 = vrot.lane.b32.xlu0 %v6799, 96
      %v6838 = vpop.permute.xlu0 %6837
      %6839 = vrot.lane.b32.xlu0 %v6800, 96
      %v6840 = vpop.permute.xlu0 %6839
      %6841 = vrot.lane.b32.xlu0 %v6801, 96
      %v6842 = vpop.permute.xlu0 %6841
      %6843 = vrot.lane.b32.xlu0 %v6802, 96
      %v6844 = vpop.permute.xlu0 %6843
      %6845 = vrot.lane.b32.xlu0 %v6803, 96
      %v6846 = vpop.permute.xlu0 %6845
      %6847 = vrot.lane.b32.xlu0 %v6804, 96
      %v6848 = vpop.permute.xlu0 %6847
      %6849 = vrot.lane.b32.xlu0 %v6805, 96
      %v6850 = vpop.permute.xlu0 %6849
      %6851 = vrot.lane.b32.xlu0 %v6806, 96
      %v6852 = vpop.permute.xlu0 %6851
      %6853 = vrot.lane.b32.xlu0 %v6807, 96
      %v6854 = vpop.permute.xlu0 %6853
      %6855 = vrot.lane.b32.xlu0 %v6808, 96
      %v6856 = vpop.permute.xlu0 %6855
      %v6857 = vlaneseq
      %v6858 = vshrl.u32 %v6857, 7
      %v6859 = vsub.s32 0, %v6858
      %v6860 = vrot.slane %v6793, %v6859
      %v6861 = vlaneseq
      %v6862 = vshrl.u32 %v6861, 7
      %v6863 = vsub.s32 0, %v6862
      %v6864 = vrot.slane %v6826, %v6863
      %v6865 = vlaneseq
      %v6866 = vshrl.u32 %v6865, 7
      %v6867 = vsub.s32 0, %v6866
      %v6868 = vrot.slane %v6797, %v6867
      %v6869 = vlaneseq
      %v6870 = vshrl.u32 %v6869, 7
      %v6871 = vsub.s32 0, %v6870
      %v6872 = vrot.slane %v6834, %v6871
      %v6873 = vlaneseq
      %v6874 = vshrl.u32 %v6873, 7
      %v6875 = vsub.s32 0, %v6874
      %v6876 = vrot.slane %v6801, %v6875
      %v6877 = vlaneseq
      %v6878 = vshrl.u32 %v6877, 7
      %v6879 = vsub.s32 0, %v6878
      %v6880 = vrot.slane %v6842, %v6879
      %v6881 = vlaneseq
      %v6882 = vshrl.u32 %v6881, 7
      %v6883 = vsub.s32 0, %v6882
      %v6884 = vrot.slane %v6805, %v6883
      %v6885 = vlaneseq
      %v6886 = vshrl.u32 %v6885, 7
      %v6887 = vsub.s32 0, %v6886
      %v6888 = vrot.slane %v6850, %v6887
      %v6889 = vsel %vm2671, %v6864, %v6860
      %v6890 = vsel %vm2673, %v6868, %v6889
      %v6891 = vsel %vm2675, %v6872, %v6890
      %v6892 = vsel %vm3037, %v6876, %v6891
      %v6893 = vsel %vm3039, %v6880, %v6892
      %v6894 = vsel %vm3042, %v6884, %v6893
      %v6895 = vsel %vm3045, %v6888, %v6894
      %v6897 = vlaneseq
      %v6898 = vshrl.u32 %v6897, 7
      %v6899 = vsub.s32 1, %v6898
      %v6900 = vrot.slane %v6793, %v6899
      %v6901 = vlaneseq
      %v6902 = vshrl.u32 %v6901, 7
      %v6903 = vsub.s32 1, %v6902
      %v6904 = vrot.slane %v6826, %v6903
      %v6905 = vlaneseq
      %v6906 = vshrl.u32 %v6905, 7
      %v6907 = vsub.s32 1, %v6906
      %v6908 = vrot.slane %v6797, %v6907
      %v6909 = vlaneseq
      %v6910 = vshrl.u32 %v6909, 7
      %v6911 = vsub.s32 1, %v6910
      %v6912 = vrot.slane %v6834, %v6911
      %v6913 = vlaneseq
      %v6914 = vshrl.u32 %v6913, 7
      %v6915 = vsub.s32 1, %v6914
      %v6916 = vrot.slane %v6801, %v6915
      %v6917 = vlaneseq
      %v6918 = vshrl.u32 %v6917, 7
      %v6919 = vsub.s32 1, %v6918
      %v6920 = vrot.slane %v6842, %v6919
      %v6921 = vlaneseq
      %v6922 = vshrl.u32 %v6921, 7
      %v6923 = vsub.s32 1, %v6922
      %v6924 = vrot.slane %v6805, %v6923
      %v6925 = vlaneseq
      %v6926 = vshrl.u32 %v6925, 7
      %v6927 = vsub.s32 1, %v6926
      %v6928 = vrot.slane %v6850, %v6927
      %v6929 = vsel %vm2671, %v6904, %v6900
      %v6930 = vsel %vm2673, %v6908, %v6929
      %v6931 = vsel %vm2675, %v6912, %v6930
      %v6932 = vsel %vm3037, %v6916, %v6931
      %v6933 = vsel %vm3039, %v6920, %v6932
      %v6934 = vsel %vm3042, %v6924, %v6933
      %v6935 = vsel %vm3045, %v6928, %v6934
      %6936 = vrot.lane.b32.xlu0 %v6935, 16
      %v6937 = vpop.permute.xlu0 %6936
      %v6939 = vlaneseq
      %v6940 = vshrl.u32 %v6939, 7
      %v6941 = vsub.s32 0, %v6940
      %v6942 = vrot.slane %v6794, %v6941
      %v6943 = vlaneseq
      %v6944 = vshrl.u32 %v6943, 7
      %v6945 = vsub.s32 0, %v6944
      %v6946 = vrot.slane %v6828, %v6945
      %v6947 = vlaneseq
      %v6948 = vshrl.u32 %v6947, 7
      %v6949 = vsub.s32 0, %v6948
      %v6950 = vrot.slane %v6798, %v6949
      %v6951 = vlaneseq
      %v6952 = vshrl.u32 %v6951, 7
      %v6953 = vsub.s32 0, %v6952
      %v6954 = vrot.slane %v6836, %v6953
      %v6955 = vlaneseq
      %v6956 = vshrl.u32 %v6955, 7
      %v6957 = vsub.s32 0, %v6956
      %v6958 = vrot.slane %v6802, %v6957
      %v6959 = vlaneseq
      %v6960 = vshrl.u32 %v6959, 7
      %v6961 = vsub.s32 0, %v6960
      %v6962 = vrot.slane %v6844, %v6961
      %v6963 = vlaneseq
      %v6964 = vshrl.u32 %v6963, 7
      %v6965 = vsub.s32 0, %v6964
      %v6966 = vrot.slane %v6806, %v6965
      %v6967 = vlaneseq
      %v6968 = vshrl.u32 %v6967, 7
      %v6969 = vsub.s32 0, %v6968
      %v6970 = vrot.slane %v6852, %v6969
      %v6971 = vsel %vm2671, %v6946, %v6942
      %v6972 = vsel %vm2673, %v6950, %v6971
      %v6973 = vsel %vm2675, %v6954, %v6972
      %v6974 = vsel %vm3037, %v6958, %v6973
      %v6975 = vsel %vm3039, %v6962, %v6974
      %v6976 = vsel %vm3042, %v6966, %v6975
      %v6977 = vsel %vm3045, %v6970, %v6976
      %6978 = vrot.lane.b32.xlu0 %v6977, 32
      %v6979 = vpop.permute.xlu0 %6978
      %v6981 = vlaneseq
      %v6982 = vshrl.u32 %v6981, 7
      %v6983 = vsub.s32 1, %v6982
      %v6984 = vrot.slane %v6794, %v6983
      %v6985 = vlaneseq
      %v6986 = vshrl.u32 %v6985, 7
      %v6987 = vsub.s32 1, %v6986
      %v6988 = vrot.slane %v6828, %v6987
      %v6989 = vlaneseq
      %v6990 = vshrl.u32 %v6989, 7
      %v6991 = vsub.s32 1, %v6990
      %v6992 = vrot.slane %v6798, %v6991
      %v6993 = vlaneseq
      %v6994 = vshrl.u32 %v6993, 7
      %v6995 = vsub.s32 1, %v6994
      %v6996 = vrot.slane %v6836, %v6995
      %v6997 = vlaneseq
      %v6998 = vshrl.u32 %v6997, 7
      %v6999 = vsub.s32 1, %v6998
      %v7000 = vrot.slane %v6802, %v6999
      %v7001 = vlaneseq
      %v7002 = vshrl.u32 %v7001, 7
      %v7003 = vsub.s32 1, %v7002
      %v7004 = vrot.slane %v6844, %v7003
      %v7005 = vlaneseq
      %v7006 = vshrl.u32 %v7005, 7
      %v7007 = vsub.s32 1, %v7006
      %v7008 = vrot.slane %v6806, %v7007
      %v7009 = vlaneseq
      %v7010 = vshrl.u32 %v7009, 7
      %v7011 = vsub.s32 1, %v7010
      %v7012 = vrot.slane %v6852, %v7011
      %v7013 = vsel %vm2671, %v6988, %v6984
      %v7014 = vsel %vm2673, %v6992, %v7013
      %v7015 = vsel %vm2675, %v6996, %v7014
      %v7016 = vsel %vm3037, %v7000, %v7015
      %v7017 = vsel %vm3039, %v7004, %v7016
      %v7018 = vsel %vm3042, %v7008, %v7017
      %v7019 = vsel %vm3045, %v7012, %v7018
      %7020 = vrot.lane.b32.xlu0 %v7019, 48
      %v7021 = vpop.permute.xlu0 %7020
      %v7023 = vlaneseq
      %v7024 = vshrl.u32 %v7023, 7
      %v7025 = vsub.s32 0, %v7024
      %v7026 = vrot.slane %v6795, %v7025
      %v7027 = vlaneseq
      %v7028 = vshrl.u32 %v7027, 7
      %v7029 = vsub.s32 0, %v7028
      %v7030 = vrot.slane %v6830, %v7029
      %v7031 = vlaneseq
      %v7032 = vshrl.u32 %v7031, 7
      %v7033 = vsub.s32 0, %v7032
      %v7034 = vrot.slane %v6799, %v7033
      %v7035 = vlaneseq
      %v7036 = vshrl.u32 %v7035, 7
      %v7037 = vsub.s32 0, %v7036
      %v7038 = vrot.slane %v6838, %v7037
      %v7039 = vlaneseq
      %v7040 = vshrl.u32 %v7039, 7
      %v7041 = vsub.s32 0, %v7040
      %v7042 = vrot.slane %v6803, %v7041
      %v7043 = vlaneseq
      %v7044 = vshrl.u32 %v7043, 7
      %v7045 = vsub.s32 0, %v7044
      %v7046 = vrot.slane %v6846, %v7045
      %v7047 = vlaneseq
      %v7048 = vshrl.u32 %v7047, 7
      %v7049 = vsub.s32 0, %v7048
      %v7050 = vrot.slane %v6807, %v7049
      %v7051 = vlaneseq
      %v7052 = vshrl.u32 %v7051, 7
      %v7053 = vsub.s32 0, %v7052
      %v7054 = vrot.slane %v6854, %v7053
      %v7055 = vsel %vm2671, %v7030, %v7026
      %v7056 = vsel %vm2673, %v7034, %v7055
      %v7057 = vsel %vm2675, %v7038, %v7056
      %v7058 = vsel %vm3037, %v7042, %v7057
      %v7059 = vsel %vm3039, %v7046, %v7058
      %v7060 = vsel %vm3042, %v7050, %v7059
      %v7061 = vsel %vm3045, %v7054, %v7060
      %7062 = vrot.lane.b32.xlu0 %v7061, 64
      %v7063 = vpop.permute.xlu0 %7062
      %v7065 = vlaneseq
      %v7066 = vshrl.u32 %v7065, 7
      %v7067 = vsub.s32 1, %v7066
      %v7068 = vrot.slane %v6795, %v7067
      %v7069 = vlaneseq
      %v7070 = vshrl.u32 %v7069, 7
      %v7071 = vsub.s32 1, %v7070
      %v7072 = vrot.slane %v6830, %v7071
      %v7073 = vlaneseq
      %v7074 = vshrl.u32 %v7073, 7
      %v7075 = vsub.s32 1, %v7074
      %v7076 = vrot.slane %v6799, %v7075
      %v7077 = vlaneseq
      %v7078 = vshrl.u32 %v7077, 7
      %v7079 = vsub.s32 1, %v7078
      %v7080 = vrot.slane %v6838, %v7079
      %v7081 = vlaneseq
      %v7082 = vshrl.u32 %v7081, 7
      %v7083 = vsub.s32 1, %v7082
      %v7084 = vrot.slane %v6803, %v7083
      %v7085 = vlaneseq
      %v7086 = vshrl.u32 %v7085, 7
      %v7087 = vsub.s32 1, %v7086
      %v7088 = vrot.slane %v6846, %v7087
      %v7089 = vlaneseq
      %v7090 = vshrl.u32 %v7089, 7
      %v7091 = vsub.s32 1, %v7090
      %v7092 = vrot.slane %v6807, %v7091
      %v7093 = vlaneseq
      %v7094 = vshrl.u32 %v7093, 7
      %v7095 = vsub.s32 1, %v7094
      %v7096 = vrot.slane %v6854, %v7095
      %v7097 = vsel %vm2671, %v7072, %v7068
      %v7098 = vsel %vm2673, %v7076, %v7097
      %v7099 = vsel %vm2675, %v7080, %v7098
      %v7100 = vsel %vm3037, %v7084, %v7099
      %v7101 = vsel %vm3039, %v7088, %v7100
      %v7102 = vsel %vm3042, %v7092, %v7101
      %v7103 = vsel %vm3045, %v7096, %v7102
      %7104 = vrot.lane.b32.xlu0 %v7103, 80
      %v7105 = vpop.permute.xlu0 %7104
      %v7107 = vlaneseq
      %v7108 = vshrl.u32 %v7107, 7
      %v7109 = vsub.s32 0, %v7108
      %v7110 = vrot.slane %v6796, %v7109
      %v7111 = vlaneseq
      %v7112 = vshrl.u32 %v7111, 7
      %v7113 = vsub.s32 0, %v7112
      %v7114 = vrot.slane %v6832, %v7113
      %v7115 = vlaneseq
      %v7116 = vshrl.u32 %v7115, 7
      %v7117 = vsub.s32 0, %v7116
      %v7118 = vrot.slane %v6800, %v7117
      %v7119 = vlaneseq
      %v7120 = vshrl.u32 %v7119, 7
      %v7121 = vsub.s32 0, %v7120
      %v7122 = vrot.slane %v6840, %v7121
      %v7123 = vlaneseq
      %v7124 = vshrl.u32 %v7123, 7
      %v7125 = vsub.s32 0, %v7124
      %v7126 = vrot.slane %v6804, %v7125
      %v7127 = vlaneseq
      %v7128 = vshrl.u32 %v7127, 7
      %v7129 = vsub.s32 0, %v7128
      %v7130 = vrot.slane %v6848, %v7129
      %v7131 = vlaneseq
      %v7132 = vshrl.u32 %v7131, 7
      %v7133 = vsub.s32 0, %v7132
      %v7134 = vrot.slane %v6808, %v7133
      %v7135 = vlaneseq
      %v7136 = vshrl.u32 %v7135, 7
      %v7137 = vsub.s32 0, %v7136
      %v7138 = vrot.slane %v6856, %v7137
      %v7139 = vsel %vm2671, %v7114, %v7110
      %v7140 = vsel %vm2673, %v7118, %v7139
      %v7141 = vsel %vm2675, %v7122, %v7140
      %v7142 = vsel %vm3037, %v7126, %v7141
      %v7143 = vsel %vm3039, %v7130, %v7142
      %v7144 = vsel %vm3042, %v7134, %v7143
      %v7145 = vsel %vm3045, %v7138, %v7144
      %7146 = vrot.lane.b32.xlu0 %v7145, 96
      %v7147 = vpop.permute.xlu0 %7146
      %v7149 = vlaneseq
      %v7150 = vshrl.u32 %v7149, 7
      %v7151 = vsub.s32 1, %v7150
      %v7152 = vrot.slane %v6796, %v7151
      %v7153 = vlaneseq
      %v7154 = vshrl.u32 %v7153, 7
      %v7155 = vsub.s32 1, %v7154
      %v7156 = vrot.slane %v6832, %v7155
      %v7157 = vlaneseq
      %v7158 = vshrl.u32 %v7157, 7
      %v7159 = vsub.s32 1, %v7158
      %v7160 = vrot.slane %v6800, %v7159
      %v7161 = vlaneseq
      %v7162 = vshrl.u32 %v7161, 7
      %v7163 = vsub.s32 1, %v7162
      %v7164 = vrot.slane %v6840, %v7163
      %v7165 = vlaneseq
      %v7166 = vshrl.u32 %v7165, 7
      %v7167 = vsub.s32 1, %v7166
      %v7168 = vrot.slane %v6804, %v7167
      %v7169 = vlaneseq
      %v7170 = vshrl.u32 %v7169, 7
      %v7171 = vsub.s32 1, %v7170
      %v7172 = vrot.slane %v6848, %v7171
      %v7173 = vlaneseq
      %v7174 = vshrl.u32 %v7173, 7
      %v7175 = vsub.s32 1, %v7174
      %v7176 = vrot.slane %v6808, %v7175
      %v7177 = vlaneseq
      %v7178 = vshrl.u32 %v7177, 7
      %v7179 = vsub.s32 1, %v7178
      %v7180 = vrot.slane %v6856, %v7179
      %v7181 = vsel %vm2671, %v7156, %v7152
      %v7182 = vsel %vm2673, %v7160, %v7181
      %v7183 = vsel %vm2675, %v7164, %v7182
      %v7184 = vsel %vm3037, %v7168, %v7183
      %v7185 = vsel %vm3039, %v7172, %v7184
      %v7186 = vsel %vm3042, %v7176, %v7185
      %v7187 = vsel %vm3045, %v7180, %v7186
      %7188 = vrot.lane.b32.xlu0 %v7187, 112
      %v7189 = vpop.permute.xlu0 %7188
      %v7191 = vsel %vm825, %v6895, %v6937
      %v7192 = vsel %vm1290, %v7191, %v6979
      %v7193 = vsel %vm1299, %v7192, %v7021
      %v7194 = vsel %vm1308, %v7193, %v7063
      %v7195 = vsel %vm1317, %v7194, %v7105
      %v7196 = vsel %vm1326, %v7195, %v7147
      %v7197 = vsel %vm1335, %v7196, %v7189
      %7198 = vst [vmem:[%s442] sm:$0xff] %v7197
      %v7199 = vcombine.low %v6793, %v6794
      %v7200 = vcombine.low %v6795, %v6796
      %v7202 = vunpack.c.l.s4 1983009808
      %v7203 = vunpack.c.0.s8 %v7202
      %v7204 = vlaneseq
      %v7205 = vshrl.u32 %v7204, 7
      %v7206 = vsub.s32 %v7203, %v7205
      %v7207 = vrot.slane %v7199, %v7206
      %v7209 = vunpack.c.l.s4 1983009808
      %v7210 = vunpack.c.0.s8 %v7209
      %v7211 = vlaneseq
      %v7212 = vshrl.u32 %v7211, 7
      %v7213 = vsub.s32 %v7210, %v7212
      %v7214 = vrot.slane %v7200, %v7213
      %v7215 = vcombine.low %v7207, %v7214
      %v7216 = vcombine.low %v6826, %v6828
      %v7217 = vcombine.low %v6830, %v6832
      %v7219 = vunpack.c.l.s4 1983009808
      %v7220 = vunpack.c.0.s8 %v7219
      %v7221 = vlaneseq
      %v7222 = vshrl.u32 %v7221, 7
      %v7223 = vsub.s32 %v7220, %v7222
      %v7224 = vrot.slane %v7216, %v7223
      %v7226 = vunpack.c.l.s4 1983009808
      %v7227 = vunpack.c.0.s8 %v7226
      %v7228 = vlaneseq
      %v7229 = vshrl.u32 %v7228, 7
      %v7230 = vsub.s32 %v7227, %v7229
      %v7231 = vrot.slane %v7217, %v7230
      %v7232 = vcombine.low %v7224, %v7231
      %v7233 = vcombine.low %v6797, %v6798
      %v7234 = vcombine.low %v6799, %v6800
      %v7236 = vunpack.c.l.s4 1983009808
      %v7237 = vunpack.c.0.s8 %v7236
      %v7238 = vlaneseq
      %v7239 = vshrl.u32 %v7238, 7
      %v7240 = vsub.s32 %v7237, %v7239
      %v7241 = vrot.slane %v7233, %v7240
      %v7243 = vunpack.c.l.s4 1983009808
      %v7244 = vunpack.c.0.s8 %v7243
      %v7245 = vlaneseq
      %v7246 = vshrl.u32 %v7245, 7
      %v7247 = vsub.s32 %v7244, %v7246
      %v7248 = vrot.slane %v7234, %v7247
      %v7249 = vcombine.low %v7241, %v7248
      %v7250 = vcombine.low %v6834, %v6836
      %v7251 = vcombine.low %v6838, %v6840
      %v7253 = vunpack.c.l.s4 1983009808
      %v7254 = vunpack.c.0.s8 %v7253
      %v7255 = vlaneseq
      %v7256 = vshrl.u32 %v7255, 7
      %v7257 = vsub.s32 %v7254, %v7256
      %v7258 = vrot.slane %v7250, %v7257
      %v7260 = vunpack.c.l.s4 1983009808
      %v7261 = vunpack.c.0.s8 %v7260
      %v7262 = vlaneseq
      %v7263 = vshrl.u32 %v7262, 7
      %v7264 = vsub.s32 %v7261, %v7263
      %v7265 = vrot.slane %v7251, %v7264
      %v7266 = vcombine.low %v7258, %v7265
      %v7267 = vcombine.low %v6801, %v6802
      %v7268 = vcombine.low %v6803, %v6804
      %v7270 = vunpack.c.l.s4 1983009808
      %v7271 = vunpack.c.0.s8 %v7270
      %v7272 = vlaneseq
      %v7273 = vshrl.u32 %v7272, 7
      %v7274 = vsub.s32 %v7271, %v7273
      %v7275 = vrot.slane %v7267, %v7274
      %v7277 = vunpack.c.l.s4 1983009808
      %v7278 = vunpack.c.0.s8 %v7277
      %v7279 = vlaneseq
      %v7280 = vshrl.u32 %v7279, 7
      %v7281 = vsub.s32 %v7278, %v7280
      %v7282 = vrot.slane %v7268, %v7281
      %v7283 = vcombine.low %v7275, %v7282
      %v7284 = vcombine.low %v6842, %v6844
      %v7285 = vcombine.low %v6846, %v6848
      %v7287 = vunpack.c.l.s4 1983009808
      %v7288 = vunpack.c.0.s8 %v7287
      %v7289 = vlaneseq
      %v7290 = vshrl.u32 %v7289, 7
      %v7291 = vsub.s32 %v7288, %v7290
      %v7292 = vrot.slane %v7284, %v7291
      %v7294 = vunpack.c.l.s4 1983009808
      %v7295 = vunpack.c.0.s8 %v7294
      %v7296 = vlaneseq
      %v7297 = vshrl.u32 %v7296, 7
      %v7298 = vsub.s32 %v7295, %v7297
      %v7299 = vrot.slane %v7285, %v7298
      %v7300 = vcombine.low %v7292, %v7299
      %v7301 = vcombine.low %v6805, %v6806
      %v7302 = vcombine.low %v6807, %v6808
      %v7304 = vunpack.c.l.s4 1983009808
      %v7305 = vunpack.c.0.s8 %v7304
      %v7306 = vlaneseq
      %v7307 = vshrl.u32 %v7306, 7
      %v7308 = vsub.s32 %v7305, %v7307
      %v7309 = vrot.slane %v7301, %v7308
      %v7311 = vunpack.c.l.s4 1983009808
      %v7312 = vunpack.c.0.s8 %v7311
      %v7313 = vlaneseq
      %v7314 = vshrl.u32 %v7313, 7
      %v7315 = vsub.s32 %v7312, %v7314
      %v7316 = vrot.slane %v7302, %v7315
      %v7317 = vcombine.low %v7309, %v7316
      %v7318 = vcombine.low %v6850, %v6852
      %v7319 = vcombine.low %v6854, %v6856
      %v7321 = vunpack.c.l.s4 1983009808
      %v7322 = vunpack.c.0.s8 %v7321
      %v7323 = vlaneseq
      %v7324 = vshrl.u32 %v7323, 7
      %v7325 = vsub.s32 %v7322, %v7324
      %v7326 = vrot.slane %v7318, %v7325
      %v7328 = vunpack.c.l.s4 1983009808
      %v7329 = vunpack.c.0.s8 %v7328
      %v7330 = vlaneseq
      %v7331 = vshrl.u32 %v7330, 7
      %v7332 = vsub.s32 %v7329, %v7331
      %v7333 = vrot.slane %v7319, %v7332
      %v7334 = vcombine.low %v7326, %v7333
      %7343 = vrot.lane.b32.xlu0 %v1427, 16
      %v7344 = vpop.permute.xlu0 %7343
      %7345 = vrot.lane.b32.xlu0 %v1432, 16
      %v7346 = vpop.permute.xlu0 %7345
      %7347 = vrot.lane.b32.xlu0 %v1437, 16
      %v7348 = vpop.permute.xlu0 %7347
      %7349 = vrot.lane.b32.xlu0 %v1442, 16
      %v7350 = vpop.permute.xlu0 %7349
      %7351 = vrot.lane.b32.xlu0 %v1447, 16
      %v7352 = vpop.permute.xlu0 %7351
      %7353 = vrot.lane.b32.xlu0 %v1452, 16
      %v7354 = vpop.permute.xlu0 %7353
      %7355 = vrot.lane.b32.xlu0 %v1457, 16
      %v7356 = vpop.permute.xlu0 %7355
      %7357 = vrot.lane.b32.xlu0 %v1462, 16
      %v7358 = vpop.permute.xlu0 %7357
      %v7367 = vsel %vm825, %v7215, %v7344
      %v7368 = vsel %vm825, %v7232, %v7346
      %v7369 = vsel %vm825, %v7249, %v7348
      %v7370 = vsel %vm825, %v7266, %v7350
      %v7371 = vsel %vm825, %v7283, %v7352
      %v7372 = vsel %vm825, %v7300, %v7354
      %v7373 = vsel %vm825, %v7317, %v7356
      %v7374 = vsel %vm825, %v7334, %v7358
      %v7375 = vld [vmem:[%s9] sm:$0xff]
      %v7376 = vld [vmem:[%s9 + $0x8] sm:$0xff]
      %v7377 = vld [vmem:[%s9 + $0x10] sm:$0xff]
      %v7378 = vld [vmem:[%s9 + $0x18] sm:$0xff]
      %v7379 = vld [vmem:[%s9 + $0x20] sm:$0xff]
      %v7380 = vld [vmem:[%s9 + $0x28] sm:$0xff]
      %v7381 = vld [vmem:[%s9 + $0x30] sm:$0xff]
      %v7382 = vld [vmem:[%s9 + $0x38] sm:$0xff]
      %v7383 = vld [vmem:[%s9 + $0x40] sm:$0xff]
      %v7384 = vld [vmem:[%s9 + $0x48] sm:$0xff]
      %v7385 = vld [vmem:[%s9 + $0x50] sm:$0xff]
      %v7386 = vld [vmem:[%s9 + $0x58] sm:$0xff]
      %v7387 = vld [vmem:[%s9 + $0x60] sm:$0xff]
      %v7388 = vld [vmem:[%s9 + $0x68] sm:$0xff]
      %v7389 = vld [vmem:[%s9 + $0x70] sm:$0xff]
      %v7390 = vld [vmem:[%s9 + $0x78] sm:$0xff]
      %v7391 = vld [vmem:[%s9 + $0x80] sm:$0xff]
      %v7392 = vld [vmem:[%s9 + $0x88] sm:$0xff]
      %v7393 = vld [vmem:[%s9 + $0x90] sm:$0xff]
      %v7394 = vld [vmem:[%s9 + $0x98] sm:$0xff]
      %v7395 = vld [vmem:[%s9 + $0xa0] sm:$0xff]
      %v7396 = vld [vmem:[%s9 + $0xa8] sm:$0xff]
      %v7397 = vld [vmem:[%s9 + $0xb0] sm:$0xff]
      %v7398 = vld [vmem:[%s9 + $0xb8] sm:$0xff]
      %v7399 = vld [vmem:[%s9 + $0xc0] sm:$0xff]
      %v7400 = vld [vmem:[%s9 + $0xc8] sm:$0xff]
      %v7401 = vld [vmem:[%s9 + $0xd0] sm:$0xff]
      %v7402 = vld [vmem:[%s9 + $0xd8] sm:$0xff]
      %v7403 = vld [vmem:[%s9 + $0xe0] sm:$0xff]
      %v7404 = vld [vmem:[%s9 + $0xe8] sm:$0xff]
      %v7405 = vld [vmem:[%s9 + $0xf0] sm:$0xff]
      %v7406 = vld [vmem:[%s9 + $0xf8] sm:$0xff]
      %v7407 = vld [vmem:[%s9 + $0x100] sm:$0xff]
      %v7408 = vld [vmem:[%s9 + $0x108] sm:$0xff]
      %v7409 = vld [vmem:[%s9 + $0x110] sm:$0xff]
      %v7410 = vld [vmem:[%s9 + $0x118] sm:$0xff]
      %v7419 = vrot.slane %v7367, 7
      %v7420 = vrot.slane %v7368, 7
      %v7421 = vrot.slane %v7369, 7
      %v7422 = vrot.slane %v7370, 7
      %v7423 = vrot.slane %v7371, 7
      %v7424 = vrot.slane %v7372, 7
      %v7425 = vrot.slane %v7373, 7
      %v7426 = vrot.slane %v7374, 7
      %v7435 = vsel %vm482, 0.0, %v7419
      %v7436 = vsel %vm482, 0.0, %v7420
      %v7437 = vsel %vm482, 0.0, %v7421
      %v7438 = vsel %vm482, 0.0, %v7422
      %v7439 = vsel %vm482, 0.0, %v7423
      %v7440 = vsel %vm482, 0.0, %v7424
      %v7441 = vsel %vm482, 0.0, %v7425
      %v7442 = vsel %vm482, 0.0, %v7426
      %v7443 = vsel %vm482, %v7419, 0.0
      %v7444 = vsel %vm482, %v7420, 0.0
      %v7445 = vsel %vm482, %v7421, 0.0
      %v7446 = vsel %vm482, %v7422, 0.0
      %v7447 = vsel %vm482, %v7423, 0.0
      %v7448 = vsel %vm482, %v7424, 0.0
      %v7449 = vsel %vm482, %v7425, 0.0
      %v7450 = vsel %vm482, %v7426, 0.0
      %v7465 = vrot.slane %v7435, 1
      %v7466 = vrot.slane %v7443, 1
      %v7467 = vsel %vm514, %v7465, %v7466
      %v7468 = vrot.slane %v7436, 1
      %v7469 = vrot.slane %v7444, 1
      %v7470 = vsel %vm514, %v7468, %v7469
      %v7471 = vrot.slane %v7437, 1
      %v7472 = vrot.slane %v7445, 1
      %v7473 = vsel %vm514, %v7471, %v7472
      %v7474 = vrot.slane %v7438, 1
      %v7475 = vrot.slane %v7446, 1
      %v7476 = vsel %vm514, %v7474, %v7475
      %v7477 = vrot.slane %v7439, 1
      %v7478 = vrot.slane %v7447, 1
      %v7479 = vsel %vm514, %v7477, %v7478
      %v7480 = vrot.slane %v7440, 1
      %v7481 = vrot.slane %v7448, 1
      %v7482 = vsel %vm514, %v7480, %v7481
      %v7483 = vrot.slane %v7441, 1
      %v7484 = vrot.slane %v7449, 1
      %v7485 = vsel %vm514, %v7483, %v7484
      %v7486 = vrot.slane %v7435, 2
      %v7487 = vrot.slane %v7443, 2
      %v7488 = vsel %vm538, %v7486, %v7487
      %v7489 = vrot.slane %v7436, 2
      %v7490 = vrot.slane %v7444, 2
      %v7491 = vsel %vm538, %v7489, %v7490
      %v7492 = vrot.slane %v7437, 2
      %v7493 = vrot.slane %v7445, 2
      %v7494 = vsel %vm538, %v7492, %v7493
      %v7495 = vrot.slane %v7438, 2
      %v7496 = vrot.slane %v7446, 2
      %v7497 = vsel %vm538, %v7495, %v7496
      %v7498 = vrot.slane %v7439, 2
      %v7499 = vrot.slane %v7447, 2
      %v7500 = vsel %vm538, %v7498, %v7499
      %v7501 = vrot.slane %v7440, 2
      %v7502 = vrot.slane %v7448, 2
      %v7503 = vsel %vm538, %v7501, %v7502
      %v7504 = vrot.slane %v7441, 2
      %v7505 = vrot.slane %v7449, 2
      %v7506 = vsel %vm538, %v7504, %v7505
      %v7509 = vrot.slane %v7442, 1
      %v7510 = vrot.slane %v7450, 1
      %v7511 = vsel %vm514, %v7509, %v7510
      %v7520 = vrot.slane %v7442, 2
      %v7521 = vrot.slane %v7450, 2
      %v7522 = vsel %vm538, %v7520, %v7521
      %7523 = vrot.lane.b32.xlu0 %v516, 32
      %v7524 = vpop.permute.xlu0 %7523
      %7525 = vrot.lane.b32.xlu0 %v7467, 32
      %v7526 = vpop.permute.xlu0 %7525
      %7527 = vrot.lane.b32.xlu0 %v7470, 32
      %v7528 = vpop.permute.xlu0 %7527
      %7529 = vrot.lane.b32.xlu0 %v7473, 32
      %v7530 = vpop.permute.xlu0 %7529
      %7531 = vrot.lane.b32.xlu0 %v7476, 32
      %v7532 = vpop.permute.xlu0 %7531
      %7533 = vrot.lane.b32.xlu0 %v7479, 32
      %v7534 = vpop.permute.xlu0 %7533
      %7535 = vrot.lane.b32.xlu0 %v7482, 32
      %v7536 = vpop.permute.xlu0 %7535
      %7537 = vrot.lane.b32.xlu0 %v7485, 32
      %v7538 = vpop.permute.xlu0 %7537
      %7547 = vrot.lane.b32.xlu0 %v540, 64
      %v7548 = vpop.permute.xlu0 %7547
      %7549 = vrot.lane.b32.xlu0 %v7488, 64
      %v7550 = vpop.permute.xlu0 %7549
      %7551 = vrot.lane.b32.xlu0 %v7491, 64
      %v7552 = vpop.permute.xlu0 %7551
      %7553 = vrot.lane.b32.xlu0 %v7494, 64
      %v7554 = vpop.permute.xlu0 %7553
      %7555 = vrot.lane.b32.xlu0 %v7497, 64
      %v7556 = vpop.permute.xlu0 %7555
      %7557 = vrot.lane.b32.xlu0 %v7500, 64
      %v7558 = vpop.permute.xlu0 %7557
      %7559 = vrot.lane.b32.xlu0 %v7503, 64
      %v7560 = vpop.permute.xlu0 %7559
      %7561 = vrot.lane.b32.xlu0 %v7506, 64
      %v7562 = vpop.permute.xlu0 %7561
      %7571 = vrot.lane.b32.xlu0 %v7435, 96
      %v7572 = vpop.permute.xlu0 %7571
      %7573 = vrot.lane.b32.xlu0 %v7436, 96
      %v7574 = vpop.permute.xlu0 %7573
      %7575 = vrot.lane.b32.xlu0 %v7437, 96
      %v7576 = vpop.permute.xlu0 %7575
      %7577 = vrot.lane.b32.xlu0 %v7438, 96
      %v7578 = vpop.permute.xlu0 %7577
      %7579 = vrot.lane.b32.xlu0 %v7439, 96
      %v7580 = vpop.permute.xlu0 %7579
      %7581 = vrot.lane.b32.xlu0 %v7440, 96
      %v7582 = vpop.permute.xlu0 %7581
      %7583 = vrot.lane.b32.xlu0 %v7441, 96
      %v7584 = vpop.permute.xlu0 %7583
      %7585 = vrot.lane.b32.xlu0 %v7442, 96
      %v7586 = vpop.permute.xlu0 %7585
      %7595 = vrot.lane.b32.xlu0 %v7488, 32
      %v7596 = vpop.permute.xlu0 %7595
      %7597 = vrot.lane.b32.xlu0 %v7491, 32
      %v7598 = vpop.permute.xlu0 %7597
      %7599 = vrot.lane.b32.xlu0 %v7494, 32
      %v7600 = vpop.permute.xlu0 %7599
      %7601 = vrot.lane.b32.xlu0 %v7497, 32
      %v7602 = vpop.permute.xlu0 %7601
      %7603 = vrot.lane.b32.xlu0 %v7500, 32
      %v7604 = vpop.permute.xlu0 %7603
      %7605 = vrot.lane.b32.xlu0 %v7503, 32
      %v7606 = vpop.permute.xlu0 %7605
      %7607 = vrot.lane.b32.xlu0 %v7506, 32
      %v7608 = vpop.permute.xlu0 %7607
      %7609 = vrot.lane.b32.xlu0 %v7522, 32
      %v7610 = vpop.permute.xlu0 %7609
      %7619 = vrot.lane.b32.xlu0 %v7436, 64
      %v7620 = vpop.permute.xlu0 %7619
      %7621 = vrot.lane.b32.xlu0 %v7437, 64
      %v7622 = vpop.permute.xlu0 %7621
      %7623 = vrot.lane.b32.xlu0 %v7438, 64
      %v7624 = vpop.permute.xlu0 %7623
      %7625 = vrot.lane.b32.xlu0 %v7439, 64
      %v7626 = vpop.permute.xlu0 %7625
      %7627 = vrot.lane.b32.xlu0 %v7440, 64
      %v7628 = vpop.permute.xlu0 %7627
      %7629 = vrot.lane.b32.xlu0 %v7441, 64
      %v7630 = vpop.permute.xlu0 %7629
      %7631 = vrot.lane.b32.xlu0 %v7442, 64
      %v7632 = vpop.permute.xlu0 %7631
      %7633 = vrot.lane.b32.xlu0 0.0, 64
      %v7634 = vpop.permute.xlu0 %7633
      %7643 = vrot.lane.b32.xlu0 %v7470, 96
      %v7644 = vpop.permute.xlu0 %7643
      %7645 = vrot.lane.b32.xlu0 %v7473, 96
      %v7646 = vpop.permute.xlu0 %7645
      %7647 = vrot.lane.b32.xlu0 %v7476, 96
      %v7648 = vpop.permute.xlu0 %7647
      %7649 = vrot.lane.b32.xlu0 %v7479, 96
      %v7650 = vpop.permute.xlu0 %7649
      %7651 = vrot.lane.b32.xlu0 %v7482, 96
      %v7652 = vpop.permute.xlu0 %7651
      %7653 = vrot.lane.b32.xlu0 %v7485, 96
      %v7654 = vpop.permute.xlu0 %7653
      %7655 = vrot.lane.b32.xlu0 %v7511, 96
      %v7656 = vpop.permute.xlu0 %7655
      %7657 = vrot.lane.b32.xlu0 %v516, 96
      %v7658 = vpop.permute.xlu0 %7657
      %v7667 = vsel %vm1290, 0.0, %v7524
      %v7668 = vsel %vm1290, %v7435, %v7526
      %v7669 = vsel %vm1290, %v7436, %v7528
      %v7670 = vsel %vm1290, %v7437, %v7530
      %v7671 = vsel %vm1290, %v7438, %v7532
      %v7672 = vsel %vm1290, %v7439, %v7534
      %v7673 = vsel %vm1290, %v7440, %v7536
      %v7674 = vsel %vm1290, %v7441, %v7538
      %v7675 = vsel %vm1308, %v7667, %v7548
      %v7676 = vsel %vm1308, %v7668, %v7550
      %v7677 = vsel %vm1308, %v7669, %v7552
      %v7678 = vsel %vm1308, %v7670, %v7554
      %v7679 = vsel %vm1308, %v7671, %v7556
      %v7680 = vsel %vm1308, %v7672, %v7558
      %v7681 = vsel %vm1308, %v7673, %v7560
      %v7682 = vsel %vm1308, %v7674, %v7562
      %v7683 = vsel %vm1326, %v7675, %v7572
      %v7684 = vsel %vm1326, %v7676, %v7574
      %v7685 = vsel %vm1326, %v7677, %v7576
      %v7686 = vsel %vm1326, %v7678, %v7578
      %v7687 = vsel %vm1326, %v7679, %v7580
      %v7688 = vsel %vm1326, %v7680, %v7582
      %v7689 = vsel %vm1326, %v7681, %v7584
      %v7690 = vsel %vm1326, %v7682, %v7586
      %v7691 = vsel %vm1290, %v7467, %v7596
      %v7692 = vsel %vm1290, %v7470, %v7598
      %v7693 = vsel %vm1290, %v7473, %v7600
      %v7694 = vsel %vm1290, %v7476, %v7602
      %v7695 = vsel %vm1290, %v7479, %v7604
      %v7696 = vsel %vm1290, %v7482, %v7606
      %v7697 = vsel %vm1290, %v7485, %v7608
      %v7698 = vsel %vm1290, %v7511, %v7610
      %v7699 = vsel %vm1308, %v7691, %v7620
      %v7700 = vsel %vm1308, %v7692, %v7622
      %v7701 = vsel %vm1308, %v7693, %v7624
      %v7702 = vsel %vm1308, %v7694, %v7626
      %v7703 = vsel %vm1308, %v7695, %v7628
      %v7704 = vsel %vm1308, %v7696, %v7630
      %v7705 = vsel %vm1308, %v7697, %v7632
      %v7706 = vsel %vm1308, %v7698, %v7634
      %v7707 = vsel %vm1326, %v7699, %v7644
      %v7708 = vsel %vm1326, %v7700, %v7646
      %v7709 = vsel %vm1326, %v7701, %v7648
      %v7710 = vsel %vm1326, %v7702, %v7650
      %v7711 = vsel %vm1326, %v7703, %v7652
      %v7712 = vsel %vm1326, %v7704, %v7654
      %v7713 = vsel %vm1326, %v7705, %v7656
      %v7714 = vsel %vm1326, %v7706, %v7658
      %v7715 = vsel %vm1290, %v7491, 0
      %v7717 = vsel %vm1290, %v7494, 0
      %v7719 = vsel %vm1290, %v7497, 0
      %v7721 = vsel %vm1290, %v7500, 0
      %v7723 = vsel %vm1290, %v7503, 0
      %v7725 = vsel %vm1290, %v7506, 0
      %v7727 = vsel %vm1290, %v7522, 0
      %v7729 = vsel %vm1290, %v540, 0
      %7731 = vmatprep.subr.mxu0 0.0
      %7732 = vmatpush1.msra.mxu0 %v7390
      %7733 = vmatprep.subr.mxu0 0.0
      %7734 = vmatpush1.msra.mxu0 %v7389
      %7735 = vmatprep.subr.mxu0 0.0
      %7736 = vmatpush1.msra.mxu0 %v7388
      %7737 = vmatprep.subr.mxu0 0.0
      %7738 = vmatpush1.msra.mxu0 %v7387
      %7739 = vmatprep.subr.mxu0 0.0
      %7740 = vmatpush1.msra.mxu0 %v7386
      %7741 = vmatprep.subr.mxu0 0.0
      %7742 = vmatpush1.msra.mxu0 %v7385
      %7743 = vmatprep.subr.mxu0 0.0
      %7744 = vmatpush1.msra.mxu0 %v7384
      %7745 = vmatprep.subr.mxu0 0.0
      %7746 = vmatpush1.msra.mxu0 %v7383
      %7747 = vmatprep.subr.mxu0 0.0
      %7748 = vmatpush1.msra.mxu0 %v7382
      %7749 = vmatprep.subr.mxu0 0.0
      %7750 = vmatpush1.msra.mxu0 %v7381
      %7751 = vmatprep.subr.mxu0 0.0
      %7752 = vmatpush1.msra.mxu0 %v7380
      %7753 = vmatprep.subr.mxu0 0.0
      %7754 = vmatpush1.msra.mxu0 %v7379
      %7755 = vmatprep.subr.mxu0 0.0
      %7756 = vmatpush1.msra.mxu0 %v7378
      %7757 = vmatprep.subr.mxu0 0.0
      %7758 = vmatpush1.msra.mxu0 %v7377
      %7759 = vmatprep.subr.mxu0 0.0
      %7760 = vmatpush1.msra.mxu0 %v7376
      %7761 = vmatprep.subr.mxu0 0.0
      %7762 = vmatpush1.msra.mxu0 %v7375
      %7763 = vmatprep.subr.mxu0 0.0
      %7764 = vmatpush2.msra.mxu0 %v7406
      %7765 = vmatprep.subr.mxu0 0.0
      %7766 = vmatpush2.msra.mxu0 %v7405
      %7767 = vmatprep.subr.mxu0 0.0
      %7768 = vmatpush2.msra.mxu0 %v7404
      %7769 = vmatprep.subr.mxu0 0.0
      %7770 = vmatpush2.msra.mxu0 %v7403
      %7771 = vmatprep.subr.mxu0 0.0
      %7772 = vmatpush2.msra.mxu0 %v7402
      %7773 = vmatprep.subr.mxu0 0.0
      %7774 = vmatpush2.msra.mxu0 %v7401
      %7775 = vmatprep.subr.mxu0 0.0
      %7776 = vmatpush2.msra.mxu0 %v7400
      %7777 = vmatprep.subr.mxu0 0.0
      %7778 = vmatpush2.msra.mxu0 %v7399
      %7779 = vmatprep.subr.mxu0 0.0
      %7780 = vmatpush2.msra.mxu0 %v7398
      %7781 = vmatprep.subr.mxu0 0.0
      %7782 = vmatpush2.msra.mxu0 %v7397
      %7783 = vmatprep.subr.mxu0 0.0
      %7784 = vmatpush2.msra.mxu0 %v7396
      %7785 = vmatprep.subr.mxu0 0.0
      %7786 = vmatpush2.msra.mxu0 %v7395
      %7787 = vmatprep.subr.mxu0 0.0
      %7788 = vmatpush2.msra.mxu0 %v7394
      %7789 = vmatprep.subr.mxu0 0.0
      %7790 = vmatpush2.msra.mxu0 %v7393
      %7791 = vmatprep.subr.mxu0 0.0
      %7792 = vmatpush2.msra.mxu0 %v7392
      %7793 = vmatprep.subr.mxu0 0.0
      %7794 = vmatpush2.msra.mxu0 %v7391
      %7795 = vmatprep.mubr.f32.mxu0 %v7707
      %7796 = vmatmul.mubr.f32.gmra.mxu0 %v7683
      %v7797 = vpop.f32.mrf.mxu0
      %v7798 = vadd.f32 0.0, %v7797
      %v7799 = vpop.f32.mrf.mxu0
      %7800 = vmatprep.mubr.f32.mxu0 %v7708
      %7801 = vmatmul.mubr.f32.gmra.mxu0 %v7684
      %v7802 = vpop.f32.mrf.mxu0
      %v7803 = vadd.f32 0.0, %v7802
      %v7804 = vpop.f32.mrf.mxu0
      %7805 = vmatprep.mubr.f32.mxu0 %v7709
      %7806 = vmatmul.mubr.f32.gmra.mxu0 %v7685
      %v7807 = vpop.f32.mrf.mxu0
      %v7808 = vadd.f32 0.0, %v7807
      %v7809 = vpop.f32.mrf.mxu0
      %7810 = vmatprep.mubr.f32.mxu0 %v7710
      %7811 = vmatmul.mubr.f32.gmra.mxu0 %v7686
      %v7812 = vpop.f32.mrf.mxu0
      %v7813 = vadd.f32 0.0, %v7812
      %v7814 = vpop.f32.mrf.mxu0
      %7815 = vmatprep.mubr.f32.mxu0 %v7711
      %7816 = vmatmul.mubr.f32.gmra.mxu0 %v7687
      %v7817 = vpop.f32.mrf.mxu0
      %v7818 = vadd.f32 0.0, %v7817
      %v7819 = vpop.f32.mrf.mxu0
      %7820 = vmatprep.mubr.f32.mxu0 %v7712
      %7821 = vmatmul.mubr.f32.gmra.mxu0 %v7688
      %v7822 = vpop.f32.mrf.mxu0
      %v7823 = vadd.f32 0.0, %v7822
      %v7824 = vpop.f32.mrf.mxu0
      %7825 = vmatprep.mubr.f32.mxu0 %v7713
      %7826 = vmatmul.mubr.f32.gmra.mxu0 %v7689
      %v7827 = vpop.f32.mrf.mxu0
      %v7828 = vadd.f32 0.0, %v7827
      %v7829 = vpop.f32.mrf.mxu0
      %7830 = vmatprep.mubr.f32.mxu0 %v7714
      %7831 = vmatmul.mubr.f32.gmra.mxu0 %v7690
      %v7832 = vpop.f32.mrf.mxu0
      %v7833 = vadd.f32 0.0, %v7832
      %v7834 = vpop.f32.mrf.mxu0
      %7835 = vdwg.mxu0
      %7836 = vmatprep.subr.mxu0 0.0
      %7837 = vmatpush1.msra.mxu0 0.0
      %7838 = vmatprep.subr.mxu0 0.0
      %7839 = vmatpush1.msra.mxu0 0.0
      %7840 = vmatprep.subr.mxu0 0.0
      %7841 = vmatpush1.msra.mxu0 0.0
      %7842 = vmatprep.subr.mxu0 0.0
      %7843 = vmatpush1.msra.mxu0 0.0
      %7844 = vmatprep.subr.mxu0 0.0
      %7845 = vmatpush1.msra.mxu0 0.0
      %7846 = vmatprep.subr.mxu0 0.0
      %7847 = vmatpush1.msra.mxu0 0.0
      %7848 = vmatprep.subr.mxu0 0.0
      %7849 = vmatpush1.msra.mxu0 0.0
      %7850 = vmatprep.subr.mxu0 0.0
      %7851 = vmatpush1.msra.mxu0 0.0
      %7852 = vmatprep.subr.mxu0 0.0
      %7853 = vmatpush1.msra.mxu0 0.0
      %7854 = vmatprep.subr.mxu0 0.0
      %7855 = vmatpush1.msra.mxu0 0.0
      %7856 = vmatprep.subr.mxu0 0.0
      %7857 = vmatpush1.msra.mxu0 0.0
      %7858 = vmatprep.subr.mxu0 0.0
      %7859 = vmatpush1.msra.mxu0 0.0
      %7860 = vmatprep.subr.mxu0 0.0
      %7861 = vmatpush1.msra.mxu0 %v7410
      %7862 = vmatprep.subr.mxu0 0.0
      %7863 = vmatpush1.msra.mxu0 %v7409
      %7864 = vmatprep.subr.mxu0 0.0
      %7865 = vmatpush1.msra.mxu0 %v7408
      %7866 = vmatprep.subr.mxu0 0.0
      %7867 = vmatpush1.msra.mxu0 %v7407
      %7868 = vmatprep.subr.mxu0 0.0
      %7869 = vmatpush2.msra.mxu0 0.0
      %7870 = vmatprep.subr.mxu0 0.0
      %7871 = vmatpush2.msra.mxu0 0.0
      %7872 = vmatprep.subr.mxu0 0.0
      %7873 = vmatpush2.msra.mxu0 0.0
      %7874 = vmatprep.subr.mxu0 0.0
      %7875 = vmatpush2.msra.mxu0 0.0
      %7876 = vmatprep.subr.mxu0 0.0
      %7877 = vmatpush2.msra.mxu0 0.0
      %7878 = vmatprep.subr.mxu0 0.0
      %7879 = vmatpush2.msra.mxu0 0.0
      %7880 = vmatprep.subr.mxu0 0.0
      %7881 = vmatpush2.msra.mxu0 0.0
      %7882 = vmatprep.subr.mxu0 0.0
      %7883 = vmatpush2.msra.mxu0 0.0
      %7884 = vmatprep.subr.mxu0 0.0
      %7885 = vmatpush2.msra.mxu0 0.0
      %7886 = vmatprep.subr.mxu0 0.0
      %7887 = vmatpush2.msra.mxu0 0.0
      %7888 = vmatprep.subr.mxu0 0.0
      %7889 = vmatpush2.msra.mxu0 0.0
      %7890 = vmatprep.subr.mxu0 0.0
      %7891 = vmatpush2.msra.mxu0 0.0
      %7892 = vmatprep.subr.mxu0 0.0
      %7893 = vmatpush2.msra.mxu0 0.0
      %7894 = vmatprep.subr.mxu0 0.0
      %7895 = vmatpush2.msra.mxu0 0.0
      %7896 = vmatprep.subr.mxu0 0.0
      %7897 = vmatpush2.msra.mxu0 0.0
      %7898 = vmatprep.subr.mxu0 0.0
      %7899 = vmatpush2.msra.mxu0 0.0
      %7900 = vmatprep.mubr.f32.mxu0 0.0
      %7901 = vmatmul.mubr.f32.gmra.mxu0 %v7715
      %v7902 = vpop.f32.mrf.mxu0
      %v7903 = vadd.f32 %v7798, %v7902
      %v7904 = vpop.f32.mrf.mxu0
      %7905 = vmatprep.mubr.f32.mxu0 0.0
      %7906 = vmatmul.mubr.f32.gmra.mxu0 %v7717
      %v7907 = vpop.f32.mrf.mxu0
      %v7908 = vadd.f32 %v7803, %v7907
      %v7909 = vpop.f32.mrf.mxu0
      %7910 = vmatprep.mubr.f32.mxu0 0.0
      %7911 = vmatmul.mubr.f32.gmra.mxu0 %v7719
      %v7912 = vpop.f32.mrf.mxu0
      %v7913 = vadd.f32 %v7808, %v7912
      %v7914 = vpop.f32.mrf.mxu0
      %7915 = vmatprep.mubr.f32.mxu0 0.0
      %7916 = vmatmul.mubr.f32.gmra.mxu0 %v7721
      %v7917 = vpop.f32.mrf.mxu0
      %v7918 = vadd.f32 %v7813, %v7917
      %v7919 = vpop.f32.mrf.mxu0
      %7920 = vmatprep.mubr.f32.mxu0 0.0
      %7921 = vmatmul.mubr.f32.gmra.mxu0 %v7723
      %v7922 = vpop.f32.mrf.mxu0
      %v7923 = vadd.f32 %v7818, %v7922
      %v7924 = vpop.f32.mrf.mxu0
      %7925 = vmatprep.mubr.f32.mxu0 0.0
      %7926 = vmatmul.mubr.f32.gmra.mxu0 %v7725
      %v7927 = vpop.f32.mrf.mxu0
      %v7928 = vadd.f32 %v7823, %v7927
      %v7929 = vpop.f32.mrf.mxu0
      %7930 = vmatprep.mubr.f32.mxu0 0.0
      %7931 = vmatmul.mubr.f32.gmra.mxu0 %v7727
      %v7932 = vpop.f32.mrf.mxu0
      %v7933 = vadd.f32 %v7828, %v7932
      %v7934 = vpop.f32.mrf.mxu0
      %7935 = vmatprep.mubr.f32.mxu0 0.0
      %7936 = vmatmul.mubr.f32.gmra.mxu0 %v7729
      %v7937 = vpop.f32.mrf.mxu0
      %v7938 = vadd.f32 %v7833, %v7937
      %v7939 = vpop.f32.mrf.mxu0
      %7940 = vdwg.mxu0
      %vm7941 = vcmp.gt.f32.partialorder %v7903, 0.0
      %vm7942 = vcmp.gt.f32.partialorder %v7908, 0.0
      %vm7943 = vcmp.gt.f32.partialorder %v7913, 0.0
      %vm7944 = vcmp.gt.f32.partialorder %v7918, 0.0
      %vm7945 = vcmp.gt.f32.partialorder %v7923, 0.0
      %vm7946 = vcmp.gt.f32.partialorder %v7928, 0.0
      %vm7947 = vcmp.gt.f32.partialorder %v7933, 0.0
      %vm7948 = vcmp.gt.f32.partialorder %v7938, 0.0
      %v7949 = vmul.f32 %v7903, 0.2
      %v7950 = vmul.f32 %v7908, 0.2
      %v7951 = vmul.f32 %v7913, 0.2
      %v7952 = vmul.f32 %v7918, 0.2
      %v7953 = vmul.f32 %v7923, 0.2
      %v7954 = vmul.f32 %v7928, 0.2
      %v7955 = vmul.f32 %v7933, 0.2
      %v7956 = vmul.f32 %v7938, 0.2
      %v7957 = vsel %vm7941, %v7903, %v7949
      %v7958 = vsel %vm7942, %v7908, %v7950
      %v7959 = vsel %vm7943, %v7913, %v7951
      %v7960 = vsel %vm7944, %v7918, %v7952
      %v7961 = vsel %vm7945, %v7923, %v7953
      %v7962 = vsel %vm7946, %v7928, %v7954
      %v7963 = vsel %vm7947, %v7933, %v7955
      %v7964 = vsel %vm7948, %v7938, %v7956
      %v7965 = vld [vmem:[%s10] sm:$0xff]
      %v7966 = vld [vmem:[%s10 + $0x8] sm:$0xff]
      %v7967 = vld [vmem:[%s10 + $0x10] sm:$0xff]
      %v7968 = vld [vmem:[%s10 + $0x18] sm:$0xff]
      %v7969 = vld [vmem:[%s10 + $0x20] sm:$0xff]
      %v7970 = vld [vmem:[%s10 + $0x28] sm:$0xff]
      %v7971 = vld [vmem:[%s10 + $0x30] sm:$0xff]
      %v7972 = vld [vmem:[%s10 + $0x38] sm:$0xff]
      %v7973 = vld [vmem:[%s10 + $0x40] sm:$0xff]
      %v7974 = vld [vmem:[%s10 + $0x48] sm:$0xff]
      %v7975 = vld [vmem:[%s10 + $0x50] sm:$0xff]
      %v7976 = vld [vmem:[%s10 + $0x58] sm:$0xff]
      %v7977 = vld [vmem:[%s10 + $0x60] sm:$0xff]
      %v7978 = vld [vmem:[%s10 + $0x68] sm:$0xff]
      %v7979 = vld [vmem:[%s10 + $0x70] sm:$0xff]
      %v7980 = vld [vmem:[%s10 + $0x78] sm:$0xff]
      %v7981 = vld [vmem:[%s10 + $0x80] sm:$0xff]
      %v7982 = vld [vmem:[%s10 + $0x88] sm:$0xff]
      %v7991 = vrot.slane %v7957, 7
      %v7992 = vrot.slane %v7958, 7
      %v7993 = vrot.slane %v7959, 7
      %v7994 = vrot.slane %v7960, 7
      %v7995 = vrot.slane %v7961, 7
      %v7996 = vrot.slane %v7962, 7
      %v7997 = vrot.slane %v7963, 7
      %v7998 = vrot.slane %v7964, 7
      %v8007 = vsel %vm482, 0.0, %v7991
      %v8008 = vsel %vm482, 0.0, %v7992
      %v8009 = vsel %vm482, 0.0, %v7993
      %v8010 = vsel %vm482, 0.0, %v7994
      %v8011 = vsel %vm482, 0.0, %v7995
      %v8012 = vsel %vm482, 0.0, %v7996
      %v8013 = vsel %vm482, 0.0, %v7997
      %v8014 = vsel %vm482, 0.0, %v7998
      %v8015 = vsel %vm482, %v7991, 0.0
      %v8016 = vsel %vm482, %v7992, 0.0
      %v8017 = vsel %vm482, %v7993, 0.0
      %v8018 = vsel %vm482, %v7994, 0.0
      %v8019 = vsel %vm482, %v7995, 0.0
      %v8020 = vsel %vm482, %v7996, 0.0
      %v8021 = vsel %vm482, %v7997, 0.0
      %v8022 = vsel %vm482, %v7998, 0.0
      %v8037 = vrot.slane %v8007, 1
      %v8038 = vrot.slane %v8015, 1
      %v8039 = vsel %vm514, %v8037, %v8038
      %v8040 = vrot.slane %v8008, 1
      %v8041 = vrot.slane %v8016, 1
      %v8042 = vsel %vm514, %v8040, %v8041
      %v8043 = vrot.slane %v8009, 1
      %v8044 = vrot.slane %v8017, 1
      %v8045 = vsel %vm514, %v8043, %v8044
      %v8046 = vrot.slane %v8010, 1
      %v8047 = vrot.slane %v8018, 1
      %v8048 = vsel %vm514, %v8046, %v8047
      %v8049 = vrot.slane %v8011, 1
      %v8050 = vrot.slane %v8019, 1
      %v8051 = vsel %vm514, %v8049, %v8050
      %v8052 = vrot.slane %v8012, 1
      %v8053 = vrot.slane %v8020, 1
      %v8054 = vsel %vm514, %v8052, %v8053
      %v8055 = vrot.slane %v8013, 1
      %v8056 = vrot.slane %v8021, 1
      %v8057 = vsel %vm514, %v8055, %v8056
      %v8058 = vrot.slane %v8007, 2
      %v8059 = vrot.slane %v8015, 2
      %v8060 = vsel %vm538, %v8058, %v8059
      %v8061 = vrot.slane %v8008, 2
      %v8062 = vrot.slane %v8016, 2
      %v8063 = vsel %vm538, %v8061, %v8062
      %v8064 = vrot.slane %v8009, 2
      %v8065 = vrot.slane %v8017, 2
      %v8066 = vsel %vm538, %v8064, %v8065
      %v8067 = vrot.slane %v8010, 2
      %v8068 = vrot.slane %v8018, 2
      %v8069 = vsel %vm538, %v8067, %v8068
      %v8070 = vrot.slane %v8011, 2
      %v8071 = vrot.slane %v8019, 2
      %v8072 = vsel %vm538, %v8070, %v8071
      %v8073 = vrot.slane %v8012, 2
      %v8074 = vrot.slane %v8020, 2
      %v8075 = vsel %vm538, %v8073, %v8074
      %v8076 = vrot.slane %v8013, 2
      %v8077 = vrot.slane %v8021, 2
      %v8078 = vsel %vm538, %v8076, %v8077
      %v8081 = vrot.slane %v8014, 1
      %v8082 = vrot.slane %v8022, 1
      %v8083 = vsel %vm514, %v8081, %v8082
      %v8084 = vrot.slane %v8014, 2
      %v8085 = vrot.slane %v8022, 2
      %v8086 = vsel %vm538, %v8084, %v8085
      %8087 = vrot.lane.b32.xlu0 %v8039, 16
      %v8088 = vpop.permute.xlu0 %8087
      %8089 = vrot.lane.b32.xlu0 %v8042, 16
      %v8090 = vpop.permute.xlu0 %8089
      %8091 = vrot.lane.b32.xlu0 %v8045, 16
      %v8092 = vpop.permute.xlu0 %8091
      %8093 = vrot.lane.b32.xlu0 %v8048, 16
      %v8094 = vpop.permute.xlu0 %8093
      %8095 = vrot.lane.b32.xlu0 %v8051, 16
      %v8096 = vpop.permute.xlu0 %8095
      %8097 = vrot.lane.b32.xlu0 %v8054, 16
      %v8098 = vpop.permute.xlu0 %8097
      %8099 = vrot.lane.b32.xlu0 %v8057, 16
      %v8100 = vpop.permute.xlu0 %8099
      %8108 = vrot.lane.b32.xlu0 %v8060, 32
      %v8109 = vpop.permute.xlu0 %8108
      %8110 = vrot.lane.b32.xlu0 %v8063, 32
      %v8111 = vpop.permute.xlu0 %8110
      %8112 = vrot.lane.b32.xlu0 %v8066, 32
      %v8113 = vpop.permute.xlu0 %8112
      %8114 = vrot.lane.b32.xlu0 %v8069, 32
      %v8115 = vpop.permute.xlu0 %8114
      %8116 = vrot.lane.b32.xlu0 %v8072, 32
      %v8117 = vpop.permute.xlu0 %8116
      %8118 = vrot.lane.b32.xlu0 %v8075, 32
      %v8119 = vpop.permute.xlu0 %8118
      %8120 = vrot.lane.b32.xlu0 %v8078, 32
      %v8121 = vpop.permute.xlu0 %8120
      %8129 = vrot.lane.b32.xlu0 %v8007, 48
      %v8130 = vpop.permute.xlu0 %8129
      %8131 = vrot.lane.b32.xlu0 %v8008, 48
      %v8132 = vpop.permute.xlu0 %8131
      %8133 = vrot.lane.b32.xlu0 %v8009, 48
      %v8134 = vpop.permute.xlu0 %8133
      %8135 = vrot.lane.b32.xlu0 %v8010, 48
      %v8136 = vpop.permute.xlu0 %8135
      %8137 = vrot.lane.b32.xlu0 %v8011, 48
      %v8138 = vpop.permute.xlu0 %8137
      %8139 = vrot.lane.b32.xlu0 %v8012, 48
      %v8140 = vpop.permute.xlu0 %8139
      %8141 = vrot.lane.b32.xlu0 %v8013, 48
      %v8142 = vpop.permute.xlu0 %8141
      %8143 = vrot.lane.b32.xlu0 %v8014, 48
      %v8144 = vpop.permute.xlu0 %8143
      %8153 = vrot.lane.b32.xlu0 %v8039, 64
      %v8154 = vpop.permute.xlu0 %8153
      %8155 = vrot.lane.b32.xlu0 %v8042, 64
      %v8156 = vpop.permute.xlu0 %8155
      %8157 = vrot.lane.b32.xlu0 %v8045, 64
      %v8158 = vpop.permute.xlu0 %8157
      %8159 = vrot.lane.b32.xlu0 %v8048, 64
      %v8160 = vpop.permute.xlu0 %8159
      %8161 = vrot.lane.b32.xlu0 %v8051, 64
      %v8162 = vpop.permute.xlu0 %8161
      %8163 = vrot.lane.b32.xlu0 %v8054, 64
      %v8164 = vpop.permute.xlu0 %8163
      %8165 = vrot.lane.b32.xlu0 %v8057, 64
      %v8166 = vpop.permute.xlu0 %8165
      %8167 = vrot.lane.b32.xlu0 %v8083, 64
      %v8168 = vpop.permute.xlu0 %8167
      %8177 = vrot.lane.b32.xlu0 %v8060, 80
      %v8178 = vpop.permute.xlu0 %8177
      %8179 = vrot.lane.b32.xlu0 %v8063, 80
      %v8180 = vpop.permute.xlu0 %8179
      %8181 = vrot.lane.b32.xlu0 %v8066, 80
      %v8182 = vpop.permute.xlu0 %8181
      %8183 = vrot.lane.b32.xlu0 %v8069, 80
      %v8184 = vpop.permute.xlu0 %8183
      %8185 = vrot.lane.b32.xlu0 %v8072, 80
      %v8186 = vpop.permute.xlu0 %8185
      %8187 = vrot.lane.b32.xlu0 %v8075, 80
      %v8188 = vpop.permute.xlu0 %8187
      %8189 = vrot.lane.b32.xlu0 %v8078, 80
      %v8190 = vpop.permute.xlu0 %8189
      %8191 = vrot.lane.b32.xlu0 %v8086, 80
      %v8192 = vpop.permute.xlu0 %8191
      %8201 = vrot.lane.b32.xlu0 %v8008, 96
      %v8202 = vpop.permute.xlu0 %8201
      %8203 = vrot.lane.b32.xlu0 %v8009, 96
      %v8204 = vpop.permute.xlu0 %8203
      %8205 = vrot.lane.b32.xlu0 %v8010, 96
      %v8206 = vpop.permute.xlu0 %8205
      %8207 = vrot.lane.b32.xlu0 %v8011, 96
      %v8208 = vpop.permute.xlu0 %8207
      %8209 = vrot.lane.b32.xlu0 %v8012, 96
      %v8210 = vpop.permute.xlu0 %8209
      %8211 = vrot.lane.b32.xlu0 %v8013, 96
      %v8212 = vpop.permute.xlu0 %8211
      %8213 = vrot.lane.b32.xlu0 %v8014, 96
      %v8214 = vpop.permute.xlu0 %8213
      %8222 = vrot.lane.b32.xlu0 %v8042, 112
      %v8223 = vpop.permute.xlu0 %8222
      %8224 = vrot.lane.b32.xlu0 %v8045, 112
      %v8225 = vpop.permute.xlu0 %8224
      %8226 = vrot.lane.b32.xlu0 %v8048, 112
      %v8227 = vpop.permute.xlu0 %8226
      %8228 = vrot.lane.b32.xlu0 %v8051, 112
      %v8229 = vpop.permute.xlu0 %8228
      %8230 = vrot.lane.b32.xlu0 %v8054, 112
      %v8231 = vpop.permute.xlu0 %8230
      %8232 = vrot.lane.b32.xlu0 %v8057, 112
      %v8233 = vpop.permute.xlu0 %8232
      %8234 = vrot.lane.b32.xlu0 %v8083, 112
      %v8235 = vpop.permute.xlu0 %8234
      %v8243 = vsel %vm825, %v8007, %v8088
      %v8244 = vsel %vm825, %v8008, %v8090
      %v8245 = vsel %vm825, %v8009, %v8092
      %v8246 = vsel %vm825, %v8010, %v8094
      %v8247 = vsel %vm825, %v8011, %v8096
      %v8248 = vsel %vm825, %v8012, %v8098
      %v8249 = vsel %vm825, %v8013, %v8100
      %v8250 = vsel %vm1290, %v8243, %v8109
      %v8251 = vsel %vm1290, %v8244, %v8111
      %v8252 = vsel %vm1290, %v8245, %v8113
      %v8253 = vsel %vm1290, %v8246, %v8115
      %v8254 = vsel %vm1290, %v8247, %v8117
      %v8255 = vsel %vm1290, %v8248, %v8119
      %v8256 = vsel %vm1290, %v8249, %v8121
      %v8257 = vsel %vm1299, %v1291, %v8130
      %v8258 = vsel %vm1299, %v8250, %v8132
      %v8259 = vsel %vm1299, %v8251, %v8134
      %v8260 = vsel %vm1299, %v8252, %v8136
      %v8261 = vsel %vm1299, %v8253, %v8138
      %v8262 = vsel %vm1299, %v8254, %v8140
      %v8263 = vsel %vm1299, %v8255, %v8142
      %v8264 = vsel %vm1299, %v8256, %v8144
      %v8265 = vsel %vm1308, %v8257, %v8154
      %v8266 = vsel %vm1308, %v8258, %v8156
      %v8267 = vsel %vm1308, %v8259, %v8158
      %v8268 = vsel %vm1308, %v8260, %v8160
      %v8269 = vsel %vm1308, %v8261, %v8162
      %v8270 = vsel %vm1308, %v8262, %v8164
      %v8271 = vsel %vm1308, %v8263, %v8166
      %v8272 = vsel %vm1308, %v8264, %v8168
      %v8273 = vsel %vm1317, %v8265, %v8178
      %v8274 = vsel %vm1317, %v8266, %v8180
      %v8275 = vsel %vm1317, %v8267, %v8182
      %v8276 = vsel %vm1317, %v8268, %v8184
      %v8277 = vsel %vm1317, %v8269, %v8186
      %v8278 = vsel %vm1317, %v8270, %v8188
      %v8279 = vsel %vm1317, %v8271, %v8190
      %v8280 = vsel %vm1317, %v8272, %v8192
      %v8281 = vsel %vm1326, %v8273, %v8202
      %v8282 = vsel %vm1326, %v8274, %v8204
      %v8283 = vsel %vm1326, %v8275, %v8206
      %v8284 = vsel %vm1326, %v8276, %v8208
      %v8285 = vsel %vm1326, %v8277, %v8210
      %v8286 = vsel %vm1326, %v8278, %v8212
      %v8287 = vsel %vm1326, %v8279, %v8214
      %v8288 = vsel %vm1326, %v8280, %v1249
      %v8289 = vsel %vm1335, %v8281, %v8223
      %v8290 = vsel %vm1335, %v8282, %v8225
      %v8291 = vsel %vm1335, %v8283, %v8227
      %v8292 = vsel %vm1335, %v8284, %v8229
      %v8293 = vsel %vm1335, %v8285, %v8231
      %v8294 = vsel %vm1335, %v8286, %v8233
      %v8295 = vsel %vm1335, %v8287, %v8235
      %v8296 = vsel %vm1335, %v8288, %v1273
      %v8297 = vsel %vm825, %v8063, 0
      %v8299 = vsel %vm825, %v8066, 0
      %v8301 = vsel %vm825, %v8069, 0
      %v8303 = vsel %vm825, %v8072, 0
      %v8305 = vsel %vm825, %v8075, 0
      %v8307 = vsel %vm825, %v8078, 0
      %v8309 = vsel %vm825, %v8086, 0
      %8311 = vmatprep.subr.mxu0 0.0
      %8312 = vmatpush1.msra.mxu0 %v7980
      %8313 = vmatprep.subr.mxu0 0.0
      %8314 = vmatpush1.msra.mxu0 %v7979
      %8315 = vmatprep.subr.mxu0 0.0
      %8316 = vmatpush1.msra.mxu0 %v7978
      %8317 = vmatprep.subr.mxu0 0.0
      %8318 = vmatpush1.msra.mxu0 %v7977
      %8319 = vmatprep.subr.mxu0 0.0
      %8320 = vmatpush1.msra.mxu0 %v7976
      %8321 = vmatprep.subr.mxu0 0.0
      %8322 = vmatpush1.msra.mxu0 %v7975
      %8323 = vmatprep.subr.mxu0 0.0
      %8324 = vmatpush1.msra.mxu0 %v7974
      %8325 = vmatprep.subr.mxu0 0.0
      %8326 = vmatpush1.msra.mxu0 %v7973
      %8327 = vmatprep.subr.mxu0 0.0
      %8328 = vmatpush1.msra.mxu0 %v7972
      %8329 = vmatprep.subr.mxu0 0.0
      %8330 = vmatpush1.msra.mxu0 %v7971
      %8331 = vmatprep.subr.mxu0 0.0
      %8332 = vmatpush1.msra.mxu0 %v7970
      %8333 = vmatprep.subr.mxu0 0.0
      %8334 = vmatpush1.msra.mxu0 %v7969
      %8335 = vmatprep.subr.mxu0 0.0
      %8336 = vmatpush1.msra.mxu0 %v7968
      %8337 = vmatprep.subr.mxu0 0.0
      %8338 = vmatpush1.msra.mxu0 %v7967
      %8339 = vmatprep.subr.mxu0 0.0
      %8340 = vmatpush1.msra.mxu0 %v7966
      %8341 = vmatprep.subr.mxu0 0.0
      %8342 = vmatpush1.msra.mxu0 %v7965
      %8343 = vmatprep.subr.mxu0 0.0
      %8344 = vmatpush2.msra.mxu0 0.0
      %8345 = vmatprep.subr.mxu0 0.0
      %8346 = vmatpush2.msra.mxu0 0.0
      %8347 = vmatprep.subr.mxu0 0.0
      %8348 = vmatpush2.msra.mxu0 0.0
      %8349 = vmatprep.subr.mxu0 0.0
      %8350 = vmatpush2.msra.mxu0 0.0
      %8351 = vmatprep.subr.mxu0 0.0
      %8352 = vmatpush2.msra.mxu0 0.0
      %8353 = vmatprep.subr.mxu0 0.0
      %8354 = vmatpush2.msra.mxu0 0.0
      %8355 = vmatprep.subr.mxu0 0.0
      %8356 = vmatpush2.msra.mxu0 0.0
      %8357 = vmatprep.subr.mxu0 0.0
      %8358 = vmatpush2.msra.mxu0 0.0
      %8359 = vmatprep.subr.mxu0 0.0
      %8360 = vmatpush2.msra.mxu0 0.0
      %8361 = vmatprep.subr.mxu0 0.0
      %8362 = vmatpush2.msra.mxu0 0.0
      %8363 = vmatprep.subr.mxu0 0.0
      %8364 = vmatpush2.msra.mxu0 0.0
      %8365 = vmatprep.subr.mxu0 0.0
      %8366 = vmatpush2.msra.mxu0 0.0
      %8367 = vmatprep.subr.mxu0 0.0
      %8368 = vmatpush2.msra.mxu0 0.0
      %8369 = vmatprep.subr.mxu0 0.0
      %8370 = vmatpush2.msra.mxu0 0.0
      %8371 = vmatprep.subr.mxu0 0.0
      %8372 = vmatpush2.msra.mxu0 %v7982
      %8373 = vmatprep.subr.mxu0 0.0
      %8374 = vmatpush2.msra.mxu0 %v7981
      %8375 = vmatprep.mubr.f32.mxu0 %v8297
      %8376 = vmatmul.mubr.f32.gmra.mxu0 %v8289
      %v8377 = vpop.f32.mrf.mxu0
      %v8378 = vadd.f32 0.0, %v8377
      %v8379 = vpop.f32.mrf.mxu0
      %8380 = vmatprep.mubr.f32.mxu0 %v8299
      %8381 = vmatmul.mubr.f32.gmra.mxu0 %v8290
      %v8382 = vpop.f32.mrf.mxu0
      %v8383 = vadd.f32 0.0, %v8382
      %v8384 = vpop.f32.mrf.mxu0
      %8385 = vmatprep.mubr.f32.mxu0 %v8301
      %8386 = vmatmul.mubr.f32.gmra.mxu0 %v8291
      %v8387 = vpop.f32.mrf.mxu0
      %v8388 = vadd.f32 0.0, %v8387
      %v8389 = vpop.f32.mrf.mxu0
      %8390 = vmatprep.mubr.f32.mxu0 %v8303
      %8391 = vmatmul.mubr.f32.gmra.mxu0 %v8292
      %v8392 = vpop.f32.mrf.mxu0
      %v8393 = vadd.f32 0.0, %v8392
      %v8394 = vpop.f32.mrf.mxu0
      %8395 = vmatprep.mubr.f32.mxu0 %v8305
      %8396 = vmatmul.mubr.f32.gmra.mxu0 %v8293
      %v8397 = vpop.f32.mrf.mxu0
      %v8398 = vadd.f32 0.0, %v8397
      %v8399 = vpop.f32.mrf.mxu0
      %8400 = vmatprep.mubr.f32.mxu0 %v8307
      %8401 = vmatmul.mubr.f32.gmra.mxu0 %v8294
      %v8402 = vpop.f32.mrf.mxu0
      %v8403 = vadd.f32 0.0, %v8402
      %v8404 = vpop.f32.mrf.mxu0
      %8405 = vmatprep.mubr.f32.mxu0 %v8309
      %8406 = vmatmul.mubr.f32.gmra.mxu0 %v8295
      %v8407 = vpop.f32.mrf.mxu0
      %v8408 = vadd.f32 0.0, %v8407
      %v8409 = vpop.f32.mrf.mxu0
      %8410 = vmatprep.mubr.f32.mxu0 %v1358
      %8411 = vmatmul.mubr.f32.gmra.mxu0 %v8296
      %v8412 = vpop.f32.mrf.mxu0
      %v8413 = vadd.f32 0.0, %v8412
      %v8414 = vpop.f32.mrf.mxu0
      %8415 = vdwg.mxu0
      %v8416 = vand.u32 2147483647, %v8378
      %v8417 = vand.u32 2147483647, %v8383
      %v8418 = vand.u32 2147483647, %v8388
      %v8419 = vand.u32 2147483647, %v8393
      %v8420 = vand.u32 2147483647, %v8398
      %v8421 = vand.u32 2147483647, %v8403
      %v8422 = vand.u32 2147483647, %v8408
      %v8423 = vand.u32 2147483647, %v8413
      %v8424 = vadd.f32 %v8416, 1.0
      %v8425 = vadd.f32 %v8417, 1.0
      %v8426 = vadd.f32 %v8418, 1.0
      %v8427 = vadd.f32 %v8419, 1.0
      %v8428 = vadd.f32 %v8420, 1.0
      %v8429 = vadd.f32 %v8421, 1.0
      %v8430 = vadd.f32 %v8422, 1.0
      %v8431 = vadd.f32 %v8423, 1.0
      %v8432 = vrcp.pop %v8424
      %v8433 = vrcp.pop %v8425
      %v8434 = vrcp.pop %v8426
      %v8435 = vrcp.pop %v8427
      %v8436 = vrcp.pop %v8428
      %v8437 = vrcp.pop %v8429
      %v8438 = vrcp.pop %v8430
      %v8439 = vrcp.pop %v8431
      %v8440 = vmul.f32 %v8378, %v8432
      %v8441 = vmul.f32 %v8383, %v8433
      %v8442 = vmul.f32 %v8388, %v8434
      %v8443 = vmul.f32 %v8393, %v8435
      %v8444 = vmul.f32 %v8398, %v8436
      %v8445 = vmul.f32 %v8403, %v8437
      %v8446 = vmul.f32 %v8408, %v8438
      %v8447 = vmul.f32 %v8413, %v8439
      %v8448 = vmul.f32 %v8440, 0.4
      %v8449 = vmul.f32 %v8441, 0.4
      %v8450 = vmul.f32 %v8442, 0.4
      %v8451 = vmul.f32 %v8443, 0.4
      %v8452 = vmul.f32 %v8444, 0.4
      %v8453 = vmul.f32 %v8445, 0.4
      %v8454 = vmul.f32 %v8446, 0.4
      %v8455 = vmul.f32 %v8447, 0.4
      %v8464 = vrot.slane %v8449, 7
      %v8465 = vsel %vm2671, %v8464, %v8448
      %v8466 = vrot.slane %v8450, 6
      %v8467 = vsel %vm2673, %v8466, %v8465
      %v8468 = vrot.slane %v8451, 5
      %v8469 = vsel %vm2675, %v8468, %v8467
      %v8470 = vrot.slane %v8452, 4
      %v8471 = vsel %vm3037, %v8470, %v8469
      %v8472 = vrot.slane %v8453, 3
      %v8473 = vsel %vm3039, %v8472, %v8471
      %v8474 = vrot.slane %v8454, 2
      %v8475 = vsel %vm3042, %v8474, %v8473
      %v8476 = vrot.slane %v8455, 1
      %v8477 = vsel %vm3045, %v8476, %v8475
      %v8479 = vrot.slane %v8448, 1
      %v8480 = vsel %vm2671, %v8449, %v8479
      %v8481 = vrot.slane %v8450, 7
      %v8482 = vsel %vm2673, %v8481, %v8480
      %v8483 = vrot.slane %v8451, 6
      %v8484 = vsel %vm2675, %v8483, %v8482
      %v8485 = vrot.slane %v8452, 5
      %v8486 = vsel %vm3037, %v8485, %v8484
      %v8487 = vrot.slane %v8453, 4
      %v8488 = vsel %vm3039, %v8487, %v8486
      %v8489 = vrot.slane %v8454, 3
      %v8490 = vsel %vm3042, %v8489, %v8488
      %v8491 = vrot.slane %v8455, 2
      %v8492 = vsel %vm3045, %v8491, %v8490
      %8493 = vrot.lane.b32.xlu0 %v8492, 2
      %v8494 = vpop.permute.xlu0 %8493
      %v8496 = vrot.slane %v8448, 2
      %v8497 = vrot.slane %v8449, 1
      %v8498 = vsel %vm2671, %v8497, %v8496
      %v8499 = vsel %vm2673, %v8450, %v8498
      %v8500 = vrot.slane %v8451, 7
      %v8501 = vsel %vm2675, %v8500, %v8499
      %v8502 = vrot.slane %v8452, 6
      %v8503 = vsel %vm3037, %v8502, %v8501
      %v8504 = vrot.slane %v8453, 5
      %v8505 = vsel %vm3039, %v8504, %v8503
      %v8506 = vrot.slane %v8454, 4
      %v8507 = vsel %vm3042, %v8506, %v8505
      %v8508 = vrot.slane %v8455, 3
      %v8509 = vsel %vm3045, %v8508, %v8507
      %8510 = vrot.lane.b32.xlu0 %v8509, 4
      %v8511 = vpop.permute.xlu0 %8510
      %v8513 = vrot.slane %v8448, 3
      %v8514 = vrot.slane %v8449, 2
      %v8515 = vsel %vm2671, %v8514, %v8513
      %v8516 = vrot.slane %v8450, 1
      %v8517 = vsel %vm2673, %v8516, %v8515
      %v8518 = vsel %vm2675, %v8451, %v8517
      %v8519 = vrot.slane %v8452, 7
      %v8520 = vsel %vm3037, %v8519, %v8518
      %v8521 = vrot.slane %v8453, 6
      %v8522 = vsel %vm3039, %v8521, %v8520
      %v8523 = vrot.slane %v8454, 5
      %v8524 = vsel %vm3042, %v8523, %v8522
      %v8525 = vrot.slane %v8455, 4
      %v8526 = vsel %vm3045, %v8525, %v8524
      %8527 = vrot.lane.b32.xlu0 %v8526, 6
      %v8528 = vpop.permute.xlu0 %8527
      %v8530 = vrot.slane %v8448, 4
      %v8531 = vrot.slane %v8449, 3
      %v8532 = vsel %vm2671, %v8531, %v8530
      %v8533 = vrot.slane %v8450, 2
      %v8534 = vsel %vm2673, %v8533, %v8532
      %v8535 = vrot.slane %v8451, 1
      %v8536 = vsel %vm2675, %v8535, %v8534
      %v8537 = vsel %vm3037, %v8452, %v8536
      %v8538 = vrot.slane %v8453, 7
      %v8539 = vsel %vm3039, %v8538, %v8537
      %v8540 = vrot.slane %v8454, 6
      %v8541 = vsel %vm3042, %v8540, %v8539
      %v8542 = vrot.slane %v8455, 5
      %v8543 = vsel %vm3045, %v8542, %v8541
      %8544 = vrot.lane.b32.xlu0 %v8543, 8
      %v8545 = vpop.permute.xlu0 %8544
      %v8547 = vrot.slane %v8448, 5
      %v8548 = vrot.slane %v8449, 4
      %v8549 = vsel %vm2671, %v8548, %v8547
      %v8550 = vrot.slane %v8450, 3
      %v8551 = vsel %vm2673, %v8550, %v8549
      %v8552 = vrot.slane %v8451, 2
      %v8553 = vsel %vm2675, %v8552, %v8551
      %v8554 = vrot.slane %v8452, 1
      %v8555 = vsel %vm3037, %v8554, %v8553
      %v8556 = vsel %vm3039, %v8453, %v8555
      %v8557 = vrot.slane %v8454, 7
      %v8558 = vsel %vm3042, %v8557, %v8556
      %v8559 = vrot.slane %v8455, 6
      %v8560 = vsel %vm3045, %v8559, %v8558
      %8561 = vrot.lane.b32.xlu0 %v8560, 10
      %v8562 = vpop.permute.xlu0 %8561
      %v8564 = vrot.slane %v8448, 6
      %v8565 = vrot.slane %v8449, 5
      %v8566 = vsel %vm2671, %v8565, %v8564
      %v8567 = vrot.slane %v8450, 4
      %v8568 = vsel %vm2673, %v8567, %v8566
      %v8569 = vrot.slane %v8451, 3
      %v8570 = vsel %vm2675, %v8569, %v8568
      %v8571 = vrot.slane %v8452, 2
      %v8572 = vsel %vm3037, %v8571, %v8570
      %v8573 = vrot.slane %v8453, 1
      %v8574 = vsel %vm3039, %v8573, %v8572
      %v8575 = vsel %vm3042, %v8454, %v8574
      %v8576 = vrot.slane %v8455, 7
      %v8577 = vsel %vm3045, %v8576, %v8575
      %8578 = vrot.lane.b32.xlu0 %v8577, 12
      %v8579 = vpop.permute.xlu0 %8578
      %v8581 = vrot.slane %v8448, 7
      %v8582 = vrot.slane %v8449, 6
      %v8583 = vsel %vm2671, %v8582, %v8581
      %v8584 = vrot.slane %v8450, 5
      %v8585 = vsel %vm2673, %v8584, %v8583
      %v8586 = vrot.slane %v8451, 4
      %v8587 = vsel %vm2675, %v8586, %v8585
      %v8588 = vrot.slane %v8452, 3
      %v8589 = vsel %vm3037, %v8588, %v8587
      %v8590 = vrot.slane %v8453, 2
      %v8591 = vsel %vm3039, %v8590, %v8589
      %v8592 = vrot.slane %v8454, 1
      %v8593 = vsel %vm3042, %v8592, %v8591
      %v8594 = vsel %vm3045, %v8455, %v8593
      %8595 = vrot.lane.b32.xlu0 %v8594, 14
      %v8596 = vpop.permute.xlu0 %8595
      %v8598 = vsel %vm762, %v8477, %v8494
      %v8599 = vsel %vm771, %v8598, %v8511
      %v8600 = vsel %vm780, %v8599, %v8528
      %v8601 = vsel %vm789, %v8600, %v8545
      %v8602 = vsel %vm798, %v8601, %v8562
      %v8603 = vsel %vm807, %v8602, %v8579
      %v8604 = vsel %vm816, %v8603, %v8596
      %8605 = vst.msk [vmem:[%s438] sm:$0xff] %vm825, %v8604
      %p8606 = scmp.lt.s32.totalorder %s24, 1
      %s8607 = scalar_select %p8606, %s24, 1
      %s8608 = smul.addr %s8607, 8
      %s8609 = scalar_lea.vmem %s11, %s8608
      %p8610 = scmp.lt.s32.totalorder %s24, 1
      %s8611 = scalar_select %p8610, %s24, 1
      %s8612 = smul.addr %s8611, 8
      %s8613 = scalar_lea.vmem %s12, %s8612
      // Predicated region
      $region65: #{csain_disp_lvl1_forward.1} parent=63 // pred_check
        %p8614 = pneg %p283
      $region66: #{csain_disp_lvl1_forward.1} parent=63 // pred_check_branch
        %8616 = sbr.rel (%p8614) target = $region68
      $region67: #{csain_disp_lvl1_forward.1} parent=63 // pred_region
        _
      $region68: #{csain_disp_lvl1_forward.1} parent=63 // pred_fallthru
        _
      // Predicated region
      $region69: #{csain_disp_lvl1_forward.1} parent=63 // pred_check
        %p8617 = pneg %p309
      $region70: #{csain_disp_lvl1_forward.1} parent=63 // pred_check_branch
        %8619 = sbr.rel (%p8617) target = $region72
      $region71: #{csain_disp_lvl1_forward.1} parent=63 // pred_region
        _
      $region72: #{csain_disp_lvl1_forward.1} parent=63 // pred_fallthru
        _
    $region64: #{csain_disp_lvl1_forward.1} parent=5 // pred_fallthru
      _
    %p8620 = scmp.le.s32.totalorder 2, %s19
    // Predicated region
    $region73: #{csain_disp_lvl1_forward.1} parent=5 // pred_check
      %p8621 = pneg %p8620
    $region74: #{csain_disp_lvl1_forward.1} parent=5 // pred_check_branch
      %8623 = sbr.rel (%p8621) target = $region76
    $region75: #{csain_disp_lvl1_forward.1} parent=5 // pred_region
      %s8624 = ssub.s32 %s19, 2
      // Predicated region
      $region77: #{csain_disp_lvl1_forward.1} parent=75 // pred_check
        %p8625 = pneg %p289
      $region78: #{csain_disp_lvl1_forward.1} parent=75 // pred_check_branch
        %8627 = sbr.rel (%p8625) target = $region80
      $region79: #{csain_disp_lvl1_forward.1} parent=75 // pred_region
        %p8628 = scmp.lt.s32.totalorder %s25, 1
        %s8629 = scalar_select %p8628, %s25, 1
        %s8630 = smul.addr %s8629, 8
        %s8631 = scalar_lea.vmem %s11, %s8630
      $region80: #{csain_disp_lvl1_forward.1} parent=75 // pred_fallthru
        _
      // Predicated region
      $region81: #{csain_disp_lvl1_forward.1} parent=75 // pred_check
        %p8632 = pneg %p315
      $region82: #{csain_disp_lvl1_forward.1} parent=75 // pred_check_branch
        %8634 = sbr.rel (%p8632) target = $region84
      $region83: #{csain_disp_lvl1_forward.1} parent=75 // pred_region
        %p8635 = scmp.lt.s32.totalorder %s25, 1
        %s8636 = scalar_select %p8635, %s25, 1
        %s8637 = smul.addr %s8636, 8
        %s8638 = scalar_lea.vmem %s12, %s8637
      $region84: #{csain_disp_lvl1_forward.1} parent=75 // pred_fallthru
        _
    $region76: #{csain_disp_lvl1_forward.1} parent=5 // pred_fallthru
      _
  $region6: #{csain_disp_lvl1_forward.1} parent=0 // loop_footer
    %s23 = sadd.s32 1, %s19
  $region7: #{csain_disp_lvl1_forward.1} parent=0 // loop_footer_branch
    %18 = sbr.rel target = $region3
  $region8: #{csain_disp_lvl1_forward.1} parent=0 // loop_exit
    _

</llo_original>
